<compile_context>
chip_gen: v6e
topology: v6e:2x2x1
jax: 0.10.0
libtpu: 0.0.40
codegen_flags: <defaults>
</compile_context>

<pallas_src>
import jax
import jax.numpy as jnp
from jax.experimental import pallas as pl
from jax.experimental.pallas import tpu as pltpu

_TM_MAX = 2048  # whole-problem row tiles up to this (per-step VMEM << limits)


def _round_up(x, m):
    return ((x + m - 1) // m) * m


def _pick_tm(m):
    """Single whole-M tile when it fits (fewest grid steps: this workload is
    launch/latency bound); otherwise the largest evenly dividing multiple-of-16
    tile so no ragged tail block is ever computed."""
    if m <= _TM_MAX:
        return m
    best = 0
    for t in range(16, _TM_MAX + 1, 16):
        if m % t == 0:
            best = t
    return best if best else _TM_MAX  # fallback: ragged tail masked by Pallas


# ----------------------------- Pallas kernels ------------------------------ #

def _conv_relu_pool_kernel(p_ref, w_ref, b_ref, o_ref):
    """Fused conv (im2col matmul) + bias + ReLU + 2x2/stride-2 max-pool.

    p: (4, TM, K) bf16 -- the 4 pool-position im2col row blocks, stacked.
    w: (K, Cout) bf16.  b: (1, Cout) f32.  o: (TM, Cout) bf16.
    One MXU matmul over the merged (4*TM, K) LHS, then max over the 4 pool
    positions, then bias + ReLU.
    """
    four, tm, k = p_ref.shape
    cout = w_ref.shape[1]
    lhs = p_ref[...].reshape(four * tm, k)          # sublane-only merge (TM % 16 == 0)
    acc = jnp.dot(lhs, w_ref[...], preferred_element_type=jnp.float32)
    acc = acc.reshape(four, tm, cout)               # sublane-only split
    pooled = jnp.max(acc, axis=0)
    # max(relu(x_k + b)) == relu(max_k(x_k) + b): single bias add + ReLU.
    o_ref[...] = jnp.maximum(pooled + b_ref[...], 0.0).astype(o_ref.dtype)


def conv_relu_pool(patches, w_mat, b_row):
    """patches: (4, M, K) bf16, w_mat: (K, Cout) bf16, b_row: (1, Cout) f32
    -> (M, Cout) bf16 pooled conv output, rows ordered (n, ph, pw)."""
    _, m, k = patches.shape
    cout = w_mat.shape[1]
    tm = _pick_tm(m)
    return pl.pallas_call(
        _conv_relu_pool_kernel,
        out_shape=jax.ShapeDtypeStruct((m, cout), jnp.bfloat16),
        grid_spec=pltpu.PrefetchScalarGridSpec(
            num_scalar_prefetch=0,
            grid=(pl.cdiv(m, tm),),
            in_specs=[pl.BlockSpec((4, tm, k), lambda i: (0, i, 0)),
                      pl.BlockSpec((k, cout), lambda i: (0, 0)),
                      pl.BlockSpec((1, cout), lambda i: (0, 0))],
            out_specs=pl.BlockSpec((tm, cout), lambda i: (i, 0)),
        ),
        compiler_params=pltpu.CompilerParams(dimension_semantics=("arbitrary",)),
    )(patches, w_mat, b_row)


def _mlp_kernel(x_ref, w1_ref, b1_ref, w2_ref, b2_ref, o_ref):
    """Fused fc1 + bias + ReLU + fc2 + bias.
    x:(TM,K1) bf16, w1:(K1,H) bf16, b1:(1,H) f32, w2:(H,E) bf16, b2:(1,E) f32
    -> o:(TM,E) f32."""
    h = jnp.dot(x_ref[...], w1_ref[...], preferred_element_type=jnp.float32)
    h = jnp.maximum(h + b1_ref[...], 0.0).astype(jnp.bfloat16)
    o_ref[...] = (jnp.dot(h, w2_ref[...], preferred_element_type=jnp.float32)
                  + b2_ref[...])


def mlp(x, w1, b1, w2, b2):
    m, k1 = x.shape
    hdim = w1.shape[1]
    e = w2.shape[1]
    tm = _pick_tm(m)
    return pl.pallas_call(
        _mlp_kernel,
        out_shape=jax.ShapeDtypeStruct((m, e), jnp.float32),
        grid_spec=pltpu.PrefetchScalarGridSpec(
            num_scalar_prefetch=0,
            grid=(pl.cdiv(m, tm),),
            in_specs=[
                pl.BlockSpec((tm, k1), lambda i: (i, 0)),
                pl.BlockSpec((k1, hdim), lambda i: (0, 0)),
                pl.BlockSpec((1, hdim), lambda i: (0, 0)),
                pl.BlockSpec((hdim, e), lambda i: (0, 0)),
                pl.BlockSpec((1, e), lambda i: (0, 0)),
            ],
            out_specs=pl.BlockSpec((tm, e), lambda i: (i, 0)),
        ),
        compiler_params=pltpu.CompilerParams(dimension_semantics=("arbitrary",)),
    )(x, w1, b1, w2, b2)


# ------------------------------- JAX glue ---------------------------------- #

def _pooled_conv_patches(x_nhwc, kh, kw):
    """Build the stacked bf16 im2col tensor, one slab per 2x2-pool position.

    Returns (P, (n, ph, pw)); P has shape (4, n*ph*pw, K_pad) with rows
    ordered (n, ph, pw), columns ordered (kh, kw, cin) to match the (2,3,1,0)
    conv-weight permute, zero-padded to K_pad = round_up(kh*kw*cin, 16).
    Slab (a, b) row (n, i, j) is the patch of conv-output position
    (2*i + a, 2*j + b).
    """
    n, h, w, c = x_nhwc.shape
    oh, ow = h - kh + 1, w - kw + 1
    ph, pw = oh // 2, ow // 2
    k = kh * kw * c
    k_pad = _round_up(k, 16)
    x = x_nhwc.astype(jnp.bfloat16)
    mats = []
    for a in range(2):
        for b in range(2):
            patches = [
                x[:, a + di:a + di + 2 * ph:2, b + dj:b + dj + 2 * pw:2, :]
                for di in range(kh) for dj in range(kw)
            ]
            p = jnp.stack(patches, axis=3)             # (n, ph, pw, kh*kw, c)
            mats.append(p.reshape(n * ph * pw, k))
    stacked = jnp.stack(mats, axis=0)                  # (4, M, K)
    if k_pad > k:
        stacked = jnp.pad(stacked, ((0, 0), (0, 0), (0, k_pad - k)))
    return stacked, (n, ph, pw)


def prepare_params(params):
    """One-time weight prep hoisted out of the forward graph: conv weights to
    (K_pad, Cout) matmul layout, fc weights transposed, torch's NCHW flatten
    folded into fc1_w's row order, contraction/hidden dims zero-padded to
    multiples of 16, matmul operands cast to bf16."""

    def conv_w(wt):
        cout, cin, kh, kw = wt.shape
        k = kh * kw * cin
        wm = jnp.transpose(wt, (2, 3, 1, 0)).reshape(k, cout)
        return jnp.pad(wm, ((0, _round_up(k, 16) - k), (0, 0))).astype(jnp.bfloat16)

    # fc1_w: (500, 800), input columns in torch NCHW order (c, h, w).
    # Our kernel feeds NHWC-flattened rows (h, w, c), so permute once here.
    fc1_w = params["fc1_w"]
    hid = fc1_w.shape[0]
    hid_pad = _round_up(hid, 16)
    w1 = jnp.transpose(fc1_w.reshape(hid, 50, 4, 4), (2, 3, 1, 0)).reshape(4 * 4 * 50, hid)
    w1 = jnp.pad(w1, ((0, 0), (0, hid_pad - hid))).astype(jnp.bfloat16)
    b1 = jnp.pad(params["fc1_b"], (0, hid_pad - hid)).reshape(1, -1).astype(jnp.float32)
    w2 = jnp.pad(params["fc2_w"].T, ((0, hid_pad - hid), (0, 0))).astype(jnp.bfloat16)

    return {
        "conv1_w": conv_w(params["conv1_w"]),
        "conv1_b": params["conv1_b"].reshape(1, -1).astype(jnp.float32),
        "conv2_w": conv_w(params["conv2_w"]),
        "conv2_b": params["conv2_b"].reshape(1, -1).astype(jnp.float32),
        "fc1_w": w1,
        "fc1_b": b1,
        "fc2_w": w2,
        "fc2_b": params["fc2_b"].reshape(1, -1).astype(jnp.float32),
    }


def digit_conv_forward(prep, x):
    """x: (batch, block, 784) f32 -> (batch, block, n_embd) f32."""
    batch, block = x.shape[0], x.shape[1]
    imgs = x.reshape(-1, 28, 28, 1)                       # NHWC, Cin = 1

    # conv1(1->20, 5x5) + ReLU + 2x2/2 max-pool, fused in one Pallas kernel.
    p1, (n, ph, pw) = _pooled_conv_patches(imgs, 5, 5)           # (4, n*144, 32)
    y = conv_relu_pool(p1, prep["conv1_w"], prep["conv1_b"])     # (n*144, 20) bf16
    y = y.reshape(n, ph, pw, -1)                                 # (n, 12, 12, 20)

    # conv2(20->50, 5x5) + ReLU + 2x2/2 max-pool, fused.
    p2, (n, ph, pw) = _pooled_conv_patches(y, 5, 5)              # (4, n*16, 512)
    y = conv_relu_pool(p2, prep["conv2_w"], prep["conv2_b"])     # (n*16, 50) bf16

    # NHWC flatten is a free reshape; torch's NCHW ordering lives in fc1_w.
    y = y.reshape(n, -1)                                         # (n, 800) bf16

    # fc1 + ReLU + fc2, fused in one Pallas kernel.
    y = mlp(y, prep["fc1_w"], prep["fc1_b"], prep["fc2_w"], prep["fc2_b"])
    return y.reshape(batch, block, -1)


def init_params(key, n_embd):
    """Deterministic synthetic init; shapes match the PyTorch module exactly."""
    ks = jax.random.split(key, 8)

    def u(k, shape, fan_in):
        bound = 1.0 / jnp.sqrt(jnp.float32(fan_in))
        return jax.random.uniform(k, shape, jnp.float32, -bound, bound)

    return {
        "conv1_w": u(ks[0], (20, 1, 5, 5), 1 * 5 * 5),
        "conv1_b": u(ks[1], (20,), 1 * 5 * 5),
        "conv2_w": u(ks[2], (50, 20, 5, 5), 20 * 5 * 5),
        "conv2_b": u(ks[3], (50,), 20 * 5 * 5),
        "fc1_w": u(ks[4], (500, 4 * 4 * 50), 4 * 4 * 50),
        "fc1_b": u(ks[5], (500,), 4 * 4 * 50),
        "fc2_w": u(ks[6], (n_embd, 500), 500),
        "fc2_b": u(ks[7], (n_embd,), 500),
    }


if __name__ == "__main__":
    key = jax.random.PRNGKey(0)
    k_params, k_x = jax.random.split(key)

    n_embd = 32          # config.n_embd (synthetic, small)
    batch, block = 2, 4  # 8 MNIST digits total; 28x28 is fixed by the module

    params = init_params(k_params, n_embd)
    prep = prepare_params(params)        # one-time weight prep (not per forward)
    x = jax.random.normal(k_x, (batch, block, 28 * 28), jnp.float32)

    out = jax.jit(digit_conv_forward)(prep, x)
    out = jax.block_until_ready(out)
    assert out.shape == (batch, block, n_embd)
    assert out.dtype == jnp.float32
    print("KERNEL_OK")
</pallas_src>

<mosaic_0001>
module attributes {stable_mosaic.version = 11 : i64} {
  func.func @_conv_relu_pool_kernel(%arg0: i32, %arg1: memref<4x1152x32xbf16, #tpu.memory_space<vmem>>, %arg2: memref<32x20xbf16, #tpu.memory_space<vmem>>, %arg3: memref<1x20xf32, #tpu.memory_space<vmem>>, %arg4: memref<1152x20xbf16, #tpu.memory_space<vmem>>) attributes {dimension_semantics = [#tpu.dimension_semantics<arbitrary>], iteration_bounds = array<i64: 1>, scalar_prefetch = 0 : i64, scratch_operands = 0 : i64, tpu.core_type = #tpu.core_type<tc>, window_params = [{transform_indices = @transform_0, window_bounds = array<i64: 4, 1152, 32>}, {pipeline_mode = #tpu.pipeline_mode<synchronous>, transform_indices = @transform_1, window_bounds = array<i64: 32, 20>}, {pipeline_mode = #tpu.pipeline_mode<synchronous>, transform_indices = @transform_2, window_bounds = array<i64: 1, 20>}, {transform_indices = @transform_3, window_bounds = array<i64: 1152, 20>}]} {
    %c0 = arith.constant 0 : index
    %c0_0 = arith.constant 0 : index
    %c0_1 = arith.constant 0 : index
    %0 = vector.load %arg1[%c0, %c0_0, %c0_1] : memref<4x1152x32xbf16, #tpu.memory_space<vmem>>, vector<4x1152x32xbf16>
    %1 = vector.shape_cast %0 : vector<4x1152x32xbf16> to vector<4608x32xbf16>
    %c0_2 = arith.constant 0 : index
    %c0_3 = arith.constant 0 : index
    %2 = vector.load %arg2[%c0_2, %c0_3] : memref<32x20xbf16, #tpu.memory_space<vmem>>, vector<32x20xbf16>
    %cst = arith.constant dense<0.000000e+00> : vector<4608x20xf32>
    %3 = tpu.matmul %1, %2, %cst {dimension_numbers = #tpu.dot_dimension_numbers<[1], [0], [0], [1], [0, 0, 1, 1], [], []>} : vector<4608x32xbf16>, vector<32x20xbf16>, vector<4608x20xf32> -> vector<4608x20xf32>
    %4 = vector.shape_cast %3 : vector<4608x20xf32> to vector<4x1152x20xf32>
    %cst_4 = arith.constant dense<0xFF800000> : vector<1152x20xf32>
    %5 = vector.multi_reduction <maximumf>, %4, %cst_4 [0] : vector<4x1152x20xf32> to vector<1152x20xf32>
    %c0_5 = arith.constant 0 : index
    %c0_6 = arith.constant 0 : index
    %6 = vector.load %arg3[%c0_5, %c0_6] : memref<1x20xf32, #tpu.memory_space<vmem>>, vector<1x20xf32>
    %7 = vector.broadcast %6 : vector<1x20xf32> to vector<1152x20xf32>
    %8 = arith.addf %5, %7 : vector<1152x20xf32>
    %cst_7 = arith.constant 0.000000e+00 : f32
    %9 = vector.broadcast %cst_7 : f32 to vector<1152x20xf32>
    %10 = arith.maximumf %8, %9 : vector<1152x20xf32>
    %11 = arith.truncf %10 : vector<1152x20xf32> to vector<1152x20xbf16>
    %c0_8 = arith.constant 0 : index
    %c0_9 = arith.constant 0 : index
    %12 = vector.load %arg4[%c0_8, %c0_9] : memref<1152x20xbf16, #tpu.memory_space<vmem>>, vector<1152x20xbf16>
    tpu.vector_store %arg4[%c0_8, %c0_9], %11 {strides = array<i32>} : memref<1152x20xbf16, #tpu.memory_space<vmem>>, vector<1152x20xbf16>,
    return
  }
  func.func @transform_0(%arg0: i32) -> (i32, i32, i32) {
    %c0_i32 = arith.constant 0 : i32
    %c0_i32_0 = arith.constant 0 : i32
    %c0_i32_1 = arith.constant 0 : i32
    return %c0_i32, %arg0, %c0_i32_0 : i32, i32, i32
  }
  func.func @transform_1(%arg0: i32) -> (i32, i32) {
    %c0_i32 = arith.constant 0 : i32
    %c0_i32_0 = arith.constant 0 : i32
    %c0_i32_1 = arith.constant 0 : i32
    return %c0_i32, %c0_i32_0 : i32, i32
  }
  func.func @transform_2(%arg0: i32) -> (i32, i32) {
    %c0_i32 = arith.constant 0 : i32
    %c0_i32_0 = arith.constant 0 : i32
    %c0_i32_1 = arith.constant 0 : i32
    return %c0_i32, %c0_i32_0 : i32, i32
  }
  func.func @transform_3(%arg0: i32) -> (i32, i32) {
    %c0_i32 = arith.constant 0 : i32
    %c0_i32_0 = arith.constant 0 : i32
    return %arg0, %c0_i32 : i32, i32
  }
}

module attributes {stable_mosaic.version = 11 : i64} {
  func.func @_conv_relu_pool_kernel(%arg0: i32, %arg1: memref<4x128x512xbf16, #tpu.memory_space<vmem>>, %arg2: memref<512x50xbf16, #tpu.memory_space<vmem>>, %arg3: memref<1x50xf32, #tpu.memory_space<vmem>>, %arg4: memref<128x50xbf16, #tpu.memory_space<vmem>>) attributes {dimension_semantics = [#tpu.dimension_semantics<arbitrary>], iteration_bounds = array<i64: 1>, scalar_prefetch = 0 : i64, scratch_operands = 0 : i64, tpu.core_type = #tpu.core_type<tc>, window_params = [{transform_indices = @transform_0, window_bounds = array<i64: 4, 128, 512>}, {pipeline_mode = #tpu.pipeline_mode<synchronous>, transform_indices = @transform_1, window_bounds = array<i64: 512, 50>}, {pipeline_mode = #tpu.pipeline_mode<synchronous>, transform_indices = @transform_2, window_bounds = array<i64: 1, 50>}, {transform_indices = @transform_3, window_bounds = array<i64: 128, 50>}]} {
    %c0 = arith.constant 0 : index
    %c0_0 = arith.constant 0 : index
    %c0_1 = arith.constant 0 : index
    %0 = vector.load %arg1[%c0, %c0_0, %c0_1] : memref<4x128x512xbf16, #tpu.memory_space<vmem>>, vector<4x128x512xbf16>
    %1 = vector.shape_cast %0 : vector<4x128x512xbf16> to vector<512x512xbf16>
    %c0_2 = arith.constant 0 : index
    %c0_3 = arith.constant 0 : index
    %2 = vector.load %arg2[%c0_2, %c0_3] : memref<512x50xbf16, #tpu.memory_space<vmem>>, vector<512x50xbf16>
    %cst = arith.constant dense<0.000000e+00> : vector<512x50xf32>
    %3 = tpu.matmul %1, %2, %cst {dimension_numbers = #tpu.dot_dimension_numbers<[1], [0], [0], [1], [0, 0, 1, 1], [], []>} : vector<512x512xbf16>, vector<512x50xbf16>, vector<512x50xf32> -> vector<512x50xf32>
    %4 = vector.shape_cast %3 : vector<512x50xf32> to vector<4x128x50xf32>
    %cst_4 = arith.constant dense<0xFF800000> : vector<128x50xf32>
    %5 = vector.multi_reduction <maximumf>, %4, %cst_4 [0] : vector<4x128x50xf32> to vector<128x50xf32>
    %c0_5 = arith.constant 0 : index
    %c0_6 = arith.constant 0 : index
    %6 = vector.load %arg3[%c0_5, %c0_6] : memref<1x50xf32, #tpu.memory_space<vmem>>, vector<1x50xf32>
    %7 = vector.broadcast %6 : vector<1x50xf32> to vector<128x50xf32>
    %8 = arith.addf %5, %7 : vector<128x50xf32>
    %cst_7 = arith.constant 0.000000e+00 : f32
    %9 = vector.broadcast %cst_7 : f32 to vector<128x50xf32>
    %10 = arith.maximumf %8, %9 : vector<128x50xf32>
    %11 = arith.truncf %10 : vector<128x50xf32> to vector<128x50xbf16>
    %c0_8 = arith.constant 0 : index
    %c0_9 = arith.constant 0 : index
    %12 = vector.load %arg4[%c0_8, %c0_9] : memref<128x50xbf16, #tpu.memory_space<vmem>>, vector<128x50xbf16>
    tpu.vector_store %arg4[%c0_8, %c0_9], %11 {strides = array<i32>} : memref<128x50xbf16, #tpu.memory_space<vmem>>, vector<128x50xbf16>,
    return
  }
  func.func @transform_0(%arg0: i32) -> (i32, i32, i32) {
    %c0_i32 = arith.constant 0 : i32
    %c0_i32_0 = arith.constant 0 : i32
    %c0_i32_1 = arith.constant 0 : i32
    return %c0_i32, %arg0, %c0_i32_0 : i32, i32, i32
  }
  func.func @transform_1(%arg0: i32) -> (i32, i32) {
    %c0_i32 = arith.constant 0 : i32
    %c0_i32_0 = arith.constant 0 : i32
    %c0_i32_1 = arith.constant 0 : i32
    return %c0_i32, %c0_i32_0 : i32, i32
  }
  func.func @transform_2(%arg0: i32) -> (i32, i32) {
    %c0_i32 = arith.constant 0 : i32
    %c0_i32_0 = arith.constant 0 : i32
    %c0_i32_1 = arith.constant 0 : i32
    return %c0_i32, %c0_i32_0 : i32, i32
  }
  func.func @transform_3(%arg0: i32) -> (i32, i32) {
    %c0_i32 = arith.constant 0 : i32
    %c0_i32_0 = arith.constant 0 : i32
    return %arg0, %c0_i32 : i32, i32
  }
}

module attributes {stable_mosaic.version = 11 : i64} {
  func.func @_mlp_kernel(%arg0: i32, %arg1: memref<8x800xbf16, #tpu.memory_space<vmem>>, %arg2: memref<800x512xbf16, #tpu.memory_space<vmem>>, %arg3: memref<1x512xf32, #tpu.memory_space<vmem>>, %arg4: memref<512x32xbf16, #tpu.memory_space<vmem>>, %arg5: memref<1x32xf32, #tpu.memory_space<vmem>>, %arg6: memref<8x32xf32, #tpu.memory_space<vmem>>) attributes {dimension_semantics = [#tpu.dimension_semantics<arbitrary>], iteration_bounds = array<i64: 1>, scalar_prefetch = 0 : i64, scratch_operands = 0 : i64, tpu.core_type = #tpu.core_type<tc>, window_params = [{transform_indices = @transform_0, window_bounds = array<i64: 8, 800>}, {pipeline_mode = #tpu.pipeline_mode<synchronous>, transform_indices = @transform_1, window_bounds = array<i64: 800, 512>}, {pipeline_mode = #tpu.pipeline_mode<synchronous>, transform_indices = @transform_2, window_bounds = array<i64: 1, 512>}, {pipeline_mode = #tpu.pipeline_mode<synchronous>, transform_indices = @transform_3, window_bounds = array<i64: 512, 32>}, {pipeline_mode = #tpu.pipeline_mode<synchronous>, transform_indices = @transform_4, window_bounds = array<i64: 1, 32>}, {transform_indices = @transform_5, window_bounds = array<i64: 8, 32>}]} {
    %c0 = arith.constant 0 : index
    %c0_0 = arith.constant 0 : index
    %0 = vector.load %arg1[%c0, %c0_0] : memref<8x800xbf16, #tpu.memory_space<vmem>>, vector<8x800xbf16>
    %c0_1 = arith.constant 0 : index
    %c0_2 = arith.constant 0 : index
    %1 = vector.load %arg2[%c0_1, %c0_2] : memref<800x512xbf16, #tpu.memory_space<vmem>>, vector<800x512xbf16>
    %cst = arith.constant dense<0.000000e+00> : vector<8x512xf32>
    %2 = tpu.matmul %0, %1, %cst {dimension_numbers = #tpu.dot_dimension_numbers<[1], [0], [0], [1], [0, 0, 1, 1], [], []>} : vector<8x800xbf16>, vector<800x512xbf16>, vector<8x512xf32> -> vector<8x512xf32>
    %c0_3 = arith.constant 0 : index
    %c0_4 = arith.constant 0 : index
    %3 = vector.load %arg3[%c0_3, %c0_4] : memref<1x512xf32, #tpu.memory_space<vmem>>, vector<1x512xf32>
    %4 = vector.broadcast %3 : vector<1x512xf32> to vector<8x512xf32>
    %5 = arith.addf %2, %4 : vector<8x512xf32>
    %cst_5 = arith.constant 0.000000e+00 : f32
    %6 = vector.broadcast %cst_5 : f32 to vector<8x512xf32>
    %7 = arith.maximumf %5, %6 : vector<8x512xf32>
    %8 = arith.truncf %7 : vector<8x512xf32> to vector<8x512xbf16>
    %c0_6 = arith.constant 0 : index
    %c0_7 = arith.constant 0 : index
    %9 = vector.load %arg4[%c0_6, %c0_7] : memref<512x32xbf16, #tpu.memory_space<vmem>>, vector<512x32xbf16>
    %cst_8 = arith.constant dense<0.000000e+00> : vector<8x32xf32>
    %10 = tpu.matmul %8, %9, %cst_8 {dimension_numbers = #tpu.dot_dimension_numbers<[1], [0], [0], [1], [0, 0, 1, 1], [], []>} : vector<8x512xbf16>, vector<512x32xbf16>, vector<8x32xf32> -> vector<8x32xf32>
    %c0_9 = arith.constant 0 : index
    %c0_10 = arith.constant 0 : index
    %11 = vector.load %arg5[%c0_9, %c0_10] : memref<1x32xf32, #tpu.memory_space<vmem>>, vector<1x32xf32>
    %12 = vector.broadcast %11 : vector<1x32xf32> to vector<8x32xf32>
    %13 = arith.addf %10, %12 : vector<8x32xf32>
    %c0_11 = arith.constant 0 : index
    %c0_12 = arith.constant 0 : index
    %14 = vector.load %arg6[%c0_11, %c0_12] : memref<8x32xf32, #tpu.memory_space<vmem>>, vector<8x32xf32>
    tpu.vector_store %arg6[%c0_11, %c0_12], %13 {strides = array<i32>} : memref<8x32xf32, #tpu.memory_space<vmem>>, vector<8x32xf32>,
    return
  }
  func.func @transform_0(%arg0: i32) -> (i32, i32) {
    %c0_i32 = arith.constant 0 : i32
    %c0_i32_0 = arith.constant 0 : i32
    return %arg0, %c0_i32 : i32, i32
  }
  func.func @transform_1(%arg0: i32) -> (i32, i32) {
    %c0_i32 = arith.constant 0 : i32
    %c0_i32_0 = arith.constant 0 : i32
    %c0_i32_1 = arith.constant 0 : i32
    return %c0_i32, %c0_i32_0 : i32, i32
  }
  func.func @transform_2(%arg0: i32) -> (i32, i32) {
    %c0_i32 = arith.constant 0 : i32
    %c0_i32_0 = arith.constant 0 : i32
    %c0_i32_1 = arith.constant 0 : i32
    return %c0_i32, %c0_i32_0 : i32, i32
  }
  func.func @transform_3(%arg0: i32) -> (i32, i32) {
    %c0_i32 = arith.constant 0 : i32
    %c0_i32_0 = arith.constant 0 : i32
    %c0_i32_1 = arith.constant 0 : i32
    return %c0_i32, %c0_i32_0 : i32, i32
  }
  func.func @transform_4(%arg0: i32) -> (i32, i32) {
    %c0_i32 = arith.constant 0 : i32
    %c0_i32_0 = arith.constant 0 : i32
    %c0_i32_1 = arith.constant 0 : i32
    return %c0_i32, %c0_i32_0 : i32, i32
  }
  func.func @transform_5(%arg0: i32) -> (i32, i32) {
    %c0_i32 = arith.constant 0 : i32
    %c0_i32_0 = arith.constant 0 : i32
    return %arg0, %c0_i32 : i32, i32
  }
}

</mosaic_0001>

<llo_original>
// kernel: digit_conv_forward.3
$region0: #{digit_conv_forward.3}
  #allocation0 [shape = 'u32[]', space=smem, size = 0x4, offset = 0x4, fixed_abs, tag = 'smem constant byte address 0x4 - core index']
  #allocation1 [shape = 'u32[144,128]{1,0:T(1,128)}', space=vmem, size = 0x12000, scoped, tag = 'internal scratch']
  %s0 = inlined_call_operand.vmem [shape: bf16[4,1152,32], index: 0, kind: input, shape index: {}]
  %s1 = inlined_call_operand.vmem [shape: bf16[32,20], index: 1, kind: input, shape index: {}]
  %s2 = inlined_call_operand.vmem [shape: f32[1,20], index: 2, kind: input, shape index: {}]
  %s3 = inlined_call_operand.vmem [shape: bf16[1152,20], index: 3, kind: output, shape index: {}]
  %s4 = sld [smem:[#allocation0]]
  $region22: #{digit_conv_forward.3} parent=0
    _
  %s6 = ssub.s32 1, %s4
  %s7 = scalar_select 0, %s6, %s4
  // Predicated region
  $region2: #{digit_conv_forward.3} parent=0 // pred_check
    _
  $region3: #{digit_conv_forward.3} parent=0 // pred_check_branch
    %9 = sbr.rel (0) target = $region5
  $region4: #{digit_conv_forward.3} parent=0 // pred_region
    _
  $region5: #{digit_conv_forward.3} parent=0 // pred_fallthru
    _
  // Predicated region
  $region6: #{digit_conv_forward.3} parent=0 // pred_check
    _
  $region7: #{digit_conv_forward.3} parent=0 // pred_check_branch
    %11 = sbr.rel (0) target = $region9
  $region8: #{digit_conv_forward.3} parent=0 // pred_region
    _
  $region9: #{digit_conv_forward.3} parent=0 // pred_fallthru
    _
  // Predicated region
  $region10: #{digit_conv_forward.3} parent=0 // pred_check
    _
  $region11: #{digit_conv_forward.3} parent=0 // pred_check_branch
    %13 = sbr.rel (0) target = $region13
  $region12: #{digit_conv_forward.3} parent=0 // pred_region
    _
  $region13: #{digit_conv_forward.3} parent=0 // pred_fallthru
    _
  %v15 = vld [vmem:[%s0] sm:$0xf]
  %v16 = vld [vmem:[%s0 + $0x4] sm:$0xf]
  %v17 = vld [vmem:[%s0 + $0x8] sm:$0xf]
  %v18 = vld [vmem:[%s0 + $0xc] sm:$0xf]
  %v19 = vld [vmem:[%s0 + $0x10] sm:$0xf]
  %v20 = vld [vmem:[%s0 + $0x14] sm:$0xf]
  %v21 = vld [vmem:[%s0 + $0x18] sm:$0xf]
  %v22 = vld [vmem:[%s0 + $0x1c] sm:$0xf]
  %v23 = vld [vmem:[%s0 + $0x20] sm:$0xf]
  %v24 = vld [vmem:[%s0 + $0x24] sm:$0xf]
  %v25 = vld [vmem:[%s0 + $0x28] sm:$0xf]
  %v26 = vld [vmem:[%s0 + $0x2c] sm:$0xf]
  %v27 = vld [vmem:[%s0 + $0x30] sm:$0xf]
  %v28 = vld [vmem:[%s0 + $0x34] sm:$0xf]
  %v29 = vld [vmem:[%s0 + $0x38] sm:$0xf]
  %v30 = vld [vmem:[%s0 + $0x3c] sm:$0xf]
  %v31 = vld [vmem:[%s0 + $0x40] sm:$0xf]
  %v32 = vld [vmem:[%s0 + $0x44] sm:$0xf]
  %v33 = vld [vmem:[%s0 + $0x48] sm:$0xf]
  %v34 = vld [vmem:[%s0 + $0x4c] sm:$0xf]
  %v35 = vld [vmem:[%s0 + $0x50] sm:$0xf]
  %v36 = vld [vmem:[%s0 + $0x54] sm:$0xf]
  %v37 = vld [vmem:[%s0 + $0x58] sm:$0xf]
  %v38 = vld [vmem:[%s0 + $0x5c] sm:$0xf]
  %v39 = vld [vmem:[%s0 + $0x60] sm:$0xf]
  %v40 = vld [vmem:[%s0 + $0x64] sm:$0xf]
  %v41 = vld [vmem:[%s0 + $0x68] sm:$0xf]
  %v42 = vld [vmem:[%s0 + $0x6c] sm:$0xf]
  %v43 = vld [vmem:[%s0 + $0x70] sm:$0xf]
  %v44 = vld [vmem:[%s0 + $0x74] sm:$0xf]
  %v45 = vld [vmem:[%s0 + $0x78] sm:$0xf]
  %v46 = vld [vmem:[%s0 + $0x7c] sm:$0xf]
  %v47 = vld [vmem:[%s0 + $0x80] sm:$0xf]
  %v48 = vld [vmem:[%s0 + $0x84] sm:$0xf]
  %v49 = vld [vmem:[%s0 + $0x88] sm:$0xf]
  %v50 = vld [vmem:[%s0 + $0x8c] sm:$0xf]
  %v51 = vld [vmem:[%s0 + $0x90] sm:$0xf]
  %v52 = vld [vmem:[%s0 + $0x94] sm:$0xf]
  %v53 = vld [vmem:[%s0 + $0x98] sm:$0xf]
  %v54 = vld [vmem:[%s0 + $0x9c] sm:$0xf]
  %v55 = vld [vmem:[%s0 + $0xa0] sm:$0xf]
  %v56 = vld [vmem:[%s0 + $0xa4] sm:$0xf]
  %v57 = vld [vmem:[%s0 + $0xa8] sm:$0xf]
  %v58 = vld [vmem:[%s0 + $0xac] sm:$0xf]
  %v59 = vld [vmem:[%s0 + $0xb0] sm:$0xf]
  %v60 = vld [vmem:[%s0 + $0xb4] sm:$0xf]
  %v61 = vld [vmem:[%s0 + $0xb8] sm:$0xf]
  %v62 = vld [vmem:[%s0 + $0xbc] sm:$0xf]
  %v63 = vld [vmem:[%s0 + $0xc0] sm:$0xf]
  %v64 = vld [vmem:[%s0 + $0xc4] sm:$0xf]
  %v65 = vld [vmem:[%s0 + $0xc8] sm:$0xf]
  %v66 = vld [vmem:[%s0 + $0xcc] sm:$0xf]
  %v67 = vld [vmem:[%s0 + $0xd0] sm:$0xf]
  %v68 = vld [vmem:[%s0 + $0xd4] sm:$0xf]
  %v69 = vld [vmem:[%s0 + $0xd8] sm:$0xf]
  %v70 = vld [vmem:[%s0 + $0xdc] sm:$0xf]
  %v71 = vld [vmem:[%s0 + $0xe0] sm:$0xf]
  %v72 = vld [vmem:[%s0 + $0xe4] sm:$0xf]
  %v73 = vld [vmem:[%s0 + $0xe8] sm:$0xf]
  %v74 = vld [vmem:[%s0 + $0xec] sm:$0xf]
  %v75 = vld [vmem:[%s0 + $0xf0] sm:$0xf]
  %v76 = vld [vmem:[%s0 + $0xf4] sm:$0xf]
  %v77 = vld [vmem:[%s0 + $0xf8] sm:$0xf]
  %v78 = vld [vmem:[%s0 + $0xfc] sm:$0xf]
  %v79 = vld [vmem:[%s0 + $0x100] sm:$0xf]
  %v80 = vld [vmem:[%s0 + $0x104] sm:$0xf]
  %v81 = vld [vmem:[%s0 + $0x108] sm:$0xf]
  %v82 = vld [vmem:[%s0 + $0x10c] sm:$0xf]
  %v83 = vld [vmem:[%s0 + $0x110] sm:$0xf]
  %v84 = vld [vmem:[%s0 + $0x114] sm:$0xf]
  %v85 = vld [vmem:[%s0 + $0x118] sm:$0xf]
  %v86 = vld [vmem:[%s0 + $0x11c] sm:$0xf]
  %v87 = vld [vmem:[%s0 + $0x120] sm:$0xf]
  %v88 = vld [vmem:[%s0 + $0x124] sm:$0xf]
  %v89 = vld [vmem:[%s0 + $0x128] sm:$0xf]
  %v90 = vld [vmem:[%s0 + $0x12c] sm:$0xf]
  %v91 = vld [vmem:[%s0 + $0x130] sm:$0xf]
  %v92 = vld [vmem:[%s0 + $0x134] sm:$0xf]
  %v93 = vld [vmem:[%s0 + $0x138] sm:$0xf]
  %v94 = vld [vmem:[%s0 + $0x13c] sm:$0xf]
  %v95 = vld [vmem:[%s0 + $0x140] sm:$0xf]
  %v96 = vld [vmem:[%s0 + $0x144] sm:$0xf]
  %v97 = vld [vmem:[%s0 + $0x148] sm:$0xf]
  %v98 = vld [vmem:[%s0 + $0x14c] sm:$0xf]
  %v99 = vld [vmem:[%s0 + $0x150] sm:$0xf]
  %v100 = vld [vmem:[%s0 + $0x154] sm:$0xf]
  %v101 = vld [vmem:[%s0 + $0x158] sm:$0xf]
  %v102 = vld [vmem:[%s0 + $0x15c] sm:$0xf]
  %v103 = vld [vmem:[%s0 + $0x160] sm:$0xf]
  %v104 = vld [vmem:[%s0 + $0x164] sm:$0xf]
  %v105 = vld [vmem:[%s0 + $0x168] sm:$0xf]
  %v106 = vld [vmem:[%s0 + $0x16c] sm:$0xf]
  %v107 = vld [vmem:[%s0 + $0x170] sm:$0xf]
  %v108 = vld [vmem:[%s0 + $0x174] sm:$0xf]
  %v109 = vld [vmem:[%s0 + $0x178] sm:$0xf]
  %v110 = vld [vmem:[%s0 + $0x17c] sm:$0xf]
  %v111 = vld [vmem:[%s0 + $0x180] sm:$0xf]
  %v112 = vld [vmem:[%s0 + $0x184] sm:$0xf]
  %v113 = vld [vmem:[%s0 + $0x188] sm:$0xf]
  %v114 = vld [vmem:[%s0 + $0x18c] sm:$0xf]
  %v115 = vld [vmem:[%s0 + $0x190] sm:$0xf]
  %v116 = vld [vmem:[%s0 + $0x194] sm:$0xf]
  %v117 = vld [vmem:[%s0 + $0x198] sm:$0xf]
  %v118 = vld [vmem:[%s0 + $0x19c] sm:$0xf]
  %v119 = vld [vmem:[%s0 + $0x1a0] sm:$0xf]
  %v120 = vld [vmem:[%s0 + $0x1a4] sm:$0xf]
  %v121 = vld [vmem:[%s0 + $0x1a8] sm:$0xf]
  %v122 = vld [vmem:[%s0 + $0x1ac] sm:$0xf]
  %v123 = vld [vmem:[%s0 + $0x1b0] sm:$0xf]
  %v124 = vld [vmem:[%s0 + $0x1b4] sm:$0xf]
  %v125 = vld [vmem:[%s0 + $0x1b8] sm:$0xf]
  %v126 = vld [vmem:[%s0 + $0x1bc] sm:$0xf]
  %v127 = vld [vmem:[%s0 + $0x1c0] sm:$0xf]
  %v128 = vld [vmem:[%s0 + $0x1c4] sm:$0xf]
  %v129 = vld [vmem:[%s0 + $0x1c8] sm:$0xf]
  %v130 = vld [vmem:[%s0 + $0x1cc] sm:$0xf]
  %v131 = vld [vmem:[%s0 + $0x1d0] sm:$0xf]
  %v132 = vld [vmem:[%s0 + $0x1d4] sm:$0xf]
  %v133 = vld [vmem:[%s0 + $0x1d8] sm:$0xf]
  %v134 = vld [vmem:[%s0 + $0x1dc] sm:$0xf]
  %v135 = vld [vmem:[%s0 + $0x1e0] sm:$0xf]
  %v136 = vld [vmem:[%s0 + $0x1e4] sm:$0xf]
  %v137 = vld [vmem:[%s0 + $0x1e8] sm:$0xf]
  %v138 = vld [vmem:[%s0 + $0x1ec] sm:$0xf]
  %v139 = vld [vmem:[%s0 + $0x1f0] sm:$0xf]
  %v140 = vld [vmem:[%s0 + $0x1f4] sm:$0xf]
  %v141 = vld [vmem:[%s0 + $0x1f8] sm:$0xf]
  %v142 = vld [vmem:[%s0 + $0x1fc] sm:$0xf]
  %v143 = vld [vmem:[%s0 + $0x200] sm:$0xf]
  %v144 = vld [vmem:[%s0 + $0x204] sm:$0xf]
  %v145 = vld [vmem:[%s0 + $0x208] sm:$0xf]
  %v146 = vld [vmem:[%s0 + $0x20c] sm:$0xf]
  %v147 = vld [vmem:[%s0 + $0x210] sm:$0xf]
  %v148 = vld [vmem:[%s0 + $0x214] sm:$0xf]
  %v149 = vld [vmem:[%s0 + $0x218] sm:$0xf]
  %v150 = vld [vmem:[%s0 + $0x21c] sm:$0xf]
  %v151 = vld [vmem:[%s0 + $0x220] sm:$0xf]
  %v152 = vld [vmem:[%s0 + $0x224] sm:$0xf]
  %v153 = vld [vmem:[%s0 + $0x228] sm:$0xf]
  %v154 = vld [vmem:[%s0 + $0x22c] sm:$0xf]
  %v155 = vld [vmem:[%s0 + $0x230] sm:$0xf]
  %v156 = vld [vmem:[%s0 + $0x234] sm:$0xf]
  %v157 = vld [vmem:[%s0 + $0x238] sm:$0xf]
  %v158 = vld [vmem:[%s0 + $0x23c] sm:$0xf]
  %v159 = vld [vmem:[%s0 + $0x240] sm:$0xf]
  %v160 = vld [vmem:[%s0 + $0x244] sm:$0xf]
  %v161 = vld [vmem:[%s0 + $0x248] sm:$0xf]
  %v162 = vld [vmem:[%s0 + $0x24c] sm:$0xf]
  %v163 = vld [vmem:[%s0 + $0x250] sm:$0xf]
  %v164 = vld [vmem:[%s0 + $0x254] sm:$0xf]
  %v165 = vld [vmem:[%s0 + $0x258] sm:$0xf]
  %v166 = vld [vmem:[%s0 + $0x25c] sm:$0xf]
  %v167 = vld [vmem:[%s0 + $0x260] sm:$0xf]
  %v168 = vld [vmem:[%s0 + $0x264] sm:$0xf]
  %v169 = vld [vmem:[%s0 + $0x268] sm:$0xf]
  %v170 = vld [vmem:[%s0 + $0x26c] sm:$0xf]
  %v171 = vld [vmem:[%s0 + $0x270] sm:$0xf]
  %v172 = vld [vmem:[%s0 + $0x274] sm:$0xf]
  %v173 = vld [vmem:[%s0 + $0x278] sm:$0xf]
  %v174 = vld [vmem:[%s0 + $0x27c] sm:$0xf]
  %v175 = vld [vmem:[%s0 + $0x280] sm:$0xf]
  %v176 = vld [vmem:[%s0 + $0x284] sm:$0xf]
  %v177 = vld [vmem:[%s0 + $0x288] sm:$0xf]
  %v178 = vld [vmem:[%s0 + $0x28c] sm:$0xf]
  %v179 = vld [vmem:[%s0 + $0x290] sm:$0xf]
  %v180 = vld [vmem:[%s0 + $0x294] sm:$0xf]
  %v181 = vld [vmem:[%s0 + $0x298] sm:$0xf]
  %v182 = vld [vmem:[%s0 + $0x29c] sm:$0xf]
  %v183 = vld [vmem:[%s0 + $0x2a0] sm:$0xf]
  %v184 = vld [vmem:[%s0 + $0x2a4] sm:$0xf]
  %v185 = vld [vmem:[%s0 + $0x2a8] sm:$0xf]
  %v186 = vld [vmem:[%s0 + $0x2ac] sm:$0xf]
  %v187 = vld [vmem:[%s0 + $0x2b0] sm:$0xf]
  %v188 = vld [vmem:[%s0 + $0x2b4] sm:$0xf]
  %v189 = vld [vmem:[%s0 + $0x2b8] sm:$0xf]
  %v190 = vld [vmem:[%s0 + $0x2bc] sm:$0xf]
  %v191 = vld [vmem:[%s0 + $0x2c0] sm:$0xf]
  %v192 = vld [vmem:[%s0 + $0x2c4] sm:$0xf]
  %v193 = vld [vmem:[%s0 + $0x2c8] sm:$0xf]
  %v194 = vld [vmem:[%s0 + $0x2cc] sm:$0xf]
  %v195 = vld [vmem:[%s0 + $0x2d0] sm:$0xf]
  %v196 = vld [vmem:[%s0 + $0x2d4] sm:$0xf]
  %v197 = vld [vmem:[%s0 + $0x2d8] sm:$0xf]
  %v198 = vld [vmem:[%s0 + $0x2dc] sm:$0xf]
  %v199 = vld [vmem:[%s0 + $0x2e0] sm:$0xf]
  %v200 = vld [vmem:[%s0 + $0x2e4] sm:$0xf]
  %v201 = vld [vmem:[%s0 + $0x2e8] sm:$0xf]
  %v202 = vld [vmem:[%s0 + $0x2ec] sm:$0xf]
  %v203 = vld [vmem:[%s0 + $0x2f0] sm:$0xf]
  %v204 = vld [vmem:[%s0 + $0x2f4] sm:$0xf]
  %v205 = vld [vmem:[%s0 + $0x2f8] sm:$0xf]
  %v206 = vld [vmem:[%s0 + $0x2fc] sm:$0xf]
  %v207 = vld [vmem:[%s0 + $0x300] sm:$0xf]
  %v208 = vld [vmem:[%s0 + $0x304] sm:$0xf]
  %v209 = vld [vmem:[%s0 + $0x308] sm:$0xf]
  %v210 = vld [vmem:[%s0 + $0x30c] sm:$0xf]
  %v211 = vld [vmem:[%s0 + $0x310] sm:$0xf]
  %v212 = vld [vmem:[%s0 + $0x314] sm:$0xf]
  %v213 = vld [vmem:[%s0 + $0x318] sm:$0xf]
  %v214 = vld [vmem:[%s0 + $0x31c] sm:$0xf]
  %v215 = vld [vmem:[%s0 + $0x320] sm:$0xf]
  %v216 = vld [vmem:[%s0 + $0x324] sm:$0xf]
  %v217 = vld [vmem:[%s0 + $0x328] sm:$0xf]
  %v218 = vld [vmem:[%s0 + $0x32c] sm:$0xf]
  %v219 = vld [vmem:[%s0 + $0x330] sm:$0xf]
  %v220 = vld [vmem:[%s0 + $0x334] sm:$0xf]
  %v221 = vld [vmem:[%s0 + $0x338] sm:$0xf]
  %v222 = vld [vmem:[%s0 + $0x33c] sm:$0xf]
  %v223 = vld [vmem:[%s0 + $0x340] sm:$0xf]
  %v224 = vld [vmem:[%s0 + $0x344] sm:$0xf]
  %v225 = vld [vmem:[%s0 + $0x348] sm:$0xf]
  %v226 = vld [vmem:[%s0 + $0x34c] sm:$0xf]
  %v227 = vld [vmem:[%s0 + $0x350] sm:$0xf]
  %v228 = vld [vmem:[%s0 + $0x354] sm:$0xf]
  %v229 = vld [vmem:[%s0 + $0x358] sm:$0xf]
  %v230 = vld [vmem:[%s0 + $0x35c] sm:$0xf]
  %v231 = vld [vmem:[%s0 + $0x360] sm:$0xf]
  %v232 = vld [vmem:[%s0 + $0x364] sm:$0xf]
  %v233 = vld [vmem:[%s0 + $0x368] sm:$0xf]
  %v234 = vld [vmem:[%s0 + $0x36c] sm:$0xf]
  %v235 = vld [vmem:[%s0 + $0x370] sm:$0xf]
  %v236 = vld [vmem:[%s0 + $0x374] sm:$0xf]
  %v237 = vld [vmem:[%s0 + $0x378] sm:$0xf]
  %v238 = vld [vmem:[%s0 + $0x37c] sm:$0xf]
  %v239 = vld [vmem:[%s0 + $0x380] sm:$0xf]
  %v240 = vld [vmem:[%s0 + $0x384] sm:$0xf]
  %v241 = vld [vmem:[%s0 + $0x388] sm:$0xf]
  %v242 = vld [vmem:[%s0 + $0x38c] sm:$0xf]
  %v243 = vld [vmem:[%s0 + $0x390] sm:$0xf]
  %v244 = vld [vmem:[%s0 + $0x394] sm:$0xf]
  %v245 = vld [vmem:[%s0 + $0x398] sm:$0xf]
  %v246 = vld [vmem:[%s0 + $0x39c] sm:$0xf]
  %v247 = vld [vmem:[%s0 + $0x3a0] sm:$0xf]
  %v248 = vld [vmem:[%s0 + $0x3a4] sm:$0xf]
  %v249 = vld [vmem:[%s0 + $0x3a8] sm:$0xf]
  %v250 = vld [vmem:[%s0 + $0x3ac] sm:$0xf]
  %v251 = vld [vmem:[%s0 + $0x3b0] sm:$0xf]
  %v252 = vld [vmem:[%s0 + $0x3b4] sm:$0xf]
  %v253 = vld [vmem:[%s0 + $0x3b8] sm:$0xf]
  %v254 = vld [vmem:[%s0 + $0x3bc] sm:$0xf]
  %v255 = vld [vmem:[%s0 + $0x3c0] sm:$0xf]
  %v256 = vld [vmem:[%s0 + $0x3c4] sm:$0xf]
  %v257 = vld [vmem:[%s0 + $0x3c8] sm:$0xf]
  %v258 = vld [vmem:[%s0 + $0x3cc] sm:$0xf]
  %v259 = vld [vmem:[%s0 + $0x3d0] sm:$0xf]
  %v260 = vld [vmem:[%s0 + $0x3d4] sm:$0xf]
  %v261 = vld [vmem:[%s0 + $0x3d8] sm:$0xf]
  %v262 = vld [vmem:[%s0 + $0x3dc] sm:$0xf]
  %v263 = vld [vmem:[%s0 + $0x3e0] sm:$0xf]
  %v264 = vld [vmem:[%s0 + $0x3e4] sm:$0xf]
  %v265 = vld [vmem:[%s0 + $0x3e8] sm:$0xf]
  %v266 = vld [vmem:[%s0 + $0x3ec] sm:$0xf]
  %v267 = vld [vmem:[%s0 + $0x3f0] sm:$0xf]
  %v268 = vld [vmem:[%s0 + $0x3f4] sm:$0xf]
  %v269 = vld [vmem:[%s0 + $0x3f8] sm:$0xf]
  %v270 = vld [vmem:[%s0 + $0x3fc] sm:$0xf]
  %v271 = vld [vmem:[%s0 + $0x400] sm:$0xf]
  %v272 = vld [vmem:[%s0 + $0x404] sm:$0xf]
  %v273 = vld [vmem:[%s0 + $0x408] sm:$0xf]
  %v274 = vld [vmem:[%s0 + $0x40c] sm:$0xf]
  %v275 = vld [vmem:[%s0 + $0x410] sm:$0xf]
  %v276 = vld [vmem:[%s0 + $0x414] sm:$0xf]
  %v277 = vld [vmem:[%s0 + $0x418] sm:$0xf]
  %v278 = vld [vmem:[%s0 + $0x41c] sm:$0xf]
  %v279 = vld [vmem:[%s0 + $0x420] sm:$0xf]
  %v280 = vld [vmem:[%s0 + $0x424] sm:$0xf]
  %v281 = vld [vmem:[%s0 + $0x428] sm:$0xf]
  %v282 = vld [vmem:[%s0 + $0x42c] sm:$0xf]
  %v283 = vld [vmem:[%s0 + $0x430] sm:$0xf]
  %v284 = vld [vmem:[%s0 + $0x434] sm:$0xf]
  %v285 = vld [vmem:[%s0 + $0x438] sm:$0xf]
  %v286 = vld [vmem:[%s0 + $0x43c] sm:$0xf]
  %v287 = vld [vmem:[%s0 + $0x440] sm:$0xf]
  %v288 = vld [vmem:[%s0 + $0x444] sm:$0xf]
  %v289 = vld [vmem:[%s0 + $0x448] sm:$0xf]
  %v290 = vld [vmem:[%s0 + $0x44c] sm:$0xf]
  %v291 = vld [vmem:[%s0 + $0x450] sm:$0xf]
  %v292 = vld [vmem:[%s0 + $0x454] sm:$0xf]
  %v293 = vld [vmem:[%s0 + $0x458] sm:$0xf]
  %v294 = vld [vmem:[%s0 + $0x45c] sm:$0xf]
  %v295 = vld [vmem:[%s0 + $0x460] sm:$0xf]
  %v296 = vld [vmem:[%s0 + $0x464] sm:$0xf]
  %v297 = vld [vmem:[%s0 + $0x468] sm:$0xf]
  %v298 = vld [vmem:[%s0 + $0x46c] sm:$0xf]
  %v299 = vld [vmem:[%s0 + $0x470] sm:$0xf]
  %v300 = vld [vmem:[%s0 + $0x474] sm:$0xf]
  %v301 = vld [vmem:[%s0 + $0x478] sm:$0xf]
  %v302 = vld [vmem:[%s0 + $0x47c] sm:$0xf]
  %v303 = vld [vmem:[%s0 + $0x480] sm:$0xf]
  %v304 = vld [vmem:[%s0 + $0x484] sm:$0xf]
  %v305 = vld [vmem:[%s0 + $0x488] sm:$0xf]
  %v306 = vld [vmem:[%s0 + $0x48c] sm:$0xf]
  %v307 = vld [vmem:[%s0 + $0x490] sm:$0xf]
  %v308 = vld [vmem:[%s0 + $0x494] sm:$0xf]
  %v309 = vld [vmem:[%s0 + $0x498] sm:$0xf]
  %v310 = vld [vmem:[%s0 + $0x49c] sm:$0xf]
  %v311 = vld [vmem:[%s0 + $0x4a0] sm:$0xf]
  %v312 = vld [vmem:[%s0 + $0x4a4] sm:$0xf]
  %v313 = vld [vmem:[%s0 + $0x4a8] sm:$0xf]
  %v314 = vld [vmem:[%s0 + $0x4ac] sm:$0xf]
  %v315 = vld [vmem:[%s0 + $0x4b0] sm:$0xf]
  %v316 = vld [vmem:[%s0 + $0x4b4] sm:$0xf]
  %v317 = vld [vmem:[%s0 + $0x4b8] sm:$0xf]
  %v318 = vld [vmem:[%s0 + $0x4bc] sm:$0xf]
  %v319 = vld [vmem:[%s0 + $0x4c0] sm:$0xf]
  %v320 = vld [vmem:[%s0 + $0x4c4] sm:$0xf]
  %v321 = vld [vmem:[%s0 + $0x4c8] sm:$0xf]
  %v322 = vld [vmem:[%s0 + $0x4cc] sm:$0xf]
  %v323 = vld [vmem:[%s0 + $0x4d0] sm:$0xf]
  %v324 = vld [vmem:[%s0 + $0x4d4] sm:$0xf]
  %v325 = vld [vmem:[%s0 + $0x4d8] sm:$0xf]
  %v326 = vld [vmem:[%s0 + $0x4dc] sm:$0xf]
  %v327 = vld [vmem:[%s0 + $0x4e0] sm:$0xf]
  %v328 = vld [vmem:[%s0 + $0x4e4] sm:$0xf]
  %v329 = vld [vmem:[%s0 + $0x4e8] sm:$0xf]
  %v330 = vld [vmem:[%s0 + $0x4ec] sm:$0xf]
  %v331 = vld [vmem:[%s0 + $0x4f0] sm:$0xf]
  %v332 = vld [vmem:[%s0 + $0x4f4] sm:$0xf]
  %v333 = vld [vmem:[%s0 + $0x4f8] sm:$0xf]
  %v334 = vld [vmem:[%s0 + $0x4fc] sm:$0xf]
  %v335 = vld [vmem:[%s0 + $0x500] sm:$0xf]
  %v336 = vld [vmem:[%s0 + $0x504] sm:$0xf]
  %v337 = vld [vmem:[%s0 + $0x508] sm:$0xf]
  %v338 = vld [vmem:[%s0 + $0x50c] sm:$0xf]
  %v339 = vld [vmem:[%s0 + $0x510] sm:$0xf]
  %v340 = vld [vmem:[%s0 + $0x514] sm:$0xf]
  %v341 = vld [vmem:[%s0 + $0x518] sm:$0xf]
  %v342 = vld [vmem:[%s0 + $0x51c] sm:$0xf]
  %v343 = vld [vmem:[%s0 + $0x520] sm:$0xf]
  %v344 = vld [vmem:[%s0 + $0x524] sm:$0xf]
  %v345 = vld [vmem:[%s0 + $0x528] sm:$0xf]
  %v346 = vld [vmem:[%s0 + $0x52c] sm:$0xf]
  %v347 = vld [vmem:[%s0 + $0x530] sm:$0xf]
  %v348 = vld [vmem:[%s0 + $0x534] sm:$0xf]
  %v349 = vld [vmem:[%s0 + $0x538] sm:$0xf]
  %v350 = vld [vmem:[%s0 + $0x53c] sm:$0xf]
  %v351 = vld [vmem:[%s0 + $0x540] sm:$0xf]
  %v352 = vld [vmem:[%s0 + $0x544] sm:$0xf]
  %v353 = vld [vmem:[%s0 + $0x548] sm:$0xf]
  %v354 = vld [vmem:[%s0 + $0x54c] sm:$0xf]
  %v355 = vld [vmem:[%s0 + $0x550] sm:$0xf]
  %v356 = vld [vmem:[%s0 + $0x554] sm:$0xf]
  %v357 = vld [vmem:[%s0 + $0x558] sm:$0xf]
  %v358 = vld [vmem:[%s0 + $0x55c] sm:$0xf]
  %v359 = vld [vmem:[%s0 + $0x560] sm:$0xf]
  %v360 = vld [vmem:[%s0 + $0x564] sm:$0xf]
  %v361 = vld [vmem:[%s0 + $0x568] sm:$0xf]
  %v362 = vld [vmem:[%s0 + $0x56c] sm:$0xf]
  %v363 = vld [vmem:[%s0 + $0x570] sm:$0xf]
  %v364 = vld [vmem:[%s0 + $0x574] sm:$0xf]
  %v365 = vld [vmem:[%s0 + $0x578] sm:$0xf]
  %v366 = vld [vmem:[%s0 + $0x57c] sm:$0xf]
  %v367 = vld [vmem:[%s0 + $0x580] sm:$0xf]
  %v368 = vld [vmem:[%s0 + $0x584] sm:$0xf]
  %v369 = vld [vmem:[%s0 + $0x588] sm:$0xf]
  %v370 = vld [vmem:[%s0 + $0x58c] sm:$0xf]
  %v371 = vld [vmem:[%s0 + $0x590] sm:$0xf]
  %v372 = vld [vmem:[%s0 + $0x594] sm:$0xf]
  %v373 = vld [vmem:[%s0 + $0x598] sm:$0xf]
  %v374 = vld [vmem:[%s0 + $0x59c] sm:$0xf]
  %v375 = vld [vmem:[%s0 + $0x5a0] sm:$0xf]
  %v376 = vld [vmem:[%s0 + $0x5a4] sm:$0xf]
  %v377 = vld [vmem:[%s0 + $0x5a8] sm:$0xf]
  %v378 = vld [vmem:[%s0 + $0x5ac] sm:$0xf]
  %v379 = vld [vmem:[%s0 + $0x5b0] sm:$0xf]
  %v380 = vld [vmem:[%s0 + $0x5b4] sm:$0xf]
  %v381 = vld [vmem:[%s0 + $0x5b8] sm:$0xf]
  %v382 = vld [vmem:[%s0 + $0x5bc] sm:$0xf]
  %v383 = vld [vmem:[%s0 + $0x5c0] sm:$0xf]
  %v384 = vld [vmem:[%s0 + $0x5c4] sm:$0xf]
  %v385 = vld [vmem:[%s0 + $0x5c8] sm:$0xf]
  %v386 = vld [vmem:[%s0 + $0x5cc] sm:$0xf]
  %v387 = vld [vmem:[%s0 + $0x5d0] sm:$0xf]
  %v388 = vld [vmem:[%s0 + $0x5d4] sm:$0xf]
  %v389 = vld [vmem:[%s0 + $0x5d8] sm:$0xf]
  %v390 = vld [vmem:[%s0 + $0x5dc] sm:$0xf]
  %v391 = vld [vmem:[%s0 + $0x5e0] sm:$0xf]
  %v392 = vld [vmem:[%s0 + $0x5e4] sm:$0xf]
  %v393 = vld [vmem:[%s0 + $0x5e8] sm:$0xf]
  %v394 = vld [vmem:[%s0 + $0x5ec] sm:$0xf]
  %v395 = vld [vmem:[%s0 + $0x5f0] sm:$0xf]
  %v396 = vld [vmem:[%s0 + $0x5f4] sm:$0xf]
  %v397 = vld [vmem:[%s0 + $0x5f8] sm:$0xf]
  %v398 = vld [vmem:[%s0 + $0x5fc] sm:$0xf]
  %v399 = vld [vmem:[%s0 + $0x600] sm:$0xf]
  %v400 = vld [vmem:[%s0 + $0x604] sm:$0xf]
  %v401 = vld [vmem:[%s0 + $0x608] sm:$0xf]
  %v402 = vld [vmem:[%s0 + $0x60c] sm:$0xf]
  %v403 = vld [vmem:[%s0 + $0x610] sm:$0xf]
  %v404 = vld [vmem:[%s0 + $0x614] sm:$0xf]
  %v405 = vld [vmem:[%s0 + $0x618] sm:$0xf]
  %v406 = vld [vmem:[%s0 + $0x61c] sm:$0xf]
  %v407 = vld [vmem:[%s0 + $0x620] sm:$0xf]
  %v408 = vld [vmem:[%s0 + $0x624] sm:$0xf]
  %v409 = vld [vmem:[%s0 + $0x628] sm:$0xf]
  %v410 = vld [vmem:[%s0 + $0x62c] sm:$0xf]
  %v411 = vld [vmem:[%s0 + $0x630] sm:$0xf]
  %v412 = vld [vmem:[%s0 + $0x634] sm:$0xf]
  %v413 = vld [vmem:[%s0 + $0x638] sm:$0xf]
  %v414 = vld [vmem:[%s0 + $0x63c] sm:$0xf]
  %v415 = vld [vmem:[%s0 + $0x640] sm:$0xf]
  %v416 = vld [vmem:[%s0 + $0x644] sm:$0xf]
  %v417 = vld [vmem:[%s0 + $0x648] sm:$0xf]
  %v418 = vld [vmem:[%s0 + $0x64c] sm:$0xf]
  %v419 = vld [vmem:[%s0 + $0x650] sm:$0xf]
  %v420 = vld [vmem:[%s0 + $0x654] sm:$0xf]
  %v421 = vld [vmem:[%s0 + $0x658] sm:$0xf]
  %v422 = vld [vmem:[%s0 + $0x65c] sm:$0xf]
  %v423 = vld [vmem:[%s0 + $0x660] sm:$0xf]
  %v424 = vld [vmem:[%s0 + $0x664] sm:$0xf]
  %v425 = vld [vmem:[%s0 + $0x668] sm:$0xf]
  %v426 = vld [vmem:[%s0 + $0x66c] sm:$0xf]
  %v427 = vld [vmem:[%s0 + $0x670] sm:$0xf]
  %v428 = vld [vmem:[%s0 + $0x674] sm:$0xf]
  %v429 = vld [vmem:[%s0 + $0x678] sm:$0xf]
  %v430 = vld [vmem:[%s0 + $0x67c] sm:$0xf]
  %v431 = vld [vmem:[%s0 + $0x680] sm:$0xf]
  %v432 = vld [vmem:[%s0 + $0x684] sm:$0xf]
  %v433 = vld [vmem:[%s0 + $0x688] sm:$0xf]
  %v434 = vld [vmem:[%s0 + $0x68c] sm:$0xf]
  %v435 = vld [vmem:[%s0 + $0x690] sm:$0xf]
  %v436 = vld [vmem:[%s0 + $0x694] sm:$0xf]
  %v437 = vld [vmem:[%s0 + $0x698] sm:$0xf]
  %v438 = vld [vmem:[%s0 + $0x69c] sm:$0xf]
  %v439 = vld [vmem:[%s0 + $0x6a0] sm:$0xf]
  %v440 = vld [vmem:[%s0 + $0x6a4] sm:$0xf]
  %v441 = vld [vmem:[%s0 + $0x6a8] sm:$0xf]
  %v442 = vld [vmem:[%s0 + $0x6ac] sm:$0xf]
  %v443 = vld [vmem:[%s0 + $0x6b0] sm:$0xf]
  %v444 = vld [vmem:[%s0 + $0x6b4] sm:$0xf]
  %v445 = vld [vmem:[%s0 + $0x6b8] sm:$0xf]
  %v446 = vld [vmem:[%s0 + $0x6bc] sm:$0xf]
  %v447 = vld [vmem:[%s0 + $0x6c0] sm:$0xf]
  %v448 = vld [vmem:[%s0 + $0x6c4] sm:$0xf]
  %v449 = vld [vmem:[%s0 + $0x6c8] sm:$0xf]
  %v450 = vld [vmem:[%s0 + $0x6cc] sm:$0xf]
  %v451 = vld [vmem:[%s0 + $0x6d0] sm:$0xf]
  %v452 = vld [vmem:[%s0 + $0x6d4] sm:$0xf]
  %v453 = vld [vmem:[%s0 + $0x6d8] sm:$0xf]
  %v454 = vld [vmem:[%s0 + $0x6dc] sm:$0xf]
  %v455 = vld [vmem:[%s0 + $0x6e0] sm:$0xf]
  %v456 = vld [vmem:[%s0 + $0x6e4] sm:$0xf]
  %v457 = vld [vmem:[%s0 + $0x6e8] sm:$0xf]
  %v458 = vld [vmem:[%s0 + $0x6ec] sm:$0xf]
  %v459 = vld [vmem:[%s0 + $0x6f0] sm:$0xf]
  %v460 = vld [vmem:[%s0 + $0x6f4] sm:$0xf]
  %v461 = vld [vmem:[%s0 + $0x6f8] sm:$0xf]
  %v462 = vld [vmem:[%s0 + $0x6fc] sm:$0xf]
  %v463 = vld [vmem:[%s0 + $0x700] sm:$0xf]
  %v464 = vld [vmem:[%s0 + $0x704] sm:$0xf]
  %v465 = vld [vmem:[%s0 + $0x708] sm:$0xf]
  %v466 = vld [vmem:[%s0 + $0x70c] sm:$0xf]
  %v467 = vld [vmem:[%s0 + $0x710] sm:$0xf]
  %v468 = vld [vmem:[%s0 + $0x714] sm:$0xf]
  %v469 = vld [vmem:[%s0 + $0x718] sm:$0xf]
  %v470 = vld [vmem:[%s0 + $0x71c] sm:$0xf]
  %v471 = vld [vmem:[%s0 + $0x720] sm:$0xf]
  %v472 = vld [vmem:[%s0 + $0x724] sm:$0xf]
  %v473 = vld [vmem:[%s0 + $0x728] sm:$0xf]
  %v474 = vld [vmem:[%s0 + $0x72c] sm:$0xf]
  %v475 = vld [vmem:[%s0 + $0x730] sm:$0xf]
  %v476 = vld [vmem:[%s0 + $0x734] sm:$0xf]
  %v477 = vld [vmem:[%s0 + $0x738] sm:$0xf]
  %v478 = vld [vmem:[%s0 + $0x73c] sm:$0xf]
  %v479 = vld [vmem:[%s0 + $0x740] sm:$0xf]
  %v480 = vld [vmem:[%s0 + $0x744] sm:$0xf]
  %v481 = vld [vmem:[%s0 + $0x748] sm:$0xf]
  %v482 = vld [vmem:[%s0 + $0x74c] sm:$0xf]
  %v483 = vld [vmem:[%s0 + $0x750] sm:$0xf]
  %v484 = vld [vmem:[%s0 + $0x754] sm:$0xf]
  %v485 = vld [vmem:[%s0 + $0x758] sm:$0xf]
  %v486 = vld [vmem:[%s0 + $0x75c] sm:$0xf]
  %v487 = vld [vmem:[%s0 + $0x760] sm:$0xf]
  %v488 = vld [vmem:[%s0 + $0x764] sm:$0xf]
  %v489 = vld [vmem:[%s0 + $0x768] sm:$0xf]
  %v490 = vld [vmem:[%s0 + $0x76c] sm:$0xf]
  %v491 = vld [vmem:[%s0 + $0x770] sm:$0xf]
  %v492 = vld [vmem:[%s0 + $0x774] sm:$0xf]
  %v493 = vld [vmem:[%s0 + $0x778] sm:$0xf]
  %v494 = vld [vmem:[%s0 + $0x77c] sm:$0xf]
  %v495 = vld [vmem:[%s0 + $0x780] sm:$0xf]
  %v496 = vld [vmem:[%s0 + $0x784] sm:$0xf]
  %v497 = vld [vmem:[%s0 + $0x788] sm:$0xf]
  %v498 = vld [vmem:[%s0 + $0x78c] sm:$0xf]
  %v499 = vld [vmem:[%s0 + $0x790] sm:$0xf]
  %v500 = vld [vmem:[%s0 + $0x794] sm:$0xf]
  %v501 = vld [vmem:[%s0 + $0x798] sm:$0xf]
  %v502 = vld [vmem:[%s0 + $0x79c] sm:$0xf]
  %v503 = vld [vmem:[%s0 + $0x7a0] sm:$0xf]
  %v504 = vld [vmem:[%s0 + $0x7a4] sm:$0xf]
  %v505 = vld [vmem:[%s0 + $0x7a8] sm:$0xf]
  %v506 = vld [vmem:[%s0 + $0x7ac] sm:$0xf]
  %v507 = vld [vmem:[%s0 + $0x7b0] sm:$0xf]
  %v508 = vld [vmem:[%s0 + $0x7b4] sm:$0xf]
  %v509 = vld [vmem:[%s0 + $0x7b8] sm:$0xf]
  %v510 = vld [vmem:[%s0 + $0x7bc] sm:$0xf]
  %v511 = vld [vmem:[%s0 + $0x7c0] sm:$0xf]
  %v512 = vld [vmem:[%s0 + $0x7c4] sm:$0xf]
  %v513 = vld [vmem:[%s0 + $0x7c8] sm:$0xf]
  %v514 = vld [vmem:[%s0 + $0x7cc] sm:$0xf]
  %v515 = vld [vmem:[%s0 + $0x7d0] sm:$0xf]
  %v516 = vld [vmem:[%s0 + $0x7d4] sm:$0xf]
  %v517 = vld [vmem:[%s0 + $0x7d8] sm:$0xf]
  %v518 = vld [vmem:[%s0 + $0x7dc] sm:$0xf]
  %v519 = vld [vmem:[%s0 + $0x7e0] sm:$0xf]
  %v520 = vld [vmem:[%s0 + $0x7e4] sm:$0xf]
  %v521 = vld [vmem:[%s0 + $0x7e8] sm:$0xf]
  %v522 = vld [vmem:[%s0 + $0x7ec] sm:$0xf]
  %v523 = vld [vmem:[%s0 + $0x7f0] sm:$0xf]
  %v524 = vld [vmem:[%s0 + $0x7f4] sm:$0xf]
  %v525 = vld [vmem:[%s0 + $0x7f8] sm:$0xf]
  %v526 = vld [vmem:[%s0 + $0x7fc] sm:$0xf]
  %v527 = vld [vmem:[%s0 + $0x800] sm:$0xf]
  %v528 = vld [vmem:[%s0 + $0x804] sm:$0xf]
  %v529 = vld [vmem:[%s0 + $0x808] sm:$0xf]
  %v530 = vld [vmem:[%s0 + $0x80c] sm:$0xf]
  %v531 = vld [vmem:[%s0 + $0x810] sm:$0xf]
  %v532 = vld [vmem:[%s0 + $0x814] sm:$0xf]
  %v533 = vld [vmem:[%s0 + $0x818] sm:$0xf]
  %v534 = vld [vmem:[%s0 + $0x81c] sm:$0xf]
  %v535 = vld [vmem:[%s0 + $0x820] sm:$0xf]
  %v536 = vld [vmem:[%s0 + $0x824] sm:$0xf]
  %v537 = vld [vmem:[%s0 + $0x828] sm:$0xf]
  %v538 = vld [vmem:[%s0 + $0x82c] sm:$0xf]
  %v539 = vld [vmem:[%s0 + $0x830] sm:$0xf]
  %v540 = vld [vmem:[%s0 + $0x834] sm:$0xf]
  %v541 = vld [vmem:[%s0 + $0x838] sm:$0xf]
  %v542 = vld [vmem:[%s0 + $0x83c] sm:$0xf]
  %v543 = vld [vmem:[%s0 + $0x840] sm:$0xf]
  %v544 = vld [vmem:[%s0 + $0x844] sm:$0xf]
  %v545 = vld [vmem:[%s0 + $0x848] sm:$0xf]
  %v546 = vld [vmem:[%s0 + $0x84c] sm:$0xf]
  %v547 = vld [vmem:[%s0 + $0x850] sm:$0xf]
  %v548 = vld [vmem:[%s0 + $0x854] sm:$0xf]
  %v549 = vld [vmem:[%s0 + $0x858] sm:$0xf]
  %v550 = vld [vmem:[%s0 + $0x85c] sm:$0xf]
  %v551 = vld [vmem:[%s0 + $0x860] sm:$0xf]
  %v552 = vld [vmem:[%s0 + $0x864] sm:$0xf]
  %v553 = vld [vmem:[%s0 + $0x868] sm:$0xf]
  %v554 = vld [vmem:[%s0 + $0x86c] sm:$0xf]
  %v555 = vld [vmem:[%s0 + $0x870] sm:$0xf]
  %v556 = vld [vmem:[%s0 + $0x874] sm:$0xf]
  %v557 = vld [vmem:[%s0 + $0x878] sm:$0xf]
  %v558 = vld [vmem:[%s0 + $0x87c] sm:$0xf]
  %v559 = vld [vmem:[%s0 + $0x880] sm:$0xf]
  %v560 = vld [vmem:[%s0 + $0x884] sm:$0xf]
  %v561 = vld [vmem:[%s0 + $0x888] sm:$0xf]
  %v562 = vld [vmem:[%s0 + $0x88c] sm:$0xf]
  %v563 = vld [vmem:[%s0 + $0x890] sm:$0xf]
  %v564 = vld [vmem:[%s0 + $0x894] sm:$0xf]
  %v565 = vld [vmem:[%s0 + $0x898] sm:$0xf]
  %v566 = vld [vmem:[%s0 + $0x89c] sm:$0xf]
  %v567 = vld [vmem:[%s0 + $0x8a0] sm:$0xf]
  %v568 = vld [vmem:[%s0 + $0x8a4] sm:$0xf]
  %v569 = vld [vmem:[%s0 + $0x8a8] sm:$0xf]
  %v570 = vld [vmem:[%s0 + $0x8ac] sm:$0xf]
  %v571 = vld [vmem:[%s0 + $0x8b0] sm:$0xf]
  %v572 = vld [vmem:[%s0 + $0x8b4] sm:$0xf]
  %v573 = vld [vmem:[%s0 + $0x8b8] sm:$0xf]
  %v574 = vld [vmem:[%s0 + $0x8bc] sm:$0xf]
  %v575 = vld [vmem:[%s0 + $0x8c0] sm:$0xf]
  %v576 = vld [vmem:[%s0 + $0x8c4] sm:$0xf]
  %v577 = vld [vmem:[%s0 + $0x8c8] sm:$0xf]
  %v578 = vld [vmem:[%s0 + $0x8cc] sm:$0xf]
  %v579 = vld [vmem:[%s0 + $0x8d0] sm:$0xf]
  %v580 = vld [vmem:[%s0 + $0x8d4] sm:$0xf]
  %v581 = vld [vmem:[%s0 + $0x8d8] sm:$0xf]
  %v582 = vld [vmem:[%s0 + $0x8dc] sm:$0xf]
  %v583 = vld [vmem:[%s0 + $0x8e0] sm:$0xf]
  %v584 = vld [vmem:[%s0 + $0x8e4] sm:$0xf]
  %v585 = vld [vmem:[%s0 + $0x8e8] sm:$0xf]
  %v586 = vld [vmem:[%s0 + $0x8ec] sm:$0xf]
  %v587 = vld [vmem:[%s0 + $0x8f0] sm:$0xf]
  %v588 = vld [vmem:[%s0 + $0x8f4] sm:$0xf]
  %v589 = vld [vmem:[%s0 + $0x8f8] sm:$0xf]
  %v590 = vld [vmem:[%s0 + $0x8fc] sm:$0xf]
  %v591 = vld [vmem:[%s1] sm:$0xf]
  %v592 = vld [vmem:[%s1 + $0x4] sm:$0xf]
  %v593 = vld [vmem:[%s1 + $0x8] sm:$0xf]
  %v594 = vld [vmem:[%s1 + $0xc] sm:$0xf]
  %v1171 = vunpack.c.l.b16 %v15
  %v1172 = vunpack.c.l.b16 %v16
  %v1173 = vunpack.c.l.b16 %v17
  %v1174 = vunpack.c.l.b16 %v18
  %v1175 = vunpack.c.l.b16 %v19
  %v1176 = vunpack.c.l.b16 %v20
  %v1177 = vunpack.c.l.b16 %v21
  %v1178 = vunpack.c.l.b16 %v22
  %v1179 = vunpack.c.l.b16 %v23
  %v1180 = vunpack.c.l.b16 %v24
  %v1181 = vunpack.c.l.b16 %v25
  %v1182 = vunpack.c.l.b16 %v26
  %v1183 = vunpack.c.l.b16 %v27
  %v1184 = vunpack.c.l.b16 %v28
  %v1185 = vunpack.c.l.b16 %v29
  %v1186 = vunpack.c.l.b16 %v30
  %v1187 = vunpack.c.l.b16 %v31
  %v1188 = vunpack.c.l.b16 %v32
  %v1189 = vunpack.c.l.b16 %v33
  %v1190 = vunpack.c.l.b16 %v34
  %v1191 = vunpack.c.l.b16 %v35
  %v1192 = vunpack.c.l.b16 %v36
  %v1193 = vunpack.c.l.b16 %v37
  %v1194 = vunpack.c.l.b16 %v38
  %v1195 = vunpack.c.l.b16 %v39
  %v1196 = vunpack.c.l.b16 %v40
  %v1197 = vunpack.c.l.b16 %v41
  %v1198 = vunpack.c.l.b16 %v42
  %v1199 = vunpack.c.l.b16 %v43
  %v1200 = vunpack.c.l.b16 %v44
  %v1201 = vunpack.c.l.b16 %v45
  %v1202 = vunpack.c.l.b16 %v46
  %v1203 = vunpack.c.l.b16 %v47
  %v1204 = vunpack.c.l.b16 %v48
  %v1205 = vunpack.c.l.b16 %v49
  %v1206 = vunpack.c.l.b16 %v50
  %v1207 = vunpack.c.l.b16 %v51
  %v1208 = vunpack.c.l.b16 %v52
  %v1209 = vunpack.c.l.b16 %v53
  %v1210 = vunpack.c.l.b16 %v54
  %v1211 = vunpack.c.l.b16 %v55
  %v1212 = vunpack.c.l.b16 %v56
  %v1213 = vunpack.c.l.b16 %v57
  %v1214 = vunpack.c.l.b16 %v58
  %v1215 = vunpack.c.l.b16 %v59
  %v1216 = vunpack.c.l.b16 %v60
  %v1217 = vunpack.c.l.b16 %v61
  %v1218 = vunpack.c.l.b16 %v62
  %v1219 = vunpack.c.l.b16 %v63
  %v1220 = vunpack.c.l.b16 %v64
  %v1221 = vunpack.c.l.b16 %v65
  %v1222 = vunpack.c.l.b16 %v66
  %v1223 = vunpack.c.l.b16 %v67
  %v1224 = vunpack.c.l.b16 %v68
  %v1225 = vunpack.c.l.b16 %v69
  %v1226 = vunpack.c.l.b16 %v70
  %v1227 = vunpack.c.l.b16 %v71
  %v1228 = vunpack.c.l.b16 %v72
  %v1229 = vunpack.c.l.b16 %v73
  %v1230 = vunpack.c.l.b16 %v74
  %v1231 = vunpack.c.l.b16 %v75
  %v1232 = vunpack.c.l.b16 %v76
  %v1233 = vunpack.c.l.b16 %v77
  %v1234 = vunpack.c.l.b16 %v78
  %v1235 = vunpack.c.l.b16 %v79
  %v1236 = vunpack.c.l.b16 %v80
  %v1237 = vunpack.c.l.b16 %v81
  %v1238 = vunpack.c.l.b16 %v82
  %v1239 = vunpack.c.l.b16 %v83
  %v1240 = vunpack.c.l.b16 %v84
  %v1241 = vunpack.c.l.b16 %v85
  %v1242 = vunpack.c.l.b16 %v86
  %v1243 = vunpack.c.l.b16 %v87
  %v1244 = vunpack.c.l.b16 %v88
  %v1245 = vunpack.c.l.b16 %v89
  %v1246 = vunpack.c.l.b16 %v90
  %v1247 = vunpack.c.l.b16 %v91
  %v1248 = vunpack.c.l.b16 %v92
  %v1249 = vunpack.c.l.b16 %v93
  %v1250 = vunpack.c.l.b16 %v94
  %v1251 = vunpack.c.l.b16 %v95
  %v1252 = vunpack.c.l.b16 %v96
  %v1253 = vunpack.c.l.b16 %v97
  %v1254 = vunpack.c.l.b16 %v98
  %v1255 = vunpack.c.l.b16 %v99
  %v1256 = vunpack.c.l.b16 %v100
  %v1257 = vunpack.c.l.b16 %v101
  %v1258 = vunpack.c.l.b16 %v102
  %v1259 = vunpack.c.l.b16 %v103
  %v1260 = vunpack.c.l.b16 %v104
  %v1261 = vunpack.c.l.b16 %v105
  %v1262 = vunpack.c.l.b16 %v106
  %v1263 = vunpack.c.l.b16 %v107
  %v1264 = vunpack.c.l.b16 %v108
  %v1265 = vunpack.c.l.b16 %v109
  %v1266 = vunpack.c.l.b16 %v110
  %v1267 = vunpack.c.l.b16 %v111
  %v1268 = vunpack.c.l.b16 %v112
  %v1269 = vunpack.c.l.b16 %v113
  %v1270 = vunpack.c.l.b16 %v114
  %v1271 = vunpack.c.l.b16 %v115
  %v1272 = vunpack.c.l.b16 %v116
  %v1273 = vunpack.c.l.b16 %v117
  %v1274 = vunpack.c.l.b16 %v118
  %v1275 = vunpack.c.l.b16 %v119
  %v1276 = vunpack.c.l.b16 %v120
  %v1277 = vunpack.c.l.b16 %v121
  %v1278 = vunpack.c.l.b16 %v122
  %v1279 = vunpack.c.l.b16 %v123
  %v1280 = vunpack.c.l.b16 %v124
  %v1281 = vunpack.c.l.b16 %v125
  %v1282 = vunpack.c.l.b16 %v126
  %v1283 = vunpack.c.l.b16 %v127
  %v1284 = vunpack.c.l.b16 %v128
  %v1285 = vunpack.c.l.b16 %v129
  %v1286 = vunpack.c.l.b16 %v130
  %v1287 = vunpack.c.l.b16 %v131
  %v1288 = vunpack.c.l.b16 %v132
  %v1289 = vunpack.c.l.b16 %v133
  %v1290 = vunpack.c.l.b16 %v134
  %v1291 = vunpack.c.l.b16 %v135
  %v1292 = vunpack.c.l.b16 %v136
  %v1293 = vunpack.c.l.b16 %v137
  %v1294 = vunpack.c.l.b16 %v138
  %v1295 = vunpack.c.l.b16 %v139
  %v1296 = vunpack.c.l.b16 %v140
  %v1297 = vunpack.c.l.b16 %v141
  %v1298 = vunpack.c.l.b16 %v142
  %v1299 = vunpack.c.l.b16 %v143
  %v1300 = vunpack.c.l.b16 %v144
  %v1301 = vunpack.c.l.b16 %v145
  %v1302 = vunpack.c.l.b16 %v146
  %v1303 = vunpack.c.l.b16 %v147
  %v1304 = vunpack.c.l.b16 %v148
  %v1305 = vunpack.c.l.b16 %v149
  %v1306 = vunpack.c.l.b16 %v150
  %v1307 = vunpack.c.l.b16 %v151
  %v1308 = vunpack.c.l.b16 %v152
  %v1309 = vunpack.c.l.b16 %v153
  %v1310 = vunpack.c.l.b16 %v154
  %v1311 = vunpack.c.l.b16 %v155
  %v1312 = vunpack.c.l.b16 %v156
  %v1313 = vunpack.c.l.b16 %v157
  %v1314 = vunpack.c.l.b16 %v158
  %v1315 = vunpack.c.l.b16 %v159
  %v1316 = vunpack.c.l.b16 %v160
  %v1317 = vunpack.c.l.b16 %v161
  %v1318 = vunpack.c.l.b16 %v162
  %v1319 = vunpack.c.l.b16 %v163
  %v1320 = vunpack.c.l.b16 %v164
  %v1321 = vunpack.c.l.b16 %v165
  %v1322 = vunpack.c.l.b16 %v166
  %v1323 = vunpack.c.l.b16 %v167
  %v1324 = vunpack.c.l.b16 %v168
  %v1325 = vunpack.c.l.b16 %v169
  %v1326 = vunpack.c.l.b16 %v170
  %v1327 = vunpack.c.l.b16 %v171
  %v1328 = vunpack.c.l.b16 %v172
  %v1329 = vunpack.c.l.b16 %v173
  %v1330 = vunpack.c.l.b16 %v174
  %v1331 = vunpack.c.l.b16 %v175
  %v1332 = vunpack.c.l.b16 %v176
  %v1333 = vunpack.c.l.b16 %v177
  %v1334 = vunpack.c.l.b16 %v178
  %v1335 = vunpack.c.l.b16 %v179
  %v1336 = vunpack.c.l.b16 %v180
  %v1337 = vunpack.c.l.b16 %v181
  %v1338 = vunpack.c.l.b16 %v182
  %v1339 = vunpack.c.l.b16 %v183
  %v1340 = vunpack.c.l.b16 %v184
  %v1341 = vunpack.c.l.b16 %v185
  %v1342 = vunpack.c.l.b16 %v186
  %v1343 = vunpack.c.l.b16 %v187
  %v1344 = vunpack.c.l.b16 %v188
  %v1345 = vunpack.c.l.b16 %v189
  %v1346 = vunpack.c.l.b16 %v190
  %v1347 = vunpack.c.l.b16 %v191
  %v1348 = vunpack.c.l.b16 %v192
  %v1349 = vunpack.c.l.b16 %v193
  %v1350 = vunpack.c.l.b16 %v194
  %v1351 = vunpack.c.l.b16 %v195
  %v1352 = vunpack.c.l.b16 %v196
  %v1353 = vunpack.c.l.b16 %v197
  %v1354 = vunpack.c.l.b16 %v198
  %v1355 = vunpack.c.l.b16 %v199
  %v1356 = vunpack.c.l.b16 %v200
  %v1357 = vunpack.c.l.b16 %v201
  %v1358 = vunpack.c.l.b16 %v202
  %v1359 = vunpack.c.l.b16 %v203
  %v1360 = vunpack.c.l.b16 %v204
  %v1361 = vunpack.c.l.b16 %v205
  %v1362 = vunpack.c.l.b16 %v206
  %v1363 = vunpack.c.l.b16 %v207
  %v1364 = vunpack.c.l.b16 %v208
  %v1365 = vunpack.c.l.b16 %v209
  %v1366 = vunpack.c.l.b16 %v210
  %v1367 = vunpack.c.l.b16 %v211
  %v1368 = vunpack.c.l.b16 %v212
  %v1369 = vunpack.c.l.b16 %v213
  %v1370 = vunpack.c.l.b16 %v214
  %v1371 = vunpack.c.l.b16 %v215
  %v1372 = vunpack.c.l.b16 %v216
  %v1373 = vunpack.c.l.b16 %v217
  %v1374 = vunpack.c.l.b16 %v218
  %v1375 = vunpack.c.l.b16 %v219
  %v1376 = vunpack.c.l.b16 %v220
  %v1377 = vunpack.c.l.b16 %v221
  %v1378 = vunpack.c.l.b16 %v222
  %v1379 = vunpack.c.l.b16 %v223
  %v1380 = vunpack.c.l.b16 %v224
  %v1381 = vunpack.c.l.b16 %v225
  %v1382 = vunpack.c.l.b16 %v226
  %v1383 = vunpack.c.l.b16 %v227
  %v1384 = vunpack.c.l.b16 %v228
  %v1385 = vunpack.c.l.b16 %v229
  %v1386 = vunpack.c.l.b16 %v230
  %v1387 = vunpack.c.l.b16 %v231
  %v1388 = vunpack.c.l.b16 %v232
  %v1389 = vunpack.c.l.b16 %v233
  %v1390 = vunpack.c.l.b16 %v234
  %v1391 = vunpack.c.l.b16 %v235
  %v1392 = vunpack.c.l.b16 %v236
  %v1393 = vunpack.c.l.b16 %v237
  %v1394 = vunpack.c.l.b16 %v238
  %v1395 = vunpack.c.l.b16 %v239
  %v1396 = vunpack.c.l.b16 %v240
  %v1397 = vunpack.c.l.b16 %v241
  %v1398 = vunpack.c.l.b16 %v242
  %v1399 = vunpack.c.l.b16 %v243
  %v1400 = vunpack.c.l.b16 %v244
  %v1401 = vunpack.c.l.b16 %v245
  %v1402 = vunpack.c.l.b16 %v246
  %v1403 = vunpack.c.l.b16 %v247
  %v1404 = vunpack.c.l.b16 %v248
  %v1405 = vunpack.c.l.b16 %v249
  %v1406 = vunpack.c.l.b16 %v250
  %v1407 = vunpack.c.l.b16 %v251
  %v1408 = vunpack.c.l.b16 %v252
  %v1409 = vunpack.c.l.b16 %v253
  %v1410 = vunpack.c.l.b16 %v254
  %v1411 = vunpack.c.l.b16 %v255
  %v1412 = vunpack.c.l.b16 %v256
  %v1413 = vunpack.c.l.b16 %v257
  %v1414 = vunpack.c.l.b16 %v258
  %v1415 = vunpack.c.l.b16 %v259
  %v1416 = vunpack.c.l.b16 %v260
  %v1417 = vunpack.c.l.b16 %v261
  %v1418 = vunpack.c.l.b16 %v262
  %v1419 = vunpack.c.l.b16 %v263
  %v1420 = vunpack.c.l.b16 %v264
  %v1421 = vunpack.c.l.b16 %v265
  %v1422 = vunpack.c.l.b16 %v266
  %v1423 = vunpack.c.l.b16 %v267
  %v1424 = vunpack.c.l.b16 %v268
  %v1425 = vunpack.c.l.b16 %v269
  %v1426 = vunpack.c.l.b16 %v270
  %v1427 = vunpack.c.l.b16 %v271
  %v1428 = vunpack.c.l.b16 %v272
  %v1429 = vunpack.c.l.b16 %v273
  %v1430 = vunpack.c.l.b16 %v274
  %v1431 = vunpack.c.l.b16 %v275
  %v1432 = vunpack.c.l.b16 %v276
  %v1433 = vunpack.c.l.b16 %v277
  %v1434 = vunpack.c.l.b16 %v278
  %v1435 = vunpack.c.l.b16 %v279
  %v1436 = vunpack.c.l.b16 %v280
  %v1437 = vunpack.c.l.b16 %v281
  %v1438 = vunpack.c.l.b16 %v282
  %v1439 = vunpack.c.l.b16 %v283
  %v1440 = vunpack.c.l.b16 %v284
  %v1441 = vunpack.c.l.b16 %v285
  %v1442 = vunpack.c.l.b16 %v286
  %v1443 = vunpack.c.l.b16 %v287
  %v1444 = vunpack.c.l.b16 %v288
  %v1445 = vunpack.c.l.b16 %v289
  %v1446 = vunpack.c.l.b16 %v290
  %v1447 = vunpack.c.l.b16 %v291
  %v1448 = vunpack.c.l.b16 %v292
  %v1449 = vunpack.c.l.b16 %v293
  %v1450 = vunpack.c.l.b16 %v294
  %v1451 = vunpack.c.l.b16 %v295
  %v1452 = vunpack.c.l.b16 %v296
  %v1453 = vunpack.c.l.b16 %v297
  %v1454 = vunpack.c.l.b16 %v298
  %v1455 = vunpack.c.l.b16 %v299
  %v1456 = vunpack.c.l.b16 %v300
  %v1457 = vunpack.c.l.b16 %v301
  %v1458 = vunpack.c.l.b16 %v302
  %v1459 = vunpack.c.l.b16 %v303
  %v1460 = vunpack.c.l.b16 %v304
  %v1461 = vunpack.c.l.b16 %v305
  %v1462 = vunpack.c.l.b16 %v306
  %v1463 = vunpack.c.l.b16 %v307
  %v1464 = vunpack.c.l.b16 %v308
  %v1465 = vunpack.c.l.b16 %v309
  %v1466 = vunpack.c.l.b16 %v310
  %v1467 = vunpack.c.l.b16 %v311
  %v1468 = vunpack.c.l.b16 %v312
  %v1469 = vunpack.c.l.b16 %v313
  %v1470 = vunpack.c.l.b16 %v314
  %v1471 = vunpack.c.l.b16 %v315
  %v1472 = vunpack.c.l.b16 %v316
  %v1473 = vunpack.c.l.b16 %v317
  %v1474 = vunpack.c.l.b16 %v318
  %v1475 = vunpack.c.l.b16 %v319
  %v1476 = vunpack.c.l.b16 %v320
  %v1477 = vunpack.c.l.b16 %v321
  %v1478 = vunpack.c.l.b16 %v322
  %v1479 = vunpack.c.l.b16 %v323
  %v1480 = vunpack.c.l.b16 %v324
  %v1481 = vunpack.c.l.b16 %v325
  %v1482 = vunpack.c.l.b16 %v326
  %v1483 = vunpack.c.l.b16 %v327
  %v1484 = vunpack.c.l.b16 %v328
  %v1485 = vunpack.c.l.b16 %v329
  %v1486 = vunpack.c.l.b16 %v330
  %v1487 = vunpack.c.l.b16 %v331
  %v1488 = vunpack.c.l.b16 %v332
  %v1489 = vunpack.c.l.b16 %v333
  %v1490 = vunpack.c.l.b16 %v334
  %v1491 = vunpack.c.l.b16 %v335
  %v1492 = vunpack.c.l.b16 %v336
  %v1493 = vunpack.c.l.b16 %v337
  %v1494 = vunpack.c.l.b16 %v338
  %v1495 = vunpack.c.l.b16 %v339
  %v1496 = vunpack.c.l.b16 %v340
  %v1497 = vunpack.c.l.b16 %v341
  %v1498 = vunpack.c.l.b16 %v342
  %v1499 = vunpack.c.l.b16 %v343
  %v1500 = vunpack.c.l.b16 %v344
  %v1501 = vunpack.c.l.b16 %v345
  %v1502 = vunpack.c.l.b16 %v346
  %v1503 = vunpack.c.l.b16 %v347
  %v1504 = vunpack.c.l.b16 %v348
  %v1505 = vunpack.c.l.b16 %v349
  %v1506 = vunpack.c.l.b16 %v350
  %v1507 = vunpack.c.l.b16 %v351
  %v1508 = vunpack.c.l.b16 %v352
  %v1509 = vunpack.c.l.b16 %v353
  %v1510 = vunpack.c.l.b16 %v354
  %v1511 = vunpack.c.l.b16 %v355
  %v1512 = vunpack.c.l.b16 %v356
  %v1513 = vunpack.c.l.b16 %v357
  %v1514 = vunpack.c.l.b16 %v358
  %v1515 = vunpack.c.l.b16 %v359
  %v1516 = vunpack.c.l.b16 %v360
  %v1517 = vunpack.c.l.b16 %v361
  %v1518 = vunpack.c.l.b16 %v362
  %v1519 = vunpack.c.l.b16 %v363
  %v1520 = vunpack.c.l.b16 %v364
  %v1521 = vunpack.c.l.b16 %v365
  %v1522 = vunpack.c.l.b16 %v366
  %v1523 = vunpack.c.l.b16 %v367
  %v1524 = vunpack.c.l.b16 %v368
  %v1525 = vunpack.c.l.b16 %v369
  %v1526 = vunpack.c.l.b16 %v370
  %v1527 = vunpack.c.l.b16 %v371
  %v1528 = vunpack.c.l.b16 %v372
  %v1529 = vunpack.c.l.b16 %v373
  %v1530 = vunpack.c.l.b16 %v374
  %v1531 = vunpack.c.l.b16 %v375
  %v1532 = vunpack.c.l.b16 %v376
  %v1533 = vunpack.c.l.b16 %v377
  %v1534 = vunpack.c.l.b16 %v378
  %v1535 = vunpack.c.l.b16 %v379
  %v1536 = vunpack.c.l.b16 %v380
  %v1537 = vunpack.c.l.b16 %v381
  %v1538 = vunpack.c.l.b16 %v382
  %v1539 = vunpack.c.l.b16 %v383
  %v1540 = vunpack.c.l.b16 %v384
  %v1541 = vunpack.c.l.b16 %v385
  %v1542 = vunpack.c.l.b16 %v386
  %v1543 = vunpack.c.l.b16 %v387
  %v1544 = vunpack.c.l.b16 %v388
  %v1545 = vunpack.c.l.b16 %v389
  %v1546 = vunpack.c.l.b16 %v390
  %v1547 = vunpack.c.l.b16 %v391
  %v1548 = vunpack.c.l.b16 %v392
  %v1549 = vunpack.c.l.b16 %v393
  %v1550 = vunpack.c.l.b16 %v394
  %v1551 = vunpack.c.l.b16 %v395
  %v1552 = vunpack.c.l.b16 %v396
  %v1553 = vunpack.c.l.b16 %v397
  %v1554 = vunpack.c.l.b16 %v398
  %v1555 = vunpack.c.l.b16 %v399
  %v1556 = vunpack.c.l.b16 %v400
  %v1557 = vunpack.c.l.b16 %v401
  %v1558 = vunpack.c.l.b16 %v402
  %v1559 = vunpack.c.l.b16 %v403
  %v1560 = vunpack.c.l.b16 %v404
  %v1561 = vunpack.c.l.b16 %v405
  %v1562 = vunpack.c.l.b16 %v406
  %v1563 = vunpack.c.l.b16 %v407
  %v1564 = vunpack.c.l.b16 %v408
  %v1565 = vunpack.c.l.b16 %v409
  %v1566 = vunpack.c.l.b16 %v410
  %v1567 = vunpack.c.l.b16 %v411
  %v1568 = vunpack.c.l.b16 %v412
  %v1569 = vunpack.c.l.b16 %v413
  %v1570 = vunpack.c.l.b16 %v414
  %v1571 = vunpack.c.l.b16 %v415
  %v1572 = vunpack.c.l.b16 %v416
  %v1573 = vunpack.c.l.b16 %v417
  %v1574 = vunpack.c.l.b16 %v418
  %v1575 = vunpack.c.l.b16 %v419
  %v1576 = vunpack.c.l.b16 %v420
  %v1577 = vunpack.c.l.b16 %v421
  %v1578 = vunpack.c.l.b16 %v422
  %v1579 = vunpack.c.l.b16 %v423
  %v1580 = vunpack.c.l.b16 %v424
  %v1581 = vunpack.c.l.b16 %v425
  %v1582 = vunpack.c.l.b16 %v426
  %v1583 = vunpack.c.l.b16 %v427
  %v1584 = vunpack.c.l.b16 %v428
  %v1585 = vunpack.c.l.b16 %v429
  %v1586 = vunpack.c.l.b16 %v430
  %v1587 = vunpack.c.l.b16 %v431
  %v1588 = vunpack.c.l.b16 %v432
  %v1589 = vunpack.c.l.b16 %v433
  %v1590 = vunpack.c.l.b16 %v434
  %v1591 = vunpack.c.l.b16 %v435
  %v1592 = vunpack.c.l.b16 %v436
  %v1593 = vunpack.c.l.b16 %v437
  %v1594 = vunpack.c.l.b16 %v438
  %v1595 = vunpack.c.l.b16 %v439
  %v1596 = vunpack.c.l.b16 %v440
  %v1597 = vunpack.c.l.b16 %v441
  %v1598 = vunpack.c.l.b16 %v442
  %v1599 = vunpack.c.l.b16 %v443
  %v1600 = vunpack.c.l.b16 %v444
  %v1601 = vunpack.c.l.b16 %v445
  %v1602 = vunpack.c.l.b16 %v446
  %v1603 = vunpack.c.l.b16 %v447
  %v1604 = vunpack.c.l.b16 %v448
  %v1605 = vunpack.c.l.b16 %v449
  %v1606 = vunpack.c.l.b16 %v450
  %v1607 = vunpack.c.l.b16 %v451
  %v1608 = vunpack.c.l.b16 %v452
  %v1609 = vunpack.c.l.b16 %v453
  %v1610 = vunpack.c.l.b16 %v454
  %v1611 = vunpack.c.l.b16 %v455
  %v1612 = vunpack.c.l.b16 %v456
  %v1613 = vunpack.c.l.b16 %v457
  %v1614 = vunpack.c.l.b16 %v458
  %v1615 = vunpack.c.l.b16 %v459
  %v1616 = vunpack.c.l.b16 %v460
  %v1617 = vunpack.c.l.b16 %v461
  %v1618 = vunpack.c.l.b16 %v462
  %v1619 = vunpack.c.l.b16 %v463
  %v1620 = vunpack.c.l.b16 %v464
  %v1621 = vunpack.c.l.b16 %v465
  %v1622 = vunpack.c.l.b16 %v466
  %v1623 = vunpack.c.l.b16 %v467
  %v1624 = vunpack.c.l.b16 %v468
  %v1625 = vunpack.c.l.b16 %v469
  %v1626 = vunpack.c.l.b16 %v470
  %v1627 = vunpack.c.l.b16 %v471
  %v1628 = vunpack.c.l.b16 %v472
  %v1629 = vunpack.c.l.b16 %v473
  %v1630 = vunpack.c.l.b16 %v474
  %v1631 = vunpack.c.l.b16 %v475
  %v1632 = vunpack.c.l.b16 %v476
  %v1633 = vunpack.c.l.b16 %v477
  %v1634 = vunpack.c.l.b16 %v478
  %v1635 = vunpack.c.l.b16 %v479
  %v1636 = vunpack.c.l.b16 %v480
  %v1637 = vunpack.c.l.b16 %v481
  %v1638 = vunpack.c.l.b16 %v482
  %v1639 = vunpack.c.l.b16 %v483
  %v1640 = vunpack.c.l.b16 %v484
  %v1641 = vunpack.c.l.b16 %v485
  %v1642 = vunpack.c.l.b16 %v486
  %v1643 = vunpack.c.l.b16 %v487
  %v1644 = vunpack.c.l.b16 %v488
  %v1645 = vunpack.c.l.b16 %v489
  %v1646 = vunpack.c.l.b16 %v490
  %v1647 = vunpack.c.l.b16 %v491
  %v1648 = vunpack.c.l.b16 %v492
  %v1649 = vunpack.c.l.b16 %v493
  %v1650 = vunpack.c.l.b16 %v494
  %v1651 = vunpack.c.l.b16 %v495
  %v1652 = vunpack.c.l.b16 %v496
  %v1653 = vunpack.c.l.b16 %v497
  %v1654 = vunpack.c.l.b16 %v498
  %v1655 = vunpack.c.l.b16 %v499
  %v1656 = vunpack.c.l.b16 %v500
  %v1657 = vunpack.c.l.b16 %v501
  %v1658 = vunpack.c.l.b16 %v502
  %v1659 = vunpack.c.l.b16 %v503
  %v1660 = vunpack.c.l.b16 %v504
  %v1661 = vunpack.c.l.b16 %v505
  %v1662 = vunpack.c.l.b16 %v506
  %v1663 = vunpack.c.l.b16 %v507
  %v1664 = vunpack.c.l.b16 %v508
  %v1665 = vunpack.c.l.b16 %v509
  %v1666 = vunpack.c.l.b16 %v510
  %v1667 = vunpack.c.l.b16 %v511
  %v1668 = vunpack.c.l.b16 %v512
  %v1669 = vunpack.c.l.b16 %v513
  %v1670 = vunpack.c.l.b16 %v514
  %v1671 = vunpack.c.l.b16 %v515
  %v1672 = vunpack.c.l.b16 %v516
  %v1673 = vunpack.c.l.b16 %v517
  %v1674 = vunpack.c.l.b16 %v518
  %v1675 = vunpack.c.l.b16 %v519
  %v1676 = vunpack.c.l.b16 %v520
  %v1677 = vunpack.c.l.b16 %v521
  %v1678 = vunpack.c.l.b16 %v522
  %v1679 = vunpack.c.l.b16 %v523
  %v1680 = vunpack.c.l.b16 %v524
  %v1681 = vunpack.c.l.b16 %v525
  %v1682 = vunpack.c.l.b16 %v526
  %v1683 = vunpack.c.l.b16 %v527
  %v1684 = vunpack.c.l.b16 %v528
  %v1685 = vunpack.c.l.b16 %v529
  %v1686 = vunpack.c.l.b16 %v530
  %v1687 = vunpack.c.l.b16 %v531
  %v1688 = vunpack.c.l.b16 %v532
  %v1689 = vunpack.c.l.b16 %v533
  %v1690 = vunpack.c.l.b16 %v534
  %v1691 = vunpack.c.l.b16 %v535
  %v1692 = vunpack.c.l.b16 %v536
  %v1693 = vunpack.c.l.b16 %v537
  %v1694 = vunpack.c.l.b16 %v538
  %v1695 = vunpack.c.l.b16 %v539
  %v1696 = vunpack.c.l.b16 %v540
  %v1697 = vunpack.c.l.b16 %v541
  %v1698 = vunpack.c.l.b16 %v542
  %v1699 = vunpack.c.l.b16 %v543
  %v1700 = vunpack.c.l.b16 %v544
  %v1701 = vunpack.c.l.b16 %v545
  %v1702 = vunpack.c.l.b16 %v546
  %v1703 = vunpack.c.l.b16 %v547
  %v1704 = vunpack.c.l.b16 %v548
  %v1705 = vunpack.c.l.b16 %v549
  %v1706 = vunpack.c.l.b16 %v550
  %v1707 = vunpack.c.l.b16 %v551
  %v1708 = vunpack.c.l.b16 %v552
  %v1709 = vunpack.c.l.b16 %v553
  %v1710 = vunpack.c.l.b16 %v554
  %v1711 = vunpack.c.l.b16 %v555
  %v1712 = vunpack.c.l.b16 %v556
  %v1713 = vunpack.c.l.b16 %v557
  %v1714 = vunpack.c.l.b16 %v558
  %v1715 = vunpack.c.l.b16 %v559
  %v1716 = vunpack.c.l.b16 %v560
  %v1717 = vunpack.c.l.b16 %v561
  %v1718 = vunpack.c.l.b16 %v562
  %v1719 = vunpack.c.l.b16 %v563
  %v1720 = vunpack.c.l.b16 %v564
  %v1721 = vunpack.c.l.b16 %v565
  %v1722 = vunpack.c.l.b16 %v566
  %v1723 = vunpack.c.l.b16 %v567
  %v1724 = vunpack.c.l.b16 %v568
  %v1725 = vunpack.c.l.b16 %v569
  %v1726 = vunpack.c.l.b16 %v570
  %v1727 = vunpack.c.l.b16 %v571
  %v1728 = vunpack.c.l.b16 %v572
  %v1729 = vunpack.c.l.b16 %v573
  %v1730 = vunpack.c.l.b16 %v574
  %v1731 = vunpack.c.l.b16 %v575
  %v1732 = vunpack.c.l.b16 %v576
  %v1733 = vunpack.c.l.b16 %v577
  %v1734 = vunpack.c.l.b16 %v578
  %v1735 = vunpack.c.l.b16 %v579
  %v1736 = vunpack.c.l.b16 %v580
  %v1737 = vunpack.c.l.b16 %v581
  %v1738 = vunpack.c.l.b16 %v582
  %v1739 = vunpack.c.l.b16 %v583
  %v1740 = vunpack.c.l.b16 %v584
  %v1741 = vunpack.c.l.b16 %v585
  %v1742 = vunpack.c.l.b16 %v586
  %v1743 = vunpack.c.l.b16 %v587
  %v1744 = vunpack.c.l.b16 %v588
  %v1745 = vunpack.c.l.b16 %v589
  %v1746 = vunpack.c.l.b16 %v590
  %v1747 = vpack.c.b16 %v1172, %v1171
  %v1748 = vpack.c.b16 %v1174, %v1173
  %v1749 = vpack.c.b16 %v1176, %v1175
  %v1750 = vpack.c.b16 %v1178, %v1177
  %v1751 = vpack.c.b16 %v1180, %v1179
  %v1752 = vpack.c.b16 %v1182, %v1181
  %v1753 = vpack.c.b16 %v1184, %v1183
  %v1754 = vpack.c.b16 %v1186, %v1185
  %v1755 = vpack.c.b16 %v1188, %v1187
  %v1756 = vpack.c.b16 %v1190, %v1189
  %v1757 = vpack.c.b16 %v1192, %v1191
  %v1758 = vpack.c.b16 %v1194, %v1193
  %v1759 = vpack.c.b16 %v1196, %v1195
  %v1760 = vpack.c.b16 %v1198, %v1197
  %v1761 = vpack.c.b16 %v1200, %v1199
  %v1762 = vpack.c.b16 %v1202, %v1201
  %v1763 = vpack.c.b16 %v1204, %v1203
  %v1764 = vpack.c.b16 %v1206, %v1205
  %v1765 = vpack.c.b16 %v1208, %v1207
  %v1766 = vpack.c.b16 %v1210, %v1209
  %v1767 = vpack.c.b16 %v1212, %v1211
  %v1768 = vpack.c.b16 %v1214, %v1213
  %v1769 = vpack.c.b16 %v1216, %v1215
  %v1770 = vpack.c.b16 %v1218, %v1217
  %v1771 = vpack.c.b16 %v1220, %v1219
  %v1772 = vpack.c.b16 %v1222, %v1221
  %v1773 = vpack.c.b16 %v1224, %v1223
  %v1774 = vpack.c.b16 %v1226, %v1225
  %v1775 = vpack.c.b16 %v1228, %v1227
  %v1776 = vpack.c.b16 %v1230, %v1229
  %v1777 = vpack.c.b16 %v1232, %v1231
  %v1778 = vpack.c.b16 %v1234, %v1233
  %v1779 = vpack.c.b16 %v1236, %v1235
  %v1780 = vpack.c.b16 %v1238, %v1237
  %v1781 = vpack.c.b16 %v1240, %v1239
  %v1782 = vpack.c.b16 %v1242, %v1241
  %v1783 = vpack.c.b16 %v1244, %v1243
  %v1784 = vpack.c.b16 %v1246, %v1245
  %v1785 = vpack.c.b16 %v1248, %v1247
  %v1786 = vpack.c.b16 %v1250, %v1249
  %v1787 = vpack.c.b16 %v1252, %v1251
  %v1788 = vpack.c.b16 %v1254, %v1253
  %v1789 = vpack.c.b16 %v1256, %v1255
  %v1790 = vpack.c.b16 %v1258, %v1257
  %v1791 = vpack.c.b16 %v1260, %v1259
  %v1792 = vpack.c.b16 %v1262, %v1261
  %v1793 = vpack.c.b16 %v1264, %v1263
  %v1794 = vpack.c.b16 %v1266, %v1265
  %v1795 = vpack.c.b16 %v1268, %v1267
  %v1796 = vpack.c.b16 %v1270, %v1269
  %v1797 = vpack.c.b16 %v1272, %v1271
  %v1798 = vpack.c.b16 %v1274, %v1273
  %v1799 = vpack.c.b16 %v1276, %v1275
  %v1800 = vpack.c.b16 %v1278, %v1277
  %v1801 = vpack.c.b16 %v1280, %v1279
  %v1802 = vpack.c.b16 %v1282, %v1281
  %v1803 = vpack.c.b16 %v1284, %v1283
  %v1804 = vpack.c.b16 %v1286, %v1285
  %v1805 = vpack.c.b16 %v1288, %v1287
  %v1806 = vpack.c.b16 %v1290, %v1289
  %v1807 = vpack.c.b16 %v1292, %v1291
  %v1808 = vpack.c.b16 %v1294, %v1293
  %v1809 = vpack.c.b16 %v1296, %v1295
  %v1810 = vpack.c.b16 %v1298, %v1297
  %v1811 = vpack.c.b16 %v1300, %v1299
  %v1812 = vpack.c.b16 %v1302, %v1301
  %v1813 = vpack.c.b16 %v1304, %v1303
  %v1814 = vpack.c.b16 %v1306, %v1305
  %v1815 = vpack.c.b16 %v1308, %v1307
  %v1816 = vpack.c.b16 %v1310, %v1309
  %v1817 = vpack.c.b16 %v1312, %v1311
  %v1818 = vpack.c.b16 %v1314, %v1313
  %v1819 = vpack.c.b16 %v1316, %v1315
  %v1820 = vpack.c.b16 %v1318, %v1317
  %v1821 = vpack.c.b16 %v1320, %v1319
  %v1822 = vpack.c.b16 %v1322, %v1321
  %v1823 = vpack.c.b16 %v1324, %v1323
  %v1824 = vpack.c.b16 %v1326, %v1325
  %v1825 = vpack.c.b16 %v1328, %v1327
  %v1826 = vpack.c.b16 %v1330, %v1329
  %v1827 = vpack.c.b16 %v1332, %v1331
  %v1828 = vpack.c.b16 %v1334, %v1333
  %v1829 = vpack.c.b16 %v1336, %v1335
  %v1830 = vpack.c.b16 %v1338, %v1337
  %v1831 = vpack.c.b16 %v1340, %v1339
  %v1832 = vpack.c.b16 %v1342, %v1341
  %v1833 = vpack.c.b16 %v1344, %v1343
  %v1834 = vpack.c.b16 %v1346, %v1345
  %v1835 = vpack.c.b16 %v1348, %v1347
  %v1836 = vpack.c.b16 %v1350, %v1349
  %v1837 = vpack.c.b16 %v1352, %v1351
  %v1838 = vpack.c.b16 %v1354, %v1353
  %v1839 = vpack.c.b16 %v1356, %v1355
  %v1840 = vpack.c.b16 %v1358, %v1357
  %v1841 = vpack.c.b16 %v1360, %v1359
  %v1842 = vpack.c.b16 %v1362, %v1361
  %v1843 = vpack.c.b16 %v1364, %v1363
  %v1844 = vpack.c.b16 %v1366, %v1365
  %v1845 = vpack.c.b16 %v1368, %v1367
  %v1846 = vpack.c.b16 %v1370, %v1369
  %v1847 = vpack.c.b16 %v1372, %v1371
  %v1848 = vpack.c.b16 %v1374, %v1373
  %v1849 = vpack.c.b16 %v1376, %v1375
  %v1850 = vpack.c.b16 %v1378, %v1377
  %v1851 = vpack.c.b16 %v1380, %v1379
  %v1852 = vpack.c.b16 %v1382, %v1381
  %v1853 = vpack.c.b16 %v1384, %v1383
  %v1854 = vpack.c.b16 %v1386, %v1385
  %v1855 = vpack.c.b16 %v1388, %v1387
  %v1856 = vpack.c.b16 %v1390, %v1389
  %v1857 = vpack.c.b16 %v1392, %v1391
  %v1858 = vpack.c.b16 %v1394, %v1393
  %v1859 = vpack.c.b16 %v1396, %v1395
  %v1860 = vpack.c.b16 %v1398, %v1397
  %v1861 = vpack.c.b16 %v1400, %v1399
  %v1862 = vpack.c.b16 %v1402, %v1401
  %v1863 = vpack.c.b16 %v1404, %v1403
  %v1864 = vpack.c.b16 %v1406, %v1405
  %v1865 = vpack.c.b16 %v1408, %v1407
  %v1866 = vpack.c.b16 %v1410, %v1409
  %v1867 = vpack.c.b16 %v1412, %v1411
  %v1868 = vpack.c.b16 %v1414, %v1413
  %v1869 = vpack.c.b16 %v1416, %v1415
  %v1870 = vpack.c.b16 %v1418, %v1417
  %v1871 = vpack.c.b16 %v1420, %v1419
  %v1872 = vpack.c.b16 %v1422, %v1421
  %v1873 = vpack.c.b16 %v1424, %v1423
  %v1874 = vpack.c.b16 %v1426, %v1425
  %v1875 = vpack.c.b16 %v1428, %v1427
  %v1876 = vpack.c.b16 %v1430, %v1429
  %v1877 = vpack.c.b16 %v1432, %v1431
  %v1878 = vpack.c.b16 %v1434, %v1433
  %v1879 = vpack.c.b16 %v1436, %v1435
  %v1880 = vpack.c.b16 %v1438, %v1437
  %v1881 = vpack.c.b16 %v1440, %v1439
  %v1882 = vpack.c.b16 %v1442, %v1441
  %v1883 = vpack.c.b16 %v1444, %v1443
  %v1884 = vpack.c.b16 %v1446, %v1445
  %v1885 = vpack.c.b16 %v1448, %v1447
  %v1886 = vpack.c.b16 %v1450, %v1449
  %v1887 = vpack.c.b16 %v1452, %v1451
  %v1888 = vpack.c.b16 %v1454, %v1453
  %v1889 = vpack.c.b16 %v1456, %v1455
  %v1890 = vpack.c.b16 %v1458, %v1457
  %v1891 = vpack.c.b16 %v1460, %v1459
  %v1892 = vpack.c.b16 %v1462, %v1461
  %v1893 = vpack.c.b16 %v1464, %v1463
  %v1894 = vpack.c.b16 %v1466, %v1465
  %v1895 = vpack.c.b16 %v1468, %v1467
  %v1896 = vpack.c.b16 %v1470, %v1469
  %v1897 = vpack.c.b16 %v1472, %v1471
  %v1898 = vpack.c.b16 %v1474, %v1473
  %v1899 = vpack.c.b16 %v1476, %v1475
  %v1900 = vpack.c.b16 %v1478, %v1477
  %v1901 = vpack.c.b16 %v1480, %v1479
  %v1902 = vpack.c.b16 %v1482, %v1481
  %v1903 = vpack.c.b16 %v1484, %v1483
  %v1904 = vpack.c.b16 %v1486, %v1485
  %v1905 = vpack.c.b16 %v1488, %v1487
  %v1906 = vpack.c.b16 %v1490, %v1489
  %v1907 = vpack.c.b16 %v1492, %v1491
  %v1908 = vpack.c.b16 %v1494, %v1493
  %v1909 = vpack.c.b16 %v1496, %v1495
  %v1910 = vpack.c.b16 %v1498, %v1497
  %v1911 = vpack.c.b16 %v1500, %v1499
  %v1912 = vpack.c.b16 %v1502, %v1501
  %v1913 = vpack.c.b16 %v1504, %v1503
  %v1914 = vpack.c.b16 %v1506, %v1505
  %v1915 = vpack.c.b16 %v1508, %v1507
  %v1916 = vpack.c.b16 %v1510, %v1509
  %v1917 = vpack.c.b16 %v1512, %v1511
  %v1918 = vpack.c.b16 %v1514, %v1513
  %v1919 = vpack.c.b16 %v1516, %v1515
  %v1920 = vpack.c.b16 %v1518, %v1517
  %v1921 = vpack.c.b16 %v1520, %v1519
  %v1922 = vpack.c.b16 %v1522, %v1521
  %v1923 = vpack.c.b16 %v1524, %v1523
  %v1924 = vpack.c.b16 %v1526, %v1525
  %v1925 = vpack.c.b16 %v1528, %v1527
  %v1926 = vpack.c.b16 %v1530, %v1529
  %v1927 = vpack.c.b16 %v1532, %v1531
  %v1928 = vpack.c.b16 %v1534, %v1533
  %v1929 = vpack.c.b16 %v1536, %v1535
  %v1930 = vpack.c.b16 %v1538, %v1537
  %v1931 = vpack.c.b16 %v1540, %v1539
  %v1932 = vpack.c.b16 %v1542, %v1541
  %v1933 = vpack.c.b16 %v1544, %v1543
  %v1934 = vpack.c.b16 %v1546, %v1545
  %v1935 = vpack.c.b16 %v1548, %v1547
  %v1936 = vpack.c.b16 %v1550, %v1549
  %v1937 = vpack.c.b16 %v1552, %v1551
  %v1938 = vpack.c.b16 %v1554, %v1553
  %v1939 = vpack.c.b16 %v1556, %v1555
  %v1940 = vpack.c.b16 %v1558, %v1557
  %v1941 = vpack.c.b16 %v1560, %v1559
  %v1942 = vpack.c.b16 %v1562, %v1561
  %v1943 = vpack.c.b16 %v1564, %v1563
  %v1944 = vpack.c.b16 %v1566, %v1565
  %v1945 = vpack.c.b16 %v1568, %v1567
  %v1946 = vpack.c.b16 %v1570, %v1569
  %v1947 = vpack.c.b16 %v1572, %v1571
  %v1948 = vpack.c.b16 %v1574, %v1573
  %v1949 = vpack.c.b16 %v1576, %v1575
  %v1950 = vpack.c.b16 %v1578, %v1577
  %v1951 = vpack.c.b16 %v1580, %v1579
  %v1952 = vpack.c.b16 %v1582, %v1581
  %v1953 = vpack.c.b16 %v1584, %v1583
  %v1954 = vpack.c.b16 %v1586, %v1585
  %v1955 = vpack.c.b16 %v1588, %v1587
  %v1956 = vpack.c.b16 %v1590, %v1589
  %v1957 = vpack.c.b16 %v1592, %v1591
  %v1958 = vpack.c.b16 %v1594, %v1593
  %v1959 = vpack.c.b16 %v1596, %v1595
  %v1960 = vpack.c.b16 %v1598, %v1597
  %v1961 = vpack.c.b16 %v1600, %v1599
  %v1962 = vpack.c.b16 %v1602, %v1601
  %v1963 = vpack.c.b16 %v1604, %v1603
  %v1964 = vpack.c.b16 %v1606, %v1605
  %v1965 = vpack.c.b16 %v1608, %v1607
  %v1966 = vpack.c.b16 %v1610, %v1609
  %v1967 = vpack.c.b16 %v1612, %v1611
  %v1968 = vpack.c.b16 %v1614, %v1613
  %v1969 = vpack.c.b16 %v1616, %v1615
  %v1970 = vpack.c.b16 %v1618, %v1617
  %v1971 = vpack.c.b16 %v1620, %v1619
  %v1972 = vpack.c.b16 %v1622, %v1621
  %v1973 = vpack.c.b16 %v1624, %v1623
  %v1974 = vpack.c.b16 %v1626, %v1625
  %v1975 = vpack.c.b16 %v1628, %v1627
  %v1976 = vpack.c.b16 %v1630, %v1629
  %v1977 = vpack.c.b16 %v1632, %v1631
  %v1978 = vpack.c.b16 %v1634, %v1633
  %v1979 = vpack.c.b16 %v1636, %v1635
  %v1980 = vpack.c.b16 %v1638, %v1637
  %v1981 = vpack.c.b16 %v1640, %v1639
  %v1982 = vpack.c.b16 %v1642, %v1641
  %v1983 = vpack.c.b16 %v1644, %v1643
  %v1984 = vpack.c.b16 %v1646, %v1645
  %v1985 = vpack.c.b16 %v1648, %v1647
  %v1986 = vpack.c.b16 %v1650, %v1649
  %v1987 = vpack.c.b16 %v1652, %v1651
  %v1988 = vpack.c.b16 %v1654, %v1653
  %v1989 = vpack.c.b16 %v1656, %v1655
  %v1990 = vpack.c.b16 %v1658, %v1657
  %v1991 = vpack.c.b16 %v1660, %v1659
  %v1992 = vpack.c.b16 %v1662, %v1661
  %v1993 = vpack.c.b16 %v1664, %v1663
  %v1994 = vpack.c.b16 %v1666, %v1665
  %v1995 = vpack.c.b16 %v1668, %v1667
  %v1996 = vpack.c.b16 %v1670, %v1669
  %v1997 = vpack.c.b16 %v1672, %v1671
  %v1998 = vpack.c.b16 %v1674, %v1673
  %v1999 = vpack.c.b16 %v1676, %v1675
  %v2000 = vpack.c.b16 %v1678, %v1677
  %v2001 = vpack.c.b16 %v1680, %v1679
  %v2002 = vpack.c.b16 %v1682, %v1681
  %v2003 = vpack.c.b16 %v1684, %v1683
  %v2004 = vpack.c.b16 %v1686, %v1685
  %v2005 = vpack.c.b16 %v1688, %v1687
  %v2006 = vpack.c.b16 %v1690, %v1689
  %v2007 = vpack.c.b16 %v1692, %v1691
  %v2008 = vpack.c.b16 %v1694, %v1693
  %v2009 = vpack.c.b16 %v1696, %v1695
  %v2010 = vpack.c.b16 %v1698, %v1697
  %v2011 = vpack.c.b16 %v1700, %v1699
  %v2012 = vpack.c.b16 %v1702, %v1701
  %v2013 = vpack.c.b16 %v1704, %v1703
  %v2014 = vpack.c.b16 %v1706, %v1705
  %v2015 = vpack.c.b16 %v1708, %v1707
  %v2016 = vpack.c.b16 %v1710, %v1709
  %v2017 = vpack.c.b16 %v1712, %v1711
  %v2018 = vpack.c.b16 %v1714, %v1713
  %v2019 = vpack.c.b16 %v1716, %v1715
  %v2020 = vpack.c.b16 %v1718, %v1717
  %v2021 = vpack.c.b16 %v1720, %v1719
  %v2022 = vpack.c.b16 %v1722, %v1721
  %v2023 = vpack.c.b16 %v1724, %v1723
  %v2024 = vpack.c.b16 %v1726, %v1725
  %v2025 = vpack.c.b16 %v1728, %v1727
  %v2026 = vpack.c.b16 %v1730, %v1729
  %v2027 = vpack.c.b16 %v1732, %v1731
  %v2028 = vpack.c.b16 %v1734, %v1733
  %v2029 = vpack.c.b16 %v1736, %v1735
  %v2030 = vpack.c.b16 %v1738, %v1737
  %v2031 = vpack.c.b16 %v1740, %v1739
  %v2032 = vpack.c.b16 %v1742, %v1741
  %v2033 = vpack.c.b16 %v1744, %v1743
  %v2034 = vpack.c.b16 %v1746, %v1745
  %v2039 = vunpack.c.l.b16 %v591
  %v2040 = vunpack.c.l.b16 %v592
  %v2041 = vunpack.c.l.b16 %v593
  %v2042 = vunpack.c.l.b16 %v594
  %v2043 = vpack.c.b16 %v2040, %v2039
  %v2044 = vpack.c.b16 %v2042, %v2041
  %vm2047 = vcmask 261120
  %v2049 = vsel %vm2047, %v1747, 0
  %v2052 = vsel %vm2047, %v1748, 0
  %v2055 = vsel %vm2047, %v1749, 0
  %v2058 = vsel %vm2047, %v1750, 0
  %v2061 = vsel %vm2047, %v1751, 0
  %v2064 = vsel %vm2047, %v1752, 0
  %v2067 = vsel %vm2047, %v1753, 0
  %v2070 = vsel %vm2047, %v1754, 0
  %v2073 = vsel %vm2047, %v1755, 0
  %v2076 = vsel %vm2047, %v1756, 0
  %v2079 = vsel %vm2047, %v1757, 0
  %v2082 = vsel %vm2047, %v1758, 0
  %v2085 = vsel %vm2047, %v1759, 0
  %v2088 = vsel %vm2047, %v1760, 0
  %v2091 = vsel %vm2047, %v1761, 0
  %v2094 = vsel %vm2047, %v1762, 0
  %v2097 = vsel %vm2047, %v1763, 0
  %v2100 = vsel %vm2047, %v1764, 0
  %v2103 = vsel %vm2047, %v1765, 0
  %v2106 = vsel %vm2047, %v1766, 0
  %v2109 = vsel %vm2047, %v1767, 0
  %v2112 = vsel %vm2047, %v1768, 0
  %v2115 = vsel %vm2047, %v1769, 0
  %v2118 = vsel %vm2047, %v1770, 0
  %v2121 = vsel %vm2047, %v1771, 0
  %v2124 = vsel %vm2047, %v1772, 0
  %v2127 = vsel %vm2047, %v1773, 0
  %v2130 = vsel %vm2047, %v1774, 0
  %v2133 = vsel %vm2047, %v1775, 0
  %v2136 = vsel %vm2047, %v1776, 0
  %v2139 = vsel %vm2047, %v1777, 0
  %v2142 = vsel %vm2047, %v1778, 0
  %v2145 = vsel %vm2047, %v1779, 0
  %v2148 = vsel %vm2047, %v1780, 0
  %v2151 = vsel %vm2047, %v1781, 0
  %v2154 = vsel %vm2047, %v1782, 0
  %v2157 = vsel %vm2047, %v1783, 0
  %v2160 = vsel %vm2047, %v1784, 0
  %v2163 = vsel %vm2047, %v1785, 0
  %v2166 = vsel %vm2047, %v1786, 0
  %v2169 = vsel %vm2047, %v1787, 0
  %v2172 = vsel %vm2047, %v1788, 0
  %v2175 = vsel %vm2047, %v1789, 0
  %v2178 = vsel %vm2047, %v1790, 0
  %v2181 = vsel %vm2047, %v1791, 0
  %v2184 = vsel %vm2047, %v1792, 0
  %v2187 = vsel %vm2047, %v1793, 0
  %v2190 = vsel %vm2047, %v1794, 0
  %v2193 = vsel %vm2047, %v1795, 0
  %v2196 = vsel %vm2047, %v1796, 0
  %v2199 = vsel %vm2047, %v1797, 0
  %v2202 = vsel %vm2047, %v1798, 0
  %v2205 = vsel %vm2047, %v1799, 0
  %v2208 = vsel %vm2047, %v1800, 0
  %v2211 = vsel %vm2047, %v1801, 0
  %v2214 = vsel %vm2047, %v1802, 0
  %v2217 = vsel %vm2047, %v1803, 0
  %v2220 = vsel %vm2047, %v1804, 0
  %v2223 = vsel %vm2047, %v1805, 0
  %v2226 = vsel %vm2047, %v1806, 0
  %v2229 = vsel %vm2047, %v1807, 0
  %v2232 = vsel %vm2047, %v1808, 0
  %v2235 = vsel %vm2047, %v1809, 0
  %v2238 = vsel %vm2047, %v1810, 0
  %v2241 = vsel %vm2047, %v1811, 0
  %v2244 = vsel %vm2047, %v1812, 0
  %v2247 = vsel %vm2047, %v1813, 0
  %v2250 = vsel %vm2047, %v1814, 0
  %v2253 = vsel %vm2047, %v1815, 0
  %v2256 = vsel %vm2047, %v1816, 0
  %v2259 = vsel %vm2047, %v1817, 0
  %v2262 = vsel %vm2047, %v1818, 0
  %v2265 = vsel %vm2047, %v1819, 0
  %v2268 = vsel %vm2047, %v1820, 0
  %v2271 = vsel %vm2047, %v1821, 0
  %v2274 = vsel %vm2047, %v1822, 0
  %v2277 = vsel %vm2047, %v1823, 0
  %v2280 = vsel %vm2047, %v1824, 0
  %v2283 = vsel %vm2047, %v1825, 0
  %v2286 = vsel %vm2047, %v1826, 0
  %v2289 = vsel %vm2047, %v1827, 0
  %v2292 = vsel %vm2047, %v1828, 0
  %v2295 = vsel %vm2047, %v1829, 0
  %v2298 = vsel %vm2047, %v1830, 0
  %v2301 = vsel %vm2047, %v1831, 0
  %v2304 = vsel %vm2047, %v1832, 0
  %v2307 = vsel %vm2047, %v1833, 0
  %v2310 = vsel %vm2047, %v1834, 0
  %v2313 = vsel %vm2047, %v1835, 0
  %v2316 = vsel %vm2047, %v1836, 0
  %v2319 = vsel %vm2047, %v1837, 0
  %v2322 = vsel %vm2047, %v1838, 0
  %v2325 = vsel %vm2047, %v1839, 0
  %v2328 = vsel %vm2047, %v1840, 0
  %v2331 = vsel %vm2047, %v1841, 0
  %v2334 = vsel %vm2047, %v1842, 0
  %v2337 = vsel %vm2047, %v1843, 0
  %v2340 = vsel %vm2047, %v1844, 0
  %v2343 = vsel %vm2047, %v1845, 0
  %v2346 = vsel %vm2047, %v1846, 0
  %v2349 = vsel %vm2047, %v1847, 0
  %v2352 = vsel %vm2047, %v1848, 0
  %v2355 = vsel %vm2047, %v1849, 0
  %v2358 = vsel %vm2047, %v1850, 0
  %v2361 = vsel %vm2047, %v1851, 0
  %v2364 = vsel %vm2047, %v1852, 0
  %v2367 = vsel %vm2047, %v1853, 0
  %v2370 = vsel %vm2047, %v1854, 0
  %v2373 = vsel %vm2047, %v1855, 0
  %v2376 = vsel %vm2047, %v1856, 0
  %v2379 = vsel %vm2047, %v1857, 0
  %v2382 = vsel %vm2047, %v1858, 0
  %v2385 = vsel %vm2047, %v1859, 0
  %v2388 = vsel %vm2047, %v1860, 0
  %v2391 = vsel %vm2047, %v1861, 0
  %v2394 = vsel %vm2047, %v1862, 0
  %v2397 = vsel %vm2047, %v1863, 0
  %v2400 = vsel %vm2047, %v1864, 0
  %v2403 = vsel %vm2047, %v1865, 0
  %v2406 = vsel %vm2047, %v1866, 0
  %v2409 = vsel %vm2047, %v1867, 0
  %v2412 = vsel %vm2047, %v1868, 0
  %v2415 = vsel %vm2047, %v1869, 0
  %v2418 = vsel %vm2047, %v1870, 0
  %v2421 = vsel %vm2047, %v1871, 0
  %v2424 = vsel %vm2047, %v1872, 0
  %v2427 = vsel %vm2047, %v1873, 0
  %v2430 = vsel %vm2047, %v1874, 0
  %v2433 = vsel %vm2047, %v1875, 0
  %v2436 = vsel %vm2047, %v1876, 0
  %v2439 = vsel %vm2047, %v1877, 0
  %v2442 = vsel %vm2047, %v1878, 0
  %v2445 = vsel %vm2047, %v1879, 0
  %v2448 = vsel %vm2047, %v1880, 0
  %v2451 = vsel %vm2047, %v1881, 0
  %v2454 = vsel %vm2047, %v1882, 0
  %v2457 = vsel %vm2047, %v1883, 0
  %v2460 = vsel %vm2047, %v1884, 0
  %v2463 = vsel %vm2047, %v1885, 0
  %v2466 = vsel %vm2047, %v1886, 0
  %v2469 = vsel %vm2047, %v1887, 0
  %v2472 = vsel %vm2047, %v1888, 0
  %v2475 = vsel %vm2047, %v1889, 0
  %v2478 = vsel %vm2047, %v1890, 0
  %v2481 = vsel %vm2047, %v1891, 0
  %v2484 = vsel %vm2047, %v1892, 0
  %v2487 = vsel %vm2047, %v1893, 0
  %v2490 = vsel %vm2047, %v1894, 0
  %v2493 = vsel %vm2047, %v1895, 0
  %v2496 = vsel %vm2047, %v1896, 0
  %v2499 = vsel %vm2047, %v1897, 0
  %v2502 = vsel %vm2047, %v1898, 0
  %v2505 = vsel %vm2047, %v1899, 0
  %v2508 = vsel %vm2047, %v1900, 0
  %v2511 = vsel %vm2047, %v1901, 0
  %v2514 = vsel %vm2047, %v1902, 0
  %v2517 = vsel %vm2047, %v1903, 0
  %v2520 = vsel %vm2047, %v1904, 0
  %v2523 = vsel %vm2047, %v1905, 0
  %v2526 = vsel %vm2047, %v1906, 0
  %v2529 = vsel %vm2047, %v1907, 0
  %v2532 = vsel %vm2047, %v1908, 0
  %v2535 = vsel %vm2047, %v1909, 0
  %v2538 = vsel %vm2047, %v1910, 0
  %v2541 = vsel %vm2047, %v1911, 0
  %v2544 = vsel %vm2047, %v1912, 0
  %v2547 = vsel %vm2047, %v1913, 0
  %v2550 = vsel %vm2047, %v1914, 0
  %v2553 = vsel %vm2047, %v1915, 0
  %v2556 = vsel %vm2047, %v1916, 0
  %v2559 = vsel %vm2047, %v1917, 0
  %v2562 = vsel %vm2047, %v1918, 0
  %v2565 = vsel %vm2047, %v1919, 0
  %v2568 = vsel %vm2047, %v1920, 0
  %v2571 = vsel %vm2047, %v1921, 0
  %v2574 = vsel %vm2047, %v1922, 0
  %v2577 = vsel %vm2047, %v1923, 0
  %v2580 = vsel %vm2047, %v1924, 0
  %v2583 = vsel %vm2047, %v1925, 0
  %v2586 = vsel %vm2047, %v1926, 0
  %v2589 = vsel %vm2047, %v1927, 0
  %v2592 = vsel %vm2047, %v1928, 0
  %v2595 = vsel %vm2047, %v1929, 0
  %v2598 = vsel %vm2047, %v1930, 0
  %v2601 = vsel %vm2047, %v1931, 0
  %v2604 = vsel %vm2047, %v1932, 0
  %v2607 = vsel %vm2047, %v1933, 0
  %v2610 = vsel %vm2047, %v1934, 0
  %v2613 = vsel %vm2047, %v1935, 0
  %v2616 = vsel %vm2047, %v1936, 0
  %v2619 = vsel %vm2047, %v1937, 0
  %v2622 = vsel %vm2047, %v1938, 0
  %v2625 = vsel %vm2047, %v1939, 0
  %v2628 = vsel %vm2047, %v1940, 0
  %v2631 = vsel %vm2047, %v1941, 0
  %v2634 = vsel %vm2047, %v1942, 0
  %v2637 = vsel %vm2047, %v1943, 0
  %v2640 = vsel %vm2047, %v1944, 0
  %v2643 = vsel %vm2047, %v1945, 0
  %v2646 = vsel %vm2047, %v1946, 0
  %v2649 = vsel %vm2047, %v1947, 0
  %v2652 = vsel %vm2047, %v1948, 0
  %v2655 = vsel %vm2047, %v1949, 0
  %v2658 = vsel %vm2047, %v1950, 0
  %v2661 = vsel %vm2047, %v1951, 0
  %v2664 = vsel %vm2047, %v1952, 0
  %v2667 = vsel %vm2047, %v1953, 0
  %v2670 = vsel %vm2047, %v1954, 0
  %v2673 = vsel %vm2047, %v1955, 0
  %v2676 = vsel %vm2047, %v1956, 0
  %v2679 = vsel %vm2047, %v1957, 0
  %v2682 = vsel %vm2047, %v1958, 0
  %v2685 = vsel %vm2047, %v1959, 0
  %v2688 = vsel %vm2047, %v1960, 0
  %v2691 = vsel %vm2047, %v1961, 0
  %v2694 = vsel %vm2047, %v1962, 0
  %v2697 = vsel %vm2047, %v1963, 0
  %v2700 = vsel %vm2047, %v1964, 0
  %v2703 = vsel %vm2047, %v1965, 0
  %v2706 = vsel %vm2047, %v1966, 0
  %v2709 = vsel %vm2047, %v1967, 0
  %v2712 = vsel %vm2047, %v1968, 0
  %v2715 = vsel %vm2047, %v1969, 0
  %v2718 = vsel %vm2047, %v1970, 0
  %v2721 = vsel %vm2047, %v1971, 0
  %v2724 = vsel %vm2047, %v1972, 0
  %v2727 = vsel %vm2047, %v1973, 0
  %v2730 = vsel %vm2047, %v1974, 0
  %v2733 = vsel %vm2047, %v1975, 0
  %v2736 = vsel %vm2047, %v1976, 0
  %v2739 = vsel %vm2047, %v1977, 0
  %v2742 = vsel %vm2047, %v1978, 0
  %v2745 = vsel %vm2047, %v1979, 0
  %v2748 = vsel %vm2047, %v1980, 0
  %v2751 = vsel %vm2047, %v1981, 0
  %v2754 = vsel %vm2047, %v1982, 0
  %v2757 = vsel %vm2047, %v1983, 0
  %v2760 = vsel %vm2047, %v1984, 0
  %v2763 = vsel %vm2047, %v1985, 0
  %v2766 = vsel %vm2047, %v1986, 0
  %v2769 = vsel %vm2047, %v1987, 0
  %v2772 = vsel %vm2047, %v1988, 0
  %v2775 = vsel %vm2047, %v1989, 0
  %v2778 = vsel %vm2047, %v1990, 0
  %v2781 = vsel %vm2047, %v1991, 0
  %v2784 = vsel %vm2047, %v1992, 0
  %v2787 = vsel %vm2047, %v1993, 0
  %v2790 = vsel %vm2047, %v1994, 0
  %v2793 = vsel %vm2047, %v1995, 0
  %v2796 = vsel %vm2047, %v1996, 0
  %v2799 = vsel %vm2047, %v1997, 0
  %v2802 = vsel %vm2047, %v1998, 0
  %v2805 = vsel %vm2047, %v1999, 0
  %v2808 = vsel %vm2047, %v2000, 0
  %v2811 = vsel %vm2047, %v2001, 0
  %v2814 = vsel %vm2047, %v2002, 0
  %v2817 = vsel %vm2047, %v2003, 0
  %v2820 = vsel %vm2047, %v2004, 0
  %v2823 = vsel %vm2047, %v2005, 0
  %v2826 = vsel %vm2047, %v2006, 0
  %v2829 = vsel %vm2047, %v2007, 0
  %v2832 = vsel %vm2047, %v2008, 0
  %v2835 = vsel %vm2047, %v2009, 0
  %v2838 = vsel %vm2047, %v2010, 0
  %v2841 = vsel %vm2047, %v2011, 0
  %v2844 = vsel %vm2047, %v2012, 0
  %v2847 = vsel %vm2047, %v2013, 0
  %v2850 = vsel %vm2047, %v2014, 0
  %v2853 = vsel %vm2047, %v2015, 0
  %v2856 = vsel %vm2047, %v2016, 0
  %v2859 = vsel %vm2047, %v2017, 0
  %v2862 = vsel %vm2047, %v2018, 0
  %v2865 = vsel %vm2047, %v2019, 0
  %v2868 = vsel %vm2047, %v2020, 0
  %v2871 = vsel %vm2047, %v2021, 0
  %v2874 = vsel %vm2047, %v2022, 0
  %v2877 = vsel %vm2047, %v2023, 0
  %v2880 = vsel %vm2047, %v2024, 0
  %v2883 = vsel %vm2047, %v2025, 0
  %v2886 = vsel %vm2047, %v2026, 0
  %v2889 = vsel %vm2047, %v2027, 0
  %v2892 = vsel %vm2047, %v2028, 0
  %v2895 = vsel %vm2047, %v2029, 0
  %v2898 = vsel %vm2047, %v2030, 0
  %v2901 = vsel %vm2047, %v2031, 0
  %v2904 = vsel %vm2047, %v2032, 0
  %v2907 = vsel %vm2047, %v2033, 0
  %v2910 = vsel %vm2047, %v2034, 0
  %2912 = vmatprep.subr.bf16.mxu0 0
  %2913 = vmatpush1.bf16.msra.mxu0 0
  %2914 = vmatprep.subr.bf16.mxu0 0
  %2915 = vmatpush1.bf16.msra.mxu0 0
  %2916 = vmatprep.subr.bf16.mxu0 0
  %2917 = vmatpush1.bf16.msra.mxu0 0
  %2918 = vmatprep.subr.bf16.mxu0 0
  %2919 = vmatpush1.bf16.msra.mxu0 0
  %2920 = vmatprep.subr.bf16.mxu0 0
  %2921 = vmatpush1.bf16.msra.mxu0 0
  %2922 = vmatprep.subr.bf16.mxu0 0
  %2923 = vmatpush1.bf16.msra.mxu0 0
  %2924 = vmatprep.subr.bf16.mxu0 0
  %2925 = vmatpush1.bf16.msra.mxu0 %v2044
  %2926 = vmatprep.subr.bf16.mxu0 0
  %2927 = vmatpush1.bf16.msra.mxu0 %v2043
  %2928 = vmatprep.subr.bf16.mxu0 0
  %2929 = vmatpush2.bf16.msra.mxu0 0
  %2930 = vmatprep.subr.bf16.mxu0 0
  %2931 = vmatpush2.bf16.msra.mxu0 0
  %2932 = vmatprep.subr.bf16.mxu0 0
  %2933 = vmatpush2.bf16.msra.mxu0 0
  %2934 = vmatprep.subr.bf16.mxu0 0
  %2935 = vmatpush2.bf16.msra.mxu0 0
  %2936 = vmatprep.subr.bf16.mxu0 0
  %2937 = vmatpush2.bf16.msra.mxu0 0
  %2938 = vmatprep.subr.bf16.mxu0 0
  %2939 = vmatpush2.bf16.msra.mxu0 0
  %2940 = vmatprep.subr.bf16.mxu0 0
  %2941 = vmatpush2.bf16.msra.mxu0 0
  %2942 = vmatprep.subr.bf16.mxu0 0
  %2943 = vmatpush2.bf16.msra.mxu0 0
  %2944 = vmatprep.mubr.bf16.mxu0 0
  %2945 = vmatmul.mubr.bf16.gmra.mxu0 %v2049
  %v2946 = vpop.f32.mrf.mxu0
  %v2947 = vadd.f32 0.0, %v2946
  %v2948 = vpop.f32.mrf.mxu0
  %v2949 = vpop.f32.mrf.mxu0
  %v2950 = vadd.f32 0.0, %v2949
  %v2951 = vpop.f32.mrf.mxu0
  %2952 = vmatprep.mubr.bf16.mxu0 0
  %2953 = vmatmul.mubr.bf16.gmra.mxu0 %v2052
  %v2954 = vpop.f32.mrf.mxu0
  %v2955 = vadd.f32 0.0, %v2954
  %v2956 = vpop.f32.mrf.mxu0
  %v2957 = vpop.f32.mrf.mxu0
  %v2958 = vadd.f32 0.0, %v2957
  %v2959 = vpop.f32.mrf.mxu0
  %2960 = vmatprep.mubr.bf16.mxu0 0
  %2961 = vmatmul.mubr.bf16.gmra.mxu0 %v2055
  %v2962 = vpop.f32.mrf.mxu0
  %v2963 = vadd.f32 0.0, %v2962
  %v2964 = vpop.f32.mrf.mxu0
  %v2965 = vpop.f32.mrf.mxu0
  %v2966 = vadd.f32 0.0, %v2965
  %v2967 = vpop.f32.mrf.mxu0
  %2968 = vmatprep.mubr.bf16.mxu0 0
  %2969 = vmatmul.mubr.bf16.gmra.mxu0 %v2058
  %v2970 = vpop.f32.mrf.mxu0
  %v2971 = vadd.f32 0.0, %v2970
  %v2972 = vpop.f32.mrf.mxu0
  %v2973 = vpop.f32.mrf.mxu0
  %v2974 = vadd.f32 0.0, %v2973
  %v2975 = vpop.f32.mrf.mxu0
  %2976 = vmatprep.mubr.bf16.mxu0 0
  %2977 = vmatmul.mubr.bf16.gmra.mxu0 %v2061
  %v2978 = vpop.f32.mrf.mxu0
  %v2979 = vadd.f32 0.0, %v2978
  %v2980 = vpop.f32.mrf.mxu0
  %v2981 = vpop.f32.mrf.mxu0
  %v2982 = vadd.f32 0.0, %v2981
  %v2983 = vpop.f32.mrf.mxu0
  %2984 = vmatprep.mubr.bf16.mxu0 0
  %2985 = vmatmul.mubr.bf16.gmra.mxu0 %v2064
  %v2986 = vpop.f32.mrf.mxu0
  %v2987 = vadd.f32 0.0, %v2986
  %v2988 = vpop.f32.mrf.mxu0
  %v2989 = vpop.f32.mrf.mxu0
  %v2990 = vadd.f32 0.0, %v2989
  %v2991 = vpop.f32.mrf.mxu0
  %2992 = vmatprep.mubr.bf16.mxu0 0
  %2993 = vmatmul.mubr.bf16.gmra.mxu0 %v2067
  %v2994 = vpop.f32.mrf.mxu0
  %v2995 = vadd.f32 0.0, %v2994
  %v2996 = vpop.f32.mrf.mxu0
  %v2997 = vpop.f32.mrf.mxu0
  %v2998 = vadd.f32 0.0, %v2997
  %v2999 = vpop.f32.mrf.mxu0
  %3000 = vmatprep.mubr.bf16.mxu0 0
  %3001 = vmatmul.mubr.bf16.gmra.mxu0 %v2070
  %v3002 = vpop.f32.mrf.mxu0
  %v3003 = vadd.f32 0.0, %v3002
  %v3004 = vpop.f32.mrf.mxu0
  %v3005 = vpop.f32.mrf.mxu0
  %v3006 = vadd.f32 0.0, %v3005
  %v3007 = vpop.f32.mrf.mxu0
  %3008 = vmatprep.mubr.bf16.mxu0 0
  %3009 = vmatmul.mubr.bf16.gmra.mxu0 %v2073
  %v3010 = vpop.f32.mrf.mxu0
  %v3011 = vadd.f32 0.0, %v3010
  %v3012 = vpop.f32.mrf.mxu0
  %v3013 = vpop.f32.mrf.mxu0
  %v3014 = vadd.f32 0.0, %v3013
  %v3015 = vpop.f32.mrf.mxu0
  %3016 = vmatprep.mubr.bf16.mxu0 0
  %3017 = vmatmul.mubr.bf16.gmra.mxu0 %v2076
  %v3018 = vpop.f32.mrf.mxu0
  %v3019 = vadd.f32 0.0, %v3018
  %v3020 = vpop.f32.mrf.mxu0
  %v3021 = vpop.f32.mrf.mxu0
  %v3022 = vadd.f32 0.0, %v3021
  %v3023 = vpop.f32.mrf.mxu0
  %3024 = vmatprep.mubr.bf16.mxu0 0
  %3025 = vmatmul.mubr.bf16.gmra.mxu0 %v2079
  %v3026 = vpop.f32.mrf.mxu0
  %v3027 = vadd.f32 0.0, %v3026
  %v3028 = vpop.f32.mrf.mxu0
  %v3029 = vpop.f32.mrf.mxu0
  %v3030 = vadd.f32 0.0, %v3029
  %v3031 = vpop.f32.mrf.mxu0
  %3032 = vmatprep.mubr.bf16.mxu0 0
  %3033 = vmatmul.mubr.bf16.gmra.mxu0 %v2082
  %v3034 = vpop.f32.mrf.mxu0
  %v3035 = vadd.f32 0.0, %v3034
  %v3036 = vpop.f32.mrf.mxu0
  %v3037 = vpop.f32.mrf.mxu0
  %v3038 = vadd.f32 0.0, %v3037
  %v3039 = vpop.f32.mrf.mxu0
  %3040 = vmatprep.mubr.bf16.mxu0 0
  %3041 = vmatmul.mubr.bf16.gmra.mxu0 %v2085
  %v3042 = vpop.f32.mrf.mxu0
  %v3043 = vadd.f32 0.0, %v3042
  %v3044 = vpop.f32.mrf.mxu0
  %v3045 = vpop.f32.mrf.mxu0
  %v3046 = vadd.f32 0.0, %v3045
  %v3047 = vpop.f32.mrf.mxu0
  %3048 = vmatprep.mubr.bf16.mxu0 0
  %3049 = vmatmul.mubr.bf16.gmra.mxu0 %v2088
  %v3050 = vpop.f32.mrf.mxu0
  %v3051 = vadd.f32 0.0, %v3050
  %v3052 = vpop.f32.mrf.mxu0
  %v3053 = vpop.f32.mrf.mxu0
  %v3054 = vadd.f32 0.0, %v3053
  %v3055 = vpop.f32.mrf.mxu0
  %3056 = vmatprep.mubr.bf16.mxu0 0
  %3057 = vmatmul.mubr.bf16.gmra.mxu0 %v2091
  %v3058 = vpop.f32.mrf.mxu0
  %v3059 = vadd.f32 0.0, %v3058
  %v3060 = vpop.f32.mrf.mxu0
  %v3061 = vpop.f32.mrf.mxu0
  %v3062 = vadd.f32 0.0, %v3061
  %v3063 = vpop.f32.mrf.mxu0
  %3064 = vmatprep.mubr.bf16.mxu0 0
  %3065 = vmatmul.mubr.bf16.gmra.mxu0 %v2094
  %v3066 = vpop.f32.mrf.mxu0
  %v3067 = vadd.f32 0.0, %v3066
  %v3068 = vpop.f32.mrf.mxu0
  %v3069 = vpop.f32.mrf.mxu0
  %v3070 = vadd.f32 0.0, %v3069
  %v3071 = vpop.f32.mrf.mxu0
  %3072 = vmatprep.mubr.bf16.mxu0 0
  %3073 = vmatmul.mubr.bf16.gmra.mxu0 %v2097
  %v3074 = vpop.f32.mrf.mxu0
  %v3075 = vadd.f32 0.0, %v3074
  %v3076 = vpop.f32.mrf.mxu0
  %v3077 = vpop.f32.mrf.mxu0
  %v3078 = vadd.f32 0.0, %v3077
  %v3079 = vpop.f32.mrf.mxu0
  %3080 = vmatprep.mubr.bf16.mxu0 0
  %3081 = vmatmul.mubr.bf16.gmra.mxu0 %v2100
  %v3082 = vpop.f32.mrf.mxu0
  %v3083 = vadd.f32 0.0, %v3082
  %v3084 = vpop.f32.mrf.mxu0
  %v3085 = vpop.f32.mrf.mxu0
  %v3086 = vadd.f32 0.0, %v3085
  %v3087 = vpop.f32.mrf.mxu0
  %3088 = vmatprep.mubr.bf16.mxu0 0
  %3089 = vmatmul.mubr.bf16.gmra.mxu0 %v2103
  %v3090 = vpop.f32.mrf.mxu0
  %v3091 = vadd.f32 0.0, %v3090
  %v3092 = vpop.f32.mrf.mxu0
  %v3093 = vpop.f32.mrf.mxu0
  %v3094 = vadd.f32 0.0, %v3093
  %v3095 = vpop.f32.mrf.mxu0
  %3096 = vmatprep.mubr.bf16.mxu0 0
  %3097 = vmatmul.mubr.bf16.gmra.mxu0 %v2106
  %v3098 = vpop.f32.mrf.mxu0
  %v3099 = vadd.f32 0.0, %v3098
  %v3100 = vpop.f32.mrf.mxu0
  %v3101 = vpop.f32.mrf.mxu0
  %v3102 = vadd.f32 0.0, %v3101
  %v3103 = vpop.f32.mrf.mxu0
  %3104 = vmatprep.mubr.bf16.mxu0 0
  %3105 = vmatmul.mubr.bf16.gmra.mxu0 %v2109
  %v3106 = vpop.f32.mrf.mxu0
  %v3107 = vadd.f32 0.0, %v3106
  %v3108 = vpop.f32.mrf.mxu0
  %v3109 = vpop.f32.mrf.mxu0
  %v3110 = vadd.f32 0.0, %v3109
  %v3111 = vpop.f32.mrf.mxu0
  %3112 = vmatprep.mubr.bf16.mxu0 0
  %3113 = vmatmul.mubr.bf16.gmra.mxu0 %v2112
  %v3114 = vpop.f32.mrf.mxu0
  %v3115 = vadd.f32 0.0, %v3114
  %v3116 = vpop.f32.mrf.mxu0
  %v3117 = vpop.f32.mrf.mxu0
  %v3118 = vadd.f32 0.0, %v3117
  %v3119 = vpop.f32.mrf.mxu0
  %3120 = vmatprep.mubr.bf16.mxu0 0
  %3121 = vmatmul.mubr.bf16.gmra.mxu0 %v2115
  %v3122 = vpop.f32.mrf.mxu0
  %v3123 = vadd.f32 0.0, %v3122
  %v3124 = vpop.f32.mrf.mxu0
  %v3125 = vpop.f32.mrf.mxu0
  %v3126 = vadd.f32 0.0, %v3125
  %v3127 = vpop.f32.mrf.mxu0
  %3128 = vmatprep.mubr.bf16.mxu0 0
  %3129 = vmatmul.mubr.bf16.gmra.mxu0 %v2118
  %v3130 = vpop.f32.mrf.mxu0
  %v3131 = vadd.f32 0.0, %v3130
  %v3132 = vpop.f32.mrf.mxu0
  %v3133 = vpop.f32.mrf.mxu0
  %v3134 = vadd.f32 0.0, %v3133
  %v3135 = vpop.f32.mrf.mxu0
  %3136 = vmatprep.mubr.bf16.mxu0 0
  %3137 = vmatmul.mubr.bf16.gmra.mxu0 %v2121
  %v3138 = vpop.f32.mrf.mxu0
  %v3139 = vadd.f32 0.0, %v3138
  %v3140 = vpop.f32.mrf.mxu0
  %v3141 = vpop.f32.mrf.mxu0
  %v3142 = vadd.f32 0.0, %v3141
  %v3143 = vpop.f32.mrf.mxu0
  %3144 = vmatprep.mubr.bf16.mxu0 0
  %3145 = vmatmul.mubr.bf16.gmra.mxu0 %v2124
  %v3146 = vpop.f32.mrf.mxu0
  %v3147 = vadd.f32 0.0, %v3146
  %v3148 = vpop.f32.mrf.mxu0
  %v3149 = vpop.f32.mrf.mxu0
  %v3150 = vadd.f32 0.0, %v3149
  %v3151 = vpop.f32.mrf.mxu0
  %3152 = vmatprep.mubr.bf16.mxu0 0
  %3153 = vmatmul.mubr.bf16.gmra.mxu0 %v2127
  %v3154 = vpop.f32.mrf.mxu0
  %v3155 = vadd.f32 0.0, %v3154
  %v3156 = vpop.f32.mrf.mxu0
  %v3157 = vpop.f32.mrf.mxu0
  %v3158 = vadd.f32 0.0, %v3157
  %v3159 = vpop.f32.mrf.mxu0
  %3160 = vmatprep.mubr.bf16.mxu0 0
  %3161 = vmatmul.mubr.bf16.gmra.mxu0 %v2130
  %v3162 = vpop.f32.mrf.mxu0
  %v3163 = vadd.f32 0.0, %v3162
  %v3164 = vpop.f32.mrf.mxu0
  %v3165 = vpop.f32.mrf.mxu0
  %v3166 = vadd.f32 0.0, %v3165
  %v3167 = vpop.f32.mrf.mxu0
  %3168 = vmatprep.mubr.bf16.mxu0 0
  %3169 = vmatmul.mubr.bf16.gmra.mxu0 %v2133
  %v3170 = vpop.f32.mrf.mxu0
  %v3171 = vadd.f32 0.0, %v3170
  %v3172 = vpop.f32.mrf.mxu0
  %v3173 = vpop.f32.mrf.mxu0
  %v3174 = vadd.f32 0.0, %v3173
  %v3175 = vpop.f32.mrf.mxu0
  %3176 = vmatprep.mubr.bf16.mxu0 0
  %3177 = vmatmul.mubr.bf16.gmra.mxu0 %v2136
  %v3178 = vpop.f32.mrf.mxu0
  %v3179 = vadd.f32 0.0, %v3178
  %v3180 = vpop.f32.mrf.mxu0
  %v3181 = vpop.f32.mrf.mxu0
  %v3182 = vadd.f32 0.0, %v3181
  %v3183 = vpop.f32.mrf.mxu0
  %3184 = vmatprep.mubr.bf16.mxu0 0
  %3185 = vmatmul.mubr.bf16.gmra.mxu0 %v2139
  %v3186 = vpop.f32.mrf.mxu0
  %v3187 = vadd.f32 0.0, %v3186
  %v3188 = vpop.f32.mrf.mxu0
  %v3189 = vpop.f32.mrf.mxu0
  %v3190 = vadd.f32 0.0, %v3189
  %v3191 = vpop.f32.mrf.mxu0
  %3192 = vmatprep.mubr.bf16.mxu0 0
  %3193 = vmatmul.mubr.bf16.gmra.mxu0 %v2142
  %v3194 = vpop.f32.mrf.mxu0
  %v3195 = vadd.f32 0.0, %v3194
  %v3196 = vpop.f32.mrf.mxu0
  %v3197 = vpop.f32.mrf.mxu0
  %v3198 = vadd.f32 0.0, %v3197
  %v3199 = vpop.f32.mrf.mxu0
  %3200 = vmatprep.mubr.bf16.mxu0 0
  %3201 = vmatmul.mubr.bf16.gmra.mxu0 %v2145
  %v3202 = vpop.f32.mrf.mxu0
  %v3203 = vadd.f32 0.0, %v3202
  %v3204 = vpop.f32.mrf.mxu0
  %v3205 = vpop.f32.mrf.mxu0
  %v3206 = vadd.f32 0.0, %v3205
  %v3207 = vpop.f32.mrf.mxu0
  %3208 = vmatprep.mubr.bf16.mxu0 0
  %3209 = vmatmul.mubr.bf16.gmra.mxu0 %v2148
  %v3210 = vpop.f32.mrf.mxu0
  %v3211 = vadd.f32 0.0, %v3210
  %v3212 = vpop.f32.mrf.mxu0
  %v3213 = vpop.f32.mrf.mxu0
  %v3214 = vadd.f32 0.0, %v3213
  %v3215 = vpop.f32.mrf.mxu0
  %3216 = vmatprep.mubr.bf16.mxu0 0
  %3217 = vmatmul.mubr.bf16.gmra.mxu0 %v2151
  %v3218 = vpop.f32.mrf.mxu0
  %v3219 = vadd.f32 0.0, %v3218
  %v3220 = vpop.f32.mrf.mxu0
  %v3221 = vpop.f32.mrf.mxu0
  %v3222 = vadd.f32 0.0, %v3221
  %v3223 = vpop.f32.mrf.mxu0
  %3224 = vmatprep.mubr.bf16.mxu0 0
  %3225 = vmatmul.mubr.bf16.gmra.mxu0 %v2154
  %v3226 = vpop.f32.mrf.mxu0
  %v3227 = vadd.f32 0.0, %v3226
  %v3228 = vpop.f32.mrf.mxu0
  %v3229 = vpop.f32.mrf.mxu0
  %v3230 = vadd.f32 0.0, %v3229
  %v3231 = vpop.f32.mrf.mxu0
  %3232 = vmatprep.mubr.bf16.mxu0 0
  %3233 = vmatmul.mubr.bf16.gmra.mxu0 %v2157
  %v3234 = vpop.f32.mrf.mxu0
  %v3235 = vadd.f32 0.0, %v3234
  %v3236 = vpop.f32.mrf.mxu0
  %v3237 = vpop.f32.mrf.mxu0
  %v3238 = vadd.f32 0.0, %v3237
  %v3239 = vpop.f32.mrf.mxu0
  %3240 = vmatprep.mubr.bf16.mxu0 0
  %3241 = vmatmul.mubr.bf16.gmra.mxu0 %v2160
  %v3242 = vpop.f32.mrf.mxu0
  %v3243 = vadd.f32 0.0, %v3242
  %v3244 = vpop.f32.mrf.mxu0
  %v3245 = vpop.f32.mrf.mxu0
  %v3246 = vadd.f32 0.0, %v3245
  %v3247 = vpop.f32.mrf.mxu0
  %3248 = vmatprep.mubr.bf16.mxu0 0
  %3249 = vmatmul.mubr.bf16.gmra.mxu0 %v2163
  %v3250 = vpop.f32.mrf.mxu0
  %v3251 = vadd.f32 0.0, %v3250
  %v3252 = vpop.f32.mrf.mxu0
  %v3253 = vpop.f32.mrf.mxu0
  %v3254 = vadd.f32 0.0, %v3253
  %v3255 = vpop.f32.mrf.mxu0
  %3256 = vmatprep.mubr.bf16.mxu0 0
  %3257 = vmatmul.mubr.bf16.gmra.mxu0 %v2166
  %v3258 = vpop.f32.mrf.mxu0
  %v3259 = vadd.f32 0.0, %v3258
  %v3260 = vpop.f32.mrf.mxu0
  %v3261 = vpop.f32.mrf.mxu0
  %v3262 = vadd.f32 0.0, %v3261
  %v3263 = vpop.f32.mrf.mxu0
  %3264 = vmatprep.mubr.bf16.mxu0 0
  %3265 = vmatmul.mubr.bf16.gmra.mxu0 %v2169
  %v3266 = vpop.f32.mrf.mxu0
  %v3267 = vadd.f32 0.0, %v3266
  %v3268 = vpop.f32.mrf.mxu0
  %v3269 = vpop.f32.mrf.mxu0
  %v3270 = vadd.f32 0.0, %v3269
  %v3271 = vpop.f32.mrf.mxu0
  %3272 = vmatprep.mubr.bf16.mxu0 0
  %3273 = vmatmul.mubr.bf16.gmra.mxu0 %v2172
  %v3274 = vpop.f32.mrf.mxu0
  %v3275 = vadd.f32 0.0, %v3274
  %v3276 = vpop.f32.mrf.mxu0
  %v3277 = vpop.f32.mrf.mxu0
  %v3278 = vadd.f32 0.0, %v3277
  %v3279 = vpop.f32.mrf.mxu0
  %3280 = vmatprep.mubr.bf16.mxu0 0
  %3281 = vmatmul.mubr.bf16.gmra.mxu0 %v2175
  %v3282 = vpop.f32.mrf.mxu0
  %v3283 = vadd.f32 0.0, %v3282
  %v3284 = vpop.f32.mrf.mxu0
  %v3285 = vpop.f32.mrf.mxu0
  %v3286 = vadd.f32 0.0, %v3285
  %v3287 = vpop.f32.mrf.mxu0
  %3288 = vmatprep.mubr.bf16.mxu0 0
  %3289 = vmatmul.mubr.bf16.gmra.mxu0 %v2178
  %v3290 = vpop.f32.mrf.mxu0
  %v3291 = vadd.f32 0.0, %v3290
  %v3292 = vpop.f32.mrf.mxu0
  %v3293 = vpop.f32.mrf.mxu0
  %v3294 = vadd.f32 0.0, %v3293
  %v3295 = vpop.f32.mrf.mxu0
  %3296 = vmatprep.mubr.bf16.mxu0 0
  %3297 = vmatmul.mubr.bf16.gmra.mxu0 %v2181
  %v3298 = vpop.f32.mrf.mxu0
  %v3299 = vadd.f32 0.0, %v3298
  %v3300 = vpop.f32.mrf.mxu0
  %v3301 = vpop.f32.mrf.mxu0
  %v3302 = vadd.f32 0.0, %v3301
  %v3303 = vpop.f32.mrf.mxu0
  %3304 = vmatprep.mubr.bf16.mxu0 0
  %3305 = vmatmul.mubr.bf16.gmra.mxu0 %v2184
  %v3306 = vpop.f32.mrf.mxu0
  %v3307 = vadd.f32 0.0, %v3306
  %v3308 = vpop.f32.mrf.mxu0
  %v3309 = vpop.f32.mrf.mxu0
  %v3310 = vadd.f32 0.0, %v3309
  %v3311 = vpop.f32.mrf.mxu0
  %3312 = vmatprep.mubr.bf16.mxu0 0
  %3313 = vmatmul.mubr.bf16.gmra.mxu0 %v2187
  %v3314 = vpop.f32.mrf.mxu0
  %v3315 = vadd.f32 0.0, %v3314
  %v3316 = vpop.f32.mrf.mxu0
  %v3317 = vpop.f32.mrf.mxu0
  %v3318 = vadd.f32 0.0, %v3317
  %v3319 = vpop.f32.mrf.mxu0
  %3320 = vmatprep.mubr.bf16.mxu0 0
  %3321 = vmatmul.mubr.bf16.gmra.mxu0 %v2190
  %v3322 = vpop.f32.mrf.mxu0
  %v3323 = vadd.f32 0.0, %v3322
  %v3324 = vpop.f32.mrf.mxu0
  %v3325 = vpop.f32.mrf.mxu0
  %v3326 = vadd.f32 0.0, %v3325
  %v3327 = vpop.f32.mrf.mxu0
  %3328 = vmatprep.mubr.bf16.mxu0 0
  %3329 = vmatmul.mubr.bf16.gmra.mxu0 %v2193
  %v3330 = vpop.f32.mrf.mxu0
  %v3331 = vadd.f32 0.0, %v3330
  %v3332 = vpop.f32.mrf.mxu0
  %v3333 = vpop.f32.mrf.mxu0
  %v3334 = vadd.f32 0.0, %v3333
  %v3335 = vpop.f32.mrf.mxu0
  %3336 = vmatprep.mubr.bf16.mxu0 0
  %3337 = vmatmul.mubr.bf16.gmra.mxu0 %v2196
  %v3338 = vpop.f32.mrf.mxu0
  %v3339 = vadd.f32 0.0, %v3338
  %v3340 = vpop.f32.mrf.mxu0
  %v3341 = vpop.f32.mrf.mxu0
  %v3342 = vadd.f32 0.0, %v3341
  %v3343 = vpop.f32.mrf.mxu0
  %3344 = vmatprep.mubr.bf16.mxu0 0
  %3345 = vmatmul.mubr.bf16.gmra.mxu0 %v2199
  %v3346 = vpop.f32.mrf.mxu0
  %v3347 = vadd.f32 0.0, %v3346
  %v3348 = vpop.f32.mrf.mxu0
  %v3349 = vpop.f32.mrf.mxu0
  %v3350 = vadd.f32 0.0, %v3349
  %v3351 = vpop.f32.mrf.mxu0
  %3352 = vmatprep.mubr.bf16.mxu0 0
  %3353 = vmatmul.mubr.bf16.gmra.mxu0 %v2202
  %v3354 = vpop.f32.mrf.mxu0
  %v3355 = vadd.f32 0.0, %v3354
  %v3356 = vpop.f32.mrf.mxu0
  %v3357 = vpop.f32.mrf.mxu0
  %v3358 = vadd.f32 0.0, %v3357
  %v3359 = vpop.f32.mrf.mxu0
  %3360 = vmatprep.mubr.bf16.mxu0 0
  %3361 = vmatmul.mubr.bf16.gmra.mxu0 %v2205
  %v3362 = vpop.f32.mrf.mxu0
  %v3363 = vadd.f32 0.0, %v3362
  %v3364 = vpop.f32.mrf.mxu0
  %v3365 = vpop.f32.mrf.mxu0
  %v3366 = vadd.f32 0.0, %v3365
  %v3367 = vpop.f32.mrf.mxu0
  %3368 = vmatprep.mubr.bf16.mxu0 0
  %3369 = vmatmul.mubr.bf16.gmra.mxu0 %v2208
  %v3370 = vpop.f32.mrf.mxu0
  %v3371 = vadd.f32 0.0, %v3370
  %v3372 = vpop.f32.mrf.mxu0
  %v3373 = vpop.f32.mrf.mxu0
  %v3374 = vadd.f32 0.0, %v3373
  %v3375 = vpop.f32.mrf.mxu0
  %3376 = vmatprep.mubr.bf16.mxu0 0
  %3377 = vmatmul.mubr.bf16.gmra.mxu0 %v2211
  %v3378 = vpop.f32.mrf.mxu0
  %v3379 = vadd.f32 0.0, %v3378
  %v3380 = vpop.f32.mrf.mxu0
  %v3381 = vpop.f32.mrf.mxu0
  %v3382 = vadd.f32 0.0, %v3381
  %v3383 = vpop.f32.mrf.mxu0
  %3384 = vmatprep.mubr.bf16.mxu0 0
  %3385 = vmatmul.mubr.bf16.gmra.mxu0 %v2214
  %v3386 = vpop.f32.mrf.mxu0
  %v3387 = vadd.f32 0.0, %v3386
  %v3388 = vpop.f32.mrf.mxu0
  %v3389 = vpop.f32.mrf.mxu0
  %v3390 = vadd.f32 0.0, %v3389
  %v3391 = vpop.f32.mrf.mxu0
  %3392 = vmatprep.mubr.bf16.mxu0 0
  %3393 = vmatmul.mubr.bf16.gmra.mxu0 %v2217
  %v3394 = vpop.f32.mrf.mxu0
  %v3395 = vadd.f32 0.0, %v3394
  %v3396 = vpop.f32.mrf.mxu0
  %v3397 = vpop.f32.mrf.mxu0
  %v3398 = vadd.f32 0.0, %v3397
  %v3399 = vpop.f32.mrf.mxu0
  %3400 = vmatprep.mubr.bf16.mxu0 0
  %3401 = vmatmul.mubr.bf16.gmra.mxu0 %v2220
  %v3402 = vpop.f32.mrf.mxu0
  %v3403 = vadd.f32 0.0, %v3402
  %v3404 = vpop.f32.mrf.mxu0
  %v3405 = vpop.f32.mrf.mxu0
  %v3406 = vadd.f32 0.0, %v3405
  %v3407 = vpop.f32.mrf.mxu0
  %3408 = vmatprep.mubr.bf16.mxu0 0
  %3409 = vmatmul.mubr.bf16.gmra.mxu0 %v2223
  %v3410 = vpop.f32.mrf.mxu0
  %v3411 = vadd.f32 0.0, %v3410
  %v3412 = vpop.f32.mrf.mxu0
  %v3413 = vpop.f32.mrf.mxu0
  %v3414 = vadd.f32 0.0, %v3413
  %v3415 = vpop.f32.mrf.mxu0
  %3416 = vmatprep.mubr.bf16.mxu0 0
  %3417 = vmatmul.mubr.bf16.gmra.mxu0 %v2226
  %v3418 = vpop.f32.mrf.mxu0
  %v3419 = vadd.f32 0.0, %v3418
  %v3420 = vpop.f32.mrf.mxu0
  %v3421 = vpop.f32.mrf.mxu0
  %v3422 = vadd.f32 0.0, %v3421
  %v3423 = vpop.f32.mrf.mxu0
  %3424 = vmatprep.mubr.bf16.mxu0 0
  %3425 = vmatmul.mubr.bf16.gmra.mxu0 %v2229
  %v3426 = vpop.f32.mrf.mxu0
  %v3427 = vadd.f32 0.0, %v3426
  %v3428 = vpop.f32.mrf.mxu0
  %v3429 = vpop.f32.mrf.mxu0
  %v3430 = vadd.f32 0.0, %v3429
  %v3431 = vpop.f32.mrf.mxu0
  %3432 = vmatprep.mubr.bf16.mxu0 0
  %3433 = vmatmul.mubr.bf16.gmra.mxu0 %v2232
  %v3434 = vpop.f32.mrf.mxu0
  %v3435 = vadd.f32 0.0, %v3434
  %v3436 = vpop.f32.mrf.mxu0
  %v3437 = vpop.f32.mrf.mxu0
  %v3438 = vadd.f32 0.0, %v3437
  %v3439 = vpop.f32.mrf.mxu0
  %3440 = vmatprep.mubr.bf16.mxu0 0
  %3441 = vmatmul.mubr.bf16.gmra.mxu0 %v2235
  %v3442 = vpop.f32.mrf.mxu0
  %v3443 = vadd.f32 0.0, %v3442
  %v3444 = vpop.f32.mrf.mxu0
  %v3445 = vpop.f32.mrf.mxu0
  %v3446 = vadd.f32 0.0, %v3445
  %v3447 = vpop.f32.mrf.mxu0
  %3448 = vmatprep.mubr.bf16.mxu0 0
  %3449 = vmatmul.mubr.bf16.gmra.mxu0 %v2238
  %v3450 = vpop.f32.mrf.mxu0
  %v3451 = vadd.f32 0.0, %v3450
  %v3452 = vpop.f32.mrf.mxu0
  %v3453 = vpop.f32.mrf.mxu0
  %v3454 = vadd.f32 0.0, %v3453
  %v3455 = vpop.f32.mrf.mxu0
  %3456 = vmatprep.mubr.bf16.mxu0 0
  %3457 = vmatmul.mubr.bf16.gmra.mxu0 %v2241
  %v3458 = vpop.f32.mrf.mxu0
  %v3459 = vadd.f32 0.0, %v3458
  %v3460 = vpop.f32.mrf.mxu0
  %v3461 = vpop.f32.mrf.mxu0
  %v3462 = vadd.f32 0.0, %v3461
  %v3463 = vpop.f32.mrf.mxu0
  %3464 = vmatprep.mubr.bf16.mxu0 0
  %3465 = vmatmul.mubr.bf16.gmra.mxu0 %v2244
  %v3466 = vpop.f32.mrf.mxu0
  %v3467 = vadd.f32 0.0, %v3466
  %v3468 = vpop.f32.mrf.mxu0
  %v3469 = vpop.f32.mrf.mxu0
  %v3470 = vadd.f32 0.0, %v3469
  %v3471 = vpop.f32.mrf.mxu0
  %3472 = vmatprep.mubr.bf16.mxu0 0
  %3473 = vmatmul.mubr.bf16.gmra.mxu0 %v2247
  %v3474 = vpop.f32.mrf.mxu0
  %v3475 = vadd.f32 0.0, %v3474
  %v3476 = vpop.f32.mrf.mxu0
  %v3477 = vpop.f32.mrf.mxu0
  %v3478 = vadd.f32 0.0, %v3477
  %v3479 = vpop.f32.mrf.mxu0
  %3480 = vmatprep.mubr.bf16.mxu0 0
  %3481 = vmatmul.mubr.bf16.gmra.mxu0 %v2250
  %v3482 = vpop.f32.mrf.mxu0
  %v3483 = vadd.f32 0.0, %v3482
  %v3484 = vpop.f32.mrf.mxu0
  %v3485 = vpop.f32.mrf.mxu0
  %v3486 = vadd.f32 0.0, %v3485
  %v3487 = vpop.f32.mrf.mxu0
  %3488 = vmatprep.mubr.bf16.mxu0 0
  %3489 = vmatmul.mubr.bf16.gmra.mxu0 %v2253
  %v3490 = vpop.f32.mrf.mxu0
  %v3491 = vadd.f32 0.0, %v3490
  %v3492 = vpop.f32.mrf.mxu0
  %v3493 = vpop.f32.mrf.mxu0
  %v3494 = vadd.f32 0.0, %v3493
  %v3495 = vpop.f32.mrf.mxu0
  %3496 = vmatprep.mubr.bf16.mxu0 0
  %3497 = vmatmul.mubr.bf16.gmra.mxu0 %v2256
  %v3498 = vpop.f32.mrf.mxu0
  %v3499 = vadd.f32 0.0, %v3498
  %v3500 = vpop.f32.mrf.mxu0
  %v3501 = vpop.f32.mrf.mxu0
  %v3502 = vadd.f32 0.0, %v3501
  %v3503 = vpop.f32.mrf.mxu0
  %3504 = vmatprep.mubr.bf16.mxu0 0
  %3505 = vmatmul.mubr.bf16.gmra.mxu0 %v2259
  %v3506 = vpop.f32.mrf.mxu0
  %v3507 = vadd.f32 0.0, %v3506
  %v3508 = vpop.f32.mrf.mxu0
  %v3509 = vpop.f32.mrf.mxu0
  %v3510 = vadd.f32 0.0, %v3509
  %v3511 = vpop.f32.mrf.mxu0
  %3512 = vmatprep.mubr.bf16.mxu0 0
  %3513 = vmatmul.mubr.bf16.gmra.mxu0 %v2262
  %v3514 = vpop.f32.mrf.mxu0
  %v3515 = vadd.f32 0.0, %v3514
  %v3516 = vpop.f32.mrf.mxu0
  %v3517 = vpop.f32.mrf.mxu0
  %v3518 = vadd.f32 0.0, %v3517
  %v3519 = vpop.f32.mrf.mxu0
  %3520 = vmatprep.mubr.bf16.mxu0 0
  %3521 = vmatmul.mubr.bf16.gmra.mxu0 %v2265
  %v3522 = vpop.f32.mrf.mxu0
  %v3523 = vadd.f32 0.0, %v3522
  %v3524 = vpop.f32.mrf.mxu0
  %v3525 = vpop.f32.mrf.mxu0
  %v3526 = vadd.f32 0.0, %v3525
  %v3527 = vpop.f32.mrf.mxu0
  %3528 = vmatprep.mubr.bf16.mxu0 0
  %3529 = vmatmul.mubr.bf16.gmra.mxu0 %v2268
  %v3530 = vpop.f32.mrf.mxu0
  %v3531 = vadd.f32 0.0, %v3530
  %v3532 = vpop.f32.mrf.mxu0
  %v3533 = vpop.f32.mrf.mxu0
  %v3534 = vadd.f32 0.0, %v3533
  %v3535 = vpop.f32.mrf.mxu0
  %3536 = vmatprep.mubr.bf16.mxu0 0
  %3537 = vmatmul.mubr.bf16.gmra.mxu0 %v2271
  %v3538 = vpop.f32.mrf.mxu0
  %v3539 = vadd.f32 0.0, %v3538
  %v3540 = vpop.f32.mrf.mxu0
  %v3541 = vpop.f32.mrf.mxu0
  %v3542 = vadd.f32 0.0, %v3541
  %v3543 = vpop.f32.mrf.mxu0
  %3544 = vmatprep.mubr.bf16.mxu0 0
  %3545 = vmatmul.mubr.bf16.gmra.mxu0 %v2274
  %v3546 = vpop.f32.mrf.mxu0
  %v3547 = vadd.f32 0.0, %v3546
  %v3548 = vpop.f32.mrf.mxu0
  %v3549 = vpop.f32.mrf.mxu0
  %v3550 = vadd.f32 0.0, %v3549
  %v3551 = vpop.f32.mrf.mxu0
  %3552 = vmatprep.mubr.bf16.mxu0 0
  %3553 = vmatmul.mubr.bf16.gmra.mxu0 %v2277
  %v3554 = vpop.f32.mrf.mxu0
  %v3555 = vadd.f32 0.0, %v3554
  %v3556 = vpop.f32.mrf.mxu0
  %v3557 = vpop.f32.mrf.mxu0
  %v3558 = vadd.f32 0.0, %v3557
  %v3559 = vpop.f32.mrf.mxu0
  %3560 = vmatprep.mubr.bf16.mxu0 0
  %3561 = vmatmul.mubr.bf16.gmra.mxu0 %v2280
  %v3562 = vpop.f32.mrf.mxu0
  %v3563 = vadd.f32 0.0, %v3562
  %v3564 = vpop.f32.mrf.mxu0
  %v3565 = vpop.f32.mrf.mxu0
  %v3566 = vadd.f32 0.0, %v3565
  %v3567 = vpop.f32.mrf.mxu0
  %3568 = vmatprep.mubr.bf16.mxu0 0
  %3569 = vmatmul.mubr.bf16.gmra.mxu0 %v2283
  %v3570 = vpop.f32.mrf.mxu0
  %v3571 = vadd.f32 0.0, %v3570
  %v3572 = vpop.f32.mrf.mxu0
  %v3573 = vpop.f32.mrf.mxu0
  %v3574 = vadd.f32 0.0, %v3573
  %v3575 = vpop.f32.mrf.mxu0
  %3576 = vmatprep.mubr.bf16.mxu0 0
  %3577 = vmatmul.mubr.bf16.gmra.mxu0 %v2286
  %v3578 = vpop.f32.mrf.mxu0
  %v3579 = vadd.f32 0.0, %v3578
  %v3580 = vpop.f32.mrf.mxu0
  %v3581 = vpop.f32.mrf.mxu0
  %v3582 = vadd.f32 0.0, %v3581
  %v3583 = vpop.f32.mrf.mxu0
  %3584 = vmatprep.mubr.bf16.mxu0 0
  %3585 = vmatmul.mubr.bf16.gmra.mxu0 %v2289
  %v3586 = vpop.f32.mrf.mxu0
  %v3587 = vadd.f32 0.0, %v3586
  %v3588 = vpop.f32.mrf.mxu0
  %v3589 = vpop.f32.mrf.mxu0
  %v3590 = vadd.f32 0.0, %v3589
  %v3591 = vpop.f32.mrf.mxu0
  %3592 = vmatprep.mubr.bf16.mxu0 0
  %3593 = vmatmul.mubr.bf16.gmra.mxu0 %v2292
  %v3594 = vpop.f32.mrf.mxu0
  %v3595 = vadd.f32 0.0, %v3594
  %v3596 = vpop.f32.mrf.mxu0
  %v3597 = vpop.f32.mrf.mxu0
  %v3598 = vadd.f32 0.0, %v3597
  %v3599 = vpop.f32.mrf.mxu0
  %3600 = vmatprep.mubr.bf16.mxu0 0
  %3601 = vmatmul.mubr.bf16.gmra.mxu0 %v2295
  %v3602 = vpop.f32.mrf.mxu0
  %v3603 = vadd.f32 0.0, %v3602
  %v3604 = vpop.f32.mrf.mxu0
  %v3605 = vpop.f32.mrf.mxu0
  %v3606 = vadd.f32 0.0, %v3605
  %v3607 = vpop.f32.mrf.mxu0
  %3608 = vmatprep.mubr.bf16.mxu0 0
  %3609 = vmatmul.mubr.bf16.gmra.mxu0 %v2298
  %v3610 = vpop.f32.mrf.mxu0
  %v3611 = vadd.f32 0.0, %v3610
  %v3612 = vpop.f32.mrf.mxu0
  %v3613 = vpop.f32.mrf.mxu0
  %v3614 = vadd.f32 0.0, %v3613
  %v3615 = vpop.f32.mrf.mxu0
  %3616 = vmatprep.mubr.bf16.mxu0 0
  %3617 = vmatmul.mubr.bf16.gmra.mxu0 %v2301
  %v3618 = vpop.f32.mrf.mxu0
  %v3619 = vadd.f32 0.0, %v3618
  %v3620 = vpop.f32.mrf.mxu0
  %v3621 = vpop.f32.mrf.mxu0
  %v3622 = vadd.f32 0.0, %v3621
  %v3623 = vpop.f32.mrf.mxu0
  %3624 = vmatprep.mubr.bf16.mxu0 0
  %3625 = vmatmul.mubr.bf16.gmra.mxu0 %v2304
  %v3626 = vpop.f32.mrf.mxu0
  %v3627 = vadd.f32 0.0, %v3626
  %v3628 = vpop.f32.mrf.mxu0
  %v3629 = vpop.f32.mrf.mxu0
  %v3630 = vadd.f32 0.0, %v3629
  %v3631 = vpop.f32.mrf.mxu0
  %3632 = vmatprep.mubr.bf16.mxu0 0
  %3633 = vmatmul.mubr.bf16.gmra.mxu0 %v2307
  %v3634 = vpop.f32.mrf.mxu0
  %v3635 = vadd.f32 0.0, %v3634
  %v3636 = vpop.f32.mrf.mxu0
  %v3637 = vpop.f32.mrf.mxu0
  %v3638 = vadd.f32 0.0, %v3637
  %v3639 = vpop.f32.mrf.mxu0
  %3640 = vmatprep.mubr.bf16.mxu0 0
  %3641 = vmatmul.mubr.bf16.gmra.mxu0 %v2310
  %v3642 = vpop.f32.mrf.mxu0
  %v3643 = vadd.f32 0.0, %v3642
  %v3644 = vpop.f32.mrf.mxu0
  %v3645 = vpop.f32.mrf.mxu0
  %v3646 = vadd.f32 0.0, %v3645
  %v3647 = vpop.f32.mrf.mxu0
  %3648 = vmatprep.mubr.bf16.mxu0 0
  %3649 = vmatmul.mubr.bf16.gmra.mxu0 %v2313
  %v3650 = vpop.f32.mrf.mxu0
  %v3651 = vadd.f32 0.0, %v3650
  %v3652 = vpop.f32.mrf.mxu0
  %v3653 = vpop.f32.mrf.mxu0
  %v3654 = vadd.f32 0.0, %v3653
  %v3655 = vpop.f32.mrf.mxu0
  %3656 = vmatprep.mubr.bf16.mxu0 0
  %3657 = vmatmul.mubr.bf16.gmra.mxu0 %v2316
  %v3658 = vpop.f32.mrf.mxu0
  %v3659 = vadd.f32 0.0, %v3658
  %v3660 = vpop.f32.mrf.mxu0
  %v3661 = vpop.f32.mrf.mxu0
  %v3662 = vadd.f32 0.0, %v3661
  %v3663 = vpop.f32.mrf.mxu0
  %3664 = vmatprep.mubr.bf16.mxu0 0
  %3665 = vmatmul.mubr.bf16.gmra.mxu0 %v2319
  %v3666 = vpop.f32.mrf.mxu0
  %v3667 = vadd.f32 0.0, %v3666
  %v3668 = vpop.f32.mrf.mxu0
  %v3669 = vpop.f32.mrf.mxu0
  %v3670 = vadd.f32 0.0, %v3669
  %v3671 = vpop.f32.mrf.mxu0
  %3672 = vmatprep.mubr.bf16.mxu0 0
  %3673 = vmatmul.mubr.bf16.gmra.mxu0 %v2322
  %v3674 = vpop.f32.mrf.mxu0
  %v3675 = vadd.f32 0.0, %v3674
  %v3676 = vpop.f32.mrf.mxu0
  %v3677 = vpop.f32.mrf.mxu0
  %v3678 = vadd.f32 0.0, %v3677
  %v3679 = vpop.f32.mrf.mxu0
  %3680 = vmatprep.mubr.bf16.mxu0 0
  %3681 = vmatmul.mubr.bf16.gmra.mxu0 %v2325
  %v3682 = vpop.f32.mrf.mxu0
  %v3683 = vadd.f32 0.0, %v3682
  %v3684 = vpop.f32.mrf.mxu0
  %v3685 = vpop.f32.mrf.mxu0
  %v3686 = vadd.f32 0.0, %v3685
  %v3687 = vpop.f32.mrf.mxu0
  %3688 = vmatprep.mubr.bf16.mxu0 0
  %3689 = vmatmul.mubr.bf16.gmra.mxu0 %v2328
  %v3690 = vpop.f32.mrf.mxu0
  %v3691 = vadd.f32 0.0, %v3690
  %v3692 = vpop.f32.mrf.mxu0
  %v3693 = vpop.f32.mrf.mxu0
  %v3694 = vadd.f32 0.0, %v3693
  %v3695 = vpop.f32.mrf.mxu0
  %3696 = vmatprep.mubr.bf16.mxu0 0
  %3697 = vmatmul.mubr.bf16.gmra.mxu0 %v2331
  %v3698 = vpop.f32.mrf.mxu0
  %v3699 = vadd.f32 0.0, %v3698
  %v3700 = vpop.f32.mrf.mxu0
  %v3701 = vpop.f32.mrf.mxu0
  %v3702 = vadd.f32 0.0, %v3701
  %v3703 = vpop.f32.mrf.mxu0
  %3704 = vmatprep.mubr.bf16.mxu0 0
  %3705 = vmatmul.mubr.bf16.gmra.mxu0 %v2334
  %v3706 = vpop.f32.mrf.mxu0
  %v3707 = vadd.f32 0.0, %v3706
  %v3708 = vpop.f32.mrf.mxu0
  %v3709 = vpop.f32.mrf.mxu0
  %v3710 = vadd.f32 0.0, %v3709
  %v3711 = vpop.f32.mrf.mxu0
  %3712 = vmatprep.mubr.bf16.mxu0 0
  %3713 = vmatmul.mubr.bf16.gmra.mxu0 %v2337
  %v3714 = vpop.f32.mrf.mxu0
  %v3715 = vadd.f32 0.0, %v3714
  %v3716 = vpop.f32.mrf.mxu0
  %v3717 = vpop.f32.mrf.mxu0
  %v3718 = vadd.f32 0.0, %v3717
  %v3719 = vpop.f32.mrf.mxu0
  %3720 = vmatprep.mubr.bf16.mxu0 0
  %3721 = vmatmul.mubr.bf16.gmra.mxu0 %v2340
  %v3722 = vpop.f32.mrf.mxu0
  %v3723 = vadd.f32 0.0, %v3722
  %v3724 = vpop.f32.mrf.mxu0
  %v3725 = vpop.f32.mrf.mxu0
  %v3726 = vadd.f32 0.0, %v3725
  %v3727 = vpop.f32.mrf.mxu0
  %3728 = vmatprep.mubr.bf16.mxu0 0
  %3729 = vmatmul.mubr.bf16.gmra.mxu0 %v2343
  %v3730 = vpop.f32.mrf.mxu0
  %v3731 = vadd.f32 0.0, %v3730
  %v3732 = vpop.f32.mrf.mxu0
  %v3733 = vpop.f32.mrf.mxu0
  %v3734 = vadd.f32 0.0, %v3733
  %v3735 = vpop.f32.mrf.mxu0
  %3736 = vmatprep.mubr.bf16.mxu0 0
  %3737 = vmatmul.mubr.bf16.gmra.mxu0 %v2346
  %v3738 = vpop.f32.mrf.mxu0
  %v3739 = vadd.f32 0.0, %v3738
  %v3740 = vpop.f32.mrf.mxu0
  %v3741 = vpop.f32.mrf.mxu0
  %v3742 = vadd.f32 0.0, %v3741
  %v3743 = vpop.f32.mrf.mxu0
  %3744 = vmatprep.mubr.bf16.mxu0 0
  %3745 = vmatmul.mubr.bf16.gmra.mxu0 %v2349
  %v3746 = vpop.f32.mrf.mxu0
  %v3747 = vadd.f32 0.0, %v3746
  %v3748 = vpop.f32.mrf.mxu0
  %v3749 = vpop.f32.mrf.mxu0
  %v3750 = vadd.f32 0.0, %v3749
  %v3751 = vpop.f32.mrf.mxu0
  %3752 = vmatprep.mubr.bf16.mxu0 0
  %3753 = vmatmul.mubr.bf16.gmra.mxu0 %v2352
  %v3754 = vpop.f32.mrf.mxu0
  %v3755 = vadd.f32 0.0, %v3754
  %v3756 = vpop.f32.mrf.mxu0
  %v3757 = vpop.f32.mrf.mxu0
  %v3758 = vadd.f32 0.0, %v3757
  %v3759 = vpop.f32.mrf.mxu0
  %3760 = vmatprep.mubr.bf16.mxu0 0
  %3761 = vmatmul.mubr.bf16.gmra.mxu0 %v2355
  %v3762 = vpop.f32.mrf.mxu0
  %v3763 = vadd.f32 0.0, %v3762
  %v3764 = vpop.f32.mrf.mxu0
  %v3765 = vpop.f32.mrf.mxu0
  %v3766 = vadd.f32 0.0, %v3765
  %v3767 = vpop.f32.mrf.mxu0
  %3768 = vmatprep.mubr.bf16.mxu0 0
  %3769 = vmatmul.mubr.bf16.gmra.mxu0 %v2358
  %v3770 = vpop.f32.mrf.mxu0
  %v3771 = vadd.f32 0.0, %v3770
  %v3772 = vpop.f32.mrf.mxu0
  %v3773 = vpop.f32.mrf.mxu0
  %v3774 = vadd.f32 0.0, %v3773
  %v3775 = vpop.f32.mrf.mxu0
  %3776 = vmatprep.mubr.bf16.mxu0 0
  %3777 = vmatmul.mubr.bf16.gmra.mxu0 %v2361
  %v3778 = vpop.f32.mrf.mxu0
  %v3779 = vadd.f32 0.0, %v3778
  %v3780 = vpop.f32.mrf.mxu0
  %v3781 = vpop.f32.mrf.mxu0
  %v3782 = vadd.f32 0.0, %v3781
  %v3783 = vpop.f32.mrf.mxu0
  %3784 = vmatprep.mubr.bf16.mxu0 0
  %3785 = vmatmul.mubr.bf16.gmra.mxu0 %v2364
  %v3786 = vpop.f32.mrf.mxu0
  %v3787 = vadd.f32 0.0, %v3786
  %v3788 = vpop.f32.mrf.mxu0
  %v3789 = vpop.f32.mrf.mxu0
  %v3790 = vadd.f32 0.0, %v3789
  %v3791 = vpop.f32.mrf.mxu0
  %3792 = vmatprep.mubr.bf16.mxu0 0
  %3793 = vmatmul.mubr.bf16.gmra.mxu0 %v2367
  %v3794 = vpop.f32.mrf.mxu0
  %v3795 = vadd.f32 0.0, %v3794
  %v3796 = vpop.f32.mrf.mxu0
  %v3797 = vpop.f32.mrf.mxu0
  %v3798 = vadd.f32 0.0, %v3797
  %v3799 = vpop.f32.mrf.mxu0
  %3800 = vmatprep.mubr.bf16.mxu0 0
  %3801 = vmatmul.mubr.bf16.gmra.mxu0 %v2370
  %v3802 = vpop.f32.mrf.mxu0
  %v3803 = vadd.f32 0.0, %v3802
  %v3804 = vpop.f32.mrf.mxu0
  %v3805 = vpop.f32.mrf.mxu0
  %v3806 = vadd.f32 0.0, %v3805
  %v3807 = vpop.f32.mrf.mxu0
  %3808 = vmatprep.mubr.bf16.mxu0 0
  %3809 = vmatmul.mubr.bf16.gmra.mxu0 %v2373
  %v3810 = vpop.f32.mrf.mxu0
  %v3811 = vadd.f32 0.0, %v3810
  %v3812 = vpop.f32.mrf.mxu0
  %v3813 = vpop.f32.mrf.mxu0
  %v3814 = vadd.f32 0.0, %v3813
  %v3815 = vpop.f32.mrf.mxu0
  %3816 = vmatprep.mubr.bf16.mxu0 0
  %3817 = vmatmul.mubr.bf16.gmra.mxu0 %v2376
  %v3818 = vpop.f32.mrf.mxu0
  %v3819 = vadd.f32 0.0, %v3818
  %v3820 = vpop.f32.mrf.mxu0
  %v3821 = vpop.f32.mrf.mxu0
  %v3822 = vadd.f32 0.0, %v3821
  %v3823 = vpop.f32.mrf.mxu0
  %3824 = vmatprep.mubr.bf16.mxu0 0
  %3825 = vmatmul.mubr.bf16.gmra.mxu0 %v2379
  %v3826 = vpop.f32.mrf.mxu0
  %v3827 = vadd.f32 0.0, %v3826
  %v3828 = vpop.f32.mrf.mxu0
  %v3829 = vpop.f32.mrf.mxu0
  %v3830 = vadd.f32 0.0, %v3829
  %v3831 = vpop.f32.mrf.mxu0
  %3832 = vmatprep.mubr.bf16.mxu0 0
  %3833 = vmatmul.mubr.bf16.gmra.mxu0 %v2382
  %v3834 = vpop.f32.mrf.mxu0
  %v3835 = vadd.f32 0.0, %v3834
  %v3836 = vpop.f32.mrf.mxu0
  %v3837 = vpop.f32.mrf.mxu0
  %v3838 = vadd.f32 0.0, %v3837
  %v3839 = vpop.f32.mrf.mxu0
  %3840 = vmatprep.mubr.bf16.mxu0 0
  %3841 = vmatmul.mubr.bf16.gmra.mxu0 %v2385
  %v3842 = vpop.f32.mrf.mxu0
  %v3843 = vadd.f32 0.0, %v3842
  %v3844 = vpop.f32.mrf.mxu0
  %v3845 = vpop.f32.mrf.mxu0
  %v3846 = vadd.f32 0.0, %v3845
  %v3847 = vpop.f32.mrf.mxu0
  %3848 = vmatprep.mubr.bf16.mxu0 0
  %3849 = vmatmul.mubr.bf16.gmra.mxu0 %v2388
  %v3850 = vpop.f32.mrf.mxu0
  %v3851 = vadd.f32 0.0, %v3850
  %v3852 = vpop.f32.mrf.mxu0
  %v3853 = vpop.f32.mrf.mxu0
  %v3854 = vadd.f32 0.0, %v3853
  %v3855 = vpop.f32.mrf.mxu0
  %3856 = vmatprep.mubr.bf16.mxu0 0
  %3857 = vmatmul.mubr.bf16.gmra.mxu0 %v2391
  %v3858 = vpop.f32.mrf.mxu0
  %v3859 = vadd.f32 0.0, %v3858
  %v3860 = vpop.f32.mrf.mxu0
  %v3861 = vpop.f32.mrf.mxu0
  %v3862 = vadd.f32 0.0, %v3861
  %v3863 = vpop.f32.mrf.mxu0
  %3864 = vmatprep.mubr.bf16.mxu0 0
  %3865 = vmatmul.mubr.bf16.gmra.mxu0 %v2394
  %v3866 = vpop.f32.mrf.mxu0
  %v3867 = vadd.f32 0.0, %v3866
  %v3868 = vpop.f32.mrf.mxu0
  %v3869 = vpop.f32.mrf.mxu0
  %v3870 = vadd.f32 0.0, %v3869
  %v3871 = vpop.f32.mrf.mxu0
  %3872 = vmatprep.mubr.bf16.mxu0 0
  %3873 = vmatmul.mubr.bf16.gmra.mxu0 %v2397
  %v3874 = vpop.f32.mrf.mxu0
  %v3875 = vadd.f32 0.0, %v3874
  %v3876 = vpop.f32.mrf.mxu0
  %v3877 = vpop.f32.mrf.mxu0
  %v3878 = vadd.f32 0.0, %v3877
  %v3879 = vpop.f32.mrf.mxu0
  %3880 = vmatprep.mubr.bf16.mxu0 0
  %3881 = vmatmul.mubr.bf16.gmra.mxu0 %v2400
  %v3882 = vpop.f32.mrf.mxu0
  %v3883 = vadd.f32 0.0, %v3882
  %v3884 = vpop.f32.mrf.mxu0
  %v3885 = vpop.f32.mrf.mxu0
  %v3886 = vadd.f32 0.0, %v3885
  %v3887 = vpop.f32.mrf.mxu0
  %3888 = vmatprep.mubr.bf16.mxu0 0
  %3889 = vmatmul.mubr.bf16.gmra.mxu0 %v2403
  %v3890 = vpop.f32.mrf.mxu0
  %v3891 = vadd.f32 0.0, %v3890
  %v3892 = vpop.f32.mrf.mxu0
  %v3893 = vpop.f32.mrf.mxu0
  %v3894 = vadd.f32 0.0, %v3893
  %v3895 = vpop.f32.mrf.mxu0
  %3896 = vmatprep.mubr.bf16.mxu0 0
  %3897 = vmatmul.mubr.bf16.gmra.mxu0 %v2406
  %v3898 = vpop.f32.mrf.mxu0
  %v3899 = vadd.f32 0.0, %v3898
  %v3900 = vpop.f32.mrf.mxu0
  %v3901 = vpop.f32.mrf.mxu0
  %v3902 = vadd.f32 0.0, %v3901
  %v3903 = vpop.f32.mrf.mxu0
  %3904 = vmatprep.mubr.bf16.mxu0 0
  %3905 = vmatmul.mubr.bf16.gmra.mxu0 %v2409
  %v3906 = vpop.f32.mrf.mxu0
  %v3907 = vadd.f32 0.0, %v3906
  %v3908 = vpop.f32.mrf.mxu0
  %v3909 = vpop.f32.mrf.mxu0
  %v3910 = vadd.f32 0.0, %v3909
  %v3911 = vpop.f32.mrf.mxu0
  %3912 = vmatprep.mubr.bf16.mxu0 0
  %3913 = vmatmul.mubr.bf16.gmra.mxu0 %v2412
  %v3914 = vpop.f32.mrf.mxu0
  %v3915 = vadd.f32 0.0, %v3914
  %v3916 = vpop.f32.mrf.mxu0
  %v3917 = vpop.f32.mrf.mxu0
  %v3918 = vadd.f32 0.0, %v3917
  %v3919 = vpop.f32.mrf.mxu0
  %3920 = vmatprep.mubr.bf16.mxu0 0
  %3921 = vmatmul.mubr.bf16.gmra.mxu0 %v2415
  %v3922 = vpop.f32.mrf.mxu0
  %v3923 = vadd.f32 0.0, %v3922
  %v3924 = vpop.f32.mrf.mxu0
  %v3925 = vpop.f32.mrf.mxu0
  %v3926 = vadd.f32 0.0, %v3925
  %v3927 = vpop.f32.mrf.mxu0
  %3928 = vmatprep.mubr.bf16.mxu0 0
  %3929 = vmatmul.mubr.bf16.gmra.mxu0 %v2418
  %v3930 = vpop.f32.mrf.mxu0
  %v3931 = vadd.f32 0.0, %v3930
  %v3932 = vpop.f32.mrf.mxu0
  %v3933 = vpop.f32.mrf.mxu0
  %v3934 = vadd.f32 0.0, %v3933
  %v3935 = vpop.f32.mrf.mxu0
  %3936 = vmatprep.mubr.bf16.mxu0 0
  %3937 = vmatmul.mubr.bf16.gmra.mxu0 %v2421
  %v3938 = vpop.f32.mrf.mxu0
  %v3939 = vadd.f32 0.0, %v3938
  %v3940 = vpop.f32.mrf.mxu0
  %v3941 = vpop.f32.mrf.mxu0
  %v3942 = vadd.f32 0.0, %v3941
  %v3943 = vpop.f32.mrf.mxu0
  %3944 = vmatprep.mubr.bf16.mxu0 0
  %3945 = vmatmul.mubr.bf16.gmra.mxu0 %v2424
  %v3946 = vpop.f32.mrf.mxu0
  %v3947 = vadd.f32 0.0, %v3946
  %v3948 = vpop.f32.mrf.mxu0
  %v3949 = vpop.f32.mrf.mxu0
  %v3950 = vadd.f32 0.0, %v3949
  %v3951 = vpop.f32.mrf.mxu0
  %3952 = vmatprep.mubr.bf16.mxu0 0
  %3953 = vmatmul.mubr.bf16.gmra.mxu0 %v2427
  %v3954 = vpop.f32.mrf.mxu0
  %v3955 = vadd.f32 0.0, %v3954
  %v3956 = vpop.f32.mrf.mxu0
  %v3957 = vpop.f32.mrf.mxu0
  %v3958 = vadd.f32 0.0, %v3957
  %v3959 = vpop.f32.mrf.mxu0
  %3960 = vmatprep.mubr.bf16.mxu0 0
  %3961 = vmatmul.mubr.bf16.gmra.mxu0 %v2430
  %v3962 = vpop.f32.mrf.mxu0
  %v3963 = vadd.f32 0.0, %v3962
  %v3964 = vpop.f32.mrf.mxu0
  %v3965 = vpop.f32.mrf.mxu0
  %v3966 = vadd.f32 0.0, %v3965
  %v3967 = vpop.f32.mrf.mxu0
  %3968 = vmatprep.mubr.bf16.mxu0 0
  %3969 = vmatmul.mubr.bf16.gmra.mxu0 %v2433
  %v3970 = vpop.f32.mrf.mxu0
  %v3971 = vadd.f32 0.0, %v3970
  %v3972 = vpop.f32.mrf.mxu0
  %v3973 = vpop.f32.mrf.mxu0
  %v3974 = vadd.f32 0.0, %v3973
  %v3975 = vpop.f32.mrf.mxu0
  %3976 = vmatprep.mubr.bf16.mxu0 0
  %3977 = vmatmul.mubr.bf16.gmra.mxu0 %v2436
  %v3978 = vpop.f32.mrf.mxu0
  %v3979 = vadd.f32 0.0, %v3978
  %v3980 = vpop.f32.mrf.mxu0
  %v3981 = vpop.f32.mrf.mxu0
  %v3982 = vadd.f32 0.0, %v3981
  %v3983 = vpop.f32.mrf.mxu0
  %3984 = vmatprep.mubr.bf16.mxu0 0
  %3985 = vmatmul.mubr.bf16.gmra.mxu0 %v2439
  %v3986 = vpop.f32.mrf.mxu0
  %v3987 = vadd.f32 0.0, %v3986
  %v3988 = vpop.f32.mrf.mxu0
  %v3989 = vpop.f32.mrf.mxu0
  %v3990 = vadd.f32 0.0, %v3989
  %v3991 = vpop.f32.mrf.mxu0
  %3992 = vmatprep.mubr.bf16.mxu0 0
  %3993 = vmatmul.mubr.bf16.gmra.mxu0 %v2442
  %v3994 = vpop.f32.mrf.mxu0
  %v3995 = vadd.f32 0.0, %v3994
  %v3996 = vpop.f32.mrf.mxu0
  %v3997 = vpop.f32.mrf.mxu0
  %v3998 = vadd.f32 0.0, %v3997
  %v3999 = vpop.f32.mrf.mxu0
  %4000 = vmatprep.mubr.bf16.mxu0 0
  %4001 = vmatmul.mubr.bf16.gmra.mxu0 %v2445
  %v4002 = vpop.f32.mrf.mxu0
  %v4003 = vadd.f32 0.0, %v4002
  %v4004 = vpop.f32.mrf.mxu0
  %v4005 = vpop.f32.mrf.mxu0
  %v4006 = vadd.f32 0.0, %v4005
  %v4007 = vpop.f32.mrf.mxu0
  %4008 = vmatprep.mubr.bf16.mxu0 0
  %4009 = vmatmul.mubr.bf16.gmra.mxu0 %v2448
  %v4010 = vpop.f32.mrf.mxu0
  %v4011 = vadd.f32 0.0, %v4010
  %v4012 = vpop.f32.mrf.mxu0
  %v4013 = vpop.f32.mrf.mxu0
  %v4014 = vadd.f32 0.0, %v4013
  %v4015 = vpop.f32.mrf.mxu0
  %4016 = vmatprep.mubr.bf16.mxu0 0
  %4017 = vmatmul.mubr.bf16.gmra.mxu0 %v2451
  %v4018 = vpop.f32.mrf.mxu0
  %v4019 = vadd.f32 0.0, %v4018
  %v4020 = vpop.f32.mrf.mxu0
  %v4021 = vpop.f32.mrf.mxu0
  %v4022 = vadd.f32 0.0, %v4021
  %v4023 = vpop.f32.mrf.mxu0
  %4024 = vmatprep.mubr.bf16.mxu0 0
  %4025 = vmatmul.mubr.bf16.gmra.mxu0 %v2454
  %v4026 = vpop.f32.mrf.mxu0
  %v4027 = vadd.f32 0.0, %v4026
  %v4028 = vpop.f32.mrf.mxu0
  %v4029 = vpop.f32.mrf.mxu0
  %v4030 = vadd.f32 0.0, %v4029
  %v4031 = vpop.f32.mrf.mxu0
  %4032 = vmatprep.mubr.bf16.mxu0 0
  %4033 = vmatmul.mubr.bf16.gmra.mxu0 %v2457
  %v4034 = vpop.f32.mrf.mxu0
  %v4035 = vadd.f32 0.0, %v4034
  %v4036 = vpop.f32.mrf.mxu0
  %v4037 = vpop.f32.mrf.mxu0
  %v4038 = vadd.f32 0.0, %v4037
  %v4039 = vpop.f32.mrf.mxu0
  %4040 = vmatprep.mubr.bf16.mxu0 0
  %4041 = vmatmul.mubr.bf16.gmra.mxu0 %v2460
  %v4042 = vpop.f32.mrf.mxu0
  %v4043 = vadd.f32 0.0, %v4042
  %v4044 = vpop.f32.mrf.mxu0
  %v4045 = vpop.f32.mrf.mxu0
  %v4046 = vadd.f32 0.0, %v4045
  %v4047 = vpop.f32.mrf.mxu0
  %4048 = vmatprep.mubr.bf16.mxu0 0
  %4049 = vmatmul.mubr.bf16.gmra.mxu0 %v2463
  %v4050 = vpop.f32.mrf.mxu0
  %v4051 = vadd.f32 0.0, %v4050
  %v4052 = vpop.f32.mrf.mxu0
  %v4053 = vpop.f32.mrf.mxu0
  %v4054 = vadd.f32 0.0, %v4053
  %v4055 = vpop.f32.mrf.mxu0
  %4056 = vmatprep.mubr.bf16.mxu0 0
  %4057 = vmatmul.mubr.bf16.gmra.mxu0 %v2466
  %v4058 = vpop.f32.mrf.mxu0
  %v4059 = vadd.f32 0.0, %v4058
  %v4060 = vpop.f32.mrf.mxu0
  %v4061 = vpop.f32.mrf.mxu0
  %v4062 = vadd.f32 0.0, %v4061
  %v4063 = vpop.f32.mrf.mxu0
  %4064 = vmatprep.mubr.bf16.mxu0 0
  %4065 = vmatmul.mubr.bf16.gmra.mxu0 %v2469
  %v4066 = vpop.f32.mrf.mxu0
  %v4067 = vadd.f32 0.0, %v4066
  %v4068 = vpop.f32.mrf.mxu0
  %v4069 = vpop.f32.mrf.mxu0
  %v4070 = vadd.f32 0.0, %v4069
  %v4071 = vpop.f32.mrf.mxu0
  %4072 = vmatprep.mubr.bf16.mxu0 0
  %4073 = vmatmul.mubr.bf16.gmra.mxu0 %v2472
  %v4074 = vpop.f32.mrf.mxu0
  %v4075 = vadd.f32 0.0, %v4074
  %v4076 = vpop.f32.mrf.mxu0
  %v4077 = vpop.f32.mrf.mxu0
  %v4078 = vadd.f32 0.0, %v4077
  %v4079 = vpop.f32.mrf.mxu0
  %4080 = vmatprep.mubr.bf16.mxu0 0
  %4081 = vmatmul.mubr.bf16.gmra.mxu0 %v2475
  %v4082 = vpop.f32.mrf.mxu0
  %v4083 = vadd.f32 0.0, %v4082
  %v4084 = vpop.f32.mrf.mxu0
  %v4085 = vpop.f32.mrf.mxu0
  %v4086 = vadd.f32 0.0, %v4085
  %v4087 = vpop.f32.mrf.mxu0
  %4088 = vmatprep.mubr.bf16.mxu0 0
  %4089 = vmatmul.mubr.bf16.gmra.mxu0 %v2478
  %v4090 = vpop.f32.mrf.mxu0
  %v4091 = vadd.f32 0.0, %v4090
  %v4092 = vpop.f32.mrf.mxu0
  %v4093 = vpop.f32.mrf.mxu0
  %v4094 = vadd.f32 0.0, %v4093
  %v4095 = vpop.f32.mrf.mxu0
  %4096 = vmatprep.mubr.bf16.mxu0 0
  %4097 = vmatmul.mubr.bf16.gmra.mxu0 %v2481
  %v4098 = vpop.f32.mrf.mxu0
  %v4099 = vadd.f32 0.0, %v4098
  %v4100 = vpop.f32.mrf.mxu0
  %v4101 = vpop.f32.mrf.mxu0
  %v4102 = vadd.f32 0.0, %v4101
  %v4103 = vpop.f32.mrf.mxu0
  %4104 = vmatprep.mubr.bf16.mxu0 0
  %4105 = vmatmul.mubr.bf16.gmra.mxu0 %v2484
  %v4106 = vpop.f32.mrf.mxu0
  %v4107 = vadd.f32 0.0, %v4106
  %v4108 = vpop.f32.mrf.mxu0
  %v4109 = vpop.f32.mrf.mxu0
  %v4110 = vadd.f32 0.0, %v4109
  %v4111 = vpop.f32.mrf.mxu0
  %4112 = vmatprep.mubr.bf16.mxu0 0
  %4113 = vmatmul.mubr.bf16.gmra.mxu0 %v2487
  %v4114 = vpop.f32.mrf.mxu0
  %v4115 = vadd.f32 0.0, %v4114
  %v4116 = vpop.f32.mrf.mxu0
  %v4117 = vpop.f32.mrf.mxu0
  %v4118 = vadd.f32 0.0, %v4117
  %v4119 = vpop.f32.mrf.mxu0
  %4120 = vmatprep.mubr.bf16.mxu0 0
  %4121 = vmatmul.mubr.bf16.gmra.mxu0 %v2490
  %v4122 = vpop.f32.mrf.mxu0
  %v4123 = vadd.f32 0.0, %v4122
  %v4124 = vpop.f32.mrf.mxu0
  %v4125 = vpop.f32.mrf.mxu0
  %v4126 = vadd.f32 0.0, %v4125
  %v4127 = vpop.f32.mrf.mxu0
  %4128 = vmatprep.mubr.bf16.mxu0 0
  %4129 = vmatmul.mubr.bf16.gmra.mxu0 %v2493
  %v4130 = vpop.f32.mrf.mxu0
  %v4131 = vadd.f32 0.0, %v4130
  %v4132 = vpop.f32.mrf.mxu0
  %v4133 = vpop.f32.mrf.mxu0
  %v4134 = vadd.f32 0.0, %v4133
  %v4135 = vpop.f32.mrf.mxu0
  %4136 = vmatprep.mubr.bf16.mxu0 0
  %4137 = vmatmul.mubr.bf16.gmra.mxu0 %v2496
  %v4138 = vpop.f32.mrf.mxu0
  %v4139 = vadd.f32 0.0, %v4138
  %v4140 = vpop.f32.mrf.mxu0
  %v4141 = vpop.f32.mrf.mxu0
  %v4142 = vadd.f32 0.0, %v4141
  %v4143 = vpop.f32.mrf.mxu0
  %4144 = vmatprep.mubr.bf16.mxu0 0
  %4145 = vmatmul.mubr.bf16.gmra.mxu0 %v2499
  %v4146 = vpop.f32.mrf.mxu0
  %v4147 = vadd.f32 0.0, %v4146
  %v4148 = vpop.f32.mrf.mxu0
  %v4149 = vpop.f32.mrf.mxu0
  %v4150 = vadd.f32 0.0, %v4149
  %v4151 = vpop.f32.mrf.mxu0
  %4152 = vmatprep.mubr.bf16.mxu0 0
  %4153 = vmatmul.mubr.bf16.gmra.mxu0 %v2502
  %v4154 = vpop.f32.mrf.mxu0
  %v4155 = vadd.f32 0.0, %v4154
  %v4156 = vpop.f32.mrf.mxu0
  %v4157 = vpop.f32.mrf.mxu0
  %v4158 = vadd.f32 0.0, %v4157
  %v4159 = vpop.f32.mrf.mxu0
  %4160 = vmatprep.mubr.bf16.mxu0 0
  %4161 = vmatmul.mubr.bf16.gmra.mxu0 %v2505
  %v4162 = vpop.f32.mrf.mxu0
  %v4163 = vadd.f32 0.0, %v4162
  %v4164 = vpop.f32.mrf.mxu0
  %v4165 = vpop.f32.mrf.mxu0
  %v4166 = vadd.f32 0.0, %v4165
  %v4167 = vpop.f32.mrf.mxu0
  %4168 = vmatprep.mubr.bf16.mxu0 0
  %4169 = vmatmul.mubr.bf16.gmra.mxu0 %v2508
  %v4170 = vpop.f32.mrf.mxu0
  %v4171 = vadd.f32 0.0, %v4170
  %v4172 = vpop.f32.mrf.mxu0
  %v4173 = vpop.f32.mrf.mxu0
  %v4174 = vadd.f32 0.0, %v4173
  %v4175 = vpop.f32.mrf.mxu0
  %4176 = vmatprep.mubr.bf16.mxu0 0
  %4177 = vmatmul.mubr.bf16.gmra.mxu0 %v2511
  %v4178 = vpop.f32.mrf.mxu0
  %v4179 = vadd.f32 0.0, %v4178
  %v4180 = vpop.f32.mrf.mxu0
  %v4181 = vpop.f32.mrf.mxu0
  %v4182 = vadd.f32 0.0, %v4181
  %v4183 = vpop.f32.mrf.mxu0
  %4184 = vmatprep.mubr.bf16.mxu0 0
  %4185 = vmatmul.mubr.bf16.gmra.mxu0 %v2514
  %v4186 = vpop.f32.mrf.mxu0
  %v4187 = vadd.f32 0.0, %v4186
  %v4188 = vpop.f32.mrf.mxu0
  %v4189 = vpop.f32.mrf.mxu0
  %v4190 = vadd.f32 0.0, %v4189
  %v4191 = vpop.f32.mrf.mxu0
  %4192 = vmatprep.mubr.bf16.mxu0 0
  %4193 = vmatmul.mubr.bf16.gmra.mxu0 %v2517
  %v4194 = vpop.f32.mrf.mxu0
  %v4195 = vadd.f32 0.0, %v4194
  %v4196 = vpop.f32.mrf.mxu0
  %v4197 = vpop.f32.mrf.mxu0
  %v4198 = vadd.f32 0.0, %v4197
  %v4199 = vpop.f32.mrf.mxu0
  %4200 = vmatprep.mubr.bf16.mxu0 0
  %4201 = vmatmul.mubr.bf16.gmra.mxu0 %v2520
  %v4202 = vpop.f32.mrf.mxu0
  %v4203 = vadd.f32 0.0, %v4202
  %v4204 = vpop.f32.mrf.mxu0
  %v4205 = vpop.f32.mrf.mxu0
  %v4206 = vadd.f32 0.0, %v4205
  %v4207 = vpop.f32.mrf.mxu0
  %4208 = vmatprep.mubr.bf16.mxu0 0
  %4209 = vmatmul.mubr.bf16.gmra.mxu0 %v2523
  %v4210 = vpop.f32.mrf.mxu0
  %v4211 = vadd.f32 0.0, %v4210
  %v4212 = vpop.f32.mrf.mxu0
  %v4213 = vpop.f32.mrf.mxu0
  %v4214 = vadd.f32 0.0, %v4213
  %v4215 = vpop.f32.mrf.mxu0
  %4216 = vmatprep.mubr.bf16.mxu0 0
  %4217 = vmatmul.mubr.bf16.gmra.mxu0 %v2526
  %v4218 = vpop.f32.mrf.mxu0
  %v4219 = vadd.f32 0.0, %v4218
  %v4220 = vpop.f32.mrf.mxu0
  %v4221 = vpop.f32.mrf.mxu0
  %v4222 = vadd.f32 0.0, %v4221
  %v4223 = vpop.f32.mrf.mxu0
  %4224 = vmatprep.mubr.bf16.mxu0 0
  %4225 = vmatmul.mubr.bf16.gmra.mxu0 %v2529
  %v4226 = vpop.f32.mrf.mxu0
  %v4227 = vadd.f32 0.0, %v4226
  %v4228 = vpop.f32.mrf.mxu0
  %v4229 = vpop.f32.mrf.mxu0
  %v4230 = vadd.f32 0.0, %v4229
  %v4231 = vpop.f32.mrf.mxu0
  %4232 = vmatprep.mubr.bf16.mxu0 0
  %4233 = vmatmul.mubr.bf16.gmra.mxu0 %v2532
  %v4234 = vpop.f32.mrf.mxu0
  %v4235 = vadd.f32 0.0, %v4234
  %v4236 = vpop.f32.mrf.mxu0
  %v4237 = vpop.f32.mrf.mxu0
  %v4238 = vadd.f32 0.0, %v4237
  %v4239 = vpop.f32.mrf.mxu0
  %4240 = vmatprep.mubr.bf16.mxu0 0
  %4241 = vmatmul.mubr.bf16.gmra.mxu0 %v2535
  %v4242 = vpop.f32.mrf.mxu0
  %v4243 = vadd.f32 0.0, %v4242
  %v4244 = vpop.f32.mrf.mxu0
  %v4245 = vpop.f32.mrf.mxu0
  %v4246 = vadd.f32 0.0, %v4245
  %v4247 = vpop.f32.mrf.mxu0
  %4248 = vmatprep.mubr.bf16.mxu0 0
  %4249 = vmatmul.mubr.bf16.gmra.mxu0 %v2538
  %v4250 = vpop.f32.mrf.mxu0
  %v4251 = vadd.f32 0.0, %v4250
  %v4252 = vpop.f32.mrf.mxu0
  %v4253 = vpop.f32.mrf.mxu0
  %v4254 = vadd.f32 0.0, %v4253
  %v4255 = vpop.f32.mrf.mxu0
  %4256 = vmatprep.mubr.bf16.mxu0 0
  %4257 = vmatmul.mubr.bf16.gmra.mxu0 %v2541
  %v4258 = vpop.f32.mrf.mxu0
  %v4259 = vadd.f32 0.0, %v4258
  %v4260 = vpop.f32.mrf.mxu0
  %v4261 = vpop.f32.mrf.mxu0
  %v4262 = vadd.f32 0.0, %v4261
  %v4263 = vpop.f32.mrf.mxu0
  %4264 = vmatprep.mubr.bf16.mxu0 0
  %4265 = vmatmul.mubr.bf16.gmra.mxu0 %v2544
  %v4266 = vpop.f32.mrf.mxu0
  %v4267 = vadd.f32 0.0, %v4266
  %v4268 = vpop.f32.mrf.mxu0
  %v4269 = vpop.f32.mrf.mxu0
  %v4270 = vadd.f32 0.0, %v4269
  %v4271 = vpop.f32.mrf.mxu0
  %4272 = vmatprep.mubr.bf16.mxu0 0
  %4273 = vmatmul.mubr.bf16.gmra.mxu0 %v2547
  %v4274 = vpop.f32.mrf.mxu0
  %v4275 = vadd.f32 0.0, %v4274
  %v4276 = vpop.f32.mrf.mxu0
  %v4277 = vpop.f32.mrf.mxu0
  %v4278 = vadd.f32 0.0, %v4277
  %v4279 = vpop.f32.mrf.mxu0
  %4280 = vmatprep.mubr.bf16.mxu0 0
  %4281 = vmatmul.mubr.bf16.gmra.mxu0 %v2550
  %v4282 = vpop.f32.mrf.mxu0
  %v4283 = vadd.f32 0.0, %v4282
  %v4284 = vpop.f32.mrf.mxu0
  %v4285 = vpop.f32.mrf.mxu0
  %v4286 = vadd.f32 0.0, %v4285
  %v4287 = vpop.f32.mrf.mxu0
  %4288 = vmatprep.mubr.bf16.mxu0 0
  %4289 = vmatmul.mubr.bf16.gmra.mxu0 %v2553
  %v4290 = vpop.f32.mrf.mxu0
  %v4291 = vadd.f32 0.0, %v4290
  %v4292 = vpop.f32.mrf.mxu0
  %v4293 = vpop.f32.mrf.mxu0
  %v4294 = vadd.f32 0.0, %v4293
  %v4295 = vpop.f32.mrf.mxu0
  %4296 = vmatprep.mubr.bf16.mxu0 0
  %4297 = vmatmul.mubr.bf16.gmra.mxu0 %v2556
  %v4298 = vpop.f32.mrf.mxu0
  %v4299 = vadd.f32 0.0, %v4298
  %v4300 = vpop.f32.mrf.mxu0
  %v4301 = vpop.f32.mrf.mxu0
  %v4302 = vadd.f32 0.0, %v4301
  %v4303 = vpop.f32.mrf.mxu0
  %4304 = vmatprep.mubr.bf16.mxu0 0
  %4305 = vmatmul.mubr.bf16.gmra.mxu0 %v2559
  %v4306 = vpop.f32.mrf.mxu0
  %v4307 = vadd.f32 0.0, %v4306
  %v4308 = vpop.f32.mrf.mxu0
  %v4309 = vpop.f32.mrf.mxu0
  %v4310 = vadd.f32 0.0, %v4309
  %v4311 = vpop.f32.mrf.mxu0
  %4312 = vmatprep.mubr.bf16.mxu0 0
  %4313 = vmatmul.mubr.bf16.gmra.mxu0 %v2562
  %v4314 = vpop.f32.mrf.mxu0
  %v4315 = vadd.f32 0.0, %v4314
  %v4316 = vpop.f32.mrf.mxu0
  %v4317 = vpop.f32.mrf.mxu0
  %v4318 = vadd.f32 0.0, %v4317
  %v4319 = vpop.f32.mrf.mxu0
  %4320 = vmatprep.mubr.bf16.mxu0 0
  %4321 = vmatmul.mubr.bf16.gmra.mxu0 %v2565
  %v4322 = vpop.f32.mrf.mxu0
  %v4323 = vadd.f32 0.0, %v4322
  %v4324 = vpop.f32.mrf.mxu0
  %v4325 = vpop.f32.mrf.mxu0
  %v4326 = vadd.f32 0.0, %v4325
  %v4327 = vpop.f32.mrf.mxu0
  %4328 = vmatprep.mubr.bf16.mxu0 0
  %4329 = vmatmul.mubr.bf16.gmra.mxu0 %v2568
  %v4330 = vpop.f32.mrf.mxu0
  %v4331 = vadd.f32 0.0, %v4330
  %v4332 = vpop.f32.mrf.mxu0
  %v4333 = vpop.f32.mrf.mxu0
  %v4334 = vadd.f32 0.0, %v4333
  %v4335 = vpop.f32.mrf.mxu0
  %4336 = vmatprep.mubr.bf16.mxu0 0
  %4337 = vmatmul.mubr.bf16.gmra.mxu0 %v2571
  %v4338 = vpop.f32.mrf.mxu0
  %v4339 = vadd.f32 0.0, %v4338
  %v4340 = vpop.f32.mrf.mxu0
  %v4341 = vpop.f32.mrf.mxu0
  %v4342 = vadd.f32 0.0, %v4341
  %v4343 = vpop.f32.mrf.mxu0
  %4344 = vmatprep.mubr.bf16.mxu0 0
  %4345 = vmatmul.mubr.bf16.gmra.mxu0 %v2574
  %v4346 = vpop.f32.mrf.mxu0
  %v4347 = vadd.f32 0.0, %v4346
  %v4348 = vpop.f32.mrf.mxu0
  %v4349 = vpop.f32.mrf.mxu0
  %v4350 = vadd.f32 0.0, %v4349
  %v4351 = vpop.f32.mrf.mxu0
  %4352 = vmatprep.mubr.bf16.mxu0 0
  %4353 = vmatmul.mubr.bf16.gmra.mxu0 %v2577
  %v4354 = vpop.f32.mrf.mxu0
  %v4355 = vadd.f32 0.0, %v4354
  %v4356 = vpop.f32.mrf.mxu0
  %v4357 = vpop.f32.mrf.mxu0
  %v4358 = vadd.f32 0.0, %v4357
  %v4359 = vpop.f32.mrf.mxu0
  %4360 = vmatprep.mubr.bf16.mxu0 0
  %4361 = vmatmul.mubr.bf16.gmra.mxu0 %v2580
  %v4362 = vpop.f32.mrf.mxu0
  %v4363 = vadd.f32 0.0, %v4362
  %v4364 = vpop.f32.mrf.mxu0
  %v4365 = vpop.f32.mrf.mxu0
  %v4366 = vadd.f32 0.0, %v4365
  %v4367 = vpop.f32.mrf.mxu0
  %4368 = vmatprep.mubr.bf16.mxu0 0
  %4369 = vmatmul.mubr.bf16.gmra.mxu0 %v2583
  %v4370 = vpop.f32.mrf.mxu0
  %v4371 = vadd.f32 0.0, %v4370
  %v4372 = vpop.f32.mrf.mxu0
  %v4373 = vpop.f32.mrf.mxu0
  %v4374 = vadd.f32 0.0, %v4373
  %v4375 = vpop.f32.mrf.mxu0
  %4376 = vmatprep.mubr.bf16.mxu0 0
  %4377 = vmatmul.mubr.bf16.gmra.mxu0 %v2586
  %v4378 = vpop.f32.mrf.mxu0
  %v4379 = vadd.f32 0.0, %v4378
  %v4380 = vpop.f32.mrf.mxu0
  %v4381 = vpop.f32.mrf.mxu0
  %v4382 = vadd.f32 0.0, %v4381
  %v4383 = vpop.f32.mrf.mxu0
  %4384 = vmatprep.mubr.bf16.mxu0 0
  %4385 = vmatmul.mubr.bf16.gmra.mxu0 %v2589
  %v4386 = vpop.f32.mrf.mxu0
  %v4387 = vadd.f32 0.0, %v4386
  %v4388 = vpop.f32.mrf.mxu0
  %v4389 = vpop.f32.mrf.mxu0
  %v4390 = vadd.f32 0.0, %v4389
  %v4391 = vpop.f32.mrf.mxu0
  %4392 = vmatprep.mubr.bf16.mxu0 0
  %4393 = vmatmul.mubr.bf16.gmra.mxu0 %v2592
  %v4394 = vpop.f32.mrf.mxu0
  %v4395 = vadd.f32 0.0, %v4394
  %v4396 = vpop.f32.mrf.mxu0
  %v4397 = vpop.f32.mrf.mxu0
  %v4398 = vadd.f32 0.0, %v4397
  %v4399 = vpop.f32.mrf.mxu0
  %4400 = vmatprep.mubr.bf16.mxu0 0
  %4401 = vmatmul.mubr.bf16.gmra.mxu0 %v2595
  %v4402 = vpop.f32.mrf.mxu0
  %v4403 = vadd.f32 0.0, %v4402
  %v4404 = vpop.f32.mrf.mxu0
  %v4405 = vpop.f32.mrf.mxu0
  %v4406 = vadd.f32 0.0, %v4405
  %v4407 = vpop.f32.mrf.mxu0
  %4408 = vmatprep.mubr.bf16.mxu0 0
  %4409 = vmatmul.mubr.bf16.gmra.mxu0 %v2598
  %v4410 = vpop.f32.mrf.mxu0
  %v4411 = vadd.f32 0.0, %v4410
  %v4412 = vpop.f32.mrf.mxu0
  %v4413 = vpop.f32.mrf.mxu0
  %v4414 = vadd.f32 0.0, %v4413
  %v4415 = vpop.f32.mrf.mxu0
  %4416 = vmatprep.mubr.bf16.mxu0 0
  %4417 = vmatmul.mubr.bf16.gmra.mxu0 %v2601
  %v4418 = vpop.f32.mrf.mxu0
  %v4419 = vadd.f32 0.0, %v4418
  %v4420 = vpop.f32.mrf.mxu0
  %v4421 = vpop.f32.mrf.mxu0
  %v4422 = vadd.f32 0.0, %v4421
  %v4423 = vpop.f32.mrf.mxu0
  %4424 = vmatprep.mubr.bf16.mxu0 0
  %4425 = vmatmul.mubr.bf16.gmra.mxu0 %v2604
  %v4426 = vpop.f32.mrf.mxu0
  %v4427 = vadd.f32 0.0, %v4426
  %v4428 = vpop.f32.mrf.mxu0
  %v4429 = vpop.f32.mrf.mxu0
  %v4430 = vadd.f32 0.0, %v4429
  %v4431 = vpop.f32.mrf.mxu0
  %4432 = vmatprep.mubr.bf16.mxu0 0
  %4433 = vmatmul.mubr.bf16.gmra.mxu0 %v2607
  %v4434 = vpop.f32.mrf.mxu0
  %v4435 = vadd.f32 0.0, %v4434
  %v4436 = vpop.f32.mrf.mxu0
  %v4437 = vpop.f32.mrf.mxu0
  %v4438 = vadd.f32 0.0, %v4437
  %v4439 = vpop.f32.mrf.mxu0
  %4440 = vmatprep.mubr.bf16.mxu0 0
  %4441 = vmatmul.mubr.bf16.gmra.mxu0 %v2610
  %v4442 = vpop.f32.mrf.mxu0
  %v4443 = vadd.f32 0.0, %v4442
  %v4444 = vpop.f32.mrf.mxu0
  %v4445 = vpop.f32.mrf.mxu0
  %v4446 = vadd.f32 0.0, %v4445
  %v4447 = vpop.f32.mrf.mxu0
  %4448 = vmatprep.mubr.bf16.mxu0 0
  %4449 = vmatmul.mubr.bf16.gmra.mxu0 %v2613
  %v4450 = vpop.f32.mrf.mxu0
  %v4451 = vadd.f32 0.0, %v4450
  %v4452 = vpop.f32.mrf.mxu0
  %v4453 = vpop.f32.mrf.mxu0
  %v4454 = vadd.f32 0.0, %v4453
  %v4455 = vpop.f32.mrf.mxu0
  %4456 = vmatprep.mubr.bf16.mxu0 0
  %4457 = vmatmul.mubr.bf16.gmra.mxu0 %v2616
  %v4458 = vpop.f32.mrf.mxu0
  %v4459 = vadd.f32 0.0, %v4458
  %v4460 = vpop.f32.mrf.mxu0
  %v4461 = vpop.f32.mrf.mxu0
  %v4462 = vadd.f32 0.0, %v4461
  %v4463 = vpop.f32.mrf.mxu0
  %4464 = vmatprep.mubr.bf16.mxu0 0
  %4465 = vmatmul.mubr.bf16.gmra.mxu0 %v2619
  %v4466 = vpop.f32.mrf.mxu0
  %v4467 = vadd.f32 0.0, %v4466
  %v4468 = vpop.f32.mrf.mxu0
  %v4469 = vpop.f32.mrf.mxu0
  %v4470 = vadd.f32 0.0, %v4469
  %v4471 = vpop.f32.mrf.mxu0
  %4472 = vmatprep.mubr.bf16.mxu0 0
  %4473 = vmatmul.mubr.bf16.gmra.mxu0 %v2622
  %v4474 = vpop.f32.mrf.mxu0
  %v4475 = vadd.f32 0.0, %v4474
  %v4476 = vpop.f32.mrf.mxu0
  %v4477 = vpop.f32.mrf.mxu0
  %v4478 = vadd.f32 0.0, %v4477
  %v4479 = vpop.f32.mrf.mxu0
  %4480 = vmatprep.mubr.bf16.mxu0 0
  %4481 = vmatmul.mubr.bf16.gmra.mxu0 %v2625
  %v4482 = vpop.f32.mrf.mxu0
  %v4483 = vadd.f32 0.0, %v4482
  %v4484 = vpop.f32.mrf.mxu0
  %v4485 = vpop.f32.mrf.mxu0
  %v4486 = vadd.f32 0.0, %v4485
  %v4487 = vpop.f32.mrf.mxu0
  %4488 = vmatprep.mubr.bf16.mxu0 0
  %4489 = vmatmul.mubr.bf16.gmra.mxu0 %v2628
  %v4490 = vpop.f32.mrf.mxu0
  %v4491 = vadd.f32 0.0, %v4490
  %v4492 = vpop.f32.mrf.mxu0
  %v4493 = vpop.f32.mrf.mxu0
  %v4494 = vadd.f32 0.0, %v4493
  %v4495 = vpop.f32.mrf.mxu0
  %4496 = vmatprep.mubr.bf16.mxu0 0
  %4497 = vmatmul.mubr.bf16.gmra.mxu0 %v2631
  %v4498 = vpop.f32.mrf.mxu0
  %v4499 = vadd.f32 0.0, %v4498
  %v4500 = vpop.f32.mrf.mxu0
  %v4501 = vpop.f32.mrf.mxu0
  %v4502 = vadd.f32 0.0, %v4501
  %v4503 = vpop.f32.mrf.mxu0
  %4504 = vmatprep.mubr.bf16.mxu0 0
  %4505 = vmatmul.mubr.bf16.gmra.mxu0 %v2634
  %v4506 = vpop.f32.mrf.mxu0
  %v4507 = vadd.f32 0.0, %v4506
  %v4508 = vpop.f32.mrf.mxu0
  %v4509 = vpop.f32.mrf.mxu0
  %v4510 = vadd.f32 0.0, %v4509
  %v4511 = vpop.f32.mrf.mxu0
  %4512 = vmatprep.mubr.bf16.mxu0 0
  %4513 = vmatmul.mubr.bf16.gmra.mxu0 %v2637
  %v4514 = vpop.f32.mrf.mxu0
  %v4515 = vadd.f32 0.0, %v4514
  %v4516 = vpop.f32.mrf.mxu0
  %v4517 = vpop.f32.mrf.mxu0
  %v4518 = vadd.f32 0.0, %v4517
  %v4519 = vpop.f32.mrf.mxu0
  %4520 = vmatprep.mubr.bf16.mxu0 0
  %4521 = vmatmul.mubr.bf16.gmra.mxu0 %v2640
  %v4522 = vpop.f32.mrf.mxu0
  %v4523 = vadd.f32 0.0, %v4522
  %v4524 = vpop.f32.mrf.mxu0
  %v4525 = vpop.f32.mrf.mxu0
  %v4526 = vadd.f32 0.0, %v4525
  %v4527 = vpop.f32.mrf.mxu0
  %4528 = vmatprep.mubr.bf16.mxu0 0
  %4529 = vmatmul.mubr.bf16.gmra.mxu0 %v2643
  %v4530 = vpop.f32.mrf.mxu0
  %v4531 = vadd.f32 0.0, %v4530
  %v4532 = vpop.f32.mrf.mxu0
  %v4533 = vpop.f32.mrf.mxu0
  %v4534 = vadd.f32 0.0, %v4533
  %v4535 = vpop.f32.mrf.mxu0
  %4536 = vmatprep.mubr.bf16.mxu0 0
  %4537 = vmatmul.mubr.bf16.gmra.mxu0 %v2646
  %v4538 = vpop.f32.mrf.mxu0
  %v4539 = vadd.f32 0.0, %v4538
  %v4540 = vpop.f32.mrf.mxu0
  %v4541 = vpop.f32.mrf.mxu0
  %v4542 = vadd.f32 0.0, %v4541
  %v4543 = vpop.f32.mrf.mxu0
  %4544 = vmatprep.mubr.bf16.mxu0 0
  %4545 = vmatmul.mubr.bf16.gmra.mxu0 %v2649
  %v4546 = vpop.f32.mrf.mxu0
  %v4547 = vadd.f32 0.0, %v4546
  %v4548 = vpop.f32.mrf.mxu0
  %v4549 = vpop.f32.mrf.mxu0
  %v4550 = vadd.f32 0.0, %v4549
  %v4551 = vpop.f32.mrf.mxu0
  %4552 = vmatprep.mubr.bf16.mxu0 0
  %4553 = vmatmul.mubr.bf16.gmra.mxu0 %v2652
  %v4554 = vpop.f32.mrf.mxu0
  %v4555 = vadd.f32 0.0, %v4554
  %v4556 = vpop.f32.mrf.mxu0
  %v4557 = vpop.f32.mrf.mxu0
  %v4558 = vadd.f32 0.0, %v4557
  %v4559 = vpop.f32.mrf.mxu0
  %4560 = vmatprep.mubr.bf16.mxu0 0
  %4561 = vmatmul.mubr.bf16.gmra.mxu0 %v2655
  %v4562 = vpop.f32.mrf.mxu0
  %v4563 = vadd.f32 0.0, %v4562
  %v4564 = vpop.f32.mrf.mxu0
  %v4565 = vpop.f32.mrf.mxu0
  %v4566 = vadd.f32 0.0, %v4565
  %v4567 = vpop.f32.mrf.mxu0
  %4568 = vmatprep.mubr.bf16.mxu0 0
  %4569 = vmatmul.mubr.bf16.gmra.mxu0 %v2658
  %v4570 = vpop.f32.mrf.mxu0
  %v4571 = vadd.f32 0.0, %v4570
  %v4572 = vpop.f32.mrf.mxu0
  %v4573 = vpop.f32.mrf.mxu0
  %v4574 = vadd.f32 0.0, %v4573
  %v4575 = vpop.f32.mrf.mxu0
  %4576 = vmatprep.mubr.bf16.mxu0 0
  %4577 = vmatmul.mubr.bf16.gmra.mxu0 %v2661
  %v4578 = vpop.f32.mrf.mxu0
  %v4579 = vadd.f32 0.0, %v4578
  %v4580 = vpop.f32.mrf.mxu0
  %v4581 = vpop.f32.mrf.mxu0
  %v4582 = vadd.f32 0.0, %v4581
  %v4583 = vpop.f32.mrf.mxu0
  %4584 = vmatprep.mubr.bf16.mxu0 0
  %4585 = vmatmul.mubr.bf16.gmra.mxu0 %v2664
  %v4586 = vpop.f32.mrf.mxu0
  %v4587 = vadd.f32 0.0, %v4586
  %v4588 = vpop.f32.mrf.mxu0
  %v4589 = vpop.f32.mrf.mxu0
  %v4590 = vadd.f32 0.0, %v4589
  %v4591 = vpop.f32.mrf.mxu0
  %4592 = vmatprep.mubr.bf16.mxu0 0
  %4593 = vmatmul.mubr.bf16.gmra.mxu0 %v2667
  %v4594 = vpop.f32.mrf.mxu0
  %v4595 = vadd.f32 0.0, %v4594
  %v4596 = vpop.f32.mrf.mxu0
  %v4597 = vpop.f32.mrf.mxu0
  %v4598 = vadd.f32 0.0, %v4597
  %v4599 = vpop.f32.mrf.mxu0
  %4600 = vmatprep.mubr.bf16.mxu0 0
  %4601 = vmatmul.mubr.bf16.gmra.mxu0 %v2670
  %v4602 = vpop.f32.mrf.mxu0
  %v4603 = vadd.f32 0.0, %v4602
  %v4604 = vpop.f32.mrf.mxu0
  %v4605 = vpop.f32.mrf.mxu0
  %v4606 = vadd.f32 0.0, %v4605
  %v4607 = vpop.f32.mrf.mxu0
  %4608 = vmatprep.mubr.bf16.mxu0 0
  %4609 = vmatmul.mubr.bf16.gmra.mxu0 %v2673
  %v4610 = vpop.f32.mrf.mxu0
  %v4611 = vadd.f32 0.0, %v4610
  %v4612 = vpop.f32.mrf.mxu0
  %v4613 = vpop.f32.mrf.mxu0
  %v4614 = vadd.f32 0.0, %v4613
  %v4615 = vpop.f32.mrf.mxu0
  %4616 = vmatprep.mubr.bf16.mxu0 0
  %4617 = vmatmul.mubr.bf16.gmra.mxu0 %v2676
  %v4618 = vpop.f32.mrf.mxu0
  %v4619 = vadd.f32 0.0, %v4618
  %v4620 = vpop.f32.mrf.mxu0
  %v4621 = vpop.f32.mrf.mxu0
  %v4622 = vadd.f32 0.0, %v4621
  %v4623 = vpop.f32.mrf.mxu0
  %4624 = vmatprep.mubr.bf16.mxu0 0
  %4625 = vmatmul.mubr.bf16.gmra.mxu0 %v2679
  %v4626 = vpop.f32.mrf.mxu0
  %v4627 = vadd.f32 0.0, %v4626
  %v4628 = vpop.f32.mrf.mxu0
  %v4629 = vpop.f32.mrf.mxu0
  %v4630 = vadd.f32 0.0, %v4629
  %v4631 = vpop.f32.mrf.mxu0
  %4632 = vmatprep.mubr.bf16.mxu0 0
  %4633 = vmatmul.mubr.bf16.gmra.mxu0 %v2682
  %v4634 = vpop.f32.mrf.mxu0
  %v4635 = vadd.f32 0.0, %v4634
  %v4636 = vpop.f32.mrf.mxu0
  %v4637 = vpop.f32.mrf.mxu0
  %v4638 = vadd.f32 0.0, %v4637
  %v4639 = vpop.f32.mrf.mxu0
  %4640 = vmatprep.mubr.bf16.mxu0 0
  %4641 = vmatmul.mubr.bf16.gmra.mxu0 %v2685
  %v4642 = vpop.f32.mrf.mxu0
  %v4643 = vadd.f32 0.0, %v4642
  %v4644 = vpop.f32.mrf.mxu0
  %v4645 = vpop.f32.mrf.mxu0
  %v4646 = vadd.f32 0.0, %v4645
  %v4647 = vpop.f32.mrf.mxu0
  %4648 = vmatprep.mubr.bf16.mxu0 0
  %4649 = vmatmul.mubr.bf16.gmra.mxu0 %v2688
  %v4650 = vpop.f32.mrf.mxu0
  %v4651 = vadd.f32 0.0, %v4650
  %v4652 = vpop.f32.mrf.mxu0
  %v4653 = vpop.f32.mrf.mxu0
  %v4654 = vadd.f32 0.0, %v4653
  %v4655 = vpop.f32.mrf.mxu0
  %4656 = vmatprep.mubr.bf16.mxu0 0
  %4657 = vmatmul.mubr.bf16.gmra.mxu0 %v2691
  %v4658 = vpop.f32.mrf.mxu0
  %v4659 = vadd.f32 0.0, %v4658
  %v4660 = vpop.f32.mrf.mxu0
  %v4661 = vpop.f32.mrf.mxu0
  %v4662 = vadd.f32 0.0, %v4661
  %v4663 = vpop.f32.mrf.mxu0
  %4664 = vmatprep.mubr.bf16.mxu0 0
  %4665 = vmatmul.mubr.bf16.gmra.mxu0 %v2694
  %v4666 = vpop.f32.mrf.mxu0
  %v4667 = vadd.f32 0.0, %v4666
  %v4668 = vpop.f32.mrf.mxu0
  %v4669 = vpop.f32.mrf.mxu0
  %v4670 = vadd.f32 0.0, %v4669
  %v4671 = vpop.f32.mrf.mxu0
  %4672 = vmatprep.mubr.bf16.mxu0 0
  %4673 = vmatmul.mubr.bf16.gmra.mxu0 %v2697
  %v4674 = vpop.f32.mrf.mxu0
  %v4675 = vadd.f32 0.0, %v4674
  %v4676 = vpop.f32.mrf.mxu0
  %v4677 = vpop.f32.mrf.mxu0
  %v4678 = vadd.f32 0.0, %v4677
  %v4679 = vpop.f32.mrf.mxu0
  %4680 = vmatprep.mubr.bf16.mxu0 0
  %4681 = vmatmul.mubr.bf16.gmra.mxu0 %v2700
  %v4682 = vpop.f32.mrf.mxu0
  %v4683 = vadd.f32 0.0, %v4682
  %v4684 = vpop.f32.mrf.mxu0
  %v4685 = vpop.f32.mrf.mxu0
  %v4686 = vadd.f32 0.0, %v4685
  %v4687 = vpop.f32.mrf.mxu0
  %4688 = vmatprep.mubr.bf16.mxu0 0
  %4689 = vmatmul.mubr.bf16.gmra.mxu0 %v2703
  %v4690 = vpop.f32.mrf.mxu0
  %v4691 = vadd.f32 0.0, %v4690
  %v4692 = vpop.f32.mrf.mxu0
  %v4693 = vpop.f32.mrf.mxu0
  %v4694 = vadd.f32 0.0, %v4693
  %v4695 = vpop.f32.mrf.mxu0
  %4696 = vmatprep.mubr.bf16.mxu0 0
  %4697 = vmatmul.mubr.bf16.gmra.mxu0 %v2706
  %v4698 = vpop.f32.mrf.mxu0
  %v4699 = vadd.f32 0.0, %v4698
  %v4700 = vpop.f32.mrf.mxu0
  %v4701 = vpop.f32.mrf.mxu0
  %v4702 = vadd.f32 0.0, %v4701
  %v4703 = vpop.f32.mrf.mxu0
  %4704 = vmatprep.mubr.bf16.mxu0 0
  %4705 = vmatmul.mubr.bf16.gmra.mxu0 %v2709
  %v4706 = vpop.f32.mrf.mxu0
  %v4707 = vadd.f32 0.0, %v4706
  %v4708 = vpop.f32.mrf.mxu0
  %v4709 = vpop.f32.mrf.mxu0
  %v4710 = vadd.f32 0.0, %v4709
  %v4711 = vpop.f32.mrf.mxu0
  %4712 = vmatprep.mubr.bf16.mxu0 0
  %4713 = vmatmul.mubr.bf16.gmra.mxu0 %v2712
  %v4714 = vpop.f32.mrf.mxu0
  %v4715 = vadd.f32 0.0, %v4714
  %v4716 = vpop.f32.mrf.mxu0
  %v4717 = vpop.f32.mrf.mxu0
  %v4718 = vadd.f32 0.0, %v4717
  %v4719 = vpop.f32.mrf.mxu0
  %4720 = vmatprep.mubr.bf16.mxu0 0
  %4721 = vmatmul.mubr.bf16.gmra.mxu0 %v2715
  %v4722 = vpop.f32.mrf.mxu0
  %v4723 = vadd.f32 0.0, %v4722
  %v4724 = vpop.f32.mrf.mxu0
  %v4725 = vpop.f32.mrf.mxu0
  %v4726 = vadd.f32 0.0, %v4725
  %v4727 = vpop.f32.mrf.mxu0
  %4728 = vmatprep.mubr.bf16.mxu0 0
  %4729 = vmatmul.mubr.bf16.gmra.mxu0 %v2718
  %v4730 = vpop.f32.mrf.mxu0
  %v4731 = vadd.f32 0.0, %v4730
  %v4732 = vpop.f32.mrf.mxu0
  %v4733 = vpop.f32.mrf.mxu0
  %v4734 = vadd.f32 0.0, %v4733
  %v4735 = vpop.f32.mrf.mxu0
  %4736 = vmatprep.mubr.bf16.mxu0 0
  %4737 = vmatmul.mubr.bf16.gmra.mxu0 %v2721
  %v4738 = vpop.f32.mrf.mxu0
  %v4739 = vadd.f32 0.0, %v4738
  %v4740 = vpop.f32.mrf.mxu0
  %v4741 = vpop.f32.mrf.mxu0
  %v4742 = vadd.f32 0.0, %v4741
  %v4743 = vpop.f32.mrf.mxu0
  %4744 = vmatprep.mubr.bf16.mxu0 0
  %4745 = vmatmul.mubr.bf16.gmra.mxu0 %v2724
  %v4746 = vpop.f32.mrf.mxu0
  %v4747 = vadd.f32 0.0, %v4746
  %v4748 = vpop.f32.mrf.mxu0
  %v4749 = vpop.f32.mrf.mxu0
  %v4750 = vadd.f32 0.0, %v4749
  %v4751 = vpop.f32.mrf.mxu0
  %4752 = vmatprep.mubr.bf16.mxu0 0
  %4753 = vmatmul.mubr.bf16.gmra.mxu0 %v2727
  %v4754 = vpop.f32.mrf.mxu0
  %v4755 = vadd.f32 0.0, %v4754
  %v4756 = vpop.f32.mrf.mxu0
  %v4757 = vpop.f32.mrf.mxu0
  %v4758 = vadd.f32 0.0, %v4757
  %v4759 = vpop.f32.mrf.mxu0
  %4760 = vmatprep.mubr.bf16.mxu0 0
  %4761 = vmatmul.mubr.bf16.gmra.mxu0 %v2730
  %v4762 = vpop.f32.mrf.mxu0
  %v4763 = vadd.f32 0.0, %v4762
  %v4764 = vpop.f32.mrf.mxu0
  %v4765 = vpop.f32.mrf.mxu0
  %v4766 = vadd.f32 0.0, %v4765
  %v4767 = vpop.f32.mrf.mxu0
  %4768 = vmatprep.mubr.bf16.mxu0 0
  %4769 = vmatmul.mubr.bf16.gmra.mxu0 %v2733
  %v4770 = vpop.f32.mrf.mxu0
  %v4771 = vadd.f32 0.0, %v4770
  %v4772 = vpop.f32.mrf.mxu0
  %v4773 = vpop.f32.mrf.mxu0
  %v4774 = vadd.f32 0.0, %v4773
  %v4775 = vpop.f32.mrf.mxu0
  %4776 = vmatprep.mubr.bf16.mxu0 0
  %4777 = vmatmul.mubr.bf16.gmra.mxu0 %v2736
  %v4778 = vpop.f32.mrf.mxu0
  %v4779 = vadd.f32 0.0, %v4778
  %v4780 = vpop.f32.mrf.mxu0
  %v4781 = vpop.f32.mrf.mxu0
  %v4782 = vadd.f32 0.0, %v4781
  %v4783 = vpop.f32.mrf.mxu0
  %4784 = vmatprep.mubr.bf16.mxu0 0
  %4785 = vmatmul.mubr.bf16.gmra.mxu0 %v2739
  %v4786 = vpop.f32.mrf.mxu0
  %v4787 = vadd.f32 0.0, %v4786
  %v4788 = vpop.f32.mrf.mxu0
  %v4789 = vpop.f32.mrf.mxu0
  %v4790 = vadd.f32 0.0, %v4789
  %v4791 = vpop.f32.mrf.mxu0
  %4792 = vmatprep.mubr.bf16.mxu0 0
  %4793 = vmatmul.mubr.bf16.gmra.mxu0 %v2742
  %v4794 = vpop.f32.mrf.mxu0
  %v4795 = vadd.f32 0.0, %v4794
  %v4796 = vpop.f32.mrf.mxu0
  %v4797 = vpop.f32.mrf.mxu0
  %v4798 = vadd.f32 0.0, %v4797
  %v4799 = vpop.f32.mrf.mxu0
  %4800 = vmatprep.mubr.bf16.mxu0 0
  %4801 = vmatmul.mubr.bf16.gmra.mxu0 %v2745
  %v4802 = vpop.f32.mrf.mxu0
  %v4803 = vadd.f32 0.0, %v4802
  %v4804 = vpop.f32.mrf.mxu0
  %v4805 = vpop.f32.mrf.mxu0
  %v4806 = vadd.f32 0.0, %v4805
  %v4807 = vpop.f32.mrf.mxu0
  %4808 = vmatprep.mubr.bf16.mxu0 0
  %4809 = vmatmul.mubr.bf16.gmra.mxu0 %v2748
  %v4810 = vpop.f32.mrf.mxu0
  %v4811 = vadd.f32 0.0, %v4810
  %v4812 = vpop.f32.mrf.mxu0
  %v4813 = vpop.f32.mrf.mxu0
  %v4814 = vadd.f32 0.0, %v4813
  %v4815 = vpop.f32.mrf.mxu0
  %4816 = vmatprep.mubr.bf16.mxu0 0
  %4817 = vmatmul.mubr.bf16.gmra.mxu0 %v2751
  %v4818 = vpop.f32.mrf.mxu0
  %v4819 = vadd.f32 0.0, %v4818
  %v4820 = vpop.f32.mrf.mxu0
  %v4821 = vpop.f32.mrf.mxu0
  %v4822 = vadd.f32 0.0, %v4821
  %v4823 = vpop.f32.mrf.mxu0
  %4824 = vmatprep.mubr.bf16.mxu0 0
  %4825 = vmatmul.mubr.bf16.gmra.mxu0 %v2754
  %v4826 = vpop.f32.mrf.mxu0
  %v4827 = vadd.f32 0.0, %v4826
  %v4828 = vpop.f32.mrf.mxu0
  %v4829 = vpop.f32.mrf.mxu0
  %v4830 = vadd.f32 0.0, %v4829
  %v4831 = vpop.f32.mrf.mxu0
  %4832 = vmatprep.mubr.bf16.mxu0 0
  %4833 = vmatmul.mubr.bf16.gmra.mxu0 %v2757
  %v4834 = vpop.f32.mrf.mxu0
  %v4835 = vadd.f32 0.0, %v4834
  %v4836 = vpop.f32.mrf.mxu0
  %v4837 = vpop.f32.mrf.mxu0
  %v4838 = vadd.f32 0.0, %v4837
  %v4839 = vpop.f32.mrf.mxu0
  %4840 = vmatprep.mubr.bf16.mxu0 0
  %4841 = vmatmul.mubr.bf16.gmra.mxu0 %v2760
  %v4842 = vpop.f32.mrf.mxu0
  %v4843 = vadd.f32 0.0, %v4842
  %v4844 = vpop.f32.mrf.mxu0
  %v4845 = vpop.f32.mrf.mxu0
  %v4846 = vadd.f32 0.0, %v4845
  %v4847 = vpop.f32.mrf.mxu0
  %4848 = vmatprep.mubr.bf16.mxu0 0
  %4849 = vmatmul.mubr.bf16.gmra.mxu0 %v2763
  %v4850 = vpop.f32.mrf.mxu0
  %v4851 = vadd.f32 0.0, %v4850
  %v4852 = vpop.f32.mrf.mxu0
  %v4853 = vpop.f32.mrf.mxu0
  %v4854 = vadd.f32 0.0, %v4853
  %v4855 = vpop.f32.mrf.mxu0
  %4856 = vmatprep.mubr.bf16.mxu0 0
  %4857 = vmatmul.mubr.bf16.gmra.mxu0 %v2766
  %v4858 = vpop.f32.mrf.mxu0
  %v4859 = vadd.f32 0.0, %v4858
  %v4860 = vpop.f32.mrf.mxu0
  %v4861 = vpop.f32.mrf.mxu0
  %v4862 = vadd.f32 0.0, %v4861
  %v4863 = vpop.f32.mrf.mxu0
  %4864 = vmatprep.mubr.bf16.mxu0 0
  %4865 = vmatmul.mubr.bf16.gmra.mxu0 %v2769
  %v4866 = vpop.f32.mrf.mxu0
  %v4867 = vadd.f32 0.0, %v4866
  %v4868 = vpop.f32.mrf.mxu0
  %v4869 = vpop.f32.mrf.mxu0
  %v4870 = vadd.f32 0.0, %v4869
  %v4871 = vpop.f32.mrf.mxu0
  %4872 = vmatprep.mubr.bf16.mxu0 0
  %4873 = vmatmul.mubr.bf16.gmra.mxu0 %v2772
  %v4874 = vpop.f32.mrf.mxu0
  %v4875 = vadd.f32 0.0, %v4874
  %v4876 = vpop.f32.mrf.mxu0
  %v4877 = vpop.f32.mrf.mxu0
  %v4878 = vadd.f32 0.0, %v4877
  %v4879 = vpop.f32.mrf.mxu0
  %4880 = vmatprep.mubr.bf16.mxu0 0
  %4881 = vmatmul.mubr.bf16.gmra.mxu0 %v2775
  %v4882 = vpop.f32.mrf.mxu0
  %v4883 = vadd.f32 0.0, %v4882
  %v4884 = vpop.f32.mrf.mxu0
  %v4885 = vpop.f32.mrf.mxu0
  %v4886 = vadd.f32 0.0, %v4885
  %v4887 = vpop.f32.mrf.mxu0
  %4888 = vmatprep.mubr.bf16.mxu0 0
  %4889 = vmatmul.mubr.bf16.gmra.mxu0 %v2778
  %v4890 = vpop.f32.mrf.mxu0
  %v4891 = vadd.f32 0.0, %v4890
  %v4892 = vpop.f32.mrf.mxu0
  %v4893 = vpop.f32.mrf.mxu0
  %v4894 = vadd.f32 0.0, %v4893
  %v4895 = vpop.f32.mrf.mxu0
  %4896 = vmatprep.mubr.bf16.mxu0 0
  %4897 = vmatmul.mubr.bf16.gmra.mxu0 %v2781
  %v4898 = vpop.f32.mrf.mxu0
  %v4899 = vadd.f32 0.0, %v4898
  %v4900 = vpop.f32.mrf.mxu0
  %v4901 = vpop.f32.mrf.mxu0
  %v4902 = vadd.f32 0.0, %v4901
  %v4903 = vpop.f32.mrf.mxu0
  %4904 = vmatprep.mubr.bf16.mxu0 0
  %4905 = vmatmul.mubr.bf16.gmra.mxu0 %v2784
  %v4906 = vpop.f32.mrf.mxu0
  %v4907 = vadd.f32 0.0, %v4906
  %v4908 = vpop.f32.mrf.mxu0
  %v4909 = vpop.f32.mrf.mxu0
  %v4910 = vadd.f32 0.0, %v4909
  %v4911 = vpop.f32.mrf.mxu0
  %4912 = vmatprep.mubr.bf16.mxu0 0
  %4913 = vmatmul.mubr.bf16.gmra.mxu0 %v2787
  %v4914 = vpop.f32.mrf.mxu0
  %v4915 = vadd.f32 0.0, %v4914
  %v4916 = vpop.f32.mrf.mxu0
  %v4917 = vpop.f32.mrf.mxu0
  %v4918 = vadd.f32 0.0, %v4917
  %v4919 = vpop.f32.mrf.mxu0
  %4920 = vmatprep.mubr.bf16.mxu0 0
  %4921 = vmatmul.mubr.bf16.gmra.mxu0 %v2790
  %v4922 = vpop.f32.mrf.mxu0
  %v4923 = vadd.f32 0.0, %v4922
  %v4924 = vpop.f32.mrf.mxu0
  %v4925 = vpop.f32.mrf.mxu0
  %v4926 = vadd.f32 0.0, %v4925
  %v4927 = vpop.f32.mrf.mxu0
  %4928 = vmatprep.mubr.bf16.mxu0 0
  %4929 = vmatmul.mubr.bf16.gmra.mxu0 %v2793
  %v4930 = vpop.f32.mrf.mxu0
  %v4931 = vadd.f32 0.0, %v4930
  %v4932 = vpop.f32.mrf.mxu0
  %v4933 = vpop.f32.mrf.mxu0
  %v4934 = vadd.f32 0.0, %v4933
  %v4935 = vpop.f32.mrf.mxu0
  %4936 = vmatprep.mubr.bf16.mxu0 0
  %4937 = vmatmul.mubr.bf16.gmra.mxu0 %v2796
  %v4938 = vpop.f32.mrf.mxu0
  %v4939 = vadd.f32 0.0, %v4938
  %v4940 = vpop.f32.mrf.mxu0
  %v4941 = vpop.f32.mrf.mxu0
  %v4942 = vadd.f32 0.0, %v4941
  %v4943 = vpop.f32.mrf.mxu0
  %4944 = vmatprep.mubr.bf16.mxu0 0
  %4945 = vmatmul.mubr.bf16.gmra.mxu0 %v2799
  %v4946 = vpop.f32.mrf.mxu0
  %v4947 = vadd.f32 0.0, %v4946
  %v4948 = vpop.f32.mrf.mxu0
  %v4949 = vpop.f32.mrf.mxu0
  %v4950 = vadd.f32 0.0, %v4949
  %v4951 = vpop.f32.mrf.mxu0
  %4952 = vmatprep.mubr.bf16.mxu0 0
  %4953 = vmatmul.mubr.bf16.gmra.mxu0 %v2802
  %v4954 = vpop.f32.mrf.mxu0
  %v4955 = vadd.f32 0.0, %v4954
  %v4956 = vpop.f32.mrf.mxu0
  %v4957 = vpop.f32.mrf.mxu0
  %v4958 = vadd.f32 0.0, %v4957
  %v4959 = vpop.f32.mrf.mxu0
  %4960 = vmatprep.mubr.bf16.mxu0 0
  %4961 = vmatmul.mubr.bf16.gmra.mxu0 %v2805
  %v4962 = vpop.f32.mrf.mxu0
  %v4963 = vadd.f32 0.0, %v4962
  %v4964 = vpop.f32.mrf.mxu0
  %v4965 = vpop.f32.mrf.mxu0
  %v4966 = vadd.f32 0.0, %v4965
  %v4967 = vpop.f32.mrf.mxu0
  %4968 = vmatprep.mubr.bf16.mxu0 0
  %4969 = vmatmul.mubr.bf16.gmra.mxu0 %v2808
  %v4970 = vpop.f32.mrf.mxu0
  %v4971 = vadd.f32 0.0, %v4970
  %v4972 = vpop.f32.mrf.mxu0
  %v4973 = vpop.f32.mrf.mxu0
  %v4974 = vadd.f32 0.0, %v4973
  %v4975 = vpop.f32.mrf.mxu0
  %4976 = vmatprep.mubr.bf16.mxu0 0
  %4977 = vmatmul.mubr.bf16.gmra.mxu0 %v2811
  %v4978 = vpop.f32.mrf.mxu0
  %v4979 = vadd.f32 0.0, %v4978
  %v4980 = vpop.f32.mrf.mxu0
  %v4981 = vpop.f32.mrf.mxu0
  %v4982 = vadd.f32 0.0, %v4981
  %v4983 = vpop.f32.mrf.mxu0
  %4984 = vmatprep.mubr.bf16.mxu0 0
  %4985 = vmatmul.mubr.bf16.gmra.mxu0 %v2814
  %v4986 = vpop.f32.mrf.mxu0
  %v4987 = vadd.f32 0.0, %v4986
  %v4988 = vpop.f32.mrf.mxu0
  %v4989 = vpop.f32.mrf.mxu0
  %v4990 = vadd.f32 0.0, %v4989
  %v4991 = vpop.f32.mrf.mxu0
  %4992 = vmatprep.mubr.bf16.mxu0 0
  %4993 = vmatmul.mubr.bf16.gmra.mxu0 %v2817
  %v4994 = vpop.f32.mrf.mxu0
  %v4995 = vadd.f32 0.0, %v4994
  %v4996 = vpop.f32.mrf.mxu0
  %v4997 = vpop.f32.mrf.mxu0
  %v4998 = vadd.f32 0.0, %v4997
  %v4999 = vpop.f32.mrf.mxu0
  %5000 = vmatprep.mubr.bf16.mxu0 0
  %5001 = vmatmul.mubr.bf16.gmra.mxu0 %v2820
  %v5002 = vpop.f32.mrf.mxu0
  %v5003 = vadd.f32 0.0, %v5002
  %v5004 = vpop.f32.mrf.mxu0
  %v5005 = vpop.f32.mrf.mxu0
  %v5006 = vadd.f32 0.0, %v5005
  %v5007 = vpop.f32.mrf.mxu0
  %5008 = vmatprep.mubr.bf16.mxu0 0
  %5009 = vmatmul.mubr.bf16.gmra.mxu0 %v2823
  %v5010 = vpop.f32.mrf.mxu0
  %v5011 = vadd.f32 0.0, %v5010
  %v5012 = vpop.f32.mrf.mxu0
  %v5013 = vpop.f32.mrf.mxu0
  %v5014 = vadd.f32 0.0, %v5013
  %v5015 = vpop.f32.mrf.mxu0
  %5016 = vmatprep.mubr.bf16.mxu0 0
  %5017 = vmatmul.mubr.bf16.gmra.mxu0 %v2826
  %v5018 = vpop.f32.mrf.mxu0
  %v5019 = vadd.f32 0.0, %v5018
  %v5020 = vpop.f32.mrf.mxu0
  %v5021 = vpop.f32.mrf.mxu0
  %v5022 = vadd.f32 0.0, %v5021
  %v5023 = vpop.f32.mrf.mxu0
  %5024 = vmatprep.mubr.bf16.mxu0 0
  %5025 = vmatmul.mubr.bf16.gmra.mxu0 %v2829
  %v5026 = vpop.f32.mrf.mxu0
  %v5027 = vadd.f32 0.0, %v5026
  %v5028 = vpop.f32.mrf.mxu0
  %v5029 = vpop.f32.mrf.mxu0
  %v5030 = vadd.f32 0.0, %v5029
  %v5031 = vpop.f32.mrf.mxu0
  %5032 = vmatprep.mubr.bf16.mxu0 0
  %5033 = vmatmul.mubr.bf16.gmra.mxu0 %v2832
  %v5034 = vpop.f32.mrf.mxu0
  %v5035 = vadd.f32 0.0, %v5034
  %v5036 = vpop.f32.mrf.mxu0
  %v5037 = vpop.f32.mrf.mxu0
  %v5038 = vadd.f32 0.0, %v5037
  %v5039 = vpop.f32.mrf.mxu0
  %5040 = vmatprep.mubr.bf16.mxu0 0
  %5041 = vmatmul.mubr.bf16.gmra.mxu0 %v2835
  %v5042 = vpop.f32.mrf.mxu0
  %v5043 = vadd.f32 0.0, %v5042
  %v5044 = vpop.f32.mrf.mxu0
  %v5045 = vpop.f32.mrf.mxu0
  %v5046 = vadd.f32 0.0, %v5045
  %v5047 = vpop.f32.mrf.mxu0
  %5048 = vmatprep.mubr.bf16.mxu0 0
  %5049 = vmatmul.mubr.bf16.gmra.mxu0 %v2838
  %v5050 = vpop.f32.mrf.mxu0
  %v5051 = vadd.f32 0.0, %v5050
  %v5052 = vpop.f32.mrf.mxu0
  %v5053 = vpop.f32.mrf.mxu0
  %v5054 = vadd.f32 0.0, %v5053
  %v5055 = vpop.f32.mrf.mxu0
  %5056 = vmatprep.mubr.bf16.mxu0 0
  %5057 = vmatmul.mubr.bf16.gmra.mxu0 %v2841
  %v5058 = vpop.f32.mrf.mxu0
  %v5059 = vadd.f32 0.0, %v5058
  %v5060 = vpop.f32.mrf.mxu0
  %v5061 = vpop.f32.mrf.mxu0
  %v5062 = vadd.f32 0.0, %v5061
  %v5063 = vpop.f32.mrf.mxu0
  %5064 = vmatprep.mubr.bf16.mxu0 0
  %5065 = vmatmul.mubr.bf16.gmra.mxu0 %v2844
  %v5066 = vpop.f32.mrf.mxu0
  %v5067 = vadd.f32 0.0, %v5066
  %v5068 = vpop.f32.mrf.mxu0
  %v5069 = vpop.f32.mrf.mxu0
  %v5070 = vadd.f32 0.0, %v5069
  %v5071 = vpop.f32.mrf.mxu0
  %5072 = vmatprep.mubr.bf16.mxu0 0
  %5073 = vmatmul.mubr.bf16.gmra.mxu0 %v2847
  %v5074 = vpop.f32.mrf.mxu0
  %v5075 = vadd.f32 0.0, %v5074
  %v5076 = vpop.f32.mrf.mxu0
  %v5077 = vpop.f32.mrf.mxu0
  %v5078 = vadd.f32 0.0, %v5077
  %v5079 = vpop.f32.mrf.mxu0
  %5080 = vmatprep.mubr.bf16.mxu0 0
  %5081 = vmatmul.mubr.bf16.gmra.mxu0 %v2850
  %v5082 = vpop.f32.mrf.mxu0
  %v5083 = vadd.f32 0.0, %v5082
  %v5084 = vpop.f32.mrf.mxu0
  %v5085 = vpop.f32.mrf.mxu0
  %v5086 = vadd.f32 0.0, %v5085
  %v5087 = vpop.f32.mrf.mxu0
  %5088 = vmatprep.mubr.bf16.mxu0 0
  %5089 = vmatmul.mubr.bf16.gmra.mxu0 %v2853
  %v5090 = vpop.f32.mrf.mxu0
  %v5091 = vadd.f32 0.0, %v5090
  %v5092 = vpop.f32.mrf.mxu0
  %v5093 = vpop.f32.mrf.mxu0
  %v5094 = vadd.f32 0.0, %v5093
  %v5095 = vpop.f32.mrf.mxu0
  %5096 = vmatprep.mubr.bf16.mxu0 0
  %5097 = vmatmul.mubr.bf16.gmra.mxu0 %v2856
  %v5098 = vpop.f32.mrf.mxu0
  %v5099 = vadd.f32 0.0, %v5098
  %v5100 = vpop.f32.mrf.mxu0
  %v5101 = vpop.f32.mrf.mxu0
  %v5102 = vadd.f32 0.0, %v5101
  %v5103 = vpop.f32.mrf.mxu0
  %5104 = vmatprep.mubr.bf16.mxu0 0
  %5105 = vmatmul.mubr.bf16.gmra.mxu0 %v2859
  %v5106 = vpop.f32.mrf.mxu0
  %v5107 = vadd.f32 0.0, %v5106
  %v5108 = vpop.f32.mrf.mxu0
  %v5109 = vpop.f32.mrf.mxu0
  %v5110 = vadd.f32 0.0, %v5109
  %v5111 = vpop.f32.mrf.mxu0
  %5112 = vmatprep.mubr.bf16.mxu0 0
  %5113 = vmatmul.mubr.bf16.gmra.mxu0 %v2862
  %v5114 = vpop.f32.mrf.mxu0
  %v5115 = vadd.f32 0.0, %v5114
  %v5116 = vpop.f32.mrf.mxu0
  %v5117 = vpop.f32.mrf.mxu0
  %v5118 = vadd.f32 0.0, %v5117
  %v5119 = vpop.f32.mrf.mxu0
  %5120 = vmatprep.mubr.bf16.mxu0 0
  %5121 = vmatmul.mubr.bf16.gmra.mxu0 %v2865
  %v5122 = vpop.f32.mrf.mxu0
  %v5123 = vadd.f32 0.0, %v5122
  %v5124 = vpop.f32.mrf.mxu0
  %v5125 = vpop.f32.mrf.mxu0
  %v5126 = vadd.f32 0.0, %v5125
  %v5127 = vpop.f32.mrf.mxu0
  %5128 = vmatprep.mubr.bf16.mxu0 0
  %5129 = vmatmul.mubr.bf16.gmra.mxu0 %v2868
  %v5130 = vpop.f32.mrf.mxu0
  %v5131 = vadd.f32 0.0, %v5130
  %v5132 = vpop.f32.mrf.mxu0
  %v5133 = vpop.f32.mrf.mxu0
  %v5134 = vadd.f32 0.0, %v5133
  %v5135 = vpop.f32.mrf.mxu0
  %5136 = vmatprep.mubr.bf16.mxu0 0
  %5137 = vmatmul.mubr.bf16.gmra.mxu0 %v2871
  %v5138 = vpop.f32.mrf.mxu0
  %v5139 = vadd.f32 0.0, %v5138
  %v5140 = vpop.f32.mrf.mxu0
  %v5141 = vpop.f32.mrf.mxu0
  %v5142 = vadd.f32 0.0, %v5141
  %v5143 = vpop.f32.mrf.mxu0
  %5144 = vmatprep.mubr.bf16.mxu0 0
  %5145 = vmatmul.mubr.bf16.gmra.mxu0 %v2874
  %v5146 = vpop.f32.mrf.mxu0
  %v5147 = vadd.f32 0.0, %v5146
  %v5148 = vpop.f32.mrf.mxu0
  %v5149 = vpop.f32.mrf.mxu0
  %v5150 = vadd.f32 0.0, %v5149
  %v5151 = vpop.f32.mrf.mxu0
  %5152 = vmatprep.mubr.bf16.mxu0 0
  %5153 = vmatmul.mubr.bf16.gmra.mxu0 %v2877
  %v5154 = vpop.f32.mrf.mxu0
  %v5155 = vadd.f32 0.0, %v5154
  %v5156 = vpop.f32.mrf.mxu0
  %v5157 = vpop.f32.mrf.mxu0
  %v5158 = vadd.f32 0.0, %v5157
  %v5159 = vpop.f32.mrf.mxu0
  %5160 = vmatprep.mubr.bf16.mxu0 0
  %5161 = vmatmul.mubr.bf16.gmra.mxu0 %v2880
  %v5162 = vpop.f32.mrf.mxu0
  %v5163 = vadd.f32 0.0, %v5162
  %v5164 = vpop.f32.mrf.mxu0
  %v5165 = vpop.f32.mrf.mxu0
  %v5166 = vadd.f32 0.0, %v5165
  %v5167 = vpop.f32.mrf.mxu0
  %5168 = vmatprep.mubr.bf16.mxu0 0
  %5169 = vmatmul.mubr.bf16.gmra.mxu0 %v2883
  %v5170 = vpop.f32.mrf.mxu0
  %v5171 = vadd.f32 0.0, %v5170
  %v5172 = vpop.f32.mrf.mxu0
  %v5173 = vpop.f32.mrf.mxu0
  %v5174 = vadd.f32 0.0, %v5173
  %v5175 = vpop.f32.mrf.mxu0
  %5176 = vmatprep.mubr.bf16.mxu0 0
  %5177 = vmatmul.mubr.bf16.gmra.mxu0 %v2886
  %v5178 = vpop.f32.mrf.mxu0
  %v5179 = vadd.f32 0.0, %v5178
  %v5180 = vpop.f32.mrf.mxu0
  %v5181 = vpop.f32.mrf.mxu0
  %v5182 = vadd.f32 0.0, %v5181
  %v5183 = vpop.f32.mrf.mxu0
  %5184 = vmatprep.mubr.bf16.mxu0 0
  %5185 = vmatmul.mubr.bf16.gmra.mxu0 %v2889
  %v5186 = vpop.f32.mrf.mxu0
  %v5187 = vadd.f32 0.0, %v5186
  %v5188 = vpop.f32.mrf.mxu0
  %v5189 = vpop.f32.mrf.mxu0
  %v5190 = vadd.f32 0.0, %v5189
  %v5191 = vpop.f32.mrf.mxu0
  %5192 = vmatprep.mubr.bf16.mxu0 0
  %5193 = vmatmul.mubr.bf16.gmra.mxu0 %v2892
  %v5194 = vpop.f32.mrf.mxu0
  %v5195 = vadd.f32 0.0, %v5194
  %v5196 = vpop.f32.mrf.mxu0
  %v5197 = vpop.f32.mrf.mxu0
  %v5198 = vadd.f32 0.0, %v5197
  %v5199 = vpop.f32.mrf.mxu0
  %5200 = vmatprep.mubr.bf16.mxu0 0
  %5201 = vmatmul.mubr.bf16.gmra.mxu0 %v2895
  %v5202 = vpop.f32.mrf.mxu0
  %v5203 = vadd.f32 0.0, %v5202
  %v5204 = vpop.f32.mrf.mxu0
  %v5205 = vpop.f32.mrf.mxu0
  %v5206 = vadd.f32 0.0, %v5205
  %v5207 = vpop.f32.mrf.mxu0
  %5208 = vmatprep.mubr.bf16.mxu0 0
  %5209 = vmatmul.mubr.bf16.gmra.mxu0 %v2898
  %v5210 = vpop.f32.mrf.mxu0
  %v5211 = vadd.f32 0.0, %v5210
  %v5212 = vpop.f32.mrf.mxu0
  %v5213 = vpop.f32.mrf.mxu0
  %v5214 = vadd.f32 0.0, %v5213
  %v5215 = vpop.f32.mrf.mxu0
  %5216 = vmatprep.mubr.bf16.mxu0 0
  %5217 = vmatmul.mubr.bf16.gmra.mxu0 %v2901
  %v5218 = vpop.f32.mrf.mxu0
  %v5219 = vadd.f32 0.0, %v5218
  %v5220 = vpop.f32.mrf.mxu0
  %v5221 = vpop.f32.mrf.mxu0
  %v5222 = vadd.f32 0.0, %v5221
  %v5223 = vpop.f32.mrf.mxu0
  %5224 = vmatprep.mubr.bf16.mxu0 0
  %5225 = vmatmul.mubr.bf16.gmra.mxu0 %v2904
  %v5226 = vpop.f32.mrf.mxu0
  %v5227 = vadd.f32 0.0, %v5226
  %v5228 = vpop.f32.mrf.mxu0
  %v5229 = vpop.f32.mrf.mxu0
  %v5230 = vadd.f32 0.0, %v5229
  %v5231 = vpop.f32.mrf.mxu0
  %5232 = vmatprep.mubr.bf16.mxu0 0
  %5233 = vmatmul.mubr.bf16.gmra.mxu0 %v2907
  %v5234 = vpop.f32.mrf.mxu0
  %v5235 = vadd.f32 0.0, %v5234
  %v5236 = vpop.f32.mrf.mxu0
  %v5237 = vpop.f32.mrf.mxu0
  %v5238 = vadd.f32 0.0, %v5237
  %v5239 = vpop.f32.mrf.mxu0
  %5240 = vmatprep.mubr.bf16.mxu0 0
  %5241 = vmatmul.mubr.bf16.gmra.mxu0 %v2910
  %v5242 = vpop.f32.mrf.mxu0
  %v5243 = vadd.f32 0.0, %v5242
  %v5244 = vpop.f32.mrf.mxu0
  %v5245 = vpop.f32.mrf.mxu0
  %v5246 = vadd.f32 0.0, %v5245
  %v5247 = vpop.f32.mrf.mxu0
  %5248 = vdwg.mxu0
  %vm5249 = vcmask 162816
  %v5250 = vsel %vm5249, %v2947, -inf
  %v5251 = vsel %vm5249, %v3523, -inf
  %v5252 = vmax.f32 %v5250, %v5251
  %v5253 = vsel %vm5249, %v4099, -inf
  %v5254 = vmax.f32 %v5252, %v5253
  %v5255 = vsel %vm5249, %v4675, -inf
  %v5256 = vmax.f32 %v5254, %v5255
  %v5257 = vsel %vm5249, %v2950, -inf
  %v5258 = vsel %vm5249, %v3526, -inf
  %v5259 = vmax.f32 %v5257, %v5258
  %v5260 = vsel %vm5249, %v4102, -inf
  %v5261 = vmax.f32 %v5259, %v5260
  %v5262 = vsel %vm5249, %v4678, -inf
  %v5263 = vmax.f32 %v5261, %v5262
  %v5264 = vsel %vm5249, %v2955, -inf
  %v5265 = vsel %vm5249, %v3531, -inf
  %v5266 = vmax.f32 %v5264, %v5265
  %v5267 = vsel %vm5249, %v4107, -inf
  %v5268 = vmax.f32 %v5266, %v5267
  %v5269 = vsel %vm5249, %v4683, -inf
  %v5270 = vmax.f32 %v5268, %v5269
  %v5271 = vsel %vm5249, %v2958, -inf
  %v5272 = vsel %vm5249, %v3534, -inf
  %v5273 = vmax.f32 %v5271, %v5272
  %v5274 = vsel %vm5249, %v4110, -inf
  %v5275 = vmax.f32 %v5273, %v5274
  %v5276 = vsel %vm5249, %v4686, -inf
  %v5277 = vmax.f32 %v5275, %v5276
  %v5278 = vsel %vm5249, %v2963, -inf
  %v5279 = vsel %vm5249, %v3539, -inf
  %v5280 = vmax.f32 %v5278, %v5279
  %v5281 = vsel %vm5249, %v4115, -inf
  %v5282 = vmax.f32 %v5280, %v5281
  %v5283 = vsel %vm5249, %v4691, -inf
  %v5284 = vmax.f32 %v5282, %v5283
  %v5285 = vsel %vm5249, %v2966, -inf
  %v5286 = vsel %vm5249, %v3542, -inf
  %v5287 = vmax.f32 %v5285, %v5286
  %v5288 = vsel %vm5249, %v4118, -inf
  %v5289 = vmax.f32 %v5287, %v5288
  %v5290 = vsel %vm5249, %v4694, -inf
  %v5291 = vmax.f32 %v5289, %v5290
  %v5292 = vsel %vm5249, %v2971, -inf
  %v5293 = vsel %vm5249, %v3547, -inf
  %v5294 = vmax.f32 %v5292, %v5293
  %v5295 = vsel %vm5249, %v4123, -inf
  %v5296 = vmax.f32 %v5294, %v5295
  %v5297 = vsel %vm5249, %v4699, -inf
  %v5298 = vmax.f32 %v5296, %v5297
  %v5299 = vsel %vm5249, %v2974, -inf
  %v5300 = vsel %vm5249, %v3550, -inf
  %v5301 = vmax.f32 %v5299, %v5300
  %v5302 = vsel %vm5249, %v4126, -inf
  %v5303 = vmax.f32 %v5301, %v5302
  %v5304 = vsel %vm5249, %v4702, -inf
  %v5305 = vmax.f32 %v5303, %v5304
  %v5306 = vsel %vm5249, %v2979, -inf
  %v5307 = vsel %vm5249, %v3555, -inf
  %v5308 = vmax.f32 %v5306, %v5307
  %v5309 = vsel %vm5249, %v4131, -inf
  %v5310 = vmax.f32 %v5308, %v5309
  %v5311 = vsel %vm5249, %v4707, -inf
  %v5312 = vmax.f32 %v5310, %v5311
  %v5313 = vsel %vm5249, %v2982, -inf
  %v5314 = vsel %vm5249, %v3558, -inf
  %v5315 = vmax.f32 %v5313, %v5314
  %v5316 = vsel %vm5249, %v4134, -inf
  %v5317 = vmax.f32 %v5315, %v5316
  %v5318 = vsel %vm5249, %v4710, -inf
  %v5319 = vmax.f32 %v5317, %v5318
  %v5320 = vsel %vm5249, %v2987, -inf
  %v5321 = vsel %vm5249, %v3563, -inf
  %v5322 = vmax.f32 %v5320, %v5321
  %v5323 = vsel %vm5249, %v4139, -inf
  %v5324 = vmax.f32 %v5322, %v5323
  %v5325 = vsel %vm5249, %v4715, -inf
  %v5326 = vmax.f32 %v5324, %v5325
  %v5327 = vsel %vm5249, %v2990, -inf
  %v5328 = vsel %vm5249, %v3566, -inf
  %v5329 = vmax.f32 %v5327, %v5328
  %v5330 = vsel %vm5249, %v4142, -inf
  %v5331 = vmax.f32 %v5329, %v5330
  %v5332 = vsel %vm5249, %v4718, -inf
  %v5333 = vmax.f32 %v5331, %v5332
  %v5334 = vsel %vm5249, %v2995, -inf
  %v5335 = vsel %vm5249, %v3571, -inf
  %v5336 = vmax.f32 %v5334, %v5335
  %v5337 = vsel %vm5249, %v4147, -inf
  %v5338 = vmax.f32 %v5336, %v5337
  %v5339 = vsel %vm5249, %v4723, -inf
  %v5340 = vmax.f32 %v5338, %v5339
  %v5341 = vsel %vm5249, %v2998, -inf
  %v5342 = vsel %vm5249, %v3574, -inf
  %v5343 = vmax.f32 %v5341, %v5342
  %v5344 = vsel %vm5249, %v4150, -inf
  %v5345 = vmax.f32 %v5343, %v5344
  %v5346 = vsel %vm5249, %v4726, -inf
  %v5347 = vmax.f32 %v5345, %v5346
  %v5348 = vsel %vm5249, %v3003, -inf
  %v5349 = vsel %vm5249, %v3579, -inf
  %v5350 = vmax.f32 %v5348, %v5349
  %v5351 = vsel %vm5249, %v4155, -inf
  %v5352 = vmax.f32 %v5350, %v5351
  %v5353 = vsel %vm5249, %v4731, -inf
  %v5354 = vmax.f32 %v5352, %v5353
  %v5355 = vsel %vm5249, %v3006, -inf
  %v5356 = vsel %vm5249, %v3582, -inf
  %v5357 = vmax.f32 %v5355, %v5356
  %v5358 = vsel %vm5249, %v4158, -inf
  %v5359 = vmax.f32 %v5357, %v5358
  %v5360 = vsel %vm5249, %v4734, -inf
  %v5361 = vmax.f32 %v5359, %v5360
  %v5362 = vsel %vm5249, %v3011, -inf
  %v5363 = vsel %vm5249, %v3587, -inf
  %v5364 = vmax.f32 %v5362, %v5363
  %v5365 = vsel %vm5249, %v4163, -inf
  %v5366 = vmax.f32 %v5364, %v5365
  %v5367 = vsel %vm5249, %v4739, -inf
  %v5368 = vmax.f32 %v5366, %v5367
  %v5369 = vsel %vm5249, %v3014, -inf
  %v5370 = vsel %vm5249, %v3590, -inf
  %v5371 = vmax.f32 %v5369, %v5370
  %v5372 = vsel %vm5249, %v4166, -inf
  %v5373 = vmax.f32 %v5371, %v5372
  %v5374 = vsel %vm5249, %v4742, -inf
  %v5375 = vmax.f32 %v5373, %v5374
  %v5376 = vsel %vm5249, %v3019, -inf
  %v5377 = vsel %vm5249, %v3595, -inf
  %v5378 = vmax.f32 %v5376, %v5377
  %v5379 = vsel %vm5249, %v4171, -inf
  %v5380 = vmax.f32 %v5378, %v5379
  %v5381 = vsel %vm5249, %v4747, -inf
  %v5382 = vmax.f32 %v5380, %v5381
  %v5383 = vsel %vm5249, %v3022, -inf
  %v5384 = vsel %vm5249, %v3598, -inf
  %v5385 = vmax.f32 %v5383, %v5384
  %v5386 = vsel %vm5249, %v4174, -inf
  %v5387 = vmax.f32 %v5385, %v5386
  %v5388 = vsel %vm5249, %v4750, -inf
  %v5389 = vmax.f32 %v5387, %v5388
  %v5390 = vsel %vm5249, %v3027, -inf
  %v5391 = vsel %vm5249, %v3603, -inf
  %v5392 = vmax.f32 %v5390, %v5391
  %v5393 = vsel %vm5249, %v4179, -inf
  %v5394 = vmax.f32 %v5392, %v5393
  %v5395 = vsel %vm5249, %v4755, -inf
  %v5396 = vmax.f32 %v5394, %v5395
  %v5397 = vsel %vm5249, %v3030, -inf
  %v5398 = vsel %vm5249, %v3606, -inf
  %v5399 = vmax.f32 %v5397, %v5398
  %v5400 = vsel %vm5249, %v4182, -inf
  %v5401 = vmax.f32 %v5399, %v5400
  %v5402 = vsel %vm5249, %v4758, -inf
  %v5403 = vmax.f32 %v5401, %v5402
  %v5404 = vsel %vm5249, %v3035, -inf
  %v5405 = vsel %vm5249, %v3611, -inf
  %v5406 = vmax.f32 %v5404, %v5405
  %v5407 = vsel %vm5249, %v4187, -inf
  %v5408 = vmax.f32 %v5406, %v5407
  %v5409 = vsel %vm5249, %v4763, -inf
  %v5410 = vmax.f32 %v5408, %v5409
  %v5411 = vsel %vm5249, %v3038, -inf
  %v5412 = vsel %vm5249, %v3614, -inf
  %v5413 = vmax.f32 %v5411, %v5412
  %v5414 = vsel %vm5249, %v4190, -inf
  %v5415 = vmax.f32 %v5413, %v5414
  %v5416 = vsel %vm5249, %v4766, -inf
  %v5417 = vmax.f32 %v5415, %v5416
  %v5418 = vsel %vm5249, %v3043, -inf
  %v5419 = vsel %vm5249, %v3619, -inf
  %v5420 = vmax.f32 %v5418, %v5419
  %v5421 = vsel %vm5249, %v4195, -inf
  %v5422 = vmax.f32 %v5420, %v5421
  %v5423 = vsel %vm5249, %v4771, -inf
  %v5424 = vmax.f32 %v5422, %v5423
  %v5425 = vsel %vm5249, %v3046, -inf
  %v5426 = vsel %vm5249, %v3622, -inf
  %v5427 = vmax.f32 %v5425, %v5426
  %v5428 = vsel %vm5249, %v4198, -inf
  %v5429 = vmax.f32 %v5427, %v5428
  %v5430 = vsel %vm5249, %v4774, -inf
  %v5431 = vmax.f32 %v5429, %v5430
  %v5432 = vsel %vm5249, %v3051, -inf
  %v5433 = vsel %vm5249, %v3627, -inf
  %v5434 = vmax.f32 %v5432, %v5433
  %v5435 = vsel %vm5249, %v4203, -inf
  %v5436 = vmax.f32 %v5434, %v5435
  %v5437 = vsel %vm5249, %v4779, -inf
  %v5438 = vmax.f32 %v5436, %v5437
  %v5439 = vsel %vm5249, %v3054, -inf
  %v5440 = vsel %vm5249, %v3630, -inf
  %v5441 = vmax.f32 %v5439, %v5440
  %v5442 = vsel %vm5249, %v4206, -inf
  %v5443 = vmax.f32 %v5441, %v5442
  %v5444 = vsel %vm5249, %v4782, -inf
  %v5445 = vmax.f32 %v5443, %v5444
  %v5446 = vsel %vm5249, %v3059, -inf
  %v5447 = vsel %vm5249, %v3635, -inf
  %v5448 = vmax.f32 %v5446, %v5447
  %v5449 = vsel %vm5249, %v4211, -inf
  %v5450 = vmax.f32 %v5448, %v5449
  %v5451 = vsel %vm5249, %v4787, -inf
  %v5452 = vmax.f32 %v5450, %v5451
  %v5453 = vsel %vm5249, %v3062, -inf
  %v5454 = vsel %vm5249, %v3638, -inf
  %v5455 = vmax.f32 %v5453, %v5454
  %v5456 = vsel %vm5249, %v4214, -inf
  %v5457 = vmax.f32 %v5455, %v5456
  %v5458 = vsel %vm5249, %v4790, -inf
  %v5459 = vmax.f32 %v5457, %v5458
  %v5460 = vsel %vm5249, %v3067, -inf
  %v5461 = vsel %vm5249, %v3643, -inf
  %v5462 = vmax.f32 %v5460, %v5461
  %v5463 = vsel %vm5249, %v4219, -inf
  %v5464 = vmax.f32 %v5462, %v5463
  %v5465 = vsel %vm5249, %v4795, -inf
  %v5466 = vmax.f32 %v5464, %v5465
  %v5467 = vsel %vm5249, %v3070, -inf
  %v5468 = vsel %vm5249, %v3646, -inf
  %v5469 = vmax.f32 %v5467, %v5468
  %v5470 = vsel %vm5249, %v4222, -inf
  %v5471 = vmax.f32 %v5469, %v5470
  %v5472 = vsel %vm5249, %v4798, -inf
  %v5473 = vmax.f32 %v5471, %v5472
  %v5474 = vsel %vm5249, %v3075, -inf
  %v5475 = vsel %vm5249, %v3651, -inf
  %v5476 = vmax.f32 %v5474, %v5475
  %v5477 = vsel %vm5249, %v4227, -inf
  %v5478 = vmax.f32 %v5476, %v5477
  %v5479 = vsel %vm5249, %v4803, -inf
  %v5480 = vmax.f32 %v5478, %v5479
  %v5481 = vsel %vm5249, %v3078, -inf
  %v5482 = vsel %vm5249, %v3654, -inf
  %v5483 = vmax.f32 %v5481, %v5482
  %v5484 = vsel %vm5249, %v4230, -inf
  %v5485 = vmax.f32 %v5483, %v5484
  %v5486 = vsel %vm5249, %v4806, -inf
  %v5487 = vmax.f32 %v5485, %v5486
  %v5488 = vsel %vm5249, %v3083, -inf
  %v5489 = vsel %vm5249, %v3659, -inf
  %v5490 = vmax.f32 %v5488, %v5489
  %v5491 = vsel %vm5249, %v4235, -inf
  %v5492 = vmax.f32 %v5490, %v5491
  %v5493 = vsel %vm5249, %v4811, -inf
  %v5494 = vmax.f32 %v5492, %v5493
  %v5495 = vsel %vm5249, %v3086, -inf
  %v5496 = vsel %vm5249, %v3662, -inf
  %v5497 = vmax.f32 %v5495, %v5496
  %v5498 = vsel %vm5249, %v4238, -inf
  %v5499 = vmax.f32 %v5497, %v5498
  %v5500 = vsel %vm5249, %v4814, -inf
  %v5501 = vmax.f32 %v5499, %v5500
  %v5502 = vsel %vm5249, %v3091, -inf
  %v5503 = vsel %vm5249, %v3667, -inf
  %v5504 = vmax.f32 %v5502, %v5503
  %v5505 = vsel %vm5249, %v4243, -inf
  %v5506 = vmax.f32 %v5504, %v5505
  %v5507 = vsel %vm5249, %v4819, -inf
  %v5508 = vmax.f32 %v5506, %v5507
  %v5509 = vsel %vm5249, %v3094, -inf
  %v5510 = vsel %vm5249, %v3670, -inf
  %v5511 = vmax.f32 %v5509, %v5510
  %v5512 = vsel %vm5249, %v4246, -inf
  %v5513 = vmax.f32 %v5511, %v5512
  %v5514 = vsel %vm5249, %v4822, -inf
  %v5515 = vmax.f32 %v5513, %v5514
  %v5516 = vsel %vm5249, %v3099, -inf
  %v5517 = vsel %vm5249, %v3675, -inf
  %v5518 = vmax.f32 %v5516, %v5517
  %v5519 = vsel %vm5249, %v4251, -inf
  %v5520 = vmax.f32 %v5518, %v5519
  %v5521 = vsel %vm5249, %v4827, -inf
  %v5522 = vmax.f32 %v5520, %v5521
  %v5523 = vsel %vm5249, %v3102, -inf
  %v5524 = vsel %vm5249, %v3678, -inf
  %v5525 = vmax.f32 %v5523, %v5524
  %v5526 = vsel %vm5249, %v4254, -inf
  %v5527 = vmax.f32 %v5525, %v5526
  %v5528 = vsel %vm5249, %v4830, -inf
  %v5529 = vmax.f32 %v5527, %v5528
  %v5530 = vsel %vm5249, %v3107, -inf
  %v5531 = vsel %vm5249, %v3683, -inf
  %v5532 = vmax.f32 %v5530, %v5531
  %v5533 = vsel %vm5249, %v4259, -inf
  %v5534 = vmax.f32 %v5532, %v5533
  %v5535 = vsel %vm5249, %v4835, -inf
  %v5536 = vmax.f32 %v5534, %v5535
  %v5537 = vsel %vm5249, %v3110, -inf
  %v5538 = vsel %vm5249, %v3686, -inf
  %v5539 = vmax.f32 %v5537, %v5538
  %v5540 = vsel %vm5249, %v4262, -inf
  %v5541 = vmax.f32 %v5539, %v5540
  %v5542 = vsel %vm5249, %v4838, -inf
  %v5543 = vmax.f32 %v5541, %v5542
  %v5544 = vsel %vm5249, %v3115, -inf
  %v5545 = vsel %vm5249, %v3691, -inf
  %v5546 = vmax.f32 %v5544, %v5545
  %v5547 = vsel %vm5249, %v4267, -inf
  %v5548 = vmax.f32 %v5546, %v5547
  %v5549 = vsel %vm5249, %v4843, -inf
  %v5550 = vmax.f32 %v5548, %v5549
  %v5551 = vsel %vm5249, %v3118, -inf
  %v5552 = vsel %vm5249, %v3694, -inf
  %v5553 = vmax.f32 %v5551, %v5552
  %v5554 = vsel %vm5249, %v4270, -inf
  %v5555 = vmax.f32 %v5553, %v5554
  %v5556 = vsel %vm5249, %v4846, -inf
  %v5557 = vmax.f32 %v5555, %v5556
  %v5558 = vsel %vm5249, %v3123, -inf
  %v5559 = vsel %vm5249, %v3699, -inf
  %v5560 = vmax.f32 %v5558, %v5559
  %v5561 = vsel %vm5249, %v4275, -inf
  %v5562 = vmax.f32 %v5560, %v5561
  %v5563 = vsel %vm5249, %v4851, -inf
  %v5564 = vmax.f32 %v5562, %v5563
  %v5565 = vsel %vm5249, %v3126, -inf
  %v5566 = vsel %vm5249, %v3702, -inf
  %v5567 = vmax.f32 %v5565, %v5566
  %v5568 = vsel %vm5249, %v4278, -inf
  %v5569 = vmax.f32 %v5567, %v5568
  %v5570 = vsel %vm5249, %v4854, -inf
  %v5571 = vmax.f32 %v5569, %v5570
  %v5572 = vsel %vm5249, %v3131, -inf
  %v5573 = vsel %vm5249, %v3707, -inf
  %v5574 = vmax.f32 %v5572, %v5573
  %v5575 = vsel %vm5249, %v4283, -inf
  %v5576 = vmax.f32 %v5574, %v5575
  %v5577 = vsel %vm5249, %v4859, -inf
  %v5578 = vmax.f32 %v5576, %v5577
  %v5579 = vsel %vm5249, %v3134, -inf
  %v5580 = vsel %vm5249, %v3710, -inf
  %v5581 = vmax.f32 %v5579, %v5580
  %v5582 = vsel %vm5249, %v4286, -inf
  %v5583 = vmax.f32 %v5581, %v5582
  %v5584 = vsel %vm5249, %v4862, -inf
  %v5585 = vmax.f32 %v5583, %v5584
  %v5586 = vsel %vm5249, %v3139, -inf
  %v5587 = vsel %vm5249, %v3715, -inf
  %v5588 = vmax.f32 %v5586, %v5587
  %v5589 = vsel %vm5249, %v4291, -inf
  %v5590 = vmax.f32 %v5588, %v5589
  %v5591 = vsel %vm5249, %v4867, -inf
  %v5592 = vmax.f32 %v5590, %v5591
  %v5593 = vsel %vm5249, %v3142, -inf
  %v5594 = vsel %vm5249, %v3718, -inf
  %v5595 = vmax.f32 %v5593, %v5594
  %v5596 = vsel %vm5249, %v4294, -inf
  %v5597 = vmax.f32 %v5595, %v5596
  %v5598 = vsel %vm5249, %v4870, -inf
  %v5599 = vmax.f32 %v5597, %v5598
  %v5600 = vsel %vm5249, %v3147, -inf
  %v5601 = vsel %vm5249, %v3723, -inf
  %v5602 = vmax.f32 %v5600, %v5601
  %v5603 = vsel %vm5249, %v4299, -inf
  %v5604 = vmax.f32 %v5602, %v5603
  %v5605 = vsel %vm5249, %v4875, -inf
  %v5606 = vmax.f32 %v5604, %v5605
  %v5607 = vsel %vm5249, %v3150, -inf
  %v5608 = vsel %vm5249, %v3726, -inf
  %v5609 = vmax.f32 %v5607, %v5608
  %v5610 = vsel %vm5249, %v4302, -inf
  %v5611 = vmax.f32 %v5609, %v5610
  %v5612 = vsel %vm5249, %v4878, -inf
  %v5613 = vmax.f32 %v5611, %v5612
  %v5614 = vsel %vm5249, %v3155, -inf
  %v5615 = vsel %vm5249, %v3731, -inf
  %v5616 = vmax.f32 %v5614, %v5615
  %v5617 = vsel %vm5249, %v4307, -inf
  %v5618 = vmax.f32 %v5616, %v5617
  %v5619 = vsel %vm5249, %v4883, -inf
  %v5620 = vmax.f32 %v5618, %v5619
  %v5621 = vsel %vm5249, %v3158, -inf
  %v5622 = vsel %vm5249, %v3734, -inf
  %v5623 = vmax.f32 %v5621, %v5622
  %v5624 = vsel %vm5249, %v4310, -inf
  %v5625 = vmax.f32 %v5623, %v5624
  %v5626 = vsel %vm5249, %v4886, -inf
  %v5627 = vmax.f32 %v5625, %v5626
  %v5628 = vsel %vm5249, %v3163, -inf
  %v5629 = vsel %vm5249, %v3739, -inf
  %v5630 = vmax.f32 %v5628, %v5629
  %v5631 = vsel %vm5249, %v4315, -inf
  %v5632 = vmax.f32 %v5630, %v5631
  %v5633 = vsel %vm5249, %v4891, -inf
  %v5634 = vmax.f32 %v5632, %v5633
  %v5635 = vsel %vm5249, %v3166, -inf
  %v5636 = vsel %vm5249, %v3742, -inf
  %v5637 = vmax.f32 %v5635, %v5636
  %v5638 = vsel %vm5249, %v4318, -inf
  %v5639 = vmax.f32 %v5637, %v5638
  %v5640 = vsel %vm5249, %v4894, -inf
  %v5641 = vmax.f32 %v5639, %v5640
  %v5642 = vsel %vm5249, %v3171, -inf
  %v5643 = vsel %vm5249, %v3747, -inf
  %v5644 = vmax.f32 %v5642, %v5643
  %v5645 = vsel %vm5249, %v4323, -inf
  %v5646 = vmax.f32 %v5644, %v5645
  %v5647 = vsel %vm5249, %v4899, -inf
  %v5648 = vmax.f32 %v5646, %v5647
  %v5649 = vsel %vm5249, %v3174, -inf
  %v5650 = vsel %vm5249, %v3750, -inf
  %v5651 = vmax.f32 %v5649, %v5650
  %v5652 = vsel %vm5249, %v4326, -inf
  %v5653 = vmax.f32 %v5651, %v5652
  %v5654 = vsel %vm5249, %v4902, -inf
  %v5655 = vmax.f32 %v5653, %v5654
  %v5656 = vsel %vm5249, %v3179, -inf
  %v5657 = vsel %vm5249, %v3755, -inf
  %v5658 = vmax.f32 %v5656, %v5657
  %v5659 = vsel %vm5249, %v4331, -inf
  %v5660 = vmax.f32 %v5658, %v5659
  %v5661 = vsel %vm5249, %v4907, -inf
  %v5662 = vmax.f32 %v5660, %v5661
  %v5663 = vsel %vm5249, %v3182, -inf
  %v5664 = vsel %vm5249, %v3758, -inf
  %v5665 = vmax.f32 %v5663, %v5664
  %v5666 = vsel %vm5249, %v4334, -inf
  %v5667 = vmax.f32 %v5665, %v5666
  %v5668 = vsel %vm5249, %v4910, -inf
  %v5669 = vmax.f32 %v5667, %v5668
  %v5670 = vsel %vm5249, %v3187, -inf
  %v5671 = vsel %vm5249, %v3763, -inf
  %v5672 = vmax.f32 %v5670, %v5671
  %v5673 = vsel %vm5249, %v4339, -inf
  %v5674 = vmax.f32 %v5672, %v5673
  %v5675 = vsel %vm5249, %v4915, -inf
  %v5676 = vmax.f32 %v5674, %v5675
  %v5677 = vsel %vm5249, %v3190, -inf
  %v5678 = vsel %vm5249, %v3766, -inf
  %v5679 = vmax.f32 %v5677, %v5678
  %v5680 = vsel %vm5249, %v4342, -inf
  %v5681 = vmax.f32 %v5679, %v5680
  %v5682 = vsel %vm5249, %v4918, -inf
  %v5683 = vmax.f32 %v5681, %v5682
  %v5684 = vsel %vm5249, %v3195, -inf
  %v5685 = vsel %vm5249, %v3771, -inf
  %v5686 = vmax.f32 %v5684, %v5685
  %v5687 = vsel %vm5249, %v4347, -inf
  %v5688 = vmax.f32 %v5686, %v5687
  %v5689 = vsel %vm5249, %v4923, -inf
  %v5690 = vmax.f32 %v5688, %v5689
  %v5691 = vsel %vm5249, %v3198, -inf
  %v5692 = vsel %vm5249, %v3774, -inf
  %v5693 = vmax.f32 %v5691, %v5692
  %v5694 = vsel %vm5249, %v4350, -inf
  %v5695 = vmax.f32 %v5693, %v5694
  %v5696 = vsel %vm5249, %v4926, -inf
  %v5697 = vmax.f32 %v5695, %v5696
  %v5698 = vsel %vm5249, %v3203, -inf
  %v5699 = vsel %vm5249, %v3779, -inf
  %v5700 = vmax.f32 %v5698, %v5699
  %v5701 = vsel %vm5249, %v4355, -inf
  %v5702 = vmax.f32 %v5700, %v5701
  %v5703 = vsel %vm5249, %v4931, -inf
  %v5704 = vmax.f32 %v5702, %v5703
  %v5705 = vsel %vm5249, %v3206, -inf
  %v5706 = vsel %vm5249, %v3782, -inf
  %v5707 = vmax.f32 %v5705, %v5706
  %v5708 = vsel %vm5249, %v4358, -inf
  %v5709 = vmax.f32 %v5707, %v5708
  %v5710 = vsel %vm5249, %v4934, -inf
  %v5711 = vmax.f32 %v5709, %v5710
  %v5712 = vsel %vm5249, %v3211, -inf
  %v5713 = vsel %vm5249, %v3787, -inf
  %v5714 = vmax.f32 %v5712, %v5713
  %v5715 = vsel %vm5249, %v4363, -inf
  %v5716 = vmax.f32 %v5714, %v5715
  %v5717 = vsel %vm5249, %v4939, -inf
  %v5718 = vmax.f32 %v5716, %v5717
  %v5719 = vsel %vm5249, %v3214, -inf
  %v5720 = vsel %vm5249, %v3790, -inf
  %v5721 = vmax.f32 %v5719, %v5720
  %v5722 = vsel %vm5249, %v4366, -inf
  %v5723 = vmax.f32 %v5721, %v5722
  %v5724 = vsel %vm5249, %v4942, -inf
  %v5725 = vmax.f32 %v5723, %v5724
  %v5726 = vsel %vm5249, %v3219, -inf
  %v5727 = vsel %vm5249, %v3795, -inf
  %v5728 = vmax.f32 %v5726, %v5727
  %v5729 = vsel %vm5249, %v4371, -inf
  %v5730 = vmax.f32 %v5728, %v5729
  %v5731 = vsel %vm5249, %v4947, -inf
  %v5732 = vmax.f32 %v5730, %v5731
  %v5733 = vsel %vm5249, %v3222, -inf
  %v5734 = vsel %vm5249, %v3798, -inf
  %v5735 = vmax.f32 %v5733, %v5734
  %v5736 = vsel %vm5249, %v4374, -inf
  %v5737 = vmax.f32 %v5735, %v5736
  %v5738 = vsel %vm5249, %v4950, -inf
  %v5739 = vmax.f32 %v5737, %v5738
  %v5740 = vsel %vm5249, %v3227, -inf
  %v5741 = vsel %vm5249, %v3803, -inf
  %v5742 = vmax.f32 %v5740, %v5741
  %v5743 = vsel %vm5249, %v4379, -inf
  %v5744 = vmax.f32 %v5742, %v5743
  %v5745 = vsel %vm5249, %v4955, -inf
  %v5746 = vmax.f32 %v5744, %v5745
  %v5747 = vsel %vm5249, %v3230, -inf
  %v5748 = vsel %vm5249, %v3806, -inf
  %v5749 = vmax.f32 %v5747, %v5748
  %v5750 = vsel %vm5249, %v4382, -inf
  %v5751 = vmax.f32 %v5749, %v5750
  %v5752 = vsel %vm5249, %v4958, -inf
  %v5753 = vmax.f32 %v5751, %v5752
  %v5754 = vsel %vm5249, %v3235, -inf
  %v5755 = vsel %vm5249, %v3811, -inf
  %v5756 = vmax.f32 %v5754, %v5755
  %v5757 = vsel %vm5249, %v4387, -inf
  %v5758 = vmax.f32 %v5756, %v5757
  %v5759 = vsel %vm5249, %v4963, -inf
  %v5760 = vmax.f32 %v5758, %v5759
  %v5761 = vsel %vm5249, %v3238, -inf
  %v5762 = vsel %vm5249, %v3814, -inf
  %v5763 = vmax.f32 %v5761, %v5762
  %v5764 = vsel %vm5249, %v4390, -inf
  %v5765 = vmax.f32 %v5763, %v5764
  %v5766 = vsel %vm5249, %v4966, -inf
  %v5767 = vmax.f32 %v5765, %v5766
  %v5768 = vsel %vm5249, %v3243, -inf
  %v5769 = vsel %vm5249, %v3819, -inf
  %v5770 = vmax.f32 %v5768, %v5769
  %v5771 = vsel %vm5249, %v4395, -inf
  %v5772 = vmax.f32 %v5770, %v5771
  %v5773 = vsel %vm5249, %v4971, -inf
  %v5774 = vmax.f32 %v5772, %v5773
  %v5775 = vsel %vm5249, %v3246, -inf
  %v5776 = vsel %vm5249, %v3822, -inf
  %v5777 = vmax.f32 %v5775, %v5776
  %v5778 = vsel %vm5249, %v4398, -inf
  %v5779 = vmax.f32 %v5777, %v5778
  %v5780 = vsel %vm5249, %v4974, -inf
  %v5781 = vmax.f32 %v5779, %v5780
  %v5782 = vsel %vm5249, %v3251, -inf
  %v5783 = vsel %vm5249, %v3827, -inf
  %v5784 = vmax.f32 %v5782, %v5783
  %v5785 = vsel %vm5249, %v4403, -inf
  %v5786 = vmax.f32 %v5784, %v5785
  %v5787 = vsel %vm5249, %v4979, -inf
  %v5788 = vmax.f32 %v5786, %v5787
  %v5789 = vsel %vm5249, %v3254, -inf
  %v5790 = vsel %vm5249, %v3830, -inf
  %v5791 = vmax.f32 %v5789, %v5790
  %v5792 = vsel %vm5249, %v4406, -inf
  %v5793 = vmax.f32 %v5791, %v5792
  %v5794 = vsel %vm5249, %v4982, -inf
  %v5795 = vmax.f32 %v5793, %v5794
  %v5796 = vsel %vm5249, %v3259, -inf
  %v5797 = vsel %vm5249, %v3835, -inf
  %v5798 = vmax.f32 %v5796, %v5797
  %v5799 = vsel %vm5249, %v4411, -inf
  %v5800 = vmax.f32 %v5798, %v5799
  %v5801 = vsel %vm5249, %v4987, -inf
  %v5802 = vmax.f32 %v5800, %v5801
  %v5803 = vsel %vm5249, %v3262, -inf
  %v5804 = vsel %vm5249, %v3838, -inf
  %v5805 = vmax.f32 %v5803, %v5804
  %v5806 = vsel %vm5249, %v4414, -inf
  %v5807 = vmax.f32 %v5805, %v5806
  %v5808 = vsel %vm5249, %v4990, -inf
  %v5809 = vmax.f32 %v5807, %v5808
  %v5810 = vsel %vm5249, %v3267, -inf
  %v5811 = vsel %vm5249, %v3843, -inf
  %v5812 = vmax.f32 %v5810, %v5811
  %v5813 = vsel %vm5249, %v4419, -inf
  %v5814 = vmax.f32 %v5812, %v5813
  %v5815 = vsel %vm5249, %v4995, -inf
  %v5816 = vmax.f32 %v5814, %v5815
  %v5817 = vsel %vm5249, %v3270, -inf
  %v5818 = vsel %vm5249, %v3846, -inf
  %v5819 = vmax.f32 %v5817, %v5818
  %v5820 = vsel %vm5249, %v4422, -inf
  %v5821 = vmax.f32 %v5819, %v5820
  %v5822 = vsel %vm5249, %v4998, -inf
  %v5823 = vmax.f32 %v5821, %v5822
  %v5824 = vsel %vm5249, %v3275, -inf
  %v5825 = vsel %vm5249, %v3851, -inf
  %v5826 = vmax.f32 %v5824, %v5825
  %v5827 = vsel %vm5249, %v4427, -inf
  %v5828 = vmax.f32 %v5826, %v5827
  %v5829 = vsel %vm5249, %v5003, -inf
  %v5830 = vmax.f32 %v5828, %v5829
  %v5831 = vsel %vm5249, %v3278, -inf
  %v5832 = vsel %vm5249, %v3854, -inf
  %v5833 = vmax.f32 %v5831, %v5832
  %v5834 = vsel %vm5249, %v4430, -inf
  %v5835 = vmax.f32 %v5833, %v5834
  %v5836 = vsel %vm5249, %v5006, -inf
  %v5837 = vmax.f32 %v5835, %v5836
  %v5838 = vsel %vm5249, %v3283, -inf
  %v5839 = vsel %vm5249, %v3859, -inf
  %v5840 = vmax.f32 %v5838, %v5839
  %v5841 = vsel %vm5249, %v4435, -inf
  %v5842 = vmax.f32 %v5840, %v5841
  %v5843 = vsel %vm5249, %v5011, -inf
  %v5844 = vmax.f32 %v5842, %v5843
  %v5845 = vsel %vm5249, %v3286, -inf
  %v5846 = vsel %vm5249, %v3862, -inf
  %v5847 = vmax.f32 %v5845, %v5846
  %v5848 = vsel %vm5249, %v4438, -inf
  %v5849 = vmax.f32 %v5847, %v5848
  %v5850 = vsel %vm5249, %v5014, -inf
  %v5851 = vmax.f32 %v5849, %v5850
  %v5852 = vsel %vm5249, %v3291, -inf
  %v5853 = vsel %vm5249, %v3867, -inf
  %v5854 = vmax.f32 %v5852, %v5853
  %v5855 = vsel %vm5249, %v4443, -inf
  %v5856 = vmax.f32 %v5854, %v5855
  %v5857 = vsel %vm5249, %v5019, -inf
  %v5858 = vmax.f32 %v5856, %v5857
  %v5859 = vsel %vm5249, %v3294, -inf
  %v5860 = vsel %vm5249, %v3870, -inf
  %v5861 = vmax.f32 %v5859, %v5860
  %v5862 = vsel %vm5249, %v4446, -inf
  %v5863 = vmax.f32 %v5861, %v5862
  %v5864 = vsel %vm5249, %v5022, -inf
  %v5865 = vmax.f32 %v5863, %v5864
  %v5866 = vsel %vm5249, %v3299, -inf
  %v5867 = vsel %vm5249, %v3875, -inf
  %v5868 = vmax.f32 %v5866, %v5867
  %v5869 = vsel %vm5249, %v4451, -inf
  %v5870 = vmax.f32 %v5868, %v5869
  %v5871 = vsel %vm5249, %v5027, -inf
  %v5872 = vmax.f32 %v5870, %v5871
  %v5873 = vsel %vm5249, %v3302, -inf
  %v5874 = vsel %vm5249, %v3878, -inf
  %v5875 = vmax.f32 %v5873, %v5874
  %v5876 = vsel %vm5249, %v4454, -inf
  %v5877 = vmax.f32 %v5875, %v5876
  %v5878 = vsel %vm5249, %v5030, -inf
  %v5879 = vmax.f32 %v5877, %v5878
  %v5880 = vsel %vm5249, %v3307, -inf
  %v5881 = vsel %vm5249, %v3883, -inf
  %v5882 = vmax.f32 %v5880, %v5881
  %v5883 = vsel %vm5249, %v4459, -inf
  %v5884 = vmax.f32 %v5882, %v5883
  %v5885 = vsel %vm5249, %v5035, -inf
  %v5886 = vmax.f32 %v5884, %v5885
  %v5887 = vsel %vm5249, %v3310, -inf
  %v5888 = vsel %vm5249, %v3886, -inf
  %v5889 = vmax.f32 %v5887, %v5888
  %v5890 = vsel %vm5249, %v4462, -inf
  %v5891 = vmax.f32 %v5889, %v5890
  %v5892 = vsel %vm5249, %v5038, -inf
  %v5893 = vmax.f32 %v5891, %v5892
  %v5894 = vsel %vm5249, %v3315, -inf
  %v5895 = vsel %vm5249, %v3891, -inf
  %v5896 = vmax.f32 %v5894, %v5895
  %v5897 = vsel %vm5249, %v4467, -inf
  %v5898 = vmax.f32 %v5896, %v5897
  %v5899 = vsel %vm5249, %v5043, -inf
  %v5900 = vmax.f32 %v5898, %v5899
  %v5901 = vsel %vm5249, %v3318, -inf
  %v5902 = vsel %vm5249, %v3894, -inf
  %v5903 = vmax.f32 %v5901, %v5902
  %v5904 = vsel %vm5249, %v4470, -inf
  %v5905 = vmax.f32 %v5903, %v5904
  %v5906 = vsel %vm5249, %v5046, -inf
  %v5907 = vmax.f32 %v5905, %v5906
  %v5908 = vsel %vm5249, %v3323, -inf
  %v5909 = vsel %vm5249, %v3899, -inf
  %v5910 = vmax.f32 %v5908, %v5909
  %v5911 = vsel %vm5249, %v4475, -inf
  %v5912 = vmax.f32 %v5910, %v5911
  %v5913 = vsel %vm5249, %v5051, -inf
  %v5914 = vmax.f32 %v5912, %v5913
  %v5915 = vsel %vm5249, %v3326, -inf
  %v5916 = vsel %vm5249, %v3902, -inf
  %v5917 = vmax.f32 %v5915, %v5916
  %v5918 = vsel %vm5249, %v4478, -inf
  %v5919 = vmax.f32 %v5917, %v5918
  %v5920 = vsel %vm5249, %v5054, -inf
  %v5921 = vmax.f32 %v5919, %v5920
  %v5922 = vsel %vm5249, %v3331, -inf
  %v5923 = vsel %vm5249, %v3907, -inf
  %v5924 = vmax.f32 %v5922, %v5923
  %v5925 = vsel %vm5249, %v4483, -inf
  %v5926 = vmax.f32 %v5924, %v5925
  %v5927 = vsel %vm5249, %v5059, -inf
  %v5928 = vmax.f32 %v5926, %v5927
  %v5929 = vsel %vm5249, %v3334, -inf
  %v5930 = vsel %vm5249, %v3910, -inf
  %v5931 = vmax.f32 %v5929, %v5930
  %v5932 = vsel %vm5249, %v4486, -inf
  %v5933 = vmax.f32 %v5931, %v5932
  %v5934 = vsel %vm5249, %v5062, -inf
  %v5935 = vmax.f32 %v5933, %v5934
  %v5936 = vsel %vm5249, %v3339, -inf
  %v5937 = vsel %vm5249, %v3915, -inf
  %v5938 = vmax.f32 %v5936, %v5937
  %v5939 = vsel %vm5249, %v4491, -inf
  %v5940 = vmax.f32 %v5938, %v5939
  %v5941 = vsel %vm5249, %v5067, -inf
  %v5942 = vmax.f32 %v5940, %v5941
  %v5943 = vsel %vm5249, %v3342, -inf
  %v5944 = vsel %vm5249, %v3918, -inf
  %v5945 = vmax.f32 %v5943, %v5944
  %v5946 = vsel %vm5249, %v4494, -inf
  %v5947 = vmax.f32 %v5945, %v5946
  %v5948 = vsel %vm5249, %v5070, -inf
  %v5949 = vmax.f32 %v5947, %v5948
  %v5950 = vsel %vm5249, %v3347, -inf
  %v5951 = vsel %vm5249, %v3923, -inf
  %v5952 = vmax.f32 %v5950, %v5951
  %v5953 = vsel %vm5249, %v4499, -inf
  %v5954 = vmax.f32 %v5952, %v5953
  %v5955 = vsel %vm5249, %v5075, -inf
  %v5956 = vmax.f32 %v5954, %v5955
  %v5957 = vsel %vm5249, %v3350, -inf
  %v5958 = vsel %vm5249, %v3926, -inf
  %v5959 = vmax.f32 %v5957, %v5958
  %v5960 = vsel %vm5249, %v4502, -inf
  %v5961 = vmax.f32 %v5959, %v5960
  %v5962 = vsel %vm5249, %v5078, -inf
  %v5963 = vmax.f32 %v5961, %v5962
  %v5964 = vsel %vm5249, %v3355, -inf
  %v5965 = vsel %vm5249, %v3931, -inf
  %v5966 = vmax.f32 %v5964, %v5965
  %v5967 = vsel %vm5249, %v4507, -inf
  %v5968 = vmax.f32 %v5966, %v5967
  %v5969 = vsel %vm5249, %v5083, -inf
  %v5970 = vmax.f32 %v5968, %v5969
  %v5971 = vsel %vm5249, %v3358, -inf
  %v5972 = vsel %vm5249, %v3934, -inf
  %v5973 = vmax.f32 %v5971, %v5972
  %v5974 = vsel %vm5249, %v4510, -inf
  %v5975 = vmax.f32 %v5973, %v5974
  %v5976 = vsel %vm5249, %v5086, -inf
  %v5977 = vmax.f32 %v5975, %v5976
  %v5978 = vsel %vm5249, %v3363, -inf
  %v5979 = vsel %vm5249, %v3939, -inf
  %v5980 = vmax.f32 %v5978, %v5979
  %v5981 = vsel %vm5249, %v4515, -inf
  %v5982 = vmax.f32 %v5980, %v5981
  %v5983 = vsel %vm5249, %v5091, -inf
  %v5984 = vmax.f32 %v5982, %v5983
  %v5985 = vsel %vm5249, %v3366, -inf
  %v5986 = vsel %vm5249, %v3942, -inf
  %v5987 = vmax.f32 %v5985, %v5986
  %v5988 = vsel %vm5249, %v4518, -inf
  %v5989 = vmax.f32 %v5987, %v5988
  %v5990 = vsel %vm5249, %v5094, -inf
  %v5991 = vmax.f32 %v5989, %v5990
  %v5992 = vsel %vm5249, %v3371, -inf
  %v5993 = vsel %vm5249, %v3947, -inf
  %v5994 = vmax.f32 %v5992, %v5993
  %v5995 = vsel %vm5249, %v4523, -inf
  %v5996 = vmax.f32 %v5994, %v5995
  %v5997 = vsel %vm5249, %v5099, -inf
  %v5998 = vmax.f32 %v5996, %v5997
  %v5999 = vsel %vm5249, %v3374, -inf
  %v6000 = vsel %vm5249, %v3950, -inf
  %v6001 = vmax.f32 %v5999, %v6000
  %v6002 = vsel %vm5249, %v4526, -inf
  %v6003 = vmax.f32 %v6001, %v6002
  %v6004 = vsel %vm5249, %v5102, -inf
  %v6005 = vmax.f32 %v6003, %v6004
  %v6006 = vsel %vm5249, %v3379, -inf
  %v6007 = vsel %vm5249, %v3955, -inf
  %v6008 = vmax.f32 %v6006, %v6007
  %v6009 = vsel %vm5249, %v4531, -inf
  %v6010 = vmax.f32 %v6008, %v6009
  %v6011 = vsel %vm5249, %v5107, -inf
  %v6012 = vmax.f32 %v6010, %v6011
  %v6013 = vsel %vm5249, %v3382, -inf
  %v6014 = vsel %vm5249, %v3958, -inf
  %v6015 = vmax.f32 %v6013, %v6014
  %v6016 = vsel %vm5249, %v4534, -inf
  %v6017 = vmax.f32 %v6015, %v6016
  %v6018 = vsel %vm5249, %v5110, -inf
  %v6019 = vmax.f32 %v6017, %v6018
  %v6020 = vsel %vm5249, %v3387, -inf
  %v6021 = vsel %vm5249, %v3963, -inf
  %v6022 = vmax.f32 %v6020, %v6021
  %v6023 = vsel %vm5249, %v4539, -inf
  %v6024 = vmax.f32 %v6022, %v6023
  %v6025 = vsel %vm5249, %v5115, -inf
  %v6026 = vmax.f32 %v6024, %v6025
  %v6027 = vsel %vm5249, %v3390, -inf
  %v6028 = vsel %vm5249, %v3966, -inf
  %v6029 = vmax.f32 %v6027, %v6028
  %v6030 = vsel %vm5249, %v4542, -inf
  %v6031 = vmax.f32 %v6029, %v6030
  %v6032 = vsel %vm5249, %v5118, -inf
  %v6033 = vmax.f32 %v6031, %v6032
  %v6034 = vsel %vm5249, %v3395, -inf
  %v6035 = vsel %vm5249, %v3971, -inf
  %v6036 = vmax.f32 %v6034, %v6035
  %v6037 = vsel %vm5249, %v4547, -inf
  %v6038 = vmax.f32 %v6036, %v6037
  %v6039 = vsel %vm5249, %v5123, -inf
  %v6040 = vmax.f32 %v6038, %v6039
  %v6041 = vsel %vm5249, %v3398, -inf
  %v6042 = vsel %vm5249, %v3974, -inf
  %v6043 = vmax.f32 %v6041, %v6042
  %v6044 = vsel %vm5249, %v4550, -inf
  %v6045 = vmax.f32 %v6043, %v6044
  %v6046 = vsel %vm5249, %v5126, -inf
  %v6047 = vmax.f32 %v6045, %v6046
  %v6048 = vsel %vm5249, %v3403, -inf
  %v6049 = vsel %vm5249, %v3979, -inf
  %v6050 = vmax.f32 %v6048, %v6049
  %v6051 = vsel %vm5249, %v4555, -inf
  %v6052 = vmax.f32 %v6050, %v6051
  %v6053 = vsel %vm5249, %v5131, -inf
  %v6054 = vmax.f32 %v6052, %v6053
  %v6055 = vsel %vm5249, %v3406, -inf
  %v6056 = vsel %vm5249, %v3982, -inf
  %v6057 = vmax.f32 %v6055, %v6056
  %v6058 = vsel %vm5249, %v4558, -inf
  %v6059 = vmax.f32 %v6057, %v6058
  %v6060 = vsel %vm5249, %v5134, -inf
  %v6061 = vmax.f32 %v6059, %v6060
  %v6062 = vsel %vm5249, %v3411, -inf
  %v6063 = vsel %vm5249, %v3987, -inf
  %v6064 = vmax.f32 %v6062, %v6063
  %v6065 = vsel %vm5249, %v4563, -inf
  %v6066 = vmax.f32 %v6064, %v6065
  %v6067 = vsel %vm5249, %v5139, -inf
  %v6068 = vmax.f32 %v6066, %v6067
  %v6069 = vsel %vm5249, %v3414, -inf
  %v6070 = vsel %vm5249, %v3990, -inf
  %v6071 = vmax.f32 %v6069, %v6070
  %v6072 = vsel %vm5249, %v4566, -inf
  %v6073 = vmax.f32 %v6071, %v6072
  %v6074 = vsel %vm5249, %v5142, -inf
  %v6075 = vmax.f32 %v6073, %v6074
  %v6076 = vsel %vm5249, %v3419, -inf
  %v6077 = vsel %vm5249, %v3995, -inf
  %v6078 = vmax.f32 %v6076, %v6077
  %v6079 = vsel %vm5249, %v4571, -inf
  %v6080 = vmax.f32 %v6078, %v6079
  %v6081 = vsel %vm5249, %v5147, -inf
  %v6082 = vmax.f32 %v6080, %v6081
  %v6083 = vsel %vm5249, %v3422, -inf
  %v6084 = vsel %vm5249, %v3998, -inf
  %v6085 = vmax.f32 %v6083, %v6084
  %v6086 = vsel %vm5249, %v4574, -inf
  %v6087 = vmax.f32 %v6085, %v6086
  %v6088 = vsel %vm5249, %v5150, -inf
  %v6089 = vmax.f32 %v6087, %v6088
  %v6090 = vsel %vm5249, %v3427, -inf
  %v6091 = vsel %vm5249, %v4003, -inf
  %v6092 = vmax.f32 %v6090, %v6091
  %v6093 = vsel %vm5249, %v4579, -inf
  %v6094 = vmax.f32 %v6092, %v6093
  %v6095 = vsel %vm5249, %v5155, -inf
  %v6096 = vmax.f32 %v6094, %v6095
  %v6097 = vsel %vm5249, %v3430, -inf
  %v6098 = vsel %vm5249, %v4006, -inf
  %v6099 = vmax.f32 %v6097, %v6098
  %v6100 = vsel %vm5249, %v4582, -inf
  %v6101 = vmax.f32 %v6099, %v6100
  %v6102 = vsel %vm5249, %v5158, -inf
  %v6103 = vmax.f32 %v6101, %v6102
  %v6104 = vsel %vm5249, %v3435, -inf
  %v6105 = vsel %vm5249, %v4011, -inf
  %v6106 = vmax.f32 %v6104, %v6105
  %v6107 = vsel %vm5249, %v4587, -inf
  %v6108 = vmax.f32 %v6106, %v6107
  %v6109 = vsel %vm5249, %v5163, -inf
  %v6110 = vmax.f32 %v6108, %v6109
  %v6111 = vsel %vm5249, %v3438, -inf
  %v6112 = vsel %vm5249, %v4014, -inf
  %v6113 = vmax.f32 %v6111, %v6112
  %v6114 = vsel %vm5249, %v4590, -inf
  %v6115 = vmax.f32 %v6113, %v6114
  %v6116 = vsel %vm5249, %v5166, -inf
  %v6117 = vmax.f32 %v6115, %v6116
  %v6118 = vsel %vm5249, %v3443, -inf
  %v6119 = vsel %vm5249, %v4019, -inf
  %v6120 = vmax.f32 %v6118, %v6119
  %v6121 = vsel %vm5249, %v4595, -inf
  %v6122 = vmax.f32 %v6120, %v6121
  %v6123 = vsel %vm5249, %v5171, -inf
  %v6124 = vmax.f32 %v6122, %v6123
  %v6125 = vsel %vm5249, %v3446, -inf
  %v6126 = vsel %vm5249, %v4022, -inf
  %v6127 = vmax.f32 %v6125, %v6126
  %v6128 = vsel %vm5249, %v4598, -inf
  %v6129 = vmax.f32 %v6127, %v6128
  %v6130 = vsel %vm5249, %v5174, -inf
  %v6131 = vmax.f32 %v6129, %v6130
  %v6132 = vsel %vm5249, %v3451, -inf
  %v6133 = vsel %vm5249, %v4027, -inf
  %v6134 = vmax.f32 %v6132, %v6133
  %v6135 = vsel %vm5249, %v4603, -inf
  %v6136 = vmax.f32 %v6134, %v6135
  %v6137 = vsel %vm5249, %v5179, -inf
  %v6138 = vmax.f32 %v6136, %v6137
  %v6139 = vsel %vm5249, %v3454, -inf
  %v6140 = vsel %vm5249, %v4030, -inf
  %v6141 = vmax.f32 %v6139, %v6140
  %v6142 = vsel %vm5249, %v4606, -inf
  %v6143 = vmax.f32 %v6141, %v6142
  %v6144 = vsel %vm5249, %v5182, -inf
  %v6145 = vmax.f32 %v6143, %v6144
  %v6146 = vsel %vm5249, %v3459, -inf
  %v6147 = vsel %vm5249, %v4035, -inf
  %v6148 = vmax.f32 %v6146, %v6147
  %v6149 = vsel %vm5249, %v4611, -inf
  %v6150 = vmax.f32 %v6148, %v6149
  %v6151 = vsel %vm5249, %v5187, -inf
  %v6152 = vmax.f32 %v6150, %v6151
  %v6153 = vsel %vm5249, %v3462, -inf
  %v6154 = vsel %vm5249, %v4038, -inf
  %v6155 = vmax.f32 %v6153, %v6154
  %v6156 = vsel %vm5249, %v4614, -inf
  %v6157 = vmax.f32 %v6155, %v6156
  %v6158 = vsel %vm5249, %v5190, -inf
  %v6159 = vmax.f32 %v6157, %v6158
  %v6160 = vsel %vm5249, %v3467, -inf
  %v6161 = vsel %vm5249, %v4043, -inf
  %v6162 = vmax.f32 %v6160, %v6161
  %v6163 = vsel %vm5249, %v4619, -inf
  %v6164 = vmax.f32 %v6162, %v6163
  %v6165 = vsel %vm5249, %v5195, -inf
  %v6166 = vmax.f32 %v6164, %v6165
  %v6167 = vsel %vm5249, %v3470, -inf
  %v6168 = vsel %vm5249, %v4046, -inf
  %v6169 = vmax.f32 %v6167, %v6168
  %v6170 = vsel %vm5249, %v4622, -inf
  %v6171 = vmax.f32 %v6169, %v6170
  %v6172 = vsel %vm5249, %v5198, -inf
  %v6173 = vmax.f32 %v6171, %v6172
  %v6174 = vsel %vm5249, %v3475, -inf
  %v6175 = vsel %vm5249, %v4051, -inf
  %v6176 = vmax.f32 %v6174, %v6175
  %v6177 = vsel %vm5249, %v4627, -inf
  %v6178 = vmax.f32 %v6176, %v6177
  %v6179 = vsel %vm5249, %v5203, -inf
  %v6180 = vmax.f32 %v6178, %v6179
  %v6181 = vsel %vm5249, %v3478, -inf
  %v6182 = vsel %vm5249, %v4054, -inf
  %v6183 = vmax.f32 %v6181, %v6182
  %v6184 = vsel %vm5249, %v4630, -inf
  %v6185 = vmax.f32 %v6183, %v6184
  %v6186 = vsel %vm5249, %v5206, -inf
  %v6187 = vmax.f32 %v6185, %v6186
  %v6188 = vsel %vm5249, %v3483, -inf
  %v6189 = vsel %vm5249, %v4059, -inf
  %v6190 = vmax.f32 %v6188, %v6189
  %v6191 = vsel %vm5249, %v4635, -inf
  %v6192 = vmax.f32 %v6190, %v6191
  %v6193 = vsel %vm5249, %v5211, -inf
  %v6194 = vmax.f32 %v6192, %v6193
  %v6195 = vsel %vm5249, %v3486, -inf
  %v6196 = vsel %vm5249, %v4062, -inf
  %v6197 = vmax.f32 %v6195, %v6196
  %v6198 = vsel %vm5249, %v4638, -inf
  %v6199 = vmax.f32 %v6197, %v6198
  %v6200 = vsel %vm5249, %v5214, -inf
  %v6201 = vmax.f32 %v6199, %v6200
  %v6202 = vsel %vm5249, %v3491, -inf
  %v6203 = vsel %vm5249, %v4067, -inf
  %v6204 = vmax.f32 %v6202, %v6203
  %v6205 = vsel %vm5249, %v4643, -inf
  %v6206 = vmax.f32 %v6204, %v6205
  %v6207 = vsel %vm5249, %v5219, -inf
  %v6208 = vmax.f32 %v6206, %v6207
  %v6209 = vsel %vm5249, %v3494, -inf
  %v6210 = vsel %vm5249, %v4070, -inf
  %v6211 = vmax.f32 %v6209, %v6210
  %v6212 = vsel %vm5249, %v4646, -inf
  %v6213 = vmax.f32 %v6211, %v6212
  %v6214 = vsel %vm5249, %v5222, -inf
  %v6215 = vmax.f32 %v6213, %v6214
  %v6216 = vsel %vm5249, %v3499, -inf
  %v6217 = vsel %vm5249, %v4075, -inf
  %v6218 = vmax.f32 %v6216, %v6217
  %v6219 = vsel %vm5249, %v4651, -inf
  %v6220 = vmax.f32 %v6218, %v6219
  %v6221 = vsel %vm5249, %v5227, -inf
  %v6222 = vmax.f32 %v6220, %v6221
  %v6223 = vsel %vm5249, %v3502, -inf
  %v6224 = vsel %vm5249, %v4078, -inf
  %v6225 = vmax.f32 %v6223, %v6224
  %v6226 = vsel %vm5249, %v4654, -inf
  %v6227 = vmax.f32 %v6225, %v6226
  %v6228 = vsel %vm5249, %v5230, -inf
  %v6229 = vmax.f32 %v6227, %v6228
  %v6230 = vsel %vm5249, %v3507, -inf
  %v6231 = vsel %vm5249, %v4083, -inf
  %v6232 = vmax.f32 %v6230, %v6231
  %v6233 = vsel %vm5249, %v4659, -inf
  %v6234 = vmax.f32 %v6232, %v6233
  %v6235 = vsel %vm5249, %v5235, -inf
  %v6236 = vmax.f32 %v6234, %v6235
  %v6237 = vsel %vm5249, %v3510, -inf
  %v6238 = vsel %vm5249, %v4086, -inf
  %v6239 = vmax.f32 %v6237, %v6238
  %v6240 = vsel %vm5249, %v4662, -inf
  %v6241 = vmax.f32 %v6239, %v6240
  %v6242 = vsel %vm5249, %v5238, -inf
  %v6243 = vmax.f32 %v6241, %v6242
  %v6244 = vsel %vm5249, %v3515, -inf
  %v6245 = vsel %vm5249, %v4091, -inf
  %v6246 = vmax.f32 %v6244, %v6245
  %v6247 = vsel %vm5249, %v4667, -inf
  %v6248 = vmax.f32 %v6246, %v6247
  %v6249 = vsel %vm5249, %v5243, -inf
  %v6250 = vmax.f32 %v6248, %v6249
  %v6251 = vsel %vm5249, %v3518, -inf
  %v6252 = vsel %vm5249, %v4094, -inf
  %v6253 = vmax.f32 %v6251, %v6252
  %v6254 = vsel %vm5249, %v4670, -inf
  %v6255 = vmax.f32 %v6253, %v6254
  %v6256 = vsel %vm5249, %v5246, -inf
  %v6257 = vmax.f32 %v6255, %v6256
  %v6258 = vld [vmem:[%s2] sm:$0x1]
  %v6260 = vlaneseq
  %v6261 = vshrl.u32 %v6260, 7
  %v6262 = vsub.s32 0, %v6261
  %v6263 = vrot.slane %v6258, %v6262
  %v6265 = vadd.f32 %v5256, %v6263
  %v6266 = vadd.f32 %v5263, %v6263
  %v6267 = vadd.f32 %v5270, %v6263
  %v6268 = vadd.f32 %v5277, %v6263
  %v6269 = vadd.f32 %v5284, %v6263
  %v6270 = vadd.f32 %v5291, %v6263
  %v6271 = vadd.f32 %v5298, %v6263
  %v6272 = vadd.f32 %v5305, %v6263
  %v6273 = vadd.f32 %v5312, %v6263
  %v6274 = vadd.f32 %v5319, %v6263
  %v6275 = vadd.f32 %v5326, %v6263
  %v6276 = vadd.f32 %v5333, %v6263
  %v6277 = vadd.f32 %v5340, %v6263
  %v6278 = vadd.f32 %v5347, %v6263
  %v6279 = vadd.f32 %v5354, %v6263
  %v6280 = vadd.f32 %v5361, %v6263
  %v6281 = vadd.f32 %v5368, %v6263
  %v6282 = vadd.f32 %v5375, %v6263
  %v6283 = vadd.f32 %v5382, %v6263
  %v6284 = vadd.f32 %v5389, %v6263
  %v6285 = vadd.f32 %v5396, %v6263
  %v6286 = vadd.f32 %v5403, %v6263
  %v6287 = vadd.f32 %v5410, %v6263
  %v6288 = vadd.f32 %v5417, %v6263
  %v6289 = vadd.f32 %v5424, %v6263
  %v6290 = vadd.f32 %v5431, %v6263
  %v6291 = vadd.f32 %v5438, %v6263
  %v6292 = vadd.f32 %v5445, %v6263
  %v6293 = vadd.f32 %v5452, %v6263
  %v6294 = vadd.f32 %v5459, %v6263
  %v6295 = vadd.f32 %v5466, %v6263
  %v6296 = vadd.f32 %v5473, %v6263
  %v6297 = vadd.f32 %v5480, %v6263
  %v6298 = vadd.f32 %v5487, %v6263
  %v6299 = vadd.f32 %v5494, %v6263
  %v6300 = vadd.f32 %v5501, %v6263
  %v6301 = vadd.f32 %v5508, %v6263
  %v6302 = vadd.f32 %v5515, %v6263
  %v6303 = vadd.f32 %v5522, %v6263
  %v6304 = vadd.f32 %v5529, %v6263
  %v6305 = vadd.f32 %v5536, %v6263
  %v6306 = vadd.f32 %v5543, %v6263
  %v6307 = vadd.f32 %v5550, %v6263
  %v6308 = vadd.f32 %v5557, %v6263
  %v6309 = vadd.f32 %v5564, %v6263
  %v6310 = vadd.f32 %v5571, %v6263
  %v6311 = vadd.f32 %v5578, %v6263
  %v6312 = vadd.f32 %v5585, %v6263
  %v6313 = vadd.f32 %v5592, %v6263
  %v6314 = vadd.f32 %v5599, %v6263
  %v6315 = vadd.f32 %v5606, %v6263
  %v6316 = vadd.f32 %v5613, %v6263
  %v6317 = vadd.f32 %v5620, %v6263
  %v6318 = vadd.f32 %v5627, %v6263
  %v6319 = vadd.f32 %v5634, %v6263
  %v6320 = vadd.f32 %v5641, %v6263
  %v6321 = vadd.f32 %v5648, %v6263
  %v6322 = vadd.f32 %v5655, %v6263
  %v6323 = vadd.f32 %v5662, %v6263
  %v6324 = vadd.f32 %v5669, %v6263
  %v6325 = vadd.f32 %v5676, %v6263
  %v6326 = vadd.f32 %v5683, %v6263
  %v6327 = vadd.f32 %v5690, %v6263
  %v6328 = vadd.f32 %v5697, %v6263
  %v6329 = vadd.f32 %v5704, %v6263
  %v6330 = vadd.f32 %v5711, %v6263
  %v6331 = vadd.f32 %v5718, %v6263
  %v6332 = vadd.f32 %v5725, %v6263
  %v6333 = vadd.f32 %v5732, %v6263
  %v6334 = vadd.f32 %v5739, %v6263
  %v6335 = vadd.f32 %v5746, %v6263
  %v6336 = vadd.f32 %v5753, %v6263
  %v6337 = vadd.f32 %v5760, %v6263
  %v6338 = vadd.f32 %v5767, %v6263
  %v6339 = vadd.f32 %v5774, %v6263
  %v6340 = vadd.f32 %v5781, %v6263
  %v6341 = vadd.f32 %v5788, %v6263
  %v6342 = vadd.f32 %v5795, %v6263
  %v6343 = vadd.f32 %v5802, %v6263
  %v6344 = vadd.f32 %v5809, %v6263
  %v6345 = vadd.f32 %v5816, %v6263
  %v6346 = vadd.f32 %v5823, %v6263
  %v6347 = vadd.f32 %v5830, %v6263
  %v6348 = vadd.f32 %v5837, %v6263
  %v6349 = vadd.f32 %v5844, %v6263
  %v6350 = vadd.f32 %v5851, %v6263
  %v6351 = vadd.f32 %v5858, %v6263
  %v6352 = vadd.f32 %v5865, %v6263
  %v6353 = vadd.f32 %v5872, %v6263
  %v6354 = vadd.f32 %v5879, %v6263
  %v6355 = vadd.f32 %v5886, %v6263
  %v6356 = vadd.f32 %v5893, %v6263
  %v6357 = vadd.f32 %v5900, %v6263
  %v6358 = vadd.f32 %v5907, %v6263
  %v6359 = vadd.f32 %v5914, %v6263
  %v6360 = vadd.f32 %v5921, %v6263
  %v6361 = vadd.f32 %v5928, %v6263
  %v6362 = vadd.f32 %v5935, %v6263
  %v6363 = vadd.f32 %v5942, %v6263
  %v6364 = vadd.f32 %v5949, %v6263
  %v6365 = vadd.f32 %v5956, %v6263
  %v6366 = vadd.f32 %v5963, %v6263
  %v6367 = vadd.f32 %v5970, %v6263
  %v6368 = vadd.f32 %v5977, %v6263
  %v6369 = vadd.f32 %v5984, %v6263
  %v6370 = vadd.f32 %v5991, %v6263
  %v6371 = vadd.f32 %v5998, %v6263
  %v6372 = vadd.f32 %v6005, %v6263
  %v6373 = vadd.f32 %v6012, %v6263
  %v6374 = vadd.f32 %v6019, %v6263
  %v6375 = vadd.f32 %v6026, %v6263
  %v6376 = vadd.f32 %v6033, %v6263
  %v6377 = vadd.f32 %v6040, %v6263
  %v6378 = vadd.f32 %v6047, %v6263
  %v6379 = vadd.f32 %v6054, %v6263
  %v6380 = vadd.f32 %v6061, %v6263
  %v6381 = vadd.f32 %v6068, %v6263
  %v6382 = vadd.f32 %v6075, %v6263
  %v6383 = vadd.f32 %v6082, %v6263
  %v6384 = vadd.f32 %v6089, %v6263
  %v6385 = vadd.f32 %v6096, %v6263
  %v6386 = vadd.f32 %v6103, %v6263
  %v6387 = vadd.f32 %v6110, %v6263
  %v6388 = vadd.f32 %v6117, %v6263
  %v6389 = vadd.f32 %v6124, %v6263
  %v6390 = vadd.f32 %v6131, %v6263
  %v6391 = vadd.f32 %v6138, %v6263
  %v6392 = vadd.f32 %v6145, %v6263
  %v6393 = vadd.f32 %v6152, %v6263
  %v6394 = vadd.f32 %v6159, %v6263
  %v6395 = vadd.f32 %v6166, %v6263
  %v6396 = vadd.f32 %v6173, %v6263
  %v6397 = vadd.f32 %v6180, %v6263
  %v6398 = vadd.f32 %v6187, %v6263
  %v6399 = vadd.f32 %v6194, %v6263
  %v6400 = vadd.f32 %v6201, %v6263
  %v6401 = vadd.f32 %v6208, %v6263
  %v6402 = vadd.f32 %v6215, %v6263
  %v6403 = vadd.f32 %v6222, %v6263
  %v6404 = vadd.f32 %v6229, %v6263
  %v6405 = vadd.f32 %v6236, %v6263
  %v6406 = vadd.f32 %v6243, %v6263
  %v6407 = vadd.f32 %v6250, %v6263
  %v6408 = vadd.f32 %v6257, %v6263
  %v6409 = vmax.f32 %v6265, 0.0
  %v6410 = vmax.f32 %v6266, 0.0
  %v6411 = vmax.f32 %v6267, 0.0
  %v6412 = vmax.f32 %v6268, 0.0
  %v6413 = vmax.f32 %v6269, 0.0
  %v6414 = vmax.f32 %v6270, 0.0
  %v6415 = vmax.f32 %v6271, 0.0
  %v6416 = vmax.f32 %v6272, 0.0
  %v6417 = vmax.f32 %v6273, 0.0
  %v6418 = vmax.f32 %v6274, 0.0
  %v6419 = vmax.f32 %v6275, 0.0
  %v6420 = vmax.f32 %v6276, 0.0
  %v6421 = vmax.f32 %v6277, 0.0
  %v6422 = vmax.f32 %v6278, 0.0
  %v6423 = vmax.f32 %v6279, 0.0
  %v6424 = vmax.f32 %v6280, 0.0
  %v6425 = vmax.f32 %v6281, 0.0
  %v6426 = vmax.f32 %v6282, 0.0
  %v6427 = vmax.f32 %v6283, 0.0
  %v6428 = vmax.f32 %v6284, 0.0
  %v6429 = vmax.f32 %v6285, 0.0
  %v6430 = vmax.f32 %v6286, 0.0
  %v6431 = vmax.f32 %v6287, 0.0
  %v6432 = vmax.f32 %v6288, 0.0
  %v6433 = vmax.f32 %v6289, 0.0
  %v6434 = vmax.f32 %v6290, 0.0
  %v6435 = vmax.f32 %v6291, 0.0
  %v6436 = vmax.f32 %v6292, 0.0
  %v6437 = vmax.f32 %v6293, 0.0
  %v6438 = vmax.f32 %v6294, 0.0
  %v6439 = vmax.f32 %v6295, 0.0
  %v6440 = vmax.f32 %v6296, 0.0
  %v6441 = vmax.f32 %v6297, 0.0
  %v6442 = vmax.f32 %v6298, 0.0
  %v6443 = vmax.f32 %v6299, 0.0
  %v6444 = vmax.f32 %v6300, 0.0
  %v6445 = vmax.f32 %v6301, 0.0
  %v6446 = vmax.f32 %v6302, 0.0
  %v6447 = vmax.f32 %v6303, 0.0
  %v6448 = vmax.f32 %v6304, 0.0
  %v6449 = vmax.f32 %v6305, 0.0
  %v6450 = vmax.f32 %v6306, 0.0
  %v6451 = vmax.f32 %v6307, 0.0
  %v6452 = vmax.f32 %v6308, 0.0
  %v6453 = vmax.f32 %v6309, 0.0
  %v6454 = vmax.f32 %v6310, 0.0
  %v6455 = vmax.f32 %v6311, 0.0
  %v6456 = vmax.f32 %v6312, 0.0
  %v6457 = vmax.f32 %v6313, 0.0
  %v6458 = vmax.f32 %v6314, 0.0
  %v6459 = vmax.f32 %v6315, 0.0
  %v6460 = vmax.f32 %v6316, 0.0
  %v6461 = vmax.f32 %v6317, 0.0
  %v6462 = vmax.f32 %v6318, 0.0
  %v6463 = vmax.f32 %v6319, 0.0
  %v6464 = vmax.f32 %v6320, 0.0
  %v6465 = vmax.f32 %v6321, 0.0
  %v6466 = vmax.f32 %v6322, 0.0
  %v6467 = vmax.f32 %v6323, 0.0
  %v6468 = vmax.f32 %v6324, 0.0
  %v6469 = vmax.f32 %v6325, 0.0
  %v6470 = vmax.f32 %v6326, 0.0
  %v6471 = vmax.f32 %v6327, 0.0
  %v6472 = vmax.f32 %v6328, 0.0
  %v6473 = vmax.f32 %v6329, 0.0
  %v6474 = vmax.f32 %v6330, 0.0
  %v6475 = vmax.f32 %v6331, 0.0
  %v6476 = vmax.f32 %v6332, 0.0
  %v6477 = vmax.f32 %v6333, 0.0
  %v6478 = vmax.f32 %v6334, 0.0
  %v6479 = vmax.f32 %v6335, 0.0
  %v6480 = vmax.f32 %v6336, 0.0
  %v6481 = vmax.f32 %v6337, 0.0
  %v6482 = vmax.f32 %v6338, 0.0
  %v6483 = vmax.f32 %v6339, 0.0
  %v6484 = vmax.f32 %v6340, 0.0
  %v6485 = vmax.f32 %v6341, 0.0
  %v6486 = vmax.f32 %v6342, 0.0
  %v6487 = vmax.f32 %v6343, 0.0
  %v6488 = vmax.f32 %v6344, 0.0
  %v6489 = vmax.f32 %v6345, 0.0
  %v6490 = vmax.f32 %v6346, 0.0
  %v6491 = vmax.f32 %v6347, 0.0
  %v6492 = vmax.f32 %v6348, 0.0
  %v6493 = vmax.f32 %v6349, 0.0
  %v6494 = vmax.f32 %v6350, 0.0
  %v6495 = vmax.f32 %v6351, 0.0
  %v6496 = vmax.f32 %v6352, 0.0
  %v6497 = vmax.f32 %v6353, 0.0
  %v6498 = vmax.f32 %v6354, 0.0
  %v6499 = vmax.f32 %v6355, 0.0
  %v6500 = vmax.f32 %v6356, 0.0
  %v6501 = vmax.f32 %v6357, 0.0
  %v6502 = vmax.f32 %v6358, 0.0
  %v6503 = vmax.f32 %v6359, 0.0
  %v6504 = vmax.f32 %v6360, 0.0
  %v6505 = vmax.f32 %v6361, 0.0
  %v6506 = vmax.f32 %v6362, 0.0
  %v6507 = vmax.f32 %v6363, 0.0
  %v6508 = vmax.f32 %v6364, 0.0
  %v6509 = vmax.f32 %v6365, 0.0
  %v6510 = vmax.f32 %v6366, 0.0
  %v6511 = vmax.f32 %v6367, 0.0
  %v6512 = vmax.f32 %v6368, 0.0
  %v6513 = vmax.f32 %v6369, 0.0
  %v6514 = vmax.f32 %v6370, 0.0
  %v6515 = vmax.f32 %v6371, 0.0
  %v6516 = vmax.f32 %v6372, 0.0
  %v6517 = vmax.f32 %v6373, 0.0
  %v6518 = vmax.f32 %v6374, 0.0
  %v6519 = vmax.f32 %v6375, 0.0
  %v6520 = vmax.f32 %v6376, 0.0
  %v6521 = vmax.f32 %v6377, 0.0
  %v6522 = vmax.f32 %v6378, 0.0
  %v6523 = vmax.f32 %v6379, 0.0
  %v6524 = vmax.f32 %v6380, 0.0
  %v6525 = vmax.f32 %v6381, 0.0
  %v6526 = vmax.f32 %v6382, 0.0
  %v6527 = vmax.f32 %v6383, 0.0
  %v6528 = vmax.f32 %v6384, 0.0
  %v6529 = vmax.f32 %v6385, 0.0
  %v6530 = vmax.f32 %v6386, 0.0
  %v6531 = vmax.f32 %v6387, 0.0
  %v6532 = vmax.f32 %v6388, 0.0
  %v6533 = vmax.f32 %v6389, 0.0
  %v6534 = vmax.f32 %v6390, 0.0
  %v6535 = vmax.f32 %v6391, 0.0
  %v6536 = vmax.f32 %v6392, 0.0
  %v6537 = vmax.f32 %v6393, 0.0
  %v6538 = vmax.f32 %v6394, 0.0
  %v6539 = vmax.f32 %v6395, 0.0
  %v6540 = vmax.f32 %v6396, 0.0
  %v6541 = vmax.f32 %v6397, 0.0
  %v6542 = vmax.f32 %v6398, 0.0
  %v6543 = vmax.f32 %v6399, 0.0
  %v6544 = vmax.f32 %v6400, 0.0
  %v6545 = vmax.f32 %v6401, 0.0
  %v6546 = vmax.f32 %v6402, 0.0
  %v6547 = vmax.f32 %v6403, 0.0
  %v6548 = vmax.f32 %v6404, 0.0
  %v6549 = vmax.f32 %v6405, 0.0
  %v6550 = vmax.f32 %v6406, 0.0
  %v6551 = vmax.f32 %v6407, 0.0
  %v6552 = vmax.f32 %v6408, 0.0
  %v6553 = vpack.c.bf16 %v6410, %v6409
  %v6554 = vpack.c.bf16 %v6412, %v6411
  %v6555 = vpack.c.bf16 %v6414, %v6413
  %v6556 = vpack.c.bf16 %v6416, %v6415
  %v6557 = vpack.c.bf16 %v6418, %v6417
  %v6558 = vpack.c.bf16 %v6420, %v6419
  %v6559 = vpack.c.bf16 %v6422, %v6421
  %v6560 = vpack.c.bf16 %v6424, %v6423
  %v6561 = vpack.c.bf16 %v6426, %v6425
  %v6562 = vpack.c.bf16 %v6428, %v6427
  %v6563 = vpack.c.bf16 %v6430, %v6429
  %v6564 = vpack.c.bf16 %v6432, %v6431
  %v6565 = vpack.c.bf16 %v6434, %v6433
  %v6566 = vpack.c.bf16 %v6436, %v6435
  %v6567 = vpack.c.bf16 %v6438, %v6437
  %v6568 = vpack.c.bf16 %v6440, %v6439
  %v6569 = vpack.c.bf16 %v6442, %v6441
  %v6570 = vpack.c.bf16 %v6444, %v6443
  %v6571 = vpack.c.bf16 %v6446, %v6445
  %v6572 = vpack.c.bf16 %v6448, %v6447
  %v6573 = vpack.c.bf16 %v6450, %v6449
  %v6574 = vpack.c.bf16 %v6452, %v6451
  %v6575 = vpack.c.bf16 %v6454, %v6453
  %v6576 = vpack.c.bf16 %v6456, %v6455
  %v6577 = vpack.c.bf16 %v6458, %v6457
  %v6578 = vpack.c.bf16 %v6460, %v6459
  %v6579 = vpack.c.bf16 %v6462, %v6461
  %v6580 = vpack.c.bf16 %v6464, %v6463
  %v6581 = vpack.c.bf16 %v6466, %v6465
  %v6582 = vpack.c.bf16 %v6468, %v6467
  %v6583 = vpack.c.bf16 %v6470, %v6469
  %v6584 = vpack.c.bf16 %v6472, %v6471
  %v6585 = vpack.c.bf16 %v6474, %v6473
  %v6586 = vpack.c.bf16 %v6476, %v6475
  %v6587 = vpack.c.bf16 %v6478, %v6477
  %v6588 = vpack.c.bf16 %v6480, %v6479
  %v6589 = vpack.c.bf16 %v6482, %v6481
  %v6590 = vpack.c.bf16 %v6484, %v6483
  %v6591 = vpack.c.bf16 %v6486, %v6485
  %v6592 = vpack.c.bf16 %v6488, %v6487
  %v6593 = vpack.c.bf16 %v6490, %v6489
  %v6594 = vpack.c.bf16 %v6492, %v6491
  %v6595 = vpack.c.bf16 %v6494, %v6493
  %v6596 = vpack.c.bf16 %v6496, %v6495
  %v6597 = vpack.c.bf16 %v6498, %v6497
  %v6598 = vpack.c.bf16 %v6500, %v6499
  %v6599 = vpack.c.bf16 %v6502, %v6501
  %v6600 = vpack.c.bf16 %v6504, %v6503
  %v6601 = vpack.c.bf16 %v6506, %v6505
  %v6602 = vpack.c.bf16 %v6508, %v6507
  %v6603 = vpack.c.bf16 %v6510, %v6509
  %v6604 = vpack.c.bf16 %v6512, %v6511
  %v6605 = vpack.c.bf16 %v6514, %v6513
  %v6606 = vpack.c.bf16 %v6516, %v6515
  %v6607 = vpack.c.bf16 %v6518, %v6517
  %v6608 = vpack.c.bf16 %v6520, %v6519
  %v6609 = vpack.c.bf16 %v6522, %v6521
  %v6610 = vpack.c.bf16 %v6524, %v6523
  %v6611 = vpack.c.bf16 %v6526, %v6525
  %v6612 = vpack.c.bf16 %v6528, %v6527
  %v6613 = vpack.c.bf16 %v6530, %v6529
  %v6614 = vpack.c.bf16 %v6532, %v6531
  %v6615 = vpack.c.bf16 %v6534, %v6533
  %v6616 = vpack.c.bf16 %v6536, %v6535
  %v6617 = vpack.c.bf16 %v6538, %v6537
  %v6618 = vpack.c.bf16 %v6540, %v6539
  %v6619 = vpack.c.bf16 %v6542, %v6541
  %v6620 = vpack.c.bf16 %v6544, %v6543
  %v6621 = vpack.c.bf16 %v6546, %v6545
  %v6622 = vpack.c.bf16 %v6548, %v6547
  %v6623 = vpack.c.bf16 %v6550, %v6549
  %v6624 = vpack.c.bf16 %v6552, %v6551
  %v6697 = vunpack.c.l.b16 %v6553
  %v6698 = vunpack.c.h.b16 %v6553
  %v6699 = vunpack.c.l.b16 %v6554
  %v6700 = vunpack.c.h.b16 %v6554
  %v6701 = vunpack.c.l.b16 %v6555
  %v6702 = vunpack.c.h.b16 %v6555
  %v6703 = vunpack.c.l.b16 %v6556
  %v6704 = vunpack.c.h.b16 %v6556
  %v6705 = vunpack.c.l.b16 %v6557
  %v6706 = vunpack.c.h.b16 %v6557
  %v6707 = vunpack.c.l.b16 %v6558
  %v6708 = vunpack.c.h.b16 %v6558
  %v6709 = vunpack.c.l.b16 %v6559
  %v6710 = vunpack.c.h.b16 %v6559
  %v6711 = vunpack.c.l.b16 %v6560
  %v6712 = vunpack.c.h.b16 %v6560
  %v6713 = vunpack.c.l.b16 %v6561
  %v6714 = vunpack.c.h.b16 %v6561
  %v6715 = vunpack.c.l.b16 %v6562
  %v6716 = vunpack.c.h.b16 %v6562
  %v6717 = vunpack.c.l.b16 %v6563
  %v6718 = vunpack.c.h.b16 %v6563
  %v6719 = vunpack.c.l.b16 %v6564
  %v6720 = vunpack.c.h.b16 %v6564
  %v6721 = vunpack.c.l.b16 %v6565
  %v6722 = vunpack.c.h.b16 %v6565
  %v6723 = vunpack.c.l.b16 %v6566
  %v6724 = vunpack.c.h.b16 %v6566
  %v6725 = vunpack.c.l.b16 %v6567
  %v6726 = vunpack.c.h.b16 %v6567
  %v6727 = vunpack.c.l.b16 %v6568
  %v6728 = vunpack.c.h.b16 %v6568
  %v6729 = vunpack.c.l.b16 %v6569
  %v6730 = vunpack.c.h.b16 %v6569
  %v6731 = vunpack.c.l.b16 %v6570
  %v6732 = vunpack.c.h.b16 %v6570
  %v6733 = vunpack.c.l.b16 %v6571
  %v6734 = vunpack.c.h.b16 %v6571
  %v6735 = vunpack.c.l.b16 %v6572
  %v6736 = vunpack.c.h.b16 %v6572
  %v6737 = vunpack.c.l.b16 %v6573
  %v6738 = vunpack.c.h.b16 %v6573
  %v6739 = vunpack.c.l.b16 %v6574
  %v6740 = vunpack.c.h.b16 %v6574
  %v6741 = vunpack.c.l.b16 %v6575
  %v6742 = vunpack.c.h.b16 %v6575
  %v6743 = vunpack.c.l.b16 %v6576
  %v6744 = vunpack.c.h.b16 %v6576
  %v6745 = vunpack.c.l.b16 %v6577
  %v6746 = vunpack.c.h.b16 %v6577
  %v6747 = vunpack.c.l.b16 %v6578
  %v6748 = vunpack.c.h.b16 %v6578
  %v6749 = vunpack.c.l.b16 %v6579
  %v6750 = vunpack.c.h.b16 %v6579
  %v6751 = vunpack.c.l.b16 %v6580
  %v6752 = vunpack.c.h.b16 %v6580
  %v6753 = vunpack.c.l.b16 %v6581
  %v6754 = vunpack.c.h.b16 %v6581
  %v6755 = vunpack.c.l.b16 %v6582
  %v6756 = vunpack.c.h.b16 %v6582
  %v6757 = vunpack.c.l.b16 %v6583
  %v6758 = vunpack.c.h.b16 %v6583
  %v6759 = vunpack.c.l.b16 %v6584
  %v6760 = vunpack.c.h.b16 %v6584
  %v6761 = vunpack.c.l.b16 %v6585
  %v6762 = vunpack.c.h.b16 %v6585
  %v6763 = vunpack.c.l.b16 %v6586
  %v6764 = vunpack.c.h.b16 %v6586
  %v6765 = vunpack.c.l.b16 %v6587
  %v6766 = vunpack.c.h.b16 %v6587
  %v6767 = vunpack.c.l.b16 %v6588
  %v6768 = vunpack.c.h.b16 %v6588
  %v6769 = vunpack.c.l.b16 %v6589
  %v6770 = vunpack.c.h.b16 %v6589
  %v6771 = vunpack.c.l.b16 %v6590
  %v6772 = vunpack.c.h.b16 %v6590
  %v6773 = vunpack.c.l.b16 %v6591
  %v6774 = vunpack.c.h.b16 %v6591
  %v6775 = vunpack.c.l.b16 %v6592
  %v6776 = vunpack.c.h.b16 %v6592
  %v6777 = vunpack.c.l.b16 %v6593
  %v6778 = vunpack.c.h.b16 %v6593
  %v6779 = vunpack.c.l.b16 %v6594
  %v6780 = vunpack.c.h.b16 %v6594
  %v6781 = vunpack.c.l.b16 %v6595
  %v6782 = vunpack.c.h.b16 %v6595
  %v6783 = vunpack.c.l.b16 %v6596
  %v6784 = vunpack.c.h.b16 %v6596
  %v6785 = vunpack.c.l.b16 %v6597
  %v6786 = vunpack.c.h.b16 %v6597
  %v6787 = vunpack.c.l.b16 %v6598
  %v6788 = vunpack.c.h.b16 %v6598
  %v6789 = vunpack.c.l.b16 %v6599
  %v6790 = vunpack.c.h.b16 %v6599
  %v6791 = vunpack.c.l.b16 %v6600
  %v6792 = vunpack.c.h.b16 %v6600
  %v6793 = vunpack.c.l.b16 %v6601
  %v6794 = vunpack.c.h.b16 %v6601
  %v6795 = vunpack.c.l.b16 %v6602
  %v6796 = vunpack.c.h.b16 %v6602
  %v6797 = vunpack.c.l.b16 %v6603
  %v6798 = vunpack.c.h.b16 %v6603
  %v6799 = vunpack.c.l.b16 %v6604
  %v6800 = vunpack.c.h.b16 %v6604
  %v6801 = vunpack.c.l.b16 %v6605
  %v6802 = vunpack.c.h.b16 %v6605
  %v6803 = vunpack.c.l.b16 %v6606
  %v6804 = vunpack.c.h.b16 %v6606
  %v6805 = vunpack.c.l.b16 %v6607
  %v6806 = vunpack.c.h.b16 %v6607
  %v6807 = vunpack.c.l.b16 %v6608
  %v6808 = vunpack.c.h.b16 %v6608
  %v6809 = vunpack.c.l.b16 %v6609
  %v6810 = vunpack.c.h.b16 %v6609
  %v6811 = vunpack.c.l.b16 %v6610
  %v6812 = vunpack.c.h.b16 %v6610
  %v6813 = vunpack.c.l.b16 %v6611
  %v6814 = vunpack.c.h.b16 %v6611
  %v6815 = vunpack.c.l.b16 %v6612
  %v6816 = vunpack.c.h.b16 %v6612
  %v6817 = vunpack.c.l.b16 %v6613
  %v6818 = vunpack.c.h.b16 %v6613
  %v6819 = vunpack.c.l.b16 %v6614
  %v6820 = vunpack.c.h.b16 %v6614
  %v6821 = vunpack.c.l.b16 %v6615
  %v6822 = vunpack.c.h.b16 %v6615
  %v6823 = vunpack.c.l.b16 %v6616
  %v6824 = vunpack.c.h.b16 %v6616
  %v6825 = vunpack.c.l.b16 %v6617
  %v6826 = vunpack.c.h.b16 %v6617
  %v6827 = vunpack.c.l.b16 %v6618
  %v6828 = vunpack.c.h.b16 %v6618
  %v6829 = vunpack.c.l.b16 %v6619
  %v6830 = vunpack.c.h.b16 %v6619
  %v6831 = vunpack.c.l.b16 %v6620
  %v6832 = vunpack.c.h.b16 %v6620
  %v6833 = vunpack.c.l.b16 %v6621
  %v6834 = vunpack.c.h.b16 %v6621
  %v6835 = vunpack.c.l.b16 %v6622
  %v6836 = vunpack.c.h.b16 %v6622
  %v6837 = vunpack.c.l.b16 %v6623
  %v6838 = vunpack.c.h.b16 %v6623
  %v6839 = vunpack.c.l.b16 %v6624
  %v6840 = vunpack.c.h.b16 %v6624
  %v6841 = vpack.c.b16 %v6697, %v6697
  %v6842 = vpack.c.b16 %v6698, %v6698
  %v6843 = vpack.c.b16 %v6699, %v6699
  %v6844 = vpack.c.b16 %v6700, %v6700
  %v6845 = vpack.c.b16 %v6701, %v6701
  %v6846 = vpack.c.b16 %v6702, %v6702
  %v6847 = vpack.c.b16 %v6703, %v6703
  %v6848 = vpack.c.b16 %v6704, %v6704
  %v6849 = vpack.c.b16 %v6705, %v6705
  %v6850 = vpack.c.b16 %v6706, %v6706
  %v6851 = vpack.c.b16 %v6707, %v6707
  %v6852 = vpack.c.b16 %v6708, %v6708
  %v6853 = vpack.c.b16 %v6709, %v6709
  %v6854 = vpack.c.b16 %v6710, %v6710
  %v6855 = vpack.c.b16 %v6711, %v6711
  %v6856 = vpack.c.b16 %v6712, %v6712
  %v6857 = vpack.c.b16 %v6713, %v6713
  %v6858 = vpack.c.b16 %v6714, %v6714
  %v6859 = vpack.c.b16 %v6715, %v6715
  %v6860 = vpack.c.b16 %v6716, %v6716
  %v6861 = vpack.c.b16 %v6717, %v6717
  %v6862 = vpack.c.b16 %v6718, %v6718
  %v6863 = vpack.c.b16 %v6719, %v6719
  %v6864 = vpack.c.b16 %v6720, %v6720
  %v6865 = vpack.c.b16 %v6721, %v6721
  %v6866 = vpack.c.b16 %v6722, %v6722
  %v6867 = vpack.c.b16 %v6723, %v6723
  %v6868 = vpack.c.b16 %v6724, %v6724
  %v6869 = vpack.c.b16 %v6725, %v6725
  %v6870 = vpack.c.b16 %v6726, %v6726
  %v6871 = vpack.c.b16 %v6727, %v6727
  %v6872 = vpack.c.b16 %v6728, %v6728
  %v6873 = vpack.c.b16 %v6729, %v6729
  %v6874 = vpack.c.b16 %v6730, %v6730
  %v6875 = vpack.c.b16 %v6731, %v6731
  %v6876 = vpack.c.b16 %v6732, %v6732
  %v6877 = vpack.c.b16 %v6733, %v6733
  %v6878 = vpack.c.b16 %v6734, %v6734
  %v6879 = vpack.c.b16 %v6735, %v6735
  %v6880 = vpack.c.b16 %v6736, %v6736
  %v6881 = vpack.c.b16 %v6737, %v6737
  %v6882 = vpack.c.b16 %v6738, %v6738
  %v6883 = vpack.c.b16 %v6739, %v6739
  %v6884 = vpack.c.b16 %v6740, %v6740
  %v6885 = vpack.c.b16 %v6741, %v6741
  %v6886 = vpack.c.b16 %v6742, %v6742
  %v6887 = vpack.c.b16 %v6743, %v6743
  %v6888 = vpack.c.b16 %v6744, %v6744
  %v6889 = vpack.c.b16 %v6745, %v6745
  %v6890 = vpack.c.b16 %v6746, %v6746
  %v6891 = vpack.c.b16 %v6747, %v6747
  %v6892 = vpack.c.b16 %v6748, %v6748
  %v6893 = vpack.c.b16 %v6749, %v6749
  %v6894 = vpack.c.b16 %v6750, %v6750
  %v6895 = vpack.c.b16 %v6751, %v6751
  %v6896 = vpack.c.b16 %v6752, %v6752
  %v6897 = vpack.c.b16 %v6753, %v6753
  %v6898 = vpack.c.b16 %v6754, %v6754
  %v6899 = vpack.c.b16 %v6755, %v6755
  %v6900 = vpack.c.b16 %v6756, %v6756
  %v6901 = vpack.c.b16 %v6757, %v6757
  %v6902 = vpack.c.b16 %v6758, %v6758
  %v6903 = vpack.c.b16 %v6759, %v6759
  %v6904 = vpack.c.b16 %v6760, %v6760
  %v6905 = vpack.c.b16 %v6761, %v6761
  %v6906 = vpack.c.b16 %v6762, %v6762
  %v6907 = vpack.c.b16 %v6763, %v6763
  %v6908 = vpack.c.b16 %v6764, %v6764
  %v6909 = vpack.c.b16 %v6765, %v6765
  %v6910 = vpack.c.b16 %v6766, %v6766
  %v6911 = vpack.c.b16 %v6767, %v6767
  %v6912 = vpack.c.b16 %v6768, %v6768
  %v6913 = vpack.c.b16 %v6769, %v6769
  %v6914 = vpack.c.b16 %v6770, %v6770
  %v6915 = vpack.c.b16 %v6771, %v6771
  %v6916 = vpack.c.b16 %v6772, %v6772
  %v6917 = vpack.c.b16 %v6773, %v6773
  %v6918 = vpack.c.b16 %v6774, %v6774
  %v6919 = vpack.c.b16 %v6775, %v6775
  %v6920 = vpack.c.b16 %v6776, %v6776
  %v6921 = vpack.c.b16 %v6777, %v6777
  %v6922 = vpack.c.b16 %v6778, %v6778
  %v6923 = vpack.c.b16 %v6779, %v6779
  %v6924 = vpack.c.b16 %v6780, %v6780
  %v6925 = vpack.c.b16 %v6781, %v6781
  %v6926 = vpack.c.b16 %v6782, %v6782
  %v6927 = vpack.c.b16 %v6783, %v6783
  %v6928 = vpack.c.b16 %v6784, %v6784
  %v6929 = vpack.c.b16 %v6785, %v6785
  %v6930 = vpack.c.b16 %v6786, %v6786
  %v6931 = vpack.c.b16 %v6787, %v6787
  %v6932 = vpack.c.b16 %v6788, %v6788
  %v6933 = vpack.c.b16 %v6789, %v6789
  %v6934 = vpack.c.b16 %v6790, %v6790
  %v6935 = vpack.c.b16 %v6791, %v6791
  %v6936 = vpack.c.b16 %v6792, %v6792
  %v6937 = vpack.c.b16 %v6793, %v6793
  %v6938 = vpack.c.b16 %v6794, %v6794
  %v6939 = vpack.c.b16 %v6795, %v6795
  %v6940 = vpack.c.b16 %v6796, %v6796
  %v6941 = vpack.c.b16 %v6797, %v6797
  %v6942 = vpack.c.b16 %v6798, %v6798
  %v6943 = vpack.c.b16 %v6799, %v6799
  %v6944 = vpack.c.b16 %v6800, %v6800
  %v6945 = vpack.c.b16 %v6801, %v6801
  %v6946 = vpack.c.b16 %v6802, %v6802
  %v6947 = vpack.c.b16 %v6803, %v6803
  %v6948 = vpack.c.b16 %v6804, %v6804
  %v6949 = vpack.c.b16 %v6805, %v6805
  %v6950 = vpack.c.b16 %v6806, %v6806
  %v6951 = vpack.c.b16 %v6807, %v6807
  %v6952 = vpack.c.b16 %v6808, %v6808
  %v6953 = vpack.c.b16 %v6809, %v6809
  %v6954 = vpack.c.b16 %v6810, %v6810
  %v6955 = vpack.c.b16 %v6811, %v6811
  %v6956 = vpack.c.b16 %v6812, %v6812
  %v6957 = vpack.c.b16 %v6813, %v6813
  %v6958 = vpack.c.b16 %v6814, %v6814
  %v6959 = vpack.c.b16 %v6815, %v6815
  %v6960 = vpack.c.b16 %v6816, %v6816
  %v6961 = vpack.c.b16 %v6817, %v6817
  %v6962 = vpack.c.b16 %v6818, %v6818
  %v6963 = vpack.c.b16 %v6819, %v6819
  %v6964 = vpack.c.b16 %v6820, %v6820
  %v6965 = vpack.c.b16 %v6821, %v6821
  %v6966 = vpack.c.b16 %v6822, %v6822
  %v6967 = vpack.c.b16 %v6823, %v6823
  %v6968 = vpack.c.b16 %v6824, %v6824
  %v6969 = vpack.c.b16 %v6825, %v6825
  %v6970 = vpack.c.b16 %v6826, %v6826
  %v6971 = vpack.c.b16 %v6827, %v6827
  %v6972 = vpack.c.b16 %v6828, %v6828
  %v6973 = vpack.c.b16 %v6829, %v6829
  %v6974 = vpack.c.b16 %v6830, %v6830
  %v6975 = vpack.c.b16 %v6831, %v6831
  %v6976 = vpack.c.b16 %v6832, %v6832
  %v6977 = vpack.c.b16 %v6833, %v6833
  %v6978 = vpack.c.b16 %v6834, %v6834
  %v6979 = vpack.c.b16 %v6835, %v6835
  %v6980 = vpack.c.b16 %v6836, %v6836
  %v6981 = vpack.c.b16 %v6837, %v6837
  %v6982 = vpack.c.b16 %v6838, %v6838
  %v6983 = vpack.c.b16 %v6839, %v6839
  %v6984 = vpack.c.b16 %v6840, %v6840
  %vm7129 = vcmask 158720
  %7130 = vst.msk [vmem:[%s3] sm:$0xf] %vm7129, %v6841
  %7131 = vst.msk [vmem:[%s3 + $0x4] sm:$0xf] %vm7129, %v6842
  %7132 = vst.msk [vmem:[%s3 + $0x8] sm:$0xf] %vm7129, %v6843
  %7133 = vst.msk [vmem:[%s3 + $0xc] sm:$0xf] %vm7129, %v6844
  %7134 = vst.msk [vmem:[%s3 + $0x10] sm:$0xf] %vm7129, %v6845
  %7135 = vst.msk [vmem:[%s3 + $0x14] sm:$0xf] %vm7129, %v6846
  %7136 = vst.msk [vmem:[%s3 + $0x18] sm:$0xf] %vm7129, %v6847
  %7137 = vst.msk [vmem:[%s3 + $0x1c] sm:$0xf] %vm7129, %v6848
  %7138 = vst.msk [vmem:[%s3 + $0x20] sm:$0xf] %vm7129, %v6849
  %7139 = vst.msk [vmem:[%s3 + $0x24] sm:$0xf] %vm7129, %v6850
  %7140 = vst.msk [vmem:[%s3 + $0x28] sm:$0xf] %vm7129, %v6851
  %7141 = vst.msk [vmem:[%s3 + $0x2c] sm:$0xf] %vm7129, %v6852
  %7142 = vst.msk [vmem:[%s3 + $0x30] sm:$0xf] %vm7129, %v6853
  %7143 = vst.msk [vmem:[%s3 + $0x34] sm:$0xf] %vm7129, %v6854
  %7144 = vst.msk [vmem:[%s3 + $0x38] sm:$0xf] %vm7129, %v6855
  %7145 = vst.msk [vmem:[%s3 + $0x3c] sm:$0xf] %vm7129, %v6856
  %7146 = vst.msk [vmem:[%s3 + $0x40] sm:$0xf] %vm7129, %v6857
  %7147 = vst.msk [vmem:[%s3 + $0x44] sm:$0xf] %vm7129, %v6858
  %7148 = vst.msk [vmem:[%s3 + $0x48] sm:$0xf] %vm7129, %v6859
  %7149 = vst.msk [vmem:[%s3 + $0x4c] sm:$0xf] %vm7129, %v6860
  %7150 = vst.msk [vmem:[%s3 + $0x50] sm:$0xf] %vm7129, %v6861
  %7151 = vst.msk [vmem:[%s3 + $0x54] sm:$0xf] %vm7129, %v6862
  %7152 = vst.msk [vmem:[%s3 + $0x58] sm:$0xf] %vm7129, %v6863
  %7153 = vst.msk [vmem:[%s3 + $0x5c] sm:$0xf] %vm7129, %v6864
  %7154 = vst.msk [vmem:[%s3 + $0x60] sm:$0xf] %vm7129, %v6865
  %7155 = vst.msk [vmem:[%s3 + $0x64] sm:$0xf] %vm7129, %v6866
  %7156 = vst.msk [vmem:[%s3 + $0x68] sm:$0xf] %vm7129, %v6867
  %7157 = vst.msk [vmem:[%s3 + $0x6c] sm:$0xf] %vm7129, %v6868
  %7158 = vst.msk [vmem:[%s3 + $0x70] sm:$0xf] %vm7129, %v6869
  %7159 = vst.msk [vmem:[%s3 + $0x74] sm:$0xf] %vm7129, %v6870
  %7160 = vst.msk [vmem:[%s3 + $0x78] sm:$0xf] %vm7129, %v6871
  %7161 = vst.msk [vmem:[%s3 + $0x7c] sm:$0xf] %vm7129, %v6872
  %7162 = vst.msk [vmem:[%s3 + $0x80] sm:$0xf] %vm7129, %v6873
  %7163 = vst.msk [vmem:[%s3 + $0x84] sm:$0xf] %vm7129, %v6874
  %7164 = vst.msk [vmem:[%s3 + $0x88] sm:$0xf] %vm7129, %v6875
  %7165 = vst.msk [vmem:[%s3 + $0x8c] sm:$0xf] %vm7129, %v6876
  %7166 = vst.msk [vmem:[%s3 + $0x90] sm:$0xf] %vm7129, %v6877
  %7167 = vst.msk [vmem:[%s3 + $0x94] sm:$0xf] %vm7129, %v6878
  %7168 = vst.msk [vmem:[%s3 + $0x98] sm:$0xf] %vm7129, %v6879
  %7169 = vst.msk [vmem:[%s3 + $0x9c] sm:$0xf] %vm7129, %v6880
  %7170 = vst.msk [vmem:[%s3 + $0xa0] sm:$0xf] %vm7129, %v6881
  %7171 = vst.msk [vmem:[%s3 + $0xa4] sm:$0xf] %vm7129, %v6882
  %7172 = vst.msk [vmem:[%s3 + $0xa8] sm:$0xf] %vm7129, %v6883
  %7173 = vst.msk [vmem:[%s3 + $0xac] sm:$0xf] %vm7129, %v6884
  %7174 = vst.msk [vmem:[%s3 + $0xb0] sm:$0xf] %vm7129, %v6885
  %7175 = vst.msk [vmem:[%s3 + $0xb4] sm:$0xf] %vm7129, %v6886
  %7176 = vst.msk [vmem:[%s3 + $0xb8] sm:$0xf] %vm7129, %v6887
  %7177 = vst.msk [vmem:[%s3 + $0xbc] sm:$0xf] %vm7129, %v6888
  %7178 = vst.msk [vmem:[%s3 + $0xc0] sm:$0xf] %vm7129, %v6889
  %7179 = vst.msk [vmem:[%s3 + $0xc4] sm:$0xf] %vm7129, %v6890
  %7180 = vst.msk [vmem:[%s3 + $0xc8] sm:$0xf] %vm7129, %v6891
  %7181 = vst.msk [vmem:[%s3 + $0xcc] sm:$0xf] %vm7129, %v6892
  %7182 = vst.msk [vmem:[%s3 + $0xd0] sm:$0xf] %vm7129, %v6893
  %7183 = vst.msk [vmem:[%s3 + $0xd4] sm:$0xf] %vm7129, %v6894
  %7184 = vst.msk [vmem:[%s3 + $0xd8] sm:$0xf] %vm7129, %v6895
  %7185 = vst.msk [vmem:[%s3 + $0xdc] sm:$0xf] %vm7129, %v6896
  %7186 = vst.msk [vmem:[%s3 + $0xe0] sm:$0xf] %vm7129, %v6897
  %7187 = vst.msk [vmem:[%s3 + $0xe4] sm:$0xf] %vm7129, %v6898
  %7188 = vst.msk [vmem:[%s3 + $0xe8] sm:$0xf] %vm7129, %v6899
  %7189 = vst.msk [vmem:[%s3 + $0xec] sm:$0xf] %vm7129, %v6900
  %7190 = vst.msk [vmem:[%s3 + $0xf0] sm:$0xf] %vm7129, %v6901
  %7191 = vst.msk [vmem:[%s3 + $0xf4] sm:$0xf] %vm7129, %v6902
  %7192 = vst.msk [vmem:[%s3 + $0xf8] sm:$0xf] %vm7129, %v6903
  %7193 = vst.msk [vmem:[%s3 + $0xfc] sm:$0xf] %vm7129, %v6904
  %7194 = vst.msk [vmem:[%s3 + $0x100] sm:$0xf] %vm7129, %v6905
  %7195 = vst.msk [vmem:[%s3 + $0x104] sm:$0xf] %vm7129, %v6906
  %7196 = vst.msk [vmem:[%s3 + $0x108] sm:$0xf] %vm7129, %v6907
  %7197 = vst.msk [vmem:[%s3 + $0x10c] sm:$0xf] %vm7129, %v6908
  %7198 = vst.msk [vmem:[%s3 + $0x110] sm:$0xf] %vm7129, %v6909
  %7199 = vst.msk [vmem:[%s3 + $0x114] sm:$0xf] %vm7129, %v6910
  %7200 = vst.msk [vmem:[%s3 + $0x118] sm:$0xf] %vm7129, %v6911
  %7201 = vst.msk [vmem:[%s3 + $0x11c] sm:$0xf] %vm7129, %v6912
  %7202 = vst.msk [vmem:[%s3 + $0x120] sm:$0xf] %vm7129, %v6913
  %7203 = vst.msk [vmem:[%s3 + $0x124] sm:$0xf] %vm7129, %v6914
  %7204 = vst.msk [vmem:[%s3 + $0x128] sm:$0xf] %vm7129, %v6915
  %7205 = vst.msk [vmem:[%s3 + $0x12c] sm:$0xf] %vm7129, %v6916
  %7206 = vst.msk [vmem:[%s3 + $0x130] sm:$0xf] %vm7129, %v6917
  %7207 = vst.msk [vmem:[%s3 + $0x134] sm:$0xf] %vm7129, %v6918
  %7208 = vst.msk [vmem:[%s3 + $0x138] sm:$0xf] %vm7129, %v6919
  %7209 = vst.msk [vmem:[%s3 + $0x13c] sm:$0xf] %vm7129, %v6920
  %7210 = vst.msk [vmem:[%s3 + $0x140] sm:$0xf] %vm7129, %v6921
  %7211 = vst.msk [vmem:[%s3 + $0x144] sm:$0xf] %vm7129, %v6922
  %7212 = vst.msk [vmem:[%s3 + $0x148] sm:$0xf] %vm7129, %v6923
  %7213 = vst.msk [vmem:[%s3 + $0x14c] sm:$0xf] %vm7129, %v6924
  %7214 = vst.msk [vmem:[%s3 + $0x150] sm:$0xf] %vm7129, %v6925
  %7215 = vst.msk [vmem:[%s3 + $0x154] sm:$0xf] %vm7129, %v6926
  %7216 = vst.msk [vmem:[%s3 + $0x158] sm:$0xf] %vm7129, %v6927
  %7217 = vst.msk [vmem:[%s3 + $0x15c] sm:$0xf] %vm7129, %v6928
  %7218 = vst.msk [vmem:[%s3 + $0x160] sm:$0xf] %vm7129, %v6929
  %7219 = vst.msk [vmem:[%s3 + $0x164] sm:$0xf] %vm7129, %v6930
  %7220 = vst.msk [vmem:[%s3 + $0x168] sm:$0xf] %vm7129, %v6931
  %7221 = vst.msk [vmem:[%s3 + $0x16c] sm:$0xf] %vm7129, %v6932
  %7222 = vst.msk [vmem:[%s3 + $0x170] sm:$0xf] %vm7129, %v6933
  %7223 = vst.msk [vmem:[%s3 + $0x174] sm:$0xf] %vm7129, %v6934
  %7224 = vst.msk [vmem:[%s3 + $0x178] sm:$0xf] %vm7129, %v6935
  %7225 = vst.msk [vmem:[%s3 + $0x17c] sm:$0xf] %vm7129, %v6936
  %7226 = vst.msk [vmem:[%s3 + $0x180] sm:$0xf] %vm7129, %v6937
  %7227 = vst.msk [vmem:[%s3 + $0x184] sm:$0xf] %vm7129, %v6938
  %7228 = vst.msk [vmem:[%s3 + $0x188] sm:$0xf] %vm7129, %v6939
  %7229 = vst.msk [vmem:[%s3 + $0x18c] sm:$0xf] %vm7129, %v6940
  %7230 = vst.msk [vmem:[%s3 + $0x190] sm:$0xf] %vm7129, %v6941
  %7231 = vst.msk [vmem:[%s3 + $0x194] sm:$0xf] %vm7129, %v6942
  %7232 = vst.msk [vmem:[%s3 + $0x198] sm:$0xf] %vm7129, %v6943
  %7233 = vst.msk [vmem:[%s3 + $0x19c] sm:$0xf] %vm7129, %v6944
  %7234 = vst.msk [vmem:[%s3 + $0x1a0] sm:$0xf] %vm7129, %v6945
  %7235 = vst.msk [vmem:[%s3 + $0x1a4] sm:$0xf] %vm7129, %v6946
  %7236 = vst.msk [vmem:[%s3 + $0x1a8] sm:$0xf] %vm7129, %v6947
  %7237 = vst.msk [vmem:[%s3 + $0x1ac] sm:$0xf] %vm7129, %v6948
  %7238 = vst.msk [vmem:[%s3 + $0x1b0] sm:$0xf] %vm7129, %v6949
  %7239 = vst.msk [vmem:[%s3 + $0x1b4] sm:$0xf] %vm7129, %v6950
  %7240 = vst.msk [vmem:[%s3 + $0x1b8] sm:$0xf] %vm7129, %v6951
  %7241 = vst.msk [vmem:[%s3 + $0x1bc] sm:$0xf] %vm7129, %v6952
  %7242 = vst.msk [vmem:[%s3 + $0x1c0] sm:$0xf] %vm7129, %v6953
  %7243 = vst.msk [vmem:[%s3 + $0x1c4] sm:$0xf] %vm7129, %v6954
  %7244 = vst.msk [vmem:[%s3 + $0x1c8] sm:$0xf] %vm7129, %v6955
  %7245 = vst.msk [vmem:[%s3 + $0x1cc] sm:$0xf] %vm7129, %v6956
  %7246 = vst.msk [vmem:[%s3 + $0x1d0] sm:$0xf] %vm7129, %v6957
  %7247 = vst.msk [vmem:[%s3 + $0x1d4] sm:$0xf] %vm7129, %v6958
  %7248 = vst.msk [vmem:[%s3 + $0x1d8] sm:$0xf] %vm7129, %v6959
  %7249 = vst.msk [vmem:[%s3 + $0x1dc] sm:$0xf] %vm7129, %v6960
  %7250 = vst.msk [vmem:[%s3 + $0x1e0] sm:$0xf] %vm7129, %v6961
  %7251 = vst.msk [vmem:[%s3 + $0x1e4] sm:$0xf] %vm7129, %v6962
  %7252 = vst.msk [vmem:[%s3 + $0x1e8] sm:$0xf] %vm7129, %v6963
  %7253 = vst.msk [vmem:[%s3 + $0x1ec] sm:$0xf] %vm7129, %v6964
  %7254 = vst.msk [vmem:[%s3 + $0x1f0] sm:$0xf] %vm7129, %v6965
  %7255 = vst.msk [vmem:[%s3 + $0x1f4] sm:$0xf] %vm7129, %v6966
  %7256 = vst.msk [vmem:[%s3 + $0x1f8] sm:$0xf] %vm7129, %v6967
  %7257 = vst.msk [vmem:[%s3 + $0x1fc] sm:$0xf] %vm7129, %v6968
  %7258 = vst.msk [vmem:[%s3 + $0x200] sm:$0xf] %vm7129, %v6969
  %7259 = vst.msk [vmem:[%s3 + $0x204] sm:$0xf] %vm7129, %v6970
  %7260 = vst.msk [vmem:[%s3 + $0x208] sm:$0xf] %vm7129, %v6971
  %7261 = vst.msk [vmem:[%s3 + $0x20c] sm:$0xf] %vm7129, %v6972
  %7262 = vst.msk [vmem:[%s3 + $0x210] sm:$0xf] %vm7129, %v6973
  %7263 = vst.msk [vmem:[%s3 + $0x214] sm:$0xf] %vm7129, %v6974
  %7264 = vst.msk [vmem:[%s3 + $0x218] sm:$0xf] %vm7129, %v6975
  %7265 = vst.msk [vmem:[%s3 + $0x21c] sm:$0xf] %vm7129, %v6976
  %7266 = vst.msk [vmem:[%s3 + $0x220] sm:$0xf] %vm7129, %v6977
  %7267 = vst.msk [vmem:[%s3 + $0x224] sm:$0xf] %vm7129, %v6978
  %7268 = vst.msk [vmem:[%s3 + $0x228] sm:$0xf] %vm7129, %v6979
  %7269 = vst.msk [vmem:[%s3 + $0x22c] sm:$0xf] %vm7129, %v6980
  %7270 = vst.msk [vmem:[%s3 + $0x230] sm:$0xf] %vm7129, %v6981
  %7271 = vst.msk [vmem:[%s3 + $0x234] sm:$0xf] %vm7129, %v6982
  %7272 = vst.msk [vmem:[%s3 + $0x238] sm:$0xf] %vm7129, %v6983
  %7273 = vst.msk [vmem:[%s3 + $0x23c] sm:$0xf] %vm7129, %v6984
  // Predicated region
  $region14: #{digit_conv_forward.3} parent=0 // pred_check
    _
  $region15: #{digit_conv_forward.3} parent=0 // pred_check_branch
    %7275 = sbr.rel (0) target = $region17
  $region16: #{digit_conv_forward.3} parent=0 // pred_region
    _
  $region17: #{digit_conv_forward.3} parent=0 // pred_fallthru
    _
  // Predicated region
  $region18: #{digit_conv_forward.3} parent=0 // pred_check
    _
  $region19: #{digit_conv_forward.3} parent=0 // pred_check_branch
    %7277 = sbr.rel (0) target = $region21
  $region20: #{digit_conv_forward.3} parent=0 // pred_region
    _
  $region21: #{digit_conv_forward.3} parent=0 // pred_fallthru
    _

// kernel: digit_conv_forward.4
$region0: #{digit_conv_forward.4}
  #allocation0 [shape = 'u32[]', space=smem, size = 0x4, offset = 0x4, fixed_abs, tag = 'smem constant byte address 0x4 - core index']
  #allocation1 [shape = 'u32[144,128]{1,0:T(1,128)}', space=vmem, size = 0x12000, scoped, tag = 'internal scratch']
  %s0 = inlined_call_operand.vmem [shape: bf16[4,128,512], index: 0, kind: input, shape index: {}]
  %s1 = inlined_call_operand.vmem [shape: bf16[512,50], index: 1, kind: input, shape index: {}]
  %s2 = inlined_call_operand.vmem [shape: f32[1,50], index: 2, kind: input, shape index: {}]
  %s3 = inlined_call_operand.vmem [shape: bf16[128,50], index: 3, kind: output, shape index: {}]
  %s4 = sld [smem:[#allocation0]]
  $region22: #{digit_conv_forward.4} parent=0
    _
  %s6 = ssub.s32 1, %s4
  %s7 = scalar_select 0, %s6, %s4
  // Predicated region
  $region2: #{digit_conv_forward.4} parent=0 // pred_check
    _
  $region3: #{digit_conv_forward.4} parent=0 // pred_check_branch
    %9 = sbr.rel (0) target = $region5
  $region4: #{digit_conv_forward.4} parent=0 // pred_region
    _
  $region5: #{digit_conv_forward.4} parent=0 // pred_fallthru
    _
  // Predicated region
  $region6: #{digit_conv_forward.4} parent=0 // pred_check
    _
  $region7: #{digit_conv_forward.4} parent=0 // pred_check_branch
    %11 = sbr.rel (0) target = $region9
  $region8: #{digit_conv_forward.4} parent=0 // pred_region
    _
  $region9: #{digit_conv_forward.4} parent=0 // pred_fallthru
    _
  // Predicated region
  $region10: #{digit_conv_forward.4} parent=0 // pred_check
    _
  $region11: #{digit_conv_forward.4} parent=0 // pred_check_branch
    %13 = sbr.rel (0) target = $region13
  $region12: #{digit_conv_forward.4} parent=0 // pred_region
    _
  $region13: #{digit_conv_forward.4} parent=0 // pred_fallthru
    _
  %v15 = vld [vmem:[%s0] sm:$0xff]
  %v16 = vld [vmem:[%s0 + $0x8] sm:$0xff]
  %v17 = vld [vmem:[%s0 + $0x10] sm:$0xff]
  %v18 = vld [vmem:[%s0 + $0x18] sm:$0xff]
  %v19 = vld [vmem:[%s0 + $0x20] sm:$0xff]
  %v20 = vld [vmem:[%s0 + $0x28] sm:$0xff]
  %v21 = vld [vmem:[%s0 + $0x30] sm:$0xff]
  %v22 = vld [vmem:[%s0 + $0x38] sm:$0xff]
  %v23 = vld [vmem:[%s0 + $0x40] sm:$0xff]
  %v24 = vld [vmem:[%s0 + $0x48] sm:$0xff]
  %v25 = vld [vmem:[%s0 + $0x50] sm:$0xff]
  %v26 = vld [vmem:[%s0 + $0x58] sm:$0xff]
  %v27 = vld [vmem:[%s0 + $0x60] sm:$0xff]
  %v28 = vld [vmem:[%s0 + $0x68] sm:$0xff]
  %v29 = vld [vmem:[%s0 + $0x70] sm:$0xff]
  %v30 = vld [vmem:[%s0 + $0x78] sm:$0xff]
  %v31 = vld [vmem:[%s0 + $0x80] sm:$0xff]
  %v32 = vld [vmem:[%s0 + $0x88] sm:$0xff]
  %v33 = vld [vmem:[%s0 + $0x90] sm:$0xff]
  %v34 = vld [vmem:[%s0 + $0x98] sm:$0xff]
  %v35 = vld [vmem:[%s0 + $0xa0] sm:$0xff]
  %v36 = vld [vmem:[%s0 + $0xa8] sm:$0xff]
  %v37 = vld [vmem:[%s0 + $0xb0] sm:$0xff]
  %v38 = vld [vmem:[%s0 + $0xb8] sm:$0xff]
  %v39 = vld [vmem:[%s0 + $0xc0] sm:$0xff]
  %v40 = vld [vmem:[%s0 + $0xc8] sm:$0xff]
  %v41 = vld [vmem:[%s0 + $0xd0] sm:$0xff]
  %v42 = vld [vmem:[%s0 + $0xd8] sm:$0xff]
  %v43 = vld [vmem:[%s0 + $0xe0] sm:$0xff]
  %v44 = vld [vmem:[%s0 + $0xe8] sm:$0xff]
  %v45 = vld [vmem:[%s0 + $0xf0] sm:$0xff]
  %v46 = vld [vmem:[%s0 + $0xf8] sm:$0xff]
  %v47 = vld [vmem:[%s0 + $0x100] sm:$0xff]
  %v48 = vld [vmem:[%s0 + $0x108] sm:$0xff]
  %v49 = vld [vmem:[%s0 + $0x110] sm:$0xff]
  %v50 = vld [vmem:[%s0 + $0x118] sm:$0xff]
  %v51 = vld [vmem:[%s0 + $0x120] sm:$0xff]
  %v52 = vld [vmem:[%s0 + $0x128] sm:$0xff]
  %v53 = vld [vmem:[%s0 + $0x130] sm:$0xff]
  %v54 = vld [vmem:[%s0 + $0x138] sm:$0xff]
  %v55 = vld [vmem:[%s0 + $0x140] sm:$0xff]
  %v56 = vld [vmem:[%s0 + $0x148] sm:$0xff]
  %v57 = vld [vmem:[%s0 + $0x150] sm:$0xff]
  %v58 = vld [vmem:[%s0 + $0x158] sm:$0xff]
  %v59 = vld [vmem:[%s0 + $0x160] sm:$0xff]
  %v60 = vld [vmem:[%s0 + $0x168] sm:$0xff]
  %v61 = vld [vmem:[%s0 + $0x170] sm:$0xff]
  %v62 = vld [vmem:[%s0 + $0x178] sm:$0xff]
  %v63 = vld [vmem:[%s0 + $0x180] sm:$0xff]
  %v64 = vld [vmem:[%s0 + $0x188] sm:$0xff]
  %v65 = vld [vmem:[%s0 + $0x190] sm:$0xff]
  %v66 = vld [vmem:[%s0 + $0x198] sm:$0xff]
  %v67 = vld [vmem:[%s0 + $0x1a0] sm:$0xff]
  %v68 = vld [vmem:[%s0 + $0x1a8] sm:$0xff]
  %v69 = vld [vmem:[%s0 + $0x1b0] sm:$0xff]
  %v70 = vld [vmem:[%s0 + $0x1b8] sm:$0xff]
  %v71 = vld [vmem:[%s0 + $0x1c0] sm:$0xff]
  %v72 = vld [vmem:[%s0 + $0x1c8] sm:$0xff]
  %v73 = vld [vmem:[%s0 + $0x1d0] sm:$0xff]
  %v74 = vld [vmem:[%s0 + $0x1d8] sm:$0xff]
  %v75 = vld [vmem:[%s0 + $0x1e0] sm:$0xff]
  %v76 = vld [vmem:[%s0 + $0x1e8] sm:$0xff]
  %v77 = vld [vmem:[%s0 + $0x1f0] sm:$0xff]
  %v78 = vld [vmem:[%s0 + $0x1f8] sm:$0xff]
  %v79 = vld [vmem:[%s0 + $0x200] sm:$0xff]
  %v80 = vld [vmem:[%s0 + $0x208] sm:$0xff]
  %v81 = vld [vmem:[%s0 + $0x210] sm:$0xff]
  %v82 = vld [vmem:[%s0 + $0x218] sm:$0xff]
  %v83 = vld [vmem:[%s0 + $0x220] sm:$0xff]
  %v84 = vld [vmem:[%s0 + $0x228] sm:$0xff]
  %v85 = vld [vmem:[%s0 + $0x230] sm:$0xff]
  %v86 = vld [vmem:[%s0 + $0x238] sm:$0xff]
  %v87 = vld [vmem:[%s0 + $0x240] sm:$0xff]
  %v88 = vld [vmem:[%s0 + $0x248] sm:$0xff]
  %v89 = vld [vmem:[%s0 + $0x250] sm:$0xff]
  %v90 = vld [vmem:[%s0 + $0x258] sm:$0xff]
  %v91 = vld [vmem:[%s0 + $0x260] sm:$0xff]
  %v92 = vld [vmem:[%s0 + $0x268] sm:$0xff]
  %v93 = vld [vmem:[%s0 + $0x270] sm:$0xff]
  %v94 = vld [vmem:[%s0 + $0x278] sm:$0xff]
  %v95 = vld [vmem:[%s0 + $0x280] sm:$0xff]
  %v96 = vld [vmem:[%s0 + $0x288] sm:$0xff]
  %v97 = vld [vmem:[%s0 + $0x290] sm:$0xff]
  %v98 = vld [vmem:[%s0 + $0x298] sm:$0xff]
  %v99 = vld [vmem:[%s0 + $0x2a0] sm:$0xff]
  %v100 = vld [vmem:[%s0 + $0x2a8] sm:$0xff]
  %v101 = vld [vmem:[%s0 + $0x2b0] sm:$0xff]
  %v102 = vld [vmem:[%s0 + $0x2b8] sm:$0xff]
  %v103 = vld [vmem:[%s0 + $0x2c0] sm:$0xff]
  %v104 = vld [vmem:[%s0 + $0x2c8] sm:$0xff]
  %v105 = vld [vmem:[%s0 + $0x2d0] sm:$0xff]
  %v106 = vld [vmem:[%s0 + $0x2d8] sm:$0xff]
  %v107 = vld [vmem:[%s0 + $0x2e0] sm:$0xff]
  %v108 = vld [vmem:[%s0 + $0x2e8] sm:$0xff]
  %v109 = vld [vmem:[%s0 + $0x2f0] sm:$0xff]
  %v110 = vld [vmem:[%s0 + $0x2f8] sm:$0xff]
  %v111 = vld [vmem:[%s0 + $0x300] sm:$0xff]
  %v112 = vld [vmem:[%s0 + $0x308] sm:$0xff]
  %v113 = vld [vmem:[%s0 + $0x310] sm:$0xff]
  %v114 = vld [vmem:[%s0 + $0x318] sm:$0xff]
  %v115 = vld [vmem:[%s0 + $0x320] sm:$0xff]
  %v116 = vld [vmem:[%s0 + $0x328] sm:$0xff]
  %v117 = vld [vmem:[%s0 + $0x330] sm:$0xff]
  %v118 = vld [vmem:[%s0 + $0x338] sm:$0xff]
  %v119 = vld [vmem:[%s0 + $0x340] sm:$0xff]
  %v120 = vld [vmem:[%s0 + $0x348] sm:$0xff]
  %v121 = vld [vmem:[%s0 + $0x350] sm:$0xff]
  %v122 = vld [vmem:[%s0 + $0x358] sm:$0xff]
  %v123 = vld [vmem:[%s0 + $0x360] sm:$0xff]
  %v124 = vld [vmem:[%s0 + $0x368] sm:$0xff]
  %v125 = vld [vmem:[%s0 + $0x370] sm:$0xff]
  %v126 = vld [vmem:[%s0 + $0x378] sm:$0xff]
  %v127 = vld [vmem:[%s0 + $0x380] sm:$0xff]
  %v128 = vld [vmem:[%s0 + $0x388] sm:$0xff]
  %v129 = vld [vmem:[%s0 + $0x390] sm:$0xff]
  %v130 = vld [vmem:[%s0 + $0x398] sm:$0xff]
  %v131 = vld [vmem:[%s0 + $0x3a0] sm:$0xff]
  %v132 = vld [vmem:[%s0 + $0x3a8] sm:$0xff]
  %v133 = vld [vmem:[%s0 + $0x3b0] sm:$0xff]
  %v134 = vld [vmem:[%s0 + $0x3b8] sm:$0xff]
  %v135 = vld [vmem:[%s0 + $0x3c0] sm:$0xff]
  %v136 = vld [vmem:[%s0 + $0x3c8] sm:$0xff]
  %v137 = vld [vmem:[%s0 + $0x3d0] sm:$0xff]
  %v138 = vld [vmem:[%s0 + $0x3d8] sm:$0xff]
  %v139 = vld [vmem:[%s0 + $0x3e0] sm:$0xff]
  %v140 = vld [vmem:[%s0 + $0x3e8] sm:$0xff]
  %v141 = vld [vmem:[%s0 + $0x3f0] sm:$0xff]
  %v142 = vld [vmem:[%s0 + $0x3f8] sm:$0xff]
  %v143 = vld [vmem:[%s1] sm:$0xf]
  %v144 = vld [vmem:[%s1 + $0x4] sm:$0xf]
  %v145 = vld [vmem:[%s1 + $0x8] sm:$0xf]
  %v146 = vld [vmem:[%s1 + $0xc] sm:$0xf]
  %v147 = vld [vmem:[%s1 + $0x10] sm:$0xf]
  %v148 = vld [vmem:[%s1 + $0x14] sm:$0xf]
  %v149 = vld [vmem:[%s1 + $0x18] sm:$0xf]
  %v150 = vld [vmem:[%s1 + $0x1c] sm:$0xf]
  %v151 = vld [vmem:[%s1 + $0x20] sm:$0xf]
  %v152 = vld [vmem:[%s1 + $0x24] sm:$0xf]
  %v153 = vld [vmem:[%s1 + $0x28] sm:$0xf]
  %v154 = vld [vmem:[%s1 + $0x2c] sm:$0xf]
  %v155 = vld [vmem:[%s1 + $0x30] sm:$0xf]
  %v156 = vld [vmem:[%s1 + $0x34] sm:$0xf]
  %v157 = vld [vmem:[%s1 + $0x38] sm:$0xf]
  %v158 = vld [vmem:[%s1 + $0x3c] sm:$0xf]
  %v159 = vld [vmem:[%s1 + $0x40] sm:$0xf]
  %v160 = vld [vmem:[%s1 + $0x44] sm:$0xf]
  %v161 = vld [vmem:[%s1 + $0x48] sm:$0xf]
  %v162 = vld [vmem:[%s1 + $0x4c] sm:$0xf]
  %v163 = vld [vmem:[%s1 + $0x50] sm:$0xf]
  %v164 = vld [vmem:[%s1 + $0x54] sm:$0xf]
  %v165 = vld [vmem:[%s1 + $0x58] sm:$0xf]
  %v166 = vld [vmem:[%s1 + $0x5c] sm:$0xf]
  %v167 = vld [vmem:[%s1 + $0x60] sm:$0xf]
  %v168 = vld [vmem:[%s1 + $0x64] sm:$0xf]
  %v169 = vld [vmem:[%s1 + $0x68] sm:$0xf]
  %v170 = vld [vmem:[%s1 + $0x6c] sm:$0xf]
  %v171 = vld [vmem:[%s1 + $0x70] sm:$0xf]
  %v172 = vld [vmem:[%s1 + $0x74] sm:$0xf]
  %v173 = vld [vmem:[%s1 + $0x78] sm:$0xf]
  %v174 = vld [vmem:[%s1 + $0x7c] sm:$0xf]
  %v175 = vld [vmem:[%s1 + $0x80] sm:$0xf]
  %v176 = vld [vmem:[%s1 + $0x84] sm:$0xf]
  %v177 = vld [vmem:[%s1 + $0x88] sm:$0xf]
  %v178 = vld [vmem:[%s1 + $0x8c] sm:$0xf]
  %v179 = vld [vmem:[%s1 + $0x90] sm:$0xf]
  %v180 = vld [vmem:[%s1 + $0x94] sm:$0xf]
  %v181 = vld [vmem:[%s1 + $0x98] sm:$0xf]
  %v182 = vld [vmem:[%s1 + $0x9c] sm:$0xf]
  %v183 = vld [vmem:[%s1 + $0xa0] sm:$0xf]
  %v184 = vld [vmem:[%s1 + $0xa4] sm:$0xf]
  %v185 = vld [vmem:[%s1 + $0xa8] sm:$0xf]
  %v186 = vld [vmem:[%s1 + $0xac] sm:$0xf]
  %v187 = vld [vmem:[%s1 + $0xb0] sm:$0xf]
  %v188 = vld [vmem:[%s1 + $0xb4] sm:$0xf]
  %v189 = vld [vmem:[%s1 + $0xb8] sm:$0xf]
  %v190 = vld [vmem:[%s1 + $0xbc] sm:$0xf]
  %v191 = vld [vmem:[%s1 + $0xc0] sm:$0xf]
  %v192 = vld [vmem:[%s1 + $0xc4] sm:$0xf]
  %v193 = vld [vmem:[%s1 + $0xc8] sm:$0xf]
  %v194 = vld [vmem:[%s1 + $0xcc] sm:$0xf]
  %v195 = vld [vmem:[%s1 + $0xd0] sm:$0xf]
  %v196 = vld [vmem:[%s1 + $0xd4] sm:$0xf]
  %v197 = vld [vmem:[%s1 + $0xd8] sm:$0xf]
  %v198 = vld [vmem:[%s1 + $0xdc] sm:$0xf]
  %v199 = vld [vmem:[%s1 + $0xe0] sm:$0xf]
  %v200 = vld [vmem:[%s1 + $0xe4] sm:$0xf]
  %v201 = vld [vmem:[%s1 + $0xe8] sm:$0xf]
  %v202 = vld [vmem:[%s1 + $0xec] sm:$0xf]
  %v203 = vld [vmem:[%s1 + $0xf0] sm:$0xf]
  %v204 = vld [vmem:[%s1 + $0xf4] sm:$0xf]
  %v205 = vld [vmem:[%s1 + $0xf8] sm:$0xf]
  %v206 = vld [vmem:[%s1 + $0xfc] sm:$0xf]
  %v335 = vunpack.c.l.b16 %v15
  %v336 = vunpack.c.h.b16 %v15
  %v337 = vunpack.c.l.b16 %v16
  %v338 = vunpack.c.h.b16 %v16
  %v339 = vunpack.c.l.b16 %v17
  %v340 = vunpack.c.h.b16 %v17
  %v341 = vunpack.c.l.b16 %v18
  %v342 = vunpack.c.h.b16 %v18
  %v343 = vunpack.c.l.b16 %v19
  %v344 = vunpack.c.h.b16 %v19
  %v345 = vunpack.c.l.b16 %v20
  %v346 = vunpack.c.h.b16 %v20
  %v347 = vunpack.c.l.b16 %v21
  %v348 = vunpack.c.h.b16 %v21
  %v349 = vunpack.c.l.b16 %v22
  %v350 = vunpack.c.h.b16 %v22
  %v351 = vunpack.c.l.b16 %v23
  %v352 = vunpack.c.h.b16 %v23
  %v353 = vunpack.c.l.b16 %v24
  %v354 = vunpack.c.h.b16 %v24
  %v355 = vunpack.c.l.b16 %v25
  %v356 = vunpack.c.h.b16 %v25
  %v357 = vunpack.c.l.b16 %v26
  %v358 = vunpack.c.h.b16 %v26
  %v359 = vunpack.c.l.b16 %v27
  %v360 = vunpack.c.h.b16 %v27
  %v361 = vunpack.c.l.b16 %v28
  %v362 = vunpack.c.h.b16 %v28
  %v363 = vunpack.c.l.b16 %v29
  %v364 = vunpack.c.h.b16 %v29
  %v365 = vunpack.c.l.b16 %v30
  %v366 = vunpack.c.h.b16 %v30
  %v367 = vunpack.c.l.b16 %v31
  %v368 = vunpack.c.h.b16 %v31
  %v369 = vunpack.c.l.b16 %v32
  %v370 = vunpack.c.h.b16 %v32
  %v371 = vunpack.c.l.b16 %v33
  %v372 = vunpack.c.h.b16 %v33
  %v373 = vunpack.c.l.b16 %v34
  %v374 = vunpack.c.h.b16 %v34
  %v375 = vunpack.c.l.b16 %v35
  %v376 = vunpack.c.h.b16 %v35
  %v377 = vunpack.c.l.b16 %v36
  %v378 = vunpack.c.h.b16 %v36
  %v379 = vunpack.c.l.b16 %v37
  %v380 = vunpack.c.h.b16 %v37
  %v381 = vunpack.c.l.b16 %v38
  %v382 = vunpack.c.h.b16 %v38
  %v383 = vunpack.c.l.b16 %v39
  %v384 = vunpack.c.h.b16 %v39
  %v385 = vunpack.c.l.b16 %v40
  %v386 = vunpack.c.h.b16 %v40
  %v387 = vunpack.c.l.b16 %v41
  %v388 = vunpack.c.h.b16 %v41
  %v389 = vunpack.c.l.b16 %v42
  %v390 = vunpack.c.h.b16 %v42
  %v391 = vunpack.c.l.b16 %v43
  %v392 = vunpack.c.h.b16 %v43
  %v393 = vunpack.c.l.b16 %v44
  %v394 = vunpack.c.h.b16 %v44
  %v395 = vunpack.c.l.b16 %v45
  %v396 = vunpack.c.h.b16 %v45
  %v397 = vunpack.c.l.b16 %v46
  %v398 = vunpack.c.h.b16 %v46
  %v399 = vunpack.c.l.b16 %v47
  %v400 = vunpack.c.h.b16 %v47
  %v401 = vunpack.c.l.b16 %v48
  %v402 = vunpack.c.h.b16 %v48
  %v403 = vunpack.c.l.b16 %v49
  %v404 = vunpack.c.h.b16 %v49
  %v405 = vunpack.c.l.b16 %v50
  %v406 = vunpack.c.h.b16 %v50
  %v407 = vunpack.c.l.b16 %v51
  %v408 = vunpack.c.h.b16 %v51
  %v409 = vunpack.c.l.b16 %v52
  %v410 = vunpack.c.h.b16 %v52
  %v411 = vunpack.c.l.b16 %v53
  %v412 = vunpack.c.h.b16 %v53
  %v413 = vunpack.c.l.b16 %v54
  %v414 = vunpack.c.h.b16 %v54
  %v415 = vunpack.c.l.b16 %v55
  %v416 = vunpack.c.h.b16 %v55
  %v417 = vunpack.c.l.b16 %v56
  %v418 = vunpack.c.h.b16 %v56
  %v419 = vunpack.c.l.b16 %v57
  %v420 = vunpack.c.h.b16 %v57
  %v421 = vunpack.c.l.b16 %v58
  %v422 = vunpack.c.h.b16 %v58
  %v423 = vunpack.c.l.b16 %v59
  %v424 = vunpack.c.h.b16 %v59
  %v425 = vunpack.c.l.b16 %v60
  %v426 = vunpack.c.h.b16 %v60
  %v427 = vunpack.c.l.b16 %v61
  %v428 = vunpack.c.h.b16 %v61
  %v429 = vunpack.c.l.b16 %v62
  %v430 = vunpack.c.h.b16 %v62
  %v431 = vunpack.c.l.b16 %v63
  %v432 = vunpack.c.h.b16 %v63
  %v433 = vunpack.c.l.b16 %v64
  %v434 = vunpack.c.h.b16 %v64
  %v435 = vunpack.c.l.b16 %v65
  %v436 = vunpack.c.h.b16 %v65
  %v437 = vunpack.c.l.b16 %v66
  %v438 = vunpack.c.h.b16 %v66
  %v439 = vunpack.c.l.b16 %v67
  %v440 = vunpack.c.h.b16 %v67
  %v441 = vunpack.c.l.b16 %v68
  %v442 = vunpack.c.h.b16 %v68
  %v443 = vunpack.c.l.b16 %v69
  %v444 = vunpack.c.h.b16 %v69
  %v445 = vunpack.c.l.b16 %v70
  %v446 = vunpack.c.h.b16 %v70
  %v447 = vunpack.c.l.b16 %v71
  %v448 = vunpack.c.h.b16 %v71
  %v449 = vunpack.c.l.b16 %v72
  %v450 = vunpack.c.h.b16 %v72
  %v451 = vunpack.c.l.b16 %v73
  %v452 = vunpack.c.h.b16 %v73
  %v453 = vunpack.c.l.b16 %v74
  %v454 = vunpack.c.h.b16 %v74
  %v455 = vunpack.c.l.b16 %v75
  %v456 = vunpack.c.h.b16 %v75
  %v457 = vunpack.c.l.b16 %v76
  %v458 = vunpack.c.h.b16 %v76
  %v459 = vunpack.c.l.b16 %v77
  %v460 = vunpack.c.h.b16 %v77
  %v461 = vunpack.c.l.b16 %v78
  %v462 = vunpack.c.h.b16 %v78
  %v463 = vunpack.c.l.b16 %v79
  %v464 = vunpack.c.h.b16 %v79
  %v465 = vunpack.c.l.b16 %v80
  %v466 = vunpack.c.h.b16 %v80
  %v467 = vunpack.c.l.b16 %v81
  %v468 = vunpack.c.h.b16 %v81
  %v469 = vunpack.c.l.b16 %v82
  %v470 = vunpack.c.h.b16 %v82
  %v471 = vunpack.c.l.b16 %v83
  %v472 = vunpack.c.h.b16 %v83
  %v473 = vunpack.c.l.b16 %v84
  %v474 = vunpack.c.h.b16 %v84
  %v475 = vunpack.c.l.b16 %v85
  %v476 = vunpack.c.h.b16 %v85
  %v477 = vunpack.c.l.b16 %v86
  %v478 = vunpack.c.h.b16 %v86
  %v479 = vunpack.c.l.b16 %v87
  %v480 = vunpack.c.h.b16 %v87
  %v481 = vunpack.c.l.b16 %v88
  %v482 = vunpack.c.h.b16 %v88
  %v483 = vunpack.c.l.b16 %v89
  %v484 = vunpack.c.h.b16 %v89
  %v485 = vunpack.c.l.b16 %v90
  %v486 = vunpack.c.h.b16 %v90
  %v487 = vunpack.c.l.b16 %v91
  %v488 = vunpack.c.h.b16 %v91
  %v489 = vunpack.c.l.b16 %v92
  %v490 = vunpack.c.h.b16 %v92
  %v491 = vunpack.c.l.b16 %v93
  %v492 = vunpack.c.h.b16 %v93
  %v493 = vunpack.c.l.b16 %v94
  %v494 = vunpack.c.h.b16 %v94
  %v495 = vunpack.c.l.b16 %v95
  %v496 = vunpack.c.h.b16 %v95
  %v497 = vunpack.c.l.b16 %v96
  %v498 = vunpack.c.h.b16 %v96
  %v499 = vunpack.c.l.b16 %v97
  %v500 = vunpack.c.h.b16 %v97
  %v501 = vunpack.c.l.b16 %v98
  %v502 = vunpack.c.h.b16 %v98
  %v503 = vunpack.c.l.b16 %v99
  %v504 = vunpack.c.h.b16 %v99
  %v505 = vunpack.c.l.b16 %v100
  %v506 = vunpack.c.h.b16 %v100
  %v507 = vunpack.c.l.b16 %v101
  %v508 = vunpack.c.h.b16 %v101
  %v509 = vunpack.c.l.b16 %v102
  %v510 = vunpack.c.h.b16 %v102
  %v511 = vunpack.c.l.b16 %v103
  %v512 = vunpack.c.h.b16 %v103
  %v513 = vunpack.c.l.b16 %v104
  %v514 = vunpack.c.h.b16 %v104
  %v515 = vunpack.c.l.b16 %v105
  %v516 = vunpack.c.h.b16 %v105
  %v517 = vunpack.c.l.b16 %v106
  %v518 = vunpack.c.h.b16 %v106
  %v519 = vunpack.c.l.b16 %v107
  %v520 = vunpack.c.h.b16 %v107
  %v521 = vunpack.c.l.b16 %v108
  %v522 = vunpack.c.h.b16 %v108
  %v523 = vunpack.c.l.b16 %v109
  %v524 = vunpack.c.h.b16 %v109
  %v525 = vunpack.c.l.b16 %v110
  %v526 = vunpack.c.h.b16 %v110
  %v527 = vunpack.c.l.b16 %v111
  %v528 = vunpack.c.h.b16 %v111
  %v529 = vunpack.c.l.b16 %v112
  %v530 = vunpack.c.h.b16 %v112
  %v531 = vunpack.c.l.b16 %v113
  %v532 = vunpack.c.h.b16 %v113
  %v533 = vunpack.c.l.b16 %v114
  %v534 = vunpack.c.h.b16 %v114
  %v535 = vunpack.c.l.b16 %v115
  %v536 = vunpack.c.h.b16 %v115
  %v537 = vunpack.c.l.b16 %v116
  %v538 = vunpack.c.h.b16 %v116
  %v539 = vunpack.c.l.b16 %v117
  %v540 = vunpack.c.h.b16 %v117
  %v541 = vunpack.c.l.b16 %v118
  %v542 = vunpack.c.h.b16 %v118
  %v543 = vunpack.c.l.b16 %v119
  %v544 = vunpack.c.h.b16 %v119
  %v545 = vunpack.c.l.b16 %v120
  %v546 = vunpack.c.h.b16 %v120
  %v547 = vunpack.c.l.b16 %v121
  %v548 = vunpack.c.h.b16 %v121
  %v549 = vunpack.c.l.b16 %v122
  %v550 = vunpack.c.h.b16 %v122
  %v551 = vunpack.c.l.b16 %v123
  %v552 = vunpack.c.h.b16 %v123
  %v553 = vunpack.c.l.b16 %v124
  %v554 = vunpack.c.h.b16 %v124
  %v555 = vunpack.c.l.b16 %v125
  %v556 = vunpack.c.h.b16 %v125
  %v557 = vunpack.c.l.b16 %v126
  %v558 = vunpack.c.h.b16 %v126
  %v559 = vunpack.c.l.b16 %v127
  %v560 = vunpack.c.h.b16 %v127
  %v561 = vunpack.c.l.b16 %v128
  %v562 = vunpack.c.h.b16 %v128
  %v563 = vunpack.c.l.b16 %v129
  %v564 = vunpack.c.h.b16 %v129
  %v565 = vunpack.c.l.b16 %v130
  %v566 = vunpack.c.h.b16 %v130
  %v567 = vunpack.c.l.b16 %v131
  %v568 = vunpack.c.h.b16 %v131
  %v569 = vunpack.c.l.b16 %v132
  %v570 = vunpack.c.h.b16 %v132
  %v571 = vunpack.c.l.b16 %v133
  %v572 = vunpack.c.h.b16 %v133
  %v573 = vunpack.c.l.b16 %v134
  %v574 = vunpack.c.h.b16 %v134
  %v575 = vunpack.c.l.b16 %v135
  %v576 = vunpack.c.h.b16 %v135
  %v577 = vunpack.c.l.b16 %v136
  %v578 = vunpack.c.h.b16 %v136
  %v579 = vunpack.c.l.b16 %v137
  %v580 = vunpack.c.h.b16 %v137
  %v581 = vunpack.c.l.b16 %v138
  %v582 = vunpack.c.h.b16 %v138
  %v583 = vunpack.c.l.b16 %v139
  %v584 = vunpack.c.h.b16 %v139
  %v585 = vunpack.c.l.b16 %v140
  %v586 = vunpack.c.h.b16 %v140
  %v587 = vunpack.c.l.b16 %v141
  %v588 = vunpack.c.h.b16 %v141
  %v589 = vunpack.c.l.b16 %v142
  %v590 = vunpack.c.h.b16 %v142
  %v591 = vpack.c.b16 %v339, %v335
  %v592 = vpack.c.b16 %v340, %v336
  %v593 = vpack.c.b16 %v341, %v337
  %v594 = vpack.c.b16 %v342, %v338
  %v595 = vpack.c.b16 %v347, %v343
  %v596 = vpack.c.b16 %v348, %v344
  %v597 = vpack.c.b16 %v349, %v345
  %v598 = vpack.c.b16 %v350, %v346
  %v599 = vpack.c.b16 %v355, %v351
  %v600 = vpack.c.b16 %v356, %v352
  %v601 = vpack.c.b16 %v357, %v353
  %v602 = vpack.c.b16 %v358, %v354
  %v603 = vpack.c.b16 %v363, %v359
  %v604 = vpack.c.b16 %v364, %v360
  %v605 = vpack.c.b16 %v365, %v361
  %v606 = vpack.c.b16 %v366, %v362
  %v607 = vpack.c.b16 %v371, %v367
  %v608 = vpack.c.b16 %v372, %v368
  %v609 = vpack.c.b16 %v373, %v369
  %v610 = vpack.c.b16 %v374, %v370
  %v611 = vpack.c.b16 %v379, %v375
  %v612 = vpack.c.b16 %v380, %v376
  %v613 = vpack.c.b16 %v381, %v377
  %v614 = vpack.c.b16 %v382, %v378
  %v615 = vpack.c.b16 %v387, %v383
  %v616 = vpack.c.b16 %v388, %v384
  %v617 = vpack.c.b16 %v389, %v385
  %v618 = vpack.c.b16 %v390, %v386
  %v619 = vpack.c.b16 %v395, %v391
  %v620 = vpack.c.b16 %v396, %v392
  %v621 = vpack.c.b16 %v397, %v393
  %v622 = vpack.c.b16 %v398, %v394
  %v623 = vpack.c.b16 %v403, %v399
  %v624 = vpack.c.b16 %v404, %v400
  %v625 = vpack.c.b16 %v405, %v401
  %v626 = vpack.c.b16 %v406, %v402
  %v627 = vpack.c.b16 %v411, %v407
  %v628 = vpack.c.b16 %v412, %v408
  %v629 = vpack.c.b16 %v413, %v409
  %v630 = vpack.c.b16 %v414, %v410
  %v631 = vpack.c.b16 %v419, %v415
  %v632 = vpack.c.b16 %v420, %v416
  %v633 = vpack.c.b16 %v421, %v417
  %v634 = vpack.c.b16 %v422, %v418
  %v635 = vpack.c.b16 %v427, %v423
  %v636 = vpack.c.b16 %v428, %v424
  %v637 = vpack.c.b16 %v429, %v425
  %v638 = vpack.c.b16 %v430, %v426
  %v639 = vpack.c.b16 %v435, %v431
  %v640 = vpack.c.b16 %v436, %v432
  %v641 = vpack.c.b16 %v437, %v433
  %v642 = vpack.c.b16 %v438, %v434
  %v643 = vpack.c.b16 %v443, %v439
  %v644 = vpack.c.b16 %v444, %v440
  %v645 = vpack.c.b16 %v445, %v441
  %v646 = vpack.c.b16 %v446, %v442
  %v647 = vpack.c.b16 %v451, %v447
  %v648 = vpack.c.b16 %v452, %v448
  %v649 = vpack.c.b16 %v453, %v449
  %v650 = vpack.c.b16 %v454, %v450
  %v651 = vpack.c.b16 %v459, %v455
  %v652 = vpack.c.b16 %v460, %v456
  %v653 = vpack.c.b16 %v461, %v457
  %v654 = vpack.c.b16 %v462, %v458
  %v655 = vpack.c.b16 %v467, %v463
  %v656 = vpack.c.b16 %v468, %v464
  %v657 = vpack.c.b16 %v469, %v465
  %v658 = vpack.c.b16 %v470, %v466
  %v659 = vpack.c.b16 %v475, %v471
  %v660 = vpack.c.b16 %v476, %v472
  %v661 = vpack.c.b16 %v477, %v473
  %v662 = vpack.c.b16 %v478, %v474
  %v663 = vpack.c.b16 %v483, %v479
  %v664 = vpack.c.b16 %v484, %v480
  %v665 = vpack.c.b16 %v485, %v481
  %v666 = vpack.c.b16 %v486, %v482
  %v667 = vpack.c.b16 %v491, %v487
  %v668 = vpack.c.b16 %v492, %v488
  %v669 = vpack.c.b16 %v493, %v489
  %v670 = vpack.c.b16 %v494, %v490
  %v671 = vpack.c.b16 %v499, %v495
  %v672 = vpack.c.b16 %v500, %v496
  %v673 = vpack.c.b16 %v501, %v497
  %v674 = vpack.c.b16 %v502, %v498
  %v675 = vpack.c.b16 %v507, %v503
  %v676 = vpack.c.b16 %v508, %v504
  %v677 = vpack.c.b16 %v509, %v505
  %v678 = vpack.c.b16 %v510, %v506
  %v679 = vpack.c.b16 %v515, %v511
  %v680 = vpack.c.b16 %v516, %v512
  %v681 = vpack.c.b16 %v517, %v513
  %v682 = vpack.c.b16 %v518, %v514
  %v683 = vpack.c.b16 %v523, %v519
  %v684 = vpack.c.b16 %v524, %v520
  %v685 = vpack.c.b16 %v525, %v521
  %v686 = vpack.c.b16 %v526, %v522
  %v687 = vpack.c.b16 %v531, %v527
  %v688 = vpack.c.b16 %v532, %v528
  %v689 = vpack.c.b16 %v533, %v529
  %v690 = vpack.c.b16 %v534, %v530
  %v691 = vpack.c.b16 %v539, %v535
  %v692 = vpack.c.b16 %v540, %v536
  %v693 = vpack.c.b16 %v541, %v537
  %v694 = vpack.c.b16 %v542, %v538
  %v695 = vpack.c.b16 %v547, %v543
  %v696 = vpack.c.b16 %v548, %v544
  %v697 = vpack.c.b16 %v549, %v545
  %v698 = vpack.c.b16 %v550, %v546
  %v699 = vpack.c.b16 %v555, %v551
  %v700 = vpack.c.b16 %v556, %v552
  %v701 = vpack.c.b16 %v557, %v553
  %v702 = vpack.c.b16 %v558, %v554
  %v703 = vpack.c.b16 %v563, %v559
  %v704 = vpack.c.b16 %v564, %v560
  %v705 = vpack.c.b16 %v565, %v561
  %v706 = vpack.c.b16 %v566, %v562
  %v707 = vpack.c.b16 %v571, %v567
  %v708 = vpack.c.b16 %v572, %v568
  %v709 = vpack.c.b16 %v573, %v569
  %v710 = vpack.c.b16 %v574, %v570
  %v711 = vpack.c.b16 %v579, %v575
  %v712 = vpack.c.b16 %v580, %v576
  %v713 = vpack.c.b16 %v581, %v577
  %v714 = vpack.c.b16 %v582, %v578
  %v715 = vpack.c.b16 %v587, %v583
  %v716 = vpack.c.b16 %v588, %v584
  %v717 = vpack.c.b16 %v589, %v585
  %v718 = vpack.c.b16 %v590, %v586
  %v911 = vunpack.c.l.b16 %v143
  %v912 = vunpack.c.l.b16 %v144
  %v913 = vunpack.c.l.b16 %v145
  %v914 = vunpack.c.l.b16 %v146
  %v915 = vunpack.c.l.b16 %v147
  %v916 = vunpack.c.l.b16 %v148
  %v917 = vunpack.c.l.b16 %v149
  %v918 = vunpack.c.l.b16 %v150
  %v919 = vunpack.c.l.b16 %v151
  %v920 = vunpack.c.l.b16 %v152
  %v921 = vunpack.c.l.b16 %v153
  %v922 = vunpack.c.l.b16 %v154
  %v923 = vunpack.c.l.b16 %v155
  %v924 = vunpack.c.l.b16 %v156
  %v925 = vunpack.c.l.b16 %v157
  %v926 = vunpack.c.l.b16 %v158
  %v927 = vunpack.c.l.b16 %v159
  %v928 = vunpack.c.l.b16 %v160
  %v929 = vunpack.c.l.b16 %v161
  %v930 = vunpack.c.l.b16 %v162
  %v931 = vunpack.c.l.b16 %v163
  %v932 = vunpack.c.l.b16 %v164
  %v933 = vunpack.c.l.b16 %v165
  %v934 = vunpack.c.l.b16 %v166
  %v935 = vunpack.c.l.b16 %v167
  %v936 = vunpack.c.l.b16 %v168
  %v937 = vunpack.c.l.b16 %v169
  %v938 = vunpack.c.l.b16 %v170
  %v939 = vunpack.c.l.b16 %v171
  %v940 = vunpack.c.l.b16 %v172
  %v941 = vunpack.c.l.b16 %v173
  %v942 = vunpack.c.l.b16 %v174
  %v943 = vunpack.c.l.b16 %v175
  %v944 = vunpack.c.l.b16 %v176
  %v945 = vunpack.c.l.b16 %v177
  %v946 = vunpack.c.l.b16 %v178
  %v947 = vunpack.c.l.b16 %v179
  %v948 = vunpack.c.l.b16 %v180
  %v949 = vunpack.c.l.b16 %v181
  %v950 = vunpack.c.l.b16 %v182
  %v951 = vunpack.c.l.b16 %v183
  %v952 = vunpack.c.l.b16 %v184
  %v953 = vunpack.c.l.b16 %v185
  %v954 = vunpack.c.l.b16 %v186
  %v955 = vunpack.c.l.b16 %v187
  %v956 = vunpack.c.l.b16 %v188
  %v957 = vunpack.c.l.b16 %v189
  %v958 = vunpack.c.l.b16 %v190
  %v959 = vunpack.c.l.b16 %v191
  %v960 = vunpack.c.l.b16 %v192
  %v961 = vunpack.c.l.b16 %v193
  %v962 = vunpack.c.l.b16 %v194
  %v963 = vunpack.c.l.b16 %v195
  %v964 = vunpack.c.l.b16 %v196
  %v965 = vunpack.c.l.b16 %v197
  %v966 = vunpack.c.l.b16 %v198
  %v967 = vunpack.c.l.b16 %v199
  %v968 = vunpack.c.l.b16 %v200
  %v969 = vunpack.c.l.b16 %v201
  %v970 = vunpack.c.l.b16 %v202
  %v971 = vunpack.c.l.b16 %v203
  %v972 = vunpack.c.l.b16 %v204
  %v973 = vunpack.c.l.b16 %v205
  %v974 = vunpack.c.l.b16 %v206
  %v975 = vpack.c.b16 %v912, %v911
  %v976 = vpack.c.b16 %v914, %v913
  %v977 = vpack.c.b16 %v916, %v915
  %v978 = vpack.c.b16 %v918, %v917
  %v979 = vpack.c.b16 %v920, %v919
  %v980 = vpack.c.b16 %v922, %v921
  %v981 = vpack.c.b16 %v924, %v923
  %v982 = vpack.c.b16 %v926, %v925
  %v983 = vpack.c.b16 %v928, %v927
  %v984 = vpack.c.b16 %v930, %v929
  %v985 = vpack.c.b16 %v932, %v931
  %v986 = vpack.c.b16 %v934, %v933
  %v987 = vpack.c.b16 %v936, %v935
  %v988 = vpack.c.b16 %v938, %v937
  %v989 = vpack.c.b16 %v940, %v939
  %v990 = vpack.c.b16 %v942, %v941
  %v991 = vpack.c.b16 %v944, %v943
  %v992 = vpack.c.b16 %v946, %v945
  %v993 = vpack.c.b16 %v948, %v947
  %v994 = vpack.c.b16 %v950, %v949
  %v995 = vpack.c.b16 %v952, %v951
  %v996 = vpack.c.b16 %v954, %v953
  %v997 = vpack.c.b16 %v956, %v955
  %v998 = vpack.c.b16 %v958, %v957
  %v999 = vpack.c.b16 %v960, %v959
  %v1000 = vpack.c.b16 %v962, %v961
  %v1001 = vpack.c.b16 %v964, %v963
  %v1002 = vpack.c.b16 %v966, %v965
  %v1003 = vpack.c.b16 %v968, %v967
  %v1004 = vpack.c.b16 %v970, %v969
  %v1005 = vpack.c.b16 %v972, %v971
  %v1006 = vpack.c.b16 %v974, %v973
  %1039 = vmatprep.subr.bf16.mxu0 0
  %1040 = vmatpush1.bf16.msra.mxu0 %v982
  %1041 = vmatprep.subr.bf16.mxu0 0
  %1042 = vmatpush1.bf16.msra.mxu0 %v981
  %1043 = vmatprep.subr.bf16.mxu0 0
  %1044 = vmatpush1.bf16.msra.mxu0 %v980
  %1045 = vmatprep.subr.bf16.mxu0 0
  %1046 = vmatpush1.bf16.msra.mxu0 %v979
  %1047 = vmatprep.subr.bf16.mxu0 0
  %1048 = vmatpush1.bf16.msra.mxu0 %v978
  %1049 = vmatprep.subr.bf16.mxu0 0
  %1050 = vmatpush1.bf16.msra.mxu0 %v977
  %1051 = vmatprep.subr.bf16.mxu0 0
  %1052 = vmatpush1.bf16.msra.mxu0 %v976
  %1053 = vmatprep.subr.bf16.mxu0 0
  %1054 = vmatpush1.bf16.msra.mxu0 %v975
  %1055 = vmatprep.subr.bf16.mxu0 0
  %1056 = vmatpush2.bf16.msra.mxu0 %v990
  %1057 = vmatprep.subr.bf16.mxu0 0
  %1058 = vmatpush2.bf16.msra.mxu0 %v989
  %1059 = vmatprep.subr.bf16.mxu0 0
  %1060 = vmatpush2.bf16.msra.mxu0 %v988
  %1061 = vmatprep.subr.bf16.mxu0 0
  %1062 = vmatpush2.bf16.msra.mxu0 %v987
  %1063 = vmatprep.subr.bf16.mxu0 0
  %1064 = vmatpush2.bf16.msra.mxu0 %v986
  %1065 = vmatprep.subr.bf16.mxu0 0
  %1066 = vmatpush2.bf16.msra.mxu0 %v985
  %1067 = vmatprep.subr.bf16.mxu0 0
  %1068 = vmatpush2.bf16.msra.mxu0 %v984
  %1069 = vmatprep.subr.bf16.mxu0 0
  %1070 = vmatpush2.bf16.msra.mxu0 %v983
  %1071 = vmatprep.mubr.bf16.mxu0 %v592
  %1072 = vmatmul.mubr.bf16.gmra.mxu0 %v591
  %v1073 = vpop.f32.mrf.mxu0
  %v1074 = vadd.f32 0.0, %v1073
  %v1075 = vpop.f32.mrf.mxu0
  %v1076 = vpop.f32.mrf.mxu0
  %v1077 = vadd.f32 0.0, %v1076
  %v1078 = vpop.f32.mrf.mxu0
  %1079 = vmatprep.mubr.bf16.mxu0 %v596
  %1080 = vmatmul.mubr.bf16.gmra.mxu0 %v595
  %v1081 = vpop.f32.mrf.mxu0
  %v1082 = vadd.f32 0.0, %v1081
  %v1083 = vpop.f32.mrf.mxu0
  %v1084 = vpop.f32.mrf.mxu0
  %v1085 = vadd.f32 0.0, %v1084
  %v1086 = vpop.f32.mrf.mxu0
  %1087 = vmatprep.mubr.bf16.mxu0 %v600
  %1088 = vmatmul.mubr.bf16.gmra.mxu0 %v599
  %v1089 = vpop.f32.mrf.mxu0
  %v1090 = vadd.f32 0.0, %v1089
  %v1091 = vpop.f32.mrf.mxu0
  %v1092 = vpop.f32.mrf.mxu0
  %v1093 = vadd.f32 0.0, %v1092
  %v1094 = vpop.f32.mrf.mxu0
  %1095 = vmatprep.mubr.bf16.mxu0 %v604
  %1096 = vmatmul.mubr.bf16.gmra.mxu0 %v603
  %v1097 = vpop.f32.mrf.mxu0
  %v1098 = vadd.f32 0.0, %v1097
  %v1099 = vpop.f32.mrf.mxu0
  %v1100 = vpop.f32.mrf.mxu0
  %v1101 = vadd.f32 0.0, %v1100
  %v1102 = vpop.f32.mrf.mxu0
  %1103 = vmatprep.mubr.bf16.mxu0 %v608
  %1104 = vmatmul.mubr.bf16.gmra.mxu0 %v607
  %v1105 = vpop.f32.mrf.mxu0
  %v1106 = vadd.f32 0.0, %v1105
  %v1107 = vpop.f32.mrf.mxu0
  %v1108 = vpop.f32.mrf.mxu0
  %v1109 = vadd.f32 0.0, %v1108
  %v1110 = vpop.f32.mrf.mxu0
  %1111 = vmatprep.mubr.bf16.mxu0 %v612
  %1112 = vmatmul.mubr.bf16.gmra.mxu0 %v611
  %v1113 = vpop.f32.mrf.mxu0
  %v1114 = vadd.f32 0.0, %v1113
  %v1115 = vpop.f32.mrf.mxu0
  %v1116 = vpop.f32.mrf.mxu0
  %v1117 = vadd.f32 0.0, %v1116
  %v1118 = vpop.f32.mrf.mxu0
  %1119 = vmatprep.mubr.bf16.mxu0 %v616
  %1120 = vmatmul.mubr.bf16.gmra.mxu0 %v615
  %v1121 = vpop.f32.mrf.mxu0
  %v1122 = vadd.f32 0.0, %v1121
  %v1123 = vpop.f32.mrf.mxu0
  %v1124 = vpop.f32.mrf.mxu0
  %v1125 = vadd.f32 0.0, %v1124
  %v1126 = vpop.f32.mrf.mxu0
  %1127 = vmatprep.mubr.bf16.mxu0 %v620
  %1128 = vmatmul.mubr.bf16.gmra.mxu0 %v619
  %v1129 = vpop.f32.mrf.mxu0
  %v1130 = vadd.f32 0.0, %v1129
  %v1131 = vpop.f32.mrf.mxu0
  %v1132 = vpop.f32.mrf.mxu0
  %v1133 = vadd.f32 0.0, %v1132
  %v1134 = vpop.f32.mrf.mxu0
  %1135 = vmatprep.mubr.bf16.mxu0 %v624
  %1136 = vmatmul.mubr.bf16.gmra.mxu0 %v623
  %v1137 = vpop.f32.mrf.mxu0
  %v1138 = vadd.f32 0.0, %v1137
  %v1139 = vpop.f32.mrf.mxu0
  %v1140 = vpop.f32.mrf.mxu0
  %v1141 = vadd.f32 0.0, %v1140
  %v1142 = vpop.f32.mrf.mxu0
  %1143 = vmatprep.mubr.bf16.mxu0 %v628
  %1144 = vmatmul.mubr.bf16.gmra.mxu0 %v627
  %v1145 = vpop.f32.mrf.mxu0
  %v1146 = vadd.f32 0.0, %v1145
  %v1147 = vpop.f32.mrf.mxu0
  %v1148 = vpop.f32.mrf.mxu0
  %v1149 = vadd.f32 0.0, %v1148
  %v1150 = vpop.f32.mrf.mxu0
  %1151 = vmatprep.mubr.bf16.mxu0 %v632
  %1152 = vmatmul.mubr.bf16.gmra.mxu0 %v631
  %v1153 = vpop.f32.mrf.mxu0
  %v1154 = vadd.f32 0.0, %v1153
  %v1155 = vpop.f32.mrf.mxu0
  %v1156 = vpop.f32.mrf.mxu0
  %v1157 = vadd.f32 0.0, %v1156
  %v1158 = vpop.f32.mrf.mxu0
  %1159 = vmatprep.mubr.bf16.mxu0 %v636
  %1160 = vmatmul.mubr.bf16.gmra.mxu0 %v635
  %v1161 = vpop.f32.mrf.mxu0
  %v1162 = vadd.f32 0.0, %v1161
  %v1163 = vpop.f32.mrf.mxu0
  %v1164 = vpop.f32.mrf.mxu0
  %v1165 = vadd.f32 0.0, %v1164
  %v1166 = vpop.f32.mrf.mxu0
  %1167 = vmatprep.mubr.bf16.mxu0 %v640
  %1168 = vmatmul.mubr.bf16.gmra.mxu0 %v639
  %v1169 = vpop.f32.mrf.mxu0
  %v1170 = vadd.f32 0.0, %v1169
  %v1171 = vpop.f32.mrf.mxu0
  %v1172 = vpop.f32.mrf.mxu0
  %v1173 = vadd.f32 0.0, %v1172
  %v1174 = vpop.f32.mrf.mxu0
  %1175 = vmatprep.mubr.bf16.mxu0 %v644
  %1176 = vmatmul.mubr.bf16.gmra.mxu0 %v643
  %v1177 = vpop.f32.mrf.mxu0
  %v1178 = vadd.f32 0.0, %v1177
  %v1179 = vpop.f32.mrf.mxu0
  %v1180 = vpop.f32.mrf.mxu0
  %v1181 = vadd.f32 0.0, %v1180
  %v1182 = vpop.f32.mrf.mxu0
  %1183 = vmatprep.mubr.bf16.mxu0 %v648
  %1184 = vmatmul.mubr.bf16.gmra.mxu0 %v647
  %v1185 = vpop.f32.mrf.mxu0
  %v1186 = vadd.f32 0.0, %v1185
  %v1187 = vpop.f32.mrf.mxu0
  %v1188 = vpop.f32.mrf.mxu0
  %v1189 = vadd.f32 0.0, %v1188
  %v1190 = vpop.f32.mrf.mxu0
  %1191 = vmatprep.mubr.bf16.mxu0 %v652
  %1192 = vmatmul.mubr.bf16.gmra.mxu0 %v651
  %v1193 = vpop.f32.mrf.mxu0
  %v1194 = vadd.f32 0.0, %v1193
  %v1195 = vpop.f32.mrf.mxu0
  %v1196 = vpop.f32.mrf.mxu0
  %v1197 = vadd.f32 0.0, %v1196
  %v1198 = vpop.f32.mrf.mxu0
  %1199 = vmatprep.mubr.bf16.mxu0 %v656
  %1200 = vmatmul.mubr.bf16.gmra.mxu0 %v655
  %v1201 = vpop.f32.mrf.mxu0
  %v1202 = vadd.f32 0.0, %v1201
  %v1203 = vpop.f32.mrf.mxu0
  %v1204 = vpop.f32.mrf.mxu0
  %v1205 = vadd.f32 0.0, %v1204
  %v1206 = vpop.f32.mrf.mxu0
  %1207 = vmatprep.mubr.bf16.mxu0 %v660
  %1208 = vmatmul.mubr.bf16.gmra.mxu0 %v659
  %v1209 = vpop.f32.mrf.mxu0
  %v1210 = vadd.f32 0.0, %v1209
  %v1211 = vpop.f32.mrf.mxu0
  %v1212 = vpop.f32.mrf.mxu0
  %v1213 = vadd.f32 0.0, %v1212
  %v1214 = vpop.f32.mrf.mxu0
  %1215 = vmatprep.mubr.bf16.mxu0 %v664
  %1216 = vmatmul.mubr.bf16.gmra.mxu0 %v663
  %v1217 = vpop.f32.mrf.mxu0
  %v1218 = vadd.f32 0.0, %v1217
  %v1219 = vpop.f32.mrf.mxu0
  %v1220 = vpop.f32.mrf.mxu0
  %v1221 = vadd.f32 0.0, %v1220
  %v1222 = vpop.f32.mrf.mxu0
  %1223 = vmatprep.mubr.bf16.mxu0 %v668
  %1224 = vmatmul.mubr.bf16.gmra.mxu0 %v667
  %v1225 = vpop.f32.mrf.mxu0
  %v1226 = vadd.f32 0.0, %v1225
  %v1227 = vpop.f32.mrf.mxu0
  %v1228 = vpop.f32.mrf.mxu0
  %v1229 = vadd.f32 0.0, %v1228
  %v1230 = vpop.f32.mrf.mxu0
  %1231 = vmatprep.mubr.bf16.mxu0 %v672
  %1232 = vmatmul.mubr.bf16.gmra.mxu0 %v671
  %v1233 = vpop.f32.mrf.mxu0
  %v1234 = vadd.f32 0.0, %v1233
  %v1235 = vpop.f32.mrf.mxu0
  %v1236 = vpop.f32.mrf.mxu0
  %v1237 = vadd.f32 0.0, %v1236
  %v1238 = vpop.f32.mrf.mxu0
  %1239 = vmatprep.mubr.bf16.mxu0 %v676
  %1240 = vmatmul.mubr.bf16.gmra.mxu0 %v675
  %v1241 = vpop.f32.mrf.mxu0
  %v1242 = vadd.f32 0.0, %v1241
  %v1243 = vpop.f32.mrf.mxu0
  %v1244 = vpop.f32.mrf.mxu0
  %v1245 = vadd.f32 0.0, %v1244
  %v1246 = vpop.f32.mrf.mxu0
  %1247 = vmatprep.mubr.bf16.mxu0 %v680
  %1248 = vmatmul.mubr.bf16.gmra.mxu0 %v679
  %v1249 = vpop.f32.mrf.mxu0
  %v1250 = vadd.f32 0.0, %v1249
  %v1251 = vpop.f32.mrf.mxu0
  %v1252 = vpop.f32.mrf.mxu0
  %v1253 = vadd.f32 0.0, %v1252
  %v1254 = vpop.f32.mrf.mxu0
  %1255 = vmatprep.mubr.bf16.mxu0 %v684
  %1256 = vmatmul.mubr.bf16.gmra.mxu0 %v683
  %v1257 = vpop.f32.mrf.mxu0
  %v1258 = vadd.f32 0.0, %v1257
  %v1259 = vpop.f32.mrf.mxu0
  %v1260 = vpop.f32.mrf.mxu0
  %v1261 = vadd.f32 0.0, %v1260
  %v1262 = vpop.f32.mrf.mxu0
  %1263 = vmatprep.mubr.bf16.mxu0 %v688
  %1264 = vmatmul.mubr.bf16.gmra.mxu0 %v687
  %v1265 = vpop.f32.mrf.mxu0
  %v1266 = vadd.f32 0.0, %v1265
  %v1267 = vpop.f32.mrf.mxu0
  %v1268 = vpop.f32.mrf.mxu0
  %v1269 = vadd.f32 0.0, %v1268
  %v1270 = vpop.f32.mrf.mxu0
  %1271 = vmatprep.mubr.bf16.mxu0 %v692
  %1272 = vmatmul.mubr.bf16.gmra.mxu0 %v691
  %v1273 = vpop.f32.mrf.mxu0
  %v1274 = vadd.f32 0.0, %v1273
  %v1275 = vpop.f32.mrf.mxu0
  %v1276 = vpop.f32.mrf.mxu0
  %v1277 = vadd.f32 0.0, %v1276
  %v1278 = vpop.f32.mrf.mxu0
  %1279 = vmatprep.mubr.bf16.mxu0 %v696
  %1280 = vmatmul.mubr.bf16.gmra.mxu0 %v695
  %v1281 = vpop.f32.mrf.mxu0
  %v1282 = vadd.f32 0.0, %v1281
  %v1283 = vpop.f32.mrf.mxu0
  %v1284 = vpop.f32.mrf.mxu0
  %v1285 = vadd.f32 0.0, %v1284
  %v1286 = vpop.f32.mrf.mxu0
  %1287 = vmatprep.mubr.bf16.mxu0 %v700
  %1288 = vmatmul.mubr.bf16.gmra.mxu0 %v699
  %v1289 = vpop.f32.mrf.mxu0
  %v1290 = vadd.f32 0.0, %v1289
  %v1291 = vpop.f32.mrf.mxu0
  %v1292 = vpop.f32.mrf.mxu0
  %v1293 = vadd.f32 0.0, %v1292
  %v1294 = vpop.f32.mrf.mxu0
  %1295 = vmatprep.mubr.bf16.mxu0 %v704
  %1296 = vmatmul.mubr.bf16.gmra.mxu0 %v703
  %v1297 = vpop.f32.mrf.mxu0
  %v1298 = vadd.f32 0.0, %v1297
  %v1299 = vpop.f32.mrf.mxu0
  %v1300 = vpop.f32.mrf.mxu0
  %v1301 = vadd.f32 0.0, %v1300
  %v1302 = vpop.f32.mrf.mxu0
  %1303 = vmatprep.mubr.bf16.mxu0 %v708
  %1304 = vmatmul.mubr.bf16.gmra.mxu0 %v707
  %v1305 = vpop.f32.mrf.mxu0
  %v1306 = vadd.f32 0.0, %v1305
  %v1307 = vpop.f32.mrf.mxu0
  %v1308 = vpop.f32.mrf.mxu0
  %v1309 = vadd.f32 0.0, %v1308
  %v1310 = vpop.f32.mrf.mxu0
  %1311 = vmatprep.mubr.bf16.mxu0 %v712
  %1312 = vmatmul.mubr.bf16.gmra.mxu0 %v711
  %v1313 = vpop.f32.mrf.mxu0
  %v1314 = vadd.f32 0.0, %v1313
  %v1315 = vpop.f32.mrf.mxu0
  %v1316 = vpop.f32.mrf.mxu0
  %v1317 = vadd.f32 0.0, %v1316
  %v1318 = vpop.f32.mrf.mxu0
  %1319 = vmatprep.mubr.bf16.mxu0 %v716
  %1320 = vmatmul.mubr.bf16.gmra.mxu0 %v715
  %v1321 = vpop.f32.mrf.mxu0
  %v1322 = vadd.f32 0.0, %v1321
  %v1323 = vpop.f32.mrf.mxu0
  %v1324 = vpop.f32.mrf.mxu0
  %v1325 = vadd.f32 0.0, %v1324
  %v1326 = vpop.f32.mrf.mxu0
  %1327 = vdwg.mxu0
  %1328 = vmatprep.subr.bf16.mxu0 0
  %1329 = vmatpush1.bf16.msra.mxu0 %v998
  %1330 = vmatprep.subr.bf16.mxu0 0
  %1331 = vmatpush1.bf16.msra.mxu0 %v997
  %1332 = vmatprep.subr.bf16.mxu0 0
  %1333 = vmatpush1.bf16.msra.mxu0 %v996
  %1334 = vmatprep.subr.bf16.mxu0 0
  %1335 = vmatpush1.bf16.msra.mxu0 %v995
  %1336 = vmatprep.subr.bf16.mxu0 0
  %1337 = vmatpush1.bf16.msra.mxu0 %v994
  %1338 = vmatprep.subr.bf16.mxu0 0
  %1339 = vmatpush1.bf16.msra.mxu0 %v993
  %1340 = vmatprep.subr.bf16.mxu0 0
  %1341 = vmatpush1.bf16.msra.mxu0 %v992
  %1342 = vmatprep.subr.bf16.mxu0 0
  %1343 = vmatpush1.bf16.msra.mxu0 %v991
  %1344 = vmatprep.subr.bf16.mxu0 0
  %1345 = vmatpush2.bf16.msra.mxu0 %v1006
  %1346 = vmatprep.subr.bf16.mxu0 0
  %1347 = vmatpush2.bf16.msra.mxu0 %v1005
  %1348 = vmatprep.subr.bf16.mxu0 0
  %1349 = vmatpush2.bf16.msra.mxu0 %v1004
  %1350 = vmatprep.subr.bf16.mxu0 0
  %1351 = vmatpush2.bf16.msra.mxu0 %v1003
  %1352 = vmatprep.subr.bf16.mxu0 0
  %1353 = vmatpush2.bf16.msra.mxu0 %v1002
  %1354 = vmatprep.subr.bf16.mxu0 0
  %1355 = vmatpush2.bf16.msra.mxu0 %v1001
  %1356 = vmatprep.subr.bf16.mxu0 0
  %1357 = vmatpush2.bf16.msra.mxu0 %v1000
  %1358 = vmatprep.subr.bf16.mxu0 0
  %1359 = vmatpush2.bf16.msra.mxu0 %v999
  %1360 = vmatprep.mubr.bf16.mxu0 %v594
  %1361 = vmatmul.mubr.bf16.gmra.mxu0 %v593
  %v1362 = vpop.f32.mrf.mxu0
  %v1363 = vadd.f32 %v1074, %v1362
  %v1364 = vpop.f32.mrf.mxu0
  %v1365 = vpop.f32.mrf.mxu0
  %v1366 = vadd.f32 %v1077, %v1365
  %v1367 = vpop.f32.mrf.mxu0
  %1368 = vmatprep.mubr.bf16.mxu0 %v598
  %1369 = vmatmul.mubr.bf16.gmra.mxu0 %v597
  %v1370 = vpop.f32.mrf.mxu0
  %v1371 = vadd.f32 %v1082, %v1370
  %v1372 = vpop.f32.mrf.mxu0
  %v1373 = vpop.f32.mrf.mxu0
  %v1374 = vadd.f32 %v1085, %v1373
  %v1375 = vpop.f32.mrf.mxu0
  %1376 = vmatprep.mubr.bf16.mxu0 %v602
  %1377 = vmatmul.mubr.bf16.gmra.mxu0 %v601
  %v1378 = vpop.f32.mrf.mxu0
  %v1379 = vadd.f32 %v1090, %v1378
  %v1380 = vpop.f32.mrf.mxu0
  %v1381 = vpop.f32.mrf.mxu0
  %v1382 = vadd.f32 %v1093, %v1381
  %v1383 = vpop.f32.mrf.mxu0
  %1384 = vmatprep.mubr.bf16.mxu0 %v606
  %1385 = vmatmul.mubr.bf16.gmra.mxu0 %v605
  %v1386 = vpop.f32.mrf.mxu0
  %v1387 = vadd.f32 %v1098, %v1386
  %v1388 = vpop.f32.mrf.mxu0
  %v1389 = vpop.f32.mrf.mxu0
  %v1390 = vadd.f32 %v1101, %v1389
  %v1391 = vpop.f32.mrf.mxu0
  %1392 = vmatprep.mubr.bf16.mxu0 %v610
  %1393 = vmatmul.mubr.bf16.gmra.mxu0 %v609
  %v1394 = vpop.f32.mrf.mxu0
  %v1395 = vadd.f32 %v1106, %v1394
  %v1396 = vpop.f32.mrf.mxu0
  %v1397 = vpop.f32.mrf.mxu0
  %v1398 = vadd.f32 %v1109, %v1397
  %v1399 = vpop.f32.mrf.mxu0
  %1400 = vmatprep.mubr.bf16.mxu0 %v614
  %1401 = vmatmul.mubr.bf16.gmra.mxu0 %v613
  %v1402 = vpop.f32.mrf.mxu0
  %v1403 = vadd.f32 %v1114, %v1402
  %v1404 = vpop.f32.mrf.mxu0
  %v1405 = vpop.f32.mrf.mxu0
  %v1406 = vadd.f32 %v1117, %v1405
  %v1407 = vpop.f32.mrf.mxu0
  %1408 = vmatprep.mubr.bf16.mxu0 %v618
  %1409 = vmatmul.mubr.bf16.gmra.mxu0 %v617
  %v1410 = vpop.f32.mrf.mxu0
  %v1411 = vadd.f32 %v1122, %v1410
  %v1412 = vpop.f32.mrf.mxu0
  %v1413 = vpop.f32.mrf.mxu0
  %v1414 = vadd.f32 %v1125, %v1413
  %v1415 = vpop.f32.mrf.mxu0
  %1416 = vmatprep.mubr.bf16.mxu0 %v622
  %1417 = vmatmul.mubr.bf16.gmra.mxu0 %v621
  %v1418 = vpop.f32.mrf.mxu0
  %v1419 = vadd.f32 %v1130, %v1418
  %v1420 = vpop.f32.mrf.mxu0
  %v1421 = vpop.f32.mrf.mxu0
  %v1422 = vadd.f32 %v1133, %v1421
  %v1423 = vpop.f32.mrf.mxu0
  %1424 = vmatprep.mubr.bf16.mxu0 %v626
  %1425 = vmatmul.mubr.bf16.gmra.mxu0 %v625
  %v1426 = vpop.f32.mrf.mxu0
  %v1427 = vadd.f32 %v1138, %v1426
  %v1428 = vpop.f32.mrf.mxu0
  %v1429 = vpop.f32.mrf.mxu0
  %v1430 = vadd.f32 %v1141, %v1429
  %v1431 = vpop.f32.mrf.mxu0
  %1432 = vmatprep.mubr.bf16.mxu0 %v630
  %1433 = vmatmul.mubr.bf16.gmra.mxu0 %v629
  %v1434 = vpop.f32.mrf.mxu0
  %v1435 = vadd.f32 %v1146, %v1434
  %v1436 = vpop.f32.mrf.mxu0
  %v1437 = vpop.f32.mrf.mxu0
  %v1438 = vadd.f32 %v1149, %v1437
  %v1439 = vpop.f32.mrf.mxu0
  %1440 = vmatprep.mubr.bf16.mxu0 %v634
  %1441 = vmatmul.mubr.bf16.gmra.mxu0 %v633
  %v1442 = vpop.f32.mrf.mxu0
  %v1443 = vadd.f32 %v1154, %v1442
  %v1444 = vpop.f32.mrf.mxu0
  %v1445 = vpop.f32.mrf.mxu0
  %v1446 = vadd.f32 %v1157, %v1445
  %v1447 = vpop.f32.mrf.mxu0
  %1448 = vmatprep.mubr.bf16.mxu0 %v638
  %1449 = vmatmul.mubr.bf16.gmra.mxu0 %v637
  %v1450 = vpop.f32.mrf.mxu0
  %v1451 = vadd.f32 %v1162, %v1450
  %v1452 = vpop.f32.mrf.mxu0
  %v1453 = vpop.f32.mrf.mxu0
  %v1454 = vadd.f32 %v1165, %v1453
  %v1455 = vpop.f32.mrf.mxu0
  %1456 = vmatprep.mubr.bf16.mxu0 %v642
  %1457 = vmatmul.mubr.bf16.gmra.mxu0 %v641
  %v1458 = vpop.f32.mrf.mxu0
  %v1459 = vadd.f32 %v1170, %v1458
  %v1460 = vpop.f32.mrf.mxu0
  %v1461 = vpop.f32.mrf.mxu0
  %v1462 = vadd.f32 %v1173, %v1461
  %v1463 = vpop.f32.mrf.mxu0
  %1464 = vmatprep.mubr.bf16.mxu0 %v646
  %1465 = vmatmul.mubr.bf16.gmra.mxu0 %v645
  %v1466 = vpop.f32.mrf.mxu0
  %v1467 = vadd.f32 %v1178, %v1466
  %v1468 = vpop.f32.mrf.mxu0
  %v1469 = vpop.f32.mrf.mxu0
  %v1470 = vadd.f32 %v1181, %v1469
  %v1471 = vpop.f32.mrf.mxu0
  %1472 = vmatprep.mubr.bf16.mxu0 %v650
  %1473 = vmatmul.mubr.bf16.gmra.mxu0 %v649
  %v1474 = vpop.f32.mrf.mxu0
  %v1475 = vadd.f32 %v1186, %v1474
  %v1476 = vpop.f32.mrf.mxu0
  %v1477 = vpop.f32.mrf.mxu0
  %v1478 = vadd.f32 %v1189, %v1477
  %v1479 = vpop.f32.mrf.mxu0
  %1480 = vmatprep.mubr.bf16.mxu0 %v654
  %1481 = vmatmul.mubr.bf16.gmra.mxu0 %v653
  %v1482 = vpop.f32.mrf.mxu0
  %v1483 = vadd.f32 %v1194, %v1482
  %v1484 = vpop.f32.mrf.mxu0
  %v1485 = vpop.f32.mrf.mxu0
  %v1486 = vadd.f32 %v1197, %v1485
  %v1487 = vpop.f32.mrf.mxu0
  %1488 = vmatprep.mubr.bf16.mxu0 %v658
  %1489 = vmatmul.mubr.bf16.gmra.mxu0 %v657
  %v1490 = vpop.f32.mrf.mxu0
  %v1491 = vadd.f32 %v1202, %v1490
  %v1492 = vpop.f32.mrf.mxu0
  %v1493 = vpop.f32.mrf.mxu0
  %v1494 = vadd.f32 %v1205, %v1493
  %v1495 = vpop.f32.mrf.mxu0
  %1496 = vmatprep.mubr.bf16.mxu0 %v662
  %1497 = vmatmul.mubr.bf16.gmra.mxu0 %v661
  %v1498 = vpop.f32.mrf.mxu0
  %v1499 = vadd.f32 %v1210, %v1498
  %v1500 = vpop.f32.mrf.mxu0
  %v1501 = vpop.f32.mrf.mxu0
  %v1502 = vadd.f32 %v1213, %v1501
  %v1503 = vpop.f32.mrf.mxu0
  %1504 = vmatprep.mubr.bf16.mxu0 %v666
  %1505 = vmatmul.mubr.bf16.gmra.mxu0 %v665
  %v1506 = vpop.f32.mrf.mxu0
  %v1507 = vadd.f32 %v1218, %v1506
  %v1508 = vpop.f32.mrf.mxu0
  %v1509 = vpop.f32.mrf.mxu0
  %v1510 = vadd.f32 %v1221, %v1509
  %v1511 = vpop.f32.mrf.mxu0
  %1512 = vmatprep.mubr.bf16.mxu0 %v670
  %1513 = vmatmul.mubr.bf16.gmra.mxu0 %v669
  %v1514 = vpop.f32.mrf.mxu0
  %v1515 = vadd.f32 %v1226, %v1514
  %v1516 = vpop.f32.mrf.mxu0
  %v1517 = vpop.f32.mrf.mxu0
  %v1518 = vadd.f32 %v1229, %v1517
  %v1519 = vpop.f32.mrf.mxu0
  %1520 = vmatprep.mubr.bf16.mxu0 %v674
  %1521 = vmatmul.mubr.bf16.gmra.mxu0 %v673
  %v1522 = vpop.f32.mrf.mxu0
  %v1523 = vadd.f32 %v1234, %v1522
  %v1524 = vpop.f32.mrf.mxu0
  %v1525 = vpop.f32.mrf.mxu0
  %v1526 = vadd.f32 %v1237, %v1525
  %v1527 = vpop.f32.mrf.mxu0
  %1528 = vmatprep.mubr.bf16.mxu0 %v678
  %1529 = vmatmul.mubr.bf16.gmra.mxu0 %v677
  %v1530 = vpop.f32.mrf.mxu0
  %v1531 = vadd.f32 %v1242, %v1530
  %v1532 = vpop.f32.mrf.mxu0
  %v1533 = vpop.f32.mrf.mxu0
  %v1534 = vadd.f32 %v1245, %v1533
  %v1535 = vpop.f32.mrf.mxu0
  %1536 = vmatprep.mubr.bf16.mxu0 %v682
  %1537 = vmatmul.mubr.bf16.gmra.mxu0 %v681
  %v1538 = vpop.f32.mrf.mxu0
  %v1539 = vadd.f32 %v1250, %v1538
  %v1540 = vpop.f32.mrf.mxu0
  %v1541 = vpop.f32.mrf.mxu0
  %v1542 = vadd.f32 %v1253, %v1541
  %v1543 = vpop.f32.mrf.mxu0
  %1544 = vmatprep.mubr.bf16.mxu0 %v686
  %1545 = vmatmul.mubr.bf16.gmra.mxu0 %v685
  %v1546 = vpop.f32.mrf.mxu0
  %v1547 = vadd.f32 %v1258, %v1546
  %v1548 = vpop.f32.mrf.mxu0
  %v1549 = vpop.f32.mrf.mxu0
  %v1550 = vadd.f32 %v1261, %v1549
  %v1551 = vpop.f32.mrf.mxu0
  %1552 = vmatprep.mubr.bf16.mxu0 %v690
  %1553 = vmatmul.mubr.bf16.gmra.mxu0 %v689
  %v1554 = vpop.f32.mrf.mxu0
  %v1555 = vadd.f32 %v1266, %v1554
  %v1556 = vpop.f32.mrf.mxu0
  %v1557 = vpop.f32.mrf.mxu0
  %v1558 = vadd.f32 %v1269, %v1557
  %v1559 = vpop.f32.mrf.mxu0
  %1560 = vmatprep.mubr.bf16.mxu0 %v694
  %1561 = vmatmul.mubr.bf16.gmra.mxu0 %v693
  %v1562 = vpop.f32.mrf.mxu0
  %v1563 = vadd.f32 %v1274, %v1562
  %v1564 = vpop.f32.mrf.mxu0
  %v1565 = vpop.f32.mrf.mxu0
  %v1566 = vadd.f32 %v1277, %v1565
  %v1567 = vpop.f32.mrf.mxu0
  %1568 = vmatprep.mubr.bf16.mxu0 %v698
  %1569 = vmatmul.mubr.bf16.gmra.mxu0 %v697
  %v1570 = vpop.f32.mrf.mxu0
  %v1571 = vadd.f32 %v1282, %v1570
  %v1572 = vpop.f32.mrf.mxu0
  %v1573 = vpop.f32.mrf.mxu0
  %v1574 = vadd.f32 %v1285, %v1573
  %v1575 = vpop.f32.mrf.mxu0
  %1576 = vmatprep.mubr.bf16.mxu0 %v702
  %1577 = vmatmul.mubr.bf16.gmra.mxu0 %v701
  %v1578 = vpop.f32.mrf.mxu0
  %v1579 = vadd.f32 %v1290, %v1578
  %v1580 = vpop.f32.mrf.mxu0
  %v1581 = vpop.f32.mrf.mxu0
  %v1582 = vadd.f32 %v1293, %v1581
  %v1583 = vpop.f32.mrf.mxu0
  %1584 = vmatprep.mubr.bf16.mxu0 %v706
  %1585 = vmatmul.mubr.bf16.gmra.mxu0 %v705
  %v1586 = vpop.f32.mrf.mxu0
  %v1587 = vadd.f32 %v1298, %v1586
  %v1588 = vpop.f32.mrf.mxu0
  %v1589 = vpop.f32.mrf.mxu0
  %v1590 = vadd.f32 %v1301, %v1589
  %v1591 = vpop.f32.mrf.mxu0
  %1592 = vmatprep.mubr.bf16.mxu0 %v710
  %1593 = vmatmul.mubr.bf16.gmra.mxu0 %v709
  %v1594 = vpop.f32.mrf.mxu0
  %v1595 = vadd.f32 %v1306, %v1594
  %v1596 = vpop.f32.mrf.mxu0
  %v1597 = vpop.f32.mrf.mxu0
  %v1598 = vadd.f32 %v1309, %v1597
  %v1599 = vpop.f32.mrf.mxu0
  %1600 = vmatprep.mubr.bf16.mxu0 %v714
  %1601 = vmatmul.mubr.bf16.gmra.mxu0 %v713
  %v1602 = vpop.f32.mrf.mxu0
  %v1603 = vadd.f32 %v1314, %v1602
  %v1604 = vpop.f32.mrf.mxu0
  %v1605 = vpop.f32.mrf.mxu0
  %v1606 = vadd.f32 %v1317, %v1605
  %v1607 = vpop.f32.mrf.mxu0
  %1608 = vmatprep.mubr.bf16.mxu0 %v718
  %1609 = vmatmul.mubr.bf16.gmra.mxu0 %v717
  %v1610 = vpop.f32.mrf.mxu0
  %v1611 = vadd.f32 %v1322, %v1610
  %v1612 = vpop.f32.mrf.mxu0
  %v1613 = vpop.f32.mrf.mxu0
  %v1614 = vadd.f32 %v1325, %v1613
  %v1615 = vpop.f32.mrf.mxu0
  %1616 = vdwg.mxu0
  %vm1617 = vcmask 408576
  %v1618 = vsel %vm1617, %v1363, -inf
  %v1619 = vsel %vm1617, %v1427, -inf
  %v1620 = vmax.f32 %v1618, %v1619
  %v1621 = vsel %vm1617, %v1491, -inf
  %v1622 = vmax.f32 %v1620, %v1621
  %v1623 = vsel %vm1617, %v1555, -inf
  %v1624 = vmax.f32 %v1622, %v1623
  %v1625 = vsel %vm1617, %v1366, -inf
  %v1626 = vsel %vm1617, %v1430, -inf
  %v1627 = vmax.f32 %v1625, %v1626
  %v1628 = vsel %vm1617, %v1494, -inf
  %v1629 = vmax.f32 %v1627, %v1628
  %v1630 = vsel %vm1617, %v1558, -inf
  %v1631 = vmax.f32 %v1629, %v1630
  %v1632 = vsel %vm1617, %v1371, -inf
  %v1633 = vsel %vm1617, %v1435, -inf
  %v1634 = vmax.f32 %v1632, %v1633
  %v1635 = vsel %vm1617, %v1499, -inf
  %v1636 = vmax.f32 %v1634, %v1635
  %v1637 = vsel %vm1617, %v1563, -inf
  %v1638 = vmax.f32 %v1636, %v1637
  %v1639 = vsel %vm1617, %v1374, -inf
  %v1640 = vsel %vm1617, %v1438, -inf
  %v1641 = vmax.f32 %v1639, %v1640
  %v1642 = vsel %vm1617, %v1502, -inf
  %v1643 = vmax.f32 %v1641, %v1642
  %v1644 = vsel %vm1617, %v1566, -inf
  %v1645 = vmax.f32 %v1643, %v1644
  %v1646 = vsel %vm1617, %v1379, -inf
  %v1647 = vsel %vm1617, %v1443, -inf
  %v1648 = vmax.f32 %v1646, %v1647
  %v1649 = vsel %vm1617, %v1507, -inf
  %v1650 = vmax.f32 %v1648, %v1649
  %v1651 = vsel %vm1617, %v1571, -inf
  %v1652 = vmax.f32 %v1650, %v1651
  %v1653 = vsel %vm1617, %v1382, -inf
  %v1654 = vsel %vm1617, %v1446, -inf
  %v1655 = vmax.f32 %v1653, %v1654
  %v1656 = vsel %vm1617, %v1510, -inf
  %v1657 = vmax.f32 %v1655, %v1656
  %v1658 = vsel %vm1617, %v1574, -inf
  %v1659 = vmax.f32 %v1657, %v1658
  %v1660 = vsel %vm1617, %v1387, -inf
  %v1661 = vsel %vm1617, %v1451, -inf
  %v1662 = vmax.f32 %v1660, %v1661
  %v1663 = vsel %vm1617, %v1515, -inf
  %v1664 = vmax.f32 %v1662, %v1663
  %v1665 = vsel %vm1617, %v1579, -inf
  %v1666 = vmax.f32 %v1664, %v1665
  %v1667 = vsel %vm1617, %v1390, -inf
  %v1668 = vsel %vm1617, %v1454, -inf
  %v1669 = vmax.f32 %v1667, %v1668
  %v1670 = vsel %vm1617, %v1518, -inf
  %v1671 = vmax.f32 %v1669, %v1670
  %v1672 = vsel %vm1617, %v1582, -inf
  %v1673 = vmax.f32 %v1671, %v1672
  %v1674 = vsel %vm1617, %v1395, -inf
  %v1675 = vsel %vm1617, %v1459, -inf
  %v1676 = vmax.f32 %v1674, %v1675
  %v1677 = vsel %vm1617, %v1523, -inf
  %v1678 = vmax.f32 %v1676, %v1677
  %v1679 = vsel %vm1617, %v1587, -inf
  %v1680 = vmax.f32 %v1678, %v1679
  %v1681 = vsel %vm1617, %v1398, -inf
  %v1682 = vsel %vm1617, %v1462, -inf
  %v1683 = vmax.f32 %v1681, %v1682
  %v1684 = vsel %vm1617, %v1526, -inf
  %v1685 = vmax.f32 %v1683, %v1684
  %v1686 = vsel %vm1617, %v1590, -inf
  %v1687 = vmax.f32 %v1685, %v1686
  %v1688 = vsel %vm1617, %v1403, -inf
  %v1689 = vsel %vm1617, %v1467, -inf
  %v1690 = vmax.f32 %v1688, %v1689
  %v1691 = vsel %vm1617, %v1531, -inf
  %v1692 = vmax.f32 %v1690, %v1691
  %v1693 = vsel %vm1617, %v1595, -inf
  %v1694 = vmax.f32 %v1692, %v1693
  %v1695 = vsel %vm1617, %v1406, -inf
  %v1696 = vsel %vm1617, %v1470, -inf
  %v1697 = vmax.f32 %v1695, %v1696
  %v1698 = vsel %vm1617, %v1534, -inf
  %v1699 = vmax.f32 %v1697, %v1698
  %v1700 = vsel %vm1617, %v1598, -inf
  %v1701 = vmax.f32 %v1699, %v1700
  %v1702 = vsel %vm1617, %v1411, -inf
  %v1703 = vsel %vm1617, %v1475, -inf
  %v1704 = vmax.f32 %v1702, %v1703
  %v1705 = vsel %vm1617, %v1539, -inf
  %v1706 = vmax.f32 %v1704, %v1705
  %v1707 = vsel %vm1617, %v1603, -inf
  %v1708 = vmax.f32 %v1706, %v1707
  %v1709 = vsel %vm1617, %v1414, -inf
  %v1710 = vsel %vm1617, %v1478, -inf
  %v1711 = vmax.f32 %v1709, %v1710
  %v1712 = vsel %vm1617, %v1542, -inf
  %v1713 = vmax.f32 %v1711, %v1712
  %v1714 = vsel %vm1617, %v1606, -inf
  %v1715 = vmax.f32 %v1713, %v1714
  %v1716 = vsel %vm1617, %v1419, -inf
  %v1717 = vsel %vm1617, %v1483, -inf
  %v1718 = vmax.f32 %v1716, %v1717
  %v1719 = vsel %vm1617, %v1547, -inf
  %v1720 = vmax.f32 %v1718, %v1719
  %v1721 = vsel %vm1617, %v1611, -inf
  %v1722 = vmax.f32 %v1720, %v1721
  %v1723 = vsel %vm1617, %v1422, -inf
  %v1724 = vsel %vm1617, %v1486, -inf
  %v1725 = vmax.f32 %v1723, %v1724
  %v1726 = vsel %vm1617, %v1550, -inf
  %v1727 = vmax.f32 %v1725, %v1726
  %v1728 = vsel %vm1617, %v1614, -inf
  %v1729 = vmax.f32 %v1727, %v1728
  %v1730 = vld [vmem:[%s2] sm:$0x1]
  %v1732 = vlaneseq
  %v1733 = vshrl.u32 %v1732, 7
  %v1734 = vsub.s32 0, %v1733
  %v1735 = vrot.slane %v1730, %v1734
  %v1737 = vadd.f32 %v1624, %v1735
  %v1738 = vadd.f32 %v1631, %v1735
  %v1739 = vadd.f32 %v1638, %v1735
  %v1740 = vadd.f32 %v1645, %v1735
  %v1741 = vadd.f32 %v1652, %v1735
  %v1742 = vadd.f32 %v1659, %v1735
  %v1743 = vadd.f32 %v1666, %v1735
  %v1744 = vadd.f32 %v1673, %v1735
  %v1745 = vadd.f32 %v1680, %v1735
  %v1746 = vadd.f32 %v1687, %v1735
  %v1747 = vadd.f32 %v1694, %v1735
  %v1748 = vadd.f32 %v1701, %v1735
  %v1749 = vadd.f32 %v1708, %v1735
  %v1750 = vadd.f32 %v1715, %v1735
  %v1751 = vadd.f32 %v1722, %v1735
  %v1752 = vadd.f32 %v1729, %v1735
  %v1753 = vmax.f32 %v1737, 0.0
  %v1754 = vmax.f32 %v1738, 0.0
  %v1755 = vmax.f32 %v1739, 0.0
  %v1756 = vmax.f32 %v1740, 0.0
  %v1757 = vmax.f32 %v1741, 0.0
  %v1758 = vmax.f32 %v1742, 0.0
  %v1759 = vmax.f32 %v1743, 0.0
  %v1760 = vmax.f32 %v1744, 0.0
  %v1761 = vmax.f32 %v1745, 0.0
  %v1762 = vmax.f32 %v1746, 0.0
  %v1763 = vmax.f32 %v1747, 0.0
  %v1764 = vmax.f32 %v1748, 0.0
  %v1765 = vmax.f32 %v1749, 0.0
  %v1766 = vmax.f32 %v1750, 0.0
  %v1767 = vmax.f32 %v1751, 0.0
  %v1768 = vmax.f32 %v1752, 0.0
  %v1769 = vpack.c.bf16 %v1754, %v1753
  %v1770 = vpack.c.bf16 %v1756, %v1755
  %v1771 = vpack.c.bf16 %v1758, %v1757
  %v1772 = vpack.c.bf16 %v1760, %v1759
  %v1773 = vpack.c.bf16 %v1762, %v1761
  %v1774 = vpack.c.bf16 %v1764, %v1763
  %v1775 = vpack.c.bf16 %v1766, %v1765
  %v1776 = vpack.c.bf16 %v1768, %v1767
  %v1785 = vunpack.c.l.b16 %v1769
  %v1786 = vunpack.c.h.b16 %v1769
  %v1787 = vunpack.c.l.b16 %v1770
  %v1788 = vunpack.c.h.b16 %v1770
  %v1789 = vunpack.c.l.b16 %v1771
  %v1790 = vunpack.c.h.b16 %v1771
  %v1791 = vunpack.c.l.b16 %v1772
  %v1792 = vunpack.c.h.b16 %v1772
  %v1793 = vunpack.c.l.b16 %v1773
  %v1794 = vunpack.c.h.b16 %v1773
  %v1795 = vunpack.c.l.b16 %v1774
  %v1796 = vunpack.c.h.b16 %v1774
  %v1797 = vunpack.c.l.b16 %v1775
  %v1798 = vunpack.c.h.b16 %v1775
  %v1799 = vunpack.c.l.b16 %v1776
  %v1800 = vunpack.c.h.b16 %v1776
  %v1801 = vpack.c.b16 %v1785, %v1785
  %v1802 = vpack.c.b16 %v1786, %v1786
  %v1803 = vpack.c.b16 %v1787, %v1787
  %v1804 = vpack.c.b16 %v1788, %v1788
  %v1805 = vpack.c.b16 %v1789, %v1789
  %v1806 = vpack.c.b16 %v1790, %v1790
  %v1807 = vpack.c.b16 %v1791, %v1791
  %v1808 = vpack.c.b16 %v1792, %v1792
  %v1809 = vpack.c.b16 %v1793, %v1793
  %v1810 = vpack.c.b16 %v1794, %v1794
  %v1811 = vpack.c.b16 %v1795, %v1795
  %v1812 = vpack.c.b16 %v1796, %v1796
  %v1813 = vpack.c.b16 %v1797, %v1797
  %v1814 = vpack.c.b16 %v1798, %v1798
  %v1815 = vpack.c.b16 %v1799, %v1799
  %v1816 = vpack.c.b16 %v1800, %v1800
  %vm1833 = vcmask 404480
  %1834 = vst.msk [vmem:[%s3] sm:$0xf] %vm1833, %v1801
  %1835 = vst.msk [vmem:[%s3 + $0x4] sm:$0xf] %vm1833, %v1802
  %1836 = vst.msk [vmem:[%s3 + $0x8] sm:$0xf] %vm1833, %v1803
  %1837 = vst.msk [vmem:[%s3 + $0xc] sm:$0xf] %vm1833, %v1804
  %1838 = vst.msk [vmem:[%s3 + $0x10] sm:$0xf] %vm1833, %v1805
  %1839 = vst.msk [vmem:[%s3 + $0x14] sm:$0xf] %vm1833, %v1806
  %1840 = vst.msk [vmem:[%s3 + $0x18] sm:$0xf] %vm1833, %v1807
  %1841 = vst.msk [vmem:[%s3 + $0x1c] sm:$0xf] %vm1833, %v1808
  %1842 = vst.msk [vmem:[%s3 + $0x20] sm:$0xf] %vm1833, %v1809
  %1843 = vst.msk [vmem:[%s3 + $0x24] sm:$0xf] %vm1833, %v1810
  %1844 = vst.msk [vmem:[%s3 + $0x28] sm:$0xf] %vm1833, %v1811
  %1845 = vst.msk [vmem:[%s3 + $0x2c] sm:$0xf] %vm1833, %v1812
  %1846 = vst.msk [vmem:[%s3 + $0x30] sm:$0xf] %vm1833, %v1813
  %1847 = vst.msk [vmem:[%s3 + $0x34] sm:$0xf] %vm1833, %v1814
  %1848 = vst.msk [vmem:[%s3 + $0x38] sm:$0xf] %vm1833, %v1815
  %1849 = vst.msk [vmem:[%s3 + $0x3c] sm:$0xf] %vm1833, %v1816
  // Predicated region
  $region14: #{digit_conv_forward.4} parent=0 // pred_check
    _
  $region15: #{digit_conv_forward.4} parent=0 // pred_check_branch
    %1851 = sbr.rel (0) target = $region17
  $region16: #{digit_conv_forward.4} parent=0 // pred_region
    _
  $region17: #{digit_conv_forward.4} parent=0 // pred_fallthru
    _
  // Predicated region
  $region18: #{digit_conv_forward.4} parent=0 // pred_check
    _
  $region19: #{digit_conv_forward.4} parent=0 // pred_check_branch
    %1853 = sbr.rel (0) target = $region21
  $region20: #{digit_conv_forward.4} parent=0 // pred_region
    _
  $region21: #{digit_conv_forward.4} parent=0 // pred_fallthru
    _

// kernel: digit_conv_forward.5
$region0: #{digit_conv_forward.5}
  #allocation0 [shape = 'u32[]', space=smem, size = 0x4, offset = 0x4, fixed_abs, tag = 'smem constant byte address 0x4 - core index']
  #allocation1 [shape = 'u32[144,128]{1,0:T(1,128)}', space=vmem, size = 0x12000, scoped, tag = 'internal scratch']
  %s0 = inlined_call_operand.vmem [shape: bf16[8,800], index: 0, kind: input, shape index: {}]
  %s1 = inlined_call_operand.vmem [shape: bf16[800,512], index: 1, kind: input, shape index: {}]
  %s2 = inlined_call_operand.vmem [shape: f32[1,512], index: 2, kind: input, shape index: {}]
  %s3 = inlined_call_operand.vmem [shape: bf16[512,32], index: 3, kind: input, shape index: {}]
  %s4 = inlined_call_operand.vmem [shape: f32[1,32], index: 4, kind: input, shape index: {}]
  %s5 = inlined_call_operand.hbm [shape: f32[8,32], index: 5, kind: output, shape index: {}]
  %s6 = sld [smem:[#allocation0]]
  $region30: #{digit_conv_forward.5} parent=0
    _
  %s8 = ssub.s32 1, %s6
  %s9 = scalar_select 0, %s8, %s6
  $region1: #{digit_conv_forward.5} parent=0
    #allocation2 [shape = 'u8[4096]{0}', space=vmem, size = 0x1000, scoped, tag = 'output window, operand 0, single buffered']
    #allocation3 [shape = 's32[1]{0}', space=sflag, size = 0x4, scoped, tag = 'scoped memory for digit_conv_forward.5']
    %10 = vsyncpa [#allocation3], 0
    // Predicated region
    $region2: #{digit_conv_forward.5} parent=1 // pred_check
      _
    $region3: #{digit_conv_forward.5} parent=1 // pred_check_branch
      %12 = sbr.rel (0) target = $region5
    $region4: #{digit_conv_forward.5} parent=1 // pred_region
      _
    $region5: #{digit_conv_forward.5} parent=1 // pred_fallthru
      _
    // Predicated region
    $region6: #{digit_conv_forward.5} parent=1 // pred_check
      _
    $region7: #{digit_conv_forward.5} parent=1 // pred_check_branch
      %14 = sbr.rel (0) target = $region9
    $region8: #{digit_conv_forward.5} parent=1 // pred_region
      _
    $region9: #{digit_conv_forward.5} parent=1 // pred_fallthru
      _
    // Predicated region
    $region10: #{digit_conv_forward.5} parent=1 // pred_check
      _
    $region11: #{digit_conv_forward.5} parent=1 // pred_check_branch
      %16 = sbr.rel (0) target = $region13
    $region12: #{digit_conv_forward.5} parent=1 // pred_region
      _
    $region13: #{digit_conv_forward.5} parent=1 // pred_fallthru
      _
    // Predicated region
    $region14: #{digit_conv_forward.5} parent=1 // pred_check
      _
    $region15: #{digit_conv_forward.5} parent=1 // pred_check_branch
      %18 = sbr.rel (0) target = $region17
    $region16: #{digit_conv_forward.5} parent=1 // pred_region
      _
    $region17: #{digit_conv_forward.5} parent=1 // pred_fallthru
      _
    // Predicated region
    $region18: #{digit_conv_forward.5} parent=1 // pred_check
      _
    $region19: #{digit_conv_forward.5} parent=1 // pred_check_branch
      %20 = sbr.rel (0) target = $region21
    $region20: #{digit_conv_forward.5} parent=1 // pred_region
      _
    $region21: #{digit_conv_forward.5} parent=1 // pred_fallthru
      _
    %v22 = vld [vmem:[%s0] sm:$0xff]
    %v23 = vld [vmem:[%s0 + $0x8] sm:$0xff]
    %v24 = vld [vmem:[%s0 + $0x10] sm:$0xff]
    %v25 = vld [vmem:[%s0 + $0x18] sm:$0xf]
    %v26 = vld [vmem:[%s1] sm:$0xff]
    %v27 = vld [vmem:[%s1 + $0x8] sm:$0xff]
    %v28 = vld [vmem:[%s1 + $0x10] sm:$0xff]
    %v29 = vld [vmem:[%s1 + $0x18] sm:$0xff]
    %v30 = vld [vmem:[%s1 + $0x20] sm:$0xff]
    %v31 = vld [vmem:[%s1 + $0x28] sm:$0xff]
    %v32 = vld [vmem:[%s1 + $0x30] sm:$0xff]
    %v33 = vld [vmem:[%s1 + $0x38] sm:$0xff]
    %v34 = vld [vmem:[%s1 + $0x40] sm:$0xff]
    %v35 = vld [vmem:[%s1 + $0x48] sm:$0xff]
    %v36 = vld [vmem:[%s1 + $0x50] sm:$0xff]
    %v37 = vld [vmem:[%s1 + $0x58] sm:$0xff]
    %v38 = vld [vmem:[%s1 + $0x60] sm:$0xff]
    %v39 = vld [vmem:[%s1 + $0x68] sm:$0xff]
    %v40 = vld [vmem:[%s1 + $0x70] sm:$0xff]
    %v41 = vld [vmem:[%s1 + $0x78] sm:$0xff]
    %v42 = vld [vmem:[%s1 + $0x80] sm:$0xff]
    %v43 = vld [vmem:[%s1 + $0x88] sm:$0xff]
    %v44 = vld [vmem:[%s1 + $0x90] sm:$0xff]
    %v45 = vld [vmem:[%s1 + $0x98] sm:$0xff]
    %v46 = vld [vmem:[%s1 + $0xa0] sm:$0xff]
    %v47 = vld [vmem:[%s1 + $0xa8] sm:$0xff]
    %v48 = vld [vmem:[%s1 + $0xb0] sm:$0xff]
    %v49 = vld [vmem:[%s1 + $0xb8] sm:$0xff]
    %v50 = vld [vmem:[%s1 + $0xc0] sm:$0xff]
    %v51 = vld [vmem:[%s1 + $0xc8] sm:$0xff]
    %v52 = vld [vmem:[%s1 + $0xd0] sm:$0xff]
    %v53 = vld [vmem:[%s1 + $0xd8] sm:$0xff]
    %v54 = vld [vmem:[%s1 + $0xe0] sm:$0xff]
    %v55 = vld [vmem:[%s1 + $0xe8] sm:$0xff]
    %v56 = vld [vmem:[%s1 + $0xf0] sm:$0xff]
    %v57 = vld [vmem:[%s1 + $0xf8] sm:$0xff]
    %v58 = vld [vmem:[%s1 + $0x100] sm:$0xff]
    %v59 = vld [vmem:[%s1 + $0x108] sm:$0xff]
    %v60 = vld [vmem:[%s1 + $0x110] sm:$0xff]
    %v61 = vld [vmem:[%s1 + $0x118] sm:$0xff]
    %v62 = vld [vmem:[%s1 + $0x120] sm:$0xff]
    %v63 = vld [vmem:[%s1 + $0x128] sm:$0xff]
    %v64 = vld [vmem:[%s1 + $0x130] sm:$0xff]
    %v65 = vld [vmem:[%s1 + $0x138] sm:$0xff]
    %v66 = vld [vmem:[%s1 + $0x140] sm:$0xff]
    %v67 = vld [vmem:[%s1 + $0x148] sm:$0xff]
    %v68 = vld [vmem:[%s1 + $0x150] sm:$0xff]
    %v69 = vld [vmem:[%s1 + $0x158] sm:$0xff]
    %v70 = vld [vmem:[%s1 + $0x160] sm:$0xff]
    %v71 = vld [vmem:[%s1 + $0x168] sm:$0xff]
    %v72 = vld [vmem:[%s1 + $0x170] sm:$0xff]
    %v73 = vld [vmem:[%s1 + $0x178] sm:$0xff]
    %v74 = vld [vmem:[%s1 + $0x180] sm:$0xff]
    %v75 = vld [vmem:[%s1 + $0x188] sm:$0xff]
    %v76 = vld [vmem:[%s1 + $0x190] sm:$0xff]
    %v77 = vld [vmem:[%s1 + $0x198] sm:$0xff]
    %v78 = vld [vmem:[%s1 + $0x1a0] sm:$0xff]
    %v79 = vld [vmem:[%s1 + $0x1a8] sm:$0xff]
    %v80 = vld [vmem:[%s1 + $0x1b0] sm:$0xff]
    %v81 = vld [vmem:[%s1 + $0x1b8] sm:$0xff]
    %v82 = vld [vmem:[%s1 + $0x1c0] sm:$0xff]
    %v83 = vld [vmem:[%s1 + $0x1c8] sm:$0xff]
    %v84 = vld [vmem:[%s1 + $0x1d0] sm:$0xff]
    %v85 = vld [vmem:[%s1 + $0x1d8] sm:$0xff]
    %v86 = vld [vmem:[%s1 + $0x1e0] sm:$0xff]
    %v87 = vld [vmem:[%s1 + $0x1e8] sm:$0xff]
    %v88 = vld [vmem:[%s1 + $0x1f0] sm:$0xff]
    %v89 = vld [vmem:[%s1 + $0x1f8] sm:$0xff]
    %v90 = vld [vmem:[%s1 + $0x200] sm:$0xff]
    %v91 = vld [vmem:[%s1 + $0x208] sm:$0xff]
    %v92 = vld [vmem:[%s1 + $0x210] sm:$0xff]
    %v93 = vld [vmem:[%s1 + $0x218] sm:$0xff]
    %v94 = vld [vmem:[%s1 + $0x220] sm:$0xff]
    %v95 = vld [vmem:[%s1 + $0x228] sm:$0xff]
    %v96 = vld [vmem:[%s1 + $0x230] sm:$0xff]
    %v97 = vld [vmem:[%s1 + $0x238] sm:$0xff]
    %v98 = vld [vmem:[%s1 + $0x240] sm:$0xff]
    %v99 = vld [vmem:[%s1 + $0x248] sm:$0xff]
    %v100 = vld [vmem:[%s1 + $0x250] sm:$0xff]
    %v101 = vld [vmem:[%s1 + $0x258] sm:$0xff]
    %v102 = vld [vmem:[%s1 + $0x260] sm:$0xff]
    %v103 = vld [vmem:[%s1 + $0x268] sm:$0xff]
    %v104 = vld [vmem:[%s1 + $0x270] sm:$0xff]
    %v105 = vld [vmem:[%s1 + $0x278] sm:$0xff]
    %v106 = vld [vmem:[%s1 + $0x280] sm:$0xff]
    %v107 = vld [vmem:[%s1 + $0x288] sm:$0xff]
    %v108 = vld [vmem:[%s1 + $0x290] sm:$0xff]
    %v109 = vld [vmem:[%s1 + $0x298] sm:$0xff]
    %v110 = vld [vmem:[%s1 + $0x2a0] sm:$0xff]
    %v111 = vld [vmem:[%s1 + $0x2a8] sm:$0xff]
    %v112 = vld [vmem:[%s1 + $0x2b0] sm:$0xff]
    %v113 = vld [vmem:[%s1 + $0x2b8] sm:$0xff]
    %v114 = vld [vmem:[%s1 + $0x2c0] sm:$0xff]
    %v115 = vld [vmem:[%s1 + $0x2c8] sm:$0xff]
    %v116 = vld [vmem:[%s1 + $0x2d0] sm:$0xff]
    %v117 = vld [vmem:[%s1 + $0x2d8] sm:$0xff]
    %v118 = vld [vmem:[%s1 + $0x2e0] sm:$0xff]
    %v119 = vld [vmem:[%s1 + $0x2e8] sm:$0xff]
    %v120 = vld [vmem:[%s1 + $0x2f0] sm:$0xff]
    %v121 = vld [vmem:[%s1 + $0x2f8] sm:$0xff]
    %v122 = vld [vmem:[%s1 + $0x300] sm:$0xff]
    %v123 = vld [vmem:[%s1 + $0x308] sm:$0xff]
    %v124 = vld [vmem:[%s1 + $0x310] sm:$0xff]
    %v125 = vld [vmem:[%s1 + $0x318] sm:$0xff]
    %v126 = vld [vmem:[%s1 + $0x320] sm:$0xff]
    %v127 = vld [vmem:[%s1 + $0x328] sm:$0xff]
    %v128 = vld [vmem:[%s1 + $0x330] sm:$0xff]
    %v129 = vld [vmem:[%s1 + $0x338] sm:$0xff]
    %v130 = vld [vmem:[%s1 + $0x340] sm:$0xff]
    %v131 = vld [vmem:[%s1 + $0x348] sm:$0xff]
    %v132 = vld [vmem:[%s1 + $0x350] sm:$0xff]
    %v133 = vld [vmem:[%s1 + $0x358] sm:$0xff]
    %v134 = vld [vmem:[%s1 + $0x360] sm:$0xff]
    %v135 = vld [vmem:[%s1 + $0x368] sm:$0xff]
    %v136 = vld [vmem:[%s1 + $0x370] sm:$0xff]
    %v137 = vld [vmem:[%s1 + $0x378] sm:$0xff]
    %v138 = vld [vmem:[%s1 + $0x380] sm:$0xff]
    %v139 = vld [vmem:[%s1 + $0x388] sm:$0xff]
    %v140 = vld [vmem:[%s1 + $0x390] sm:$0xff]
    %v141 = vld [vmem:[%s1 + $0x398] sm:$0xff]
    %v142 = vld [vmem:[%s1 + $0x3a0] sm:$0xff]
    %v143 = vld [vmem:[%s1 + $0x3a8] sm:$0xff]
    %v144 = vld [vmem:[%s1 + $0x3b0] sm:$0xff]
    %v145 = vld [vmem:[%s1 + $0x3b8] sm:$0xff]
    %v146 = vld [vmem:[%s1 + $0x3c0] sm:$0xff]
    %v147 = vld [vmem:[%s1 + $0x3c8] sm:$0xff]
    %v148 = vld [vmem:[%s1 + $0x3d0] sm:$0xff]
    %v149 = vld [vmem:[%s1 + $0x3d8] sm:$0xff]
    %v150 = vld [vmem:[%s1 + $0x3e0] sm:$0xff]
    %v151 = vld [vmem:[%s1 + $0x3e8] sm:$0xff]
    %v152 = vld [vmem:[%s1 + $0x3f0] sm:$0xff]
    %v153 = vld [vmem:[%s1 + $0x3f8] sm:$0xff]
    %v154 = vld [vmem:[%s1 + $0x400] sm:$0xff]
    %v155 = vld [vmem:[%s1 + $0x408] sm:$0xff]
    %v156 = vld [vmem:[%s1 + $0x410] sm:$0xff]
    %v157 = vld [vmem:[%s1 + $0x418] sm:$0xff]
    %v158 = vld [vmem:[%s1 + $0x420] sm:$0xff]
    %v159 = vld [vmem:[%s1 + $0x428] sm:$0xff]
    %v160 = vld [vmem:[%s1 + $0x430] sm:$0xff]
    %v161 = vld [vmem:[%s1 + $0x438] sm:$0xff]
    %v162 = vld [vmem:[%s1 + $0x440] sm:$0xff]
    %v163 = vld [vmem:[%s1 + $0x448] sm:$0xff]
    %v164 = vld [vmem:[%s1 + $0x450] sm:$0xff]
    %v165 = vld [vmem:[%s1 + $0x458] sm:$0xff]
    %v166 = vld [vmem:[%s1 + $0x460] sm:$0xff]
    %v167 = vld [vmem:[%s1 + $0x468] sm:$0xff]
    %v168 = vld [vmem:[%s1 + $0x470] sm:$0xff]
    %v169 = vld [vmem:[%s1 + $0x478] sm:$0xff]
    %v170 = vld [vmem:[%s1 + $0x480] sm:$0xff]
    %v171 = vld [vmem:[%s1 + $0x488] sm:$0xff]
    %v172 = vld [vmem:[%s1 + $0x490] sm:$0xff]
    %v173 = vld [vmem:[%s1 + $0x498] sm:$0xff]
    %v174 = vld [vmem:[%s1 + $0x4a0] sm:$0xff]
    %v175 = vld [vmem:[%s1 + $0x4a8] sm:$0xff]
    %v176 = vld [vmem:[%s1 + $0x4b0] sm:$0xff]
    %v177 = vld [vmem:[%s1 + $0x4b8] sm:$0xff]
    %v178 = vld [vmem:[%s1 + $0x4c0] sm:$0xff]
    %v179 = vld [vmem:[%s1 + $0x4c8] sm:$0xff]
    %v180 = vld [vmem:[%s1 + $0x4d0] sm:$0xff]
    %v181 = vld [vmem:[%s1 + $0x4d8] sm:$0xff]
    %v182 = vld [vmem:[%s1 + $0x4e0] sm:$0xff]
    %v183 = vld [vmem:[%s1 + $0x4e8] sm:$0xff]
    %v184 = vld [vmem:[%s1 + $0x4f0] sm:$0xff]
    %v185 = vld [vmem:[%s1 + $0x4f8] sm:$0xff]
    %v186 = vld [vmem:[%s1 + $0x500] sm:$0xff]
    %v187 = vld [vmem:[%s1 + $0x508] sm:$0xff]
    %v188 = vld [vmem:[%s1 + $0x510] sm:$0xff]
    %v189 = vld [vmem:[%s1 + $0x518] sm:$0xff]
    %v190 = vld [vmem:[%s1 + $0x520] sm:$0xff]
    %v191 = vld [vmem:[%s1 + $0x528] sm:$0xff]
    %v192 = vld [vmem:[%s1 + $0x530] sm:$0xff]
    %v193 = vld [vmem:[%s1 + $0x538] sm:$0xff]
    %v194 = vld [vmem:[%s1 + $0x540] sm:$0xff]
    %v195 = vld [vmem:[%s1 + $0x548] sm:$0xff]
    %v196 = vld [vmem:[%s1 + $0x550] sm:$0xff]
    %v197 = vld [vmem:[%s1 + $0x558] sm:$0xff]
    %v198 = vld [vmem:[%s1 + $0x560] sm:$0xff]
    %v199 = vld [vmem:[%s1 + $0x568] sm:$0xff]
    %v200 = vld [vmem:[%s1 + $0x570] sm:$0xff]
    %v201 = vld [vmem:[%s1 + $0x578] sm:$0xff]
    %v202 = vld [vmem:[%s1 + $0x580] sm:$0xff]
    %v203 = vld [vmem:[%s1 + $0x588] sm:$0xff]
    %v204 = vld [vmem:[%s1 + $0x590] sm:$0xff]
    %v205 = vld [vmem:[%s1 + $0x598] sm:$0xff]
    %v206 = vld [vmem:[%s1 + $0x5a0] sm:$0xff]
    %v207 = vld [vmem:[%s1 + $0x5a8] sm:$0xff]
    %v208 = vld [vmem:[%s1 + $0x5b0] sm:$0xff]
    %v209 = vld [vmem:[%s1 + $0x5b8] sm:$0xff]
    %v210 = vld [vmem:[%s1 + $0x5c0] sm:$0xff]
    %v211 = vld [vmem:[%s1 + $0x5c8] sm:$0xff]
    %v212 = vld [vmem:[%s1 + $0x5d0] sm:$0xff]
    %v213 = vld [vmem:[%s1 + $0x5d8] sm:$0xff]
    %v214 = vld [vmem:[%s1 + $0x5e0] sm:$0xff]
    %v215 = vld [vmem:[%s1 + $0x5e8] sm:$0xff]
    %v216 = vld [vmem:[%s1 + $0x5f0] sm:$0xff]
    %v217 = vld [vmem:[%s1 + $0x5f8] sm:$0xff]
    %v218 = vld [vmem:[%s1 + $0x600] sm:$0xff]
    %v219 = vld [vmem:[%s1 + $0x608] sm:$0xff]
    %v220 = vld [vmem:[%s1 + $0x610] sm:$0xff]
    %v221 = vld [vmem:[%s1 + $0x618] sm:$0xff]
    %v222 = vld [vmem:[%s1 + $0x620] sm:$0xff]
    %v223 = vld [vmem:[%s1 + $0x628] sm:$0xff]
    %v224 = vld [vmem:[%s1 + $0x630] sm:$0xff]
    %v225 = vld [vmem:[%s1 + $0x638] sm:$0xff]
    %v226 = vld [vmem:[%s2] sm:$0xf]
    %v228 = vlaneseq
    %v229 = vshrl.u32 %v228, 7
    %v230 = vsub.s32 0, %v229
    %v231 = vrot.slane %v226, %v230
    %v232 = vlaneseq
    %v233 = vshrl.u32 %v232, 7
    %v234 = vsub.s32 1, %v233
    %v235 = vrot.slane %v226, %v234
    %v236 = vlaneseq
    %v237 = vshrl.u32 %v236, 7
    %v238 = vsub.s32 2, %v237
    %v239 = vrot.slane %v226, %v238
    %v240 = vlaneseq
    %v241 = vshrl.u32 %v240, 7
    %v242 = vsub.s32 3, %v241
    %v243 = vrot.slane %v226, %v242
    %v252 = vunpack.c.l.b16 %v22
    %v253 = vunpack.c.h.b16 %v22
    %v254 = vunpack.c.l.b16 %v23
    %v255 = vunpack.c.h.b16 %v23
    %v256 = vunpack.c.l.b16 %v24
    %v257 = vunpack.c.h.b16 %v24
    %v258 = vunpack.c.l.b16 %v25
    %v259 = vpack.c.b16 %v252, %v252
    %v260 = vpack.c.b16 %v253, %v253
    %v261 = vpack.c.b16 %v254, %v254
    %v262 = vpack.c.b16 %v255, %v255
    %v263 = vpack.c.b16 %v256, %v256
    %v264 = vpack.c.b16 %v257, %v257
    %v265 = vpack.c.b16 %v258, %v258
    %v472 = vunpack.c.l.b16 %v26
    %v473 = vunpack.c.h.b16 %v26
    %v474 = vunpack.c.l.b16 %v27
    %v475 = vunpack.c.h.b16 %v27
    %v476 = vunpack.c.l.b16 %v28
    %v477 = vunpack.c.h.b16 %v28
    %v478 = vunpack.c.l.b16 %v29
    %v479 = vunpack.c.h.b16 %v29
    %v480 = vunpack.c.l.b16 %v30
    %v481 = vunpack.c.h.b16 %v30
    %v482 = vunpack.c.l.b16 %v31
    %v483 = vunpack.c.h.b16 %v31
    %v484 = vunpack.c.l.b16 %v32
    %v485 = vunpack.c.h.b16 %v32
    %v486 = vunpack.c.l.b16 %v33
    %v487 = vunpack.c.h.b16 %v33
    %v488 = vunpack.c.l.b16 %v34
    %v489 = vunpack.c.h.b16 %v34
    %v490 = vunpack.c.l.b16 %v35
    %v491 = vunpack.c.h.b16 %v35
    %v492 = vunpack.c.l.b16 %v36
    %v493 = vunpack.c.h.b16 %v36
    %v494 = vunpack.c.l.b16 %v37
    %v495 = vunpack.c.h.b16 %v37
    %v496 = vunpack.c.l.b16 %v38
    %v497 = vunpack.c.h.b16 %v38
    %v498 = vunpack.c.l.b16 %v39
    %v499 = vunpack.c.h.b16 %v39
    %v500 = vunpack.c.l.b16 %v40
    %v501 = vunpack.c.h.b16 %v40
    %v502 = vunpack.c.l.b16 %v41
    %v503 = vunpack.c.h.b16 %v41
    %v504 = vunpack.c.l.b16 %v42
    %v505 = vunpack.c.h.b16 %v42
    %v506 = vunpack.c.l.b16 %v43
    %v507 = vunpack.c.h.b16 %v43
    %v508 = vunpack.c.l.b16 %v44
    %v509 = vunpack.c.h.b16 %v44
    %v510 = vunpack.c.l.b16 %v45
    %v511 = vunpack.c.h.b16 %v45
    %v512 = vunpack.c.l.b16 %v46
    %v513 = vunpack.c.h.b16 %v46
    %v514 = vunpack.c.l.b16 %v47
    %v515 = vunpack.c.h.b16 %v47
    %v516 = vunpack.c.l.b16 %v48
    %v517 = vunpack.c.h.b16 %v48
    %v518 = vunpack.c.l.b16 %v49
    %v519 = vunpack.c.h.b16 %v49
    %v520 = vunpack.c.l.b16 %v50
    %v521 = vunpack.c.h.b16 %v50
    %v522 = vunpack.c.l.b16 %v51
    %v523 = vunpack.c.h.b16 %v51
    %v524 = vunpack.c.l.b16 %v52
    %v525 = vunpack.c.h.b16 %v52
    %v526 = vunpack.c.l.b16 %v53
    %v527 = vunpack.c.h.b16 %v53
    %v528 = vunpack.c.l.b16 %v54
    %v529 = vunpack.c.h.b16 %v54
    %v530 = vunpack.c.l.b16 %v55
    %v531 = vunpack.c.h.b16 %v55
    %v532 = vunpack.c.l.b16 %v56
    %v533 = vunpack.c.h.b16 %v56
    %v534 = vunpack.c.l.b16 %v57
    %v535 = vunpack.c.h.b16 %v57
    %v536 = vunpack.c.l.b16 %v58
    %v537 = vunpack.c.h.b16 %v58
    %v538 = vunpack.c.l.b16 %v59
    %v539 = vunpack.c.h.b16 %v59
    %v540 = vunpack.c.l.b16 %v60
    %v541 = vunpack.c.h.b16 %v60
    %v542 = vunpack.c.l.b16 %v61
    %v543 = vunpack.c.h.b16 %v61
    %v544 = vunpack.c.l.b16 %v62
    %v545 = vunpack.c.h.b16 %v62
    %v546 = vunpack.c.l.b16 %v63
    %v547 = vunpack.c.h.b16 %v63
    %v548 = vunpack.c.l.b16 %v64
    %v549 = vunpack.c.h.b16 %v64
    %v550 = vunpack.c.l.b16 %v65
    %v551 = vunpack.c.h.b16 %v65
    %v552 = vunpack.c.l.b16 %v66
    %v553 = vunpack.c.h.b16 %v66
    %v554 = vunpack.c.l.b16 %v67
    %v555 = vunpack.c.h.b16 %v67
    %v556 = vunpack.c.l.b16 %v68
    %v557 = vunpack.c.h.b16 %v68
    %v558 = vunpack.c.l.b16 %v69
    %v559 = vunpack.c.h.b16 %v69
    %v560 = vunpack.c.l.b16 %v70
    %v561 = vunpack.c.h.b16 %v70
    %v562 = vunpack.c.l.b16 %v71
    %v563 = vunpack.c.h.b16 %v71
    %v564 = vunpack.c.l.b16 %v72
    %v565 = vunpack.c.h.b16 %v72
    %v566 = vunpack.c.l.b16 %v73
    %v567 = vunpack.c.h.b16 %v73
    %v568 = vunpack.c.l.b16 %v74
    %v569 = vunpack.c.h.b16 %v74
    %v570 = vunpack.c.l.b16 %v75
    %v571 = vunpack.c.h.b16 %v75
    %v572 = vunpack.c.l.b16 %v76
    %v573 = vunpack.c.h.b16 %v76
    %v574 = vunpack.c.l.b16 %v77
    %v575 = vunpack.c.h.b16 %v77
    %v576 = vunpack.c.l.b16 %v78
    %v577 = vunpack.c.h.b16 %v78
    %v578 = vunpack.c.l.b16 %v79
    %v579 = vunpack.c.h.b16 %v79
    %v580 = vunpack.c.l.b16 %v80
    %v581 = vunpack.c.h.b16 %v80
    %v582 = vunpack.c.l.b16 %v81
    %v583 = vunpack.c.h.b16 %v81
    %v584 = vunpack.c.l.b16 %v82
    %v585 = vunpack.c.h.b16 %v82
    %v586 = vunpack.c.l.b16 %v83
    %v587 = vunpack.c.h.b16 %v83
    %v588 = vunpack.c.l.b16 %v84
    %v589 = vunpack.c.h.b16 %v84
    %v590 = vunpack.c.l.b16 %v85
    %v591 = vunpack.c.h.b16 %v85
    %v592 = vunpack.c.l.b16 %v86
    %v593 = vunpack.c.h.b16 %v86
    %v594 = vunpack.c.l.b16 %v87
    %v595 = vunpack.c.h.b16 %v87
    %v596 = vunpack.c.l.b16 %v88
    %v597 = vunpack.c.h.b16 %v88
    %v598 = vunpack.c.l.b16 %v89
    %v599 = vunpack.c.h.b16 %v89
    %v600 = vunpack.c.l.b16 %v90
    %v601 = vunpack.c.h.b16 %v90
    %v602 = vunpack.c.l.b16 %v91
    %v603 = vunpack.c.h.b16 %v91
    %v604 = vunpack.c.l.b16 %v92
    %v605 = vunpack.c.h.b16 %v92
    %v606 = vunpack.c.l.b16 %v93
    %v607 = vunpack.c.h.b16 %v93
    %v608 = vunpack.c.l.b16 %v94
    %v609 = vunpack.c.h.b16 %v94
    %v610 = vunpack.c.l.b16 %v95
    %v611 = vunpack.c.h.b16 %v95
    %v612 = vunpack.c.l.b16 %v96
    %v613 = vunpack.c.h.b16 %v96
    %v614 = vunpack.c.l.b16 %v97
    %v615 = vunpack.c.h.b16 %v97
    %v616 = vunpack.c.l.b16 %v98
    %v617 = vunpack.c.h.b16 %v98
    %v618 = vunpack.c.l.b16 %v99
    %v619 = vunpack.c.h.b16 %v99
    %v620 = vunpack.c.l.b16 %v100
    %v621 = vunpack.c.h.b16 %v100
    %v622 = vunpack.c.l.b16 %v101
    %v623 = vunpack.c.h.b16 %v101
    %v624 = vunpack.c.l.b16 %v102
    %v625 = vunpack.c.h.b16 %v102
    %v626 = vunpack.c.l.b16 %v103
    %v627 = vunpack.c.h.b16 %v103
    %v628 = vunpack.c.l.b16 %v104
    %v629 = vunpack.c.h.b16 %v104
    %v630 = vunpack.c.l.b16 %v105
    %v631 = vunpack.c.h.b16 %v105
    %v632 = vunpack.c.l.b16 %v106
    %v633 = vunpack.c.h.b16 %v106
    %v634 = vunpack.c.l.b16 %v107
    %v635 = vunpack.c.h.b16 %v107
    %v636 = vunpack.c.l.b16 %v108
    %v637 = vunpack.c.h.b16 %v108
    %v638 = vunpack.c.l.b16 %v109
    %v639 = vunpack.c.h.b16 %v109
    %v640 = vunpack.c.l.b16 %v110
    %v641 = vunpack.c.h.b16 %v110
    %v642 = vunpack.c.l.b16 %v111
    %v643 = vunpack.c.h.b16 %v111
    %v644 = vunpack.c.l.b16 %v112
    %v645 = vunpack.c.h.b16 %v112
    %v646 = vunpack.c.l.b16 %v113
    %v647 = vunpack.c.h.b16 %v113
    %v648 = vunpack.c.l.b16 %v114
    %v649 = vunpack.c.h.b16 %v114
    %v650 = vunpack.c.l.b16 %v115
    %v651 = vunpack.c.h.b16 %v115
    %v652 = vunpack.c.l.b16 %v116
    %v653 = vunpack.c.h.b16 %v116
    %v654 = vunpack.c.l.b16 %v117
    %v655 = vunpack.c.h.b16 %v117
    %v656 = vunpack.c.l.b16 %v118
    %v657 = vunpack.c.h.b16 %v118
    %v658 = vunpack.c.l.b16 %v119
    %v659 = vunpack.c.h.b16 %v119
    %v660 = vunpack.c.l.b16 %v120
    %v661 = vunpack.c.h.b16 %v120
    %v662 = vunpack.c.l.b16 %v121
    %v663 = vunpack.c.h.b16 %v121
    %v664 = vunpack.c.l.b16 %v122
    %v665 = vunpack.c.h.b16 %v122
    %v666 = vunpack.c.l.b16 %v123
    %v667 = vunpack.c.h.b16 %v123
    %v668 = vunpack.c.l.b16 %v124
    %v669 = vunpack.c.h.b16 %v124
    %v670 = vunpack.c.l.b16 %v125
    %v671 = vunpack.c.h.b16 %v125
    %v672 = vunpack.c.l.b16 %v126
    %v673 = vunpack.c.h.b16 %v126
    %v674 = vunpack.c.l.b16 %v127
    %v675 = vunpack.c.h.b16 %v127
    %v676 = vunpack.c.l.b16 %v128
    %v677 = vunpack.c.h.b16 %v128
    %v678 = vunpack.c.l.b16 %v129
    %v679 = vunpack.c.h.b16 %v129
    %v680 = vunpack.c.l.b16 %v130
    %v681 = vunpack.c.h.b16 %v130
    %v682 = vunpack.c.l.b16 %v131
    %v683 = vunpack.c.h.b16 %v131
    %v684 = vunpack.c.l.b16 %v132
    %v685 = vunpack.c.h.b16 %v132
    %v686 = vunpack.c.l.b16 %v133
    %v687 = vunpack.c.h.b16 %v133
    %v688 = vunpack.c.l.b16 %v134
    %v689 = vunpack.c.h.b16 %v134
    %v690 = vunpack.c.l.b16 %v135
    %v691 = vunpack.c.h.b16 %v135
    %v692 = vunpack.c.l.b16 %v136
    %v693 = vunpack.c.h.b16 %v136
    %v694 = vunpack.c.l.b16 %v137
    %v695 = vunpack.c.h.b16 %v137
    %v696 = vunpack.c.l.b16 %v138
    %v697 = vunpack.c.h.b16 %v138
    %v698 = vunpack.c.l.b16 %v139
    %v699 = vunpack.c.h.b16 %v139
    %v700 = vunpack.c.l.b16 %v140
    %v701 = vunpack.c.h.b16 %v140
    %v702 = vunpack.c.l.b16 %v141
    %v703 = vunpack.c.h.b16 %v141
    %v704 = vunpack.c.l.b16 %v142
    %v705 = vunpack.c.h.b16 %v142
    %v706 = vunpack.c.l.b16 %v143
    %v707 = vunpack.c.h.b16 %v143
    %v708 = vunpack.c.l.b16 %v144
    %v709 = vunpack.c.h.b16 %v144
    %v710 = vunpack.c.l.b16 %v145
    %v711 = vunpack.c.h.b16 %v145
    %v712 = vunpack.c.l.b16 %v146
    %v713 = vunpack.c.h.b16 %v146
    %v714 = vunpack.c.l.b16 %v147
    %v715 = vunpack.c.h.b16 %v147
    %v716 = vunpack.c.l.b16 %v148
    %v717 = vunpack.c.h.b16 %v148
    %v718 = vunpack.c.l.b16 %v149
    %v719 = vunpack.c.h.b16 %v149
    %v720 = vunpack.c.l.b16 %v150
    %v721 = vunpack.c.h.b16 %v150
    %v722 = vunpack.c.l.b16 %v151
    %v723 = vunpack.c.h.b16 %v151
    %v724 = vunpack.c.l.b16 %v152
    %v725 = vunpack.c.h.b16 %v152
    %v726 = vunpack.c.l.b16 %v153
    %v727 = vunpack.c.h.b16 %v153
    %v728 = vunpack.c.l.b16 %v154
    %v729 = vunpack.c.h.b16 %v154
    %v730 = vunpack.c.l.b16 %v155
    %v731 = vunpack.c.h.b16 %v155
    %v732 = vunpack.c.l.b16 %v156
    %v733 = vunpack.c.h.b16 %v156
    %v734 = vunpack.c.l.b16 %v157
    %v735 = vunpack.c.h.b16 %v157
    %v736 = vunpack.c.l.b16 %v158
    %v737 = vunpack.c.h.b16 %v158
    %v738 = vunpack.c.l.b16 %v159
    %v739 = vunpack.c.h.b16 %v159
    %v740 = vunpack.c.l.b16 %v160
    %v741 = vunpack.c.h.b16 %v160
    %v742 = vunpack.c.l.b16 %v161
    %v743 = vunpack.c.h.b16 %v161
    %v744 = vunpack.c.l.b16 %v162
    %v745 = vunpack.c.h.b16 %v162
    %v746 = vunpack.c.l.b16 %v163
    %v747 = vunpack.c.h.b16 %v163
    %v748 = vunpack.c.l.b16 %v164
    %v749 = vunpack.c.h.b16 %v164
    %v750 = vunpack.c.l.b16 %v165
    %v751 = vunpack.c.h.b16 %v165
    %v752 = vunpack.c.l.b16 %v166
    %v753 = vunpack.c.h.b16 %v166
    %v754 = vunpack.c.l.b16 %v167
    %v755 = vunpack.c.h.b16 %v167
    %v756 = vunpack.c.l.b16 %v168
    %v757 = vunpack.c.h.b16 %v168
    %v758 = vunpack.c.l.b16 %v169
    %v759 = vunpack.c.h.b16 %v169
    %v760 = vunpack.c.l.b16 %v170
    %v761 = vunpack.c.h.b16 %v170
    %v762 = vunpack.c.l.b16 %v171
    %v763 = vunpack.c.h.b16 %v171
    %v764 = vunpack.c.l.b16 %v172
    %v765 = vunpack.c.h.b16 %v172
    %v766 = vunpack.c.l.b16 %v173
    %v767 = vunpack.c.h.b16 %v173
    %v768 = vunpack.c.l.b16 %v174
    %v769 = vunpack.c.h.b16 %v174
    %v770 = vunpack.c.l.b16 %v175
    %v771 = vunpack.c.h.b16 %v175
    %v772 = vunpack.c.l.b16 %v176
    %v773 = vunpack.c.h.b16 %v176
    %v774 = vunpack.c.l.b16 %v177
    %v775 = vunpack.c.h.b16 %v177
    %v776 = vunpack.c.l.b16 %v178
    %v777 = vunpack.c.h.b16 %v178
    %v778 = vunpack.c.l.b16 %v179
    %v779 = vunpack.c.h.b16 %v179
    %v780 = vunpack.c.l.b16 %v180
    %v781 = vunpack.c.h.b16 %v180
    %v782 = vunpack.c.l.b16 %v181
    %v783 = vunpack.c.h.b16 %v181
    %v784 = vunpack.c.l.b16 %v182
    %v785 = vunpack.c.h.b16 %v182
    %v786 = vunpack.c.l.b16 %v183
    %v787 = vunpack.c.h.b16 %v183
    %v788 = vunpack.c.l.b16 %v184
    %v789 = vunpack.c.h.b16 %v184
    %v790 = vunpack.c.l.b16 %v185
    %v791 = vunpack.c.h.b16 %v185
    %v792 = vunpack.c.l.b16 %v186
    %v793 = vunpack.c.h.b16 %v186
    %v794 = vunpack.c.l.b16 %v187
    %v795 = vunpack.c.h.b16 %v187
    %v796 = vunpack.c.l.b16 %v188
    %v797 = vunpack.c.h.b16 %v188
    %v798 = vunpack.c.l.b16 %v189
    %v799 = vunpack.c.h.b16 %v189
    %v800 = vunpack.c.l.b16 %v190
    %v801 = vunpack.c.h.b16 %v190
    %v802 = vunpack.c.l.b16 %v191
    %v803 = vunpack.c.h.b16 %v191
    %v804 = vunpack.c.l.b16 %v192
    %v805 = vunpack.c.h.b16 %v192
    %v806 = vunpack.c.l.b16 %v193
    %v807 = vunpack.c.h.b16 %v193
    %v808 = vunpack.c.l.b16 %v194
    %v809 = vunpack.c.h.b16 %v194
    %v810 = vunpack.c.l.b16 %v195
    %v811 = vunpack.c.h.b16 %v195
    %v812 = vunpack.c.l.b16 %v196
    %v813 = vunpack.c.h.b16 %v196
    %v814 = vunpack.c.l.b16 %v197
    %v815 = vunpack.c.h.b16 %v197
    %v816 = vunpack.c.l.b16 %v198
    %v817 = vunpack.c.h.b16 %v198
    %v818 = vunpack.c.l.b16 %v199
    %v819 = vunpack.c.h.b16 %v199
    %v820 = vunpack.c.l.b16 %v200
    %v821 = vunpack.c.h.b16 %v200
    %v822 = vunpack.c.l.b16 %v201
    %v823 = vunpack.c.h.b16 %v201
    %v824 = vunpack.c.l.b16 %v202
    %v825 = vunpack.c.h.b16 %v202
    %v826 = vunpack.c.l.b16 %v203
    %v827 = vunpack.c.h.b16 %v203
    %v828 = vunpack.c.l.b16 %v204
    %v829 = vunpack.c.h.b16 %v204
    %v830 = vunpack.c.l.b16 %v205
    %v831 = vunpack.c.h.b16 %v205
    %v832 = vunpack.c.l.b16 %v206
    %v833 = vunpack.c.h.b16 %v206
    %v834 = vunpack.c.l.b16 %v207
    %v835 = vunpack.c.h.b16 %v207
    %v836 = vunpack.c.l.b16 %v208
    %v837 = vunpack.c.h.b16 %v208
    %v838 = vunpack.c.l.b16 %v209
    %v839 = vunpack.c.h.b16 %v209
    %v840 = vunpack.c.l.b16 %v210
    %v841 = vunpack.c.h.b16 %v210
    %v842 = vunpack.c.l.b16 %v211
    %v843 = vunpack.c.h.b16 %v211
    %v844 = vunpack.c.l.b16 %v212
    %v845 = vunpack.c.h.b16 %v212
    %v846 = vunpack.c.l.b16 %v213
    %v847 = vunpack.c.h.b16 %v213
    %v848 = vunpack.c.l.b16 %v214
    %v849 = vunpack.c.h.b16 %v214
    %v850 = vunpack.c.l.b16 %v215
    %v851 = vunpack.c.h.b16 %v215
    %v852 = vunpack.c.l.b16 %v216
    %v853 = vunpack.c.h.b16 %v216
    %v854 = vunpack.c.l.b16 %v217
    %v855 = vunpack.c.h.b16 %v217
    %v856 = vunpack.c.l.b16 %v218
    %v857 = vunpack.c.h.b16 %v218
    %v858 = vunpack.c.l.b16 %v219
    %v859 = vunpack.c.h.b16 %v219
    %v860 = vunpack.c.l.b16 %v220
    %v861 = vunpack.c.h.b16 %v220
    %v862 = vunpack.c.l.b16 %v221
    %v863 = vunpack.c.h.b16 %v221
    %v864 = vunpack.c.l.b16 %v222
    %v865 = vunpack.c.h.b16 %v222
    %v866 = vunpack.c.l.b16 %v223
    %v867 = vunpack.c.h.b16 %v223
    %v868 = vunpack.c.l.b16 %v224
    %v869 = vunpack.c.h.b16 %v224
    %v870 = vunpack.c.l.b16 %v225
    %v871 = vunpack.c.h.b16 %v225
    %v872 = vpack.c.b16 %v476, %v472
    %v873 = vpack.c.b16 %v477, %v473
    %v874 = vpack.c.b16 %v478, %v474
    %v875 = vpack.c.b16 %v479, %v475
    %v876 = vpack.c.b16 %v484, %v480
    %v877 = vpack.c.b16 %v485, %v481
    %v878 = vpack.c.b16 %v486, %v482
    %v879 = vpack.c.b16 %v487, %v483
    %v880 = vpack.c.b16 %v492, %v488
    %v881 = vpack.c.b16 %v493, %v489
    %v882 = vpack.c.b16 %v494, %v490
    %v883 = vpack.c.b16 %v495, %v491
    %v884 = vpack.c.b16 %v500, %v496
    %v885 = vpack.c.b16 %v501, %v497
    %v886 = vpack.c.b16 %v502, %v498
    %v887 = vpack.c.b16 %v503, %v499
    %v888 = vpack.c.b16 %v508, %v504
    %v889 = vpack.c.b16 %v509, %v505
    %v890 = vpack.c.b16 %v510, %v506
    %v891 = vpack.c.b16 %v511, %v507
    %v892 = vpack.c.b16 %v516, %v512
    %v893 = vpack.c.b16 %v517, %v513
    %v894 = vpack.c.b16 %v518, %v514
    %v895 = vpack.c.b16 %v519, %v515
    %v896 = vpack.c.b16 %v524, %v520
    %v897 = vpack.c.b16 %v525, %v521
    %v898 = vpack.c.b16 %v526, %v522
    %v899 = vpack.c.b16 %v527, %v523
    %v900 = vpack.c.b16 %v532, %v528
    %v901 = vpack.c.b16 %v533, %v529
    %v902 = vpack.c.b16 %v534, %v530
    %v903 = vpack.c.b16 %v535, %v531
    %v904 = vpack.c.b16 %v540, %v536
    %v905 = vpack.c.b16 %v541, %v537
    %v906 = vpack.c.b16 %v542, %v538
    %v907 = vpack.c.b16 %v543, %v539
    %v908 = vpack.c.b16 %v548, %v544
    %v909 = vpack.c.b16 %v549, %v545
    %v910 = vpack.c.b16 %v550, %v546
    %v911 = vpack.c.b16 %v551, %v547
    %v912 = vpack.c.b16 %v556, %v552
    %v913 = vpack.c.b16 %v557, %v553
    %v914 = vpack.c.b16 %v558, %v554
    %v915 = vpack.c.b16 %v559, %v555
    %v916 = vpack.c.b16 %v564, %v560
    %v917 = vpack.c.b16 %v565, %v561
    %v918 = vpack.c.b16 %v566, %v562
    %v919 = vpack.c.b16 %v567, %v563
    %v920 = vpack.c.b16 %v572, %v568
    %v921 = vpack.c.b16 %v573, %v569
    %v922 = vpack.c.b16 %v574, %v570
    %v923 = vpack.c.b16 %v575, %v571
    %v924 = vpack.c.b16 %v580, %v576
    %v925 = vpack.c.b16 %v581, %v577
    %v926 = vpack.c.b16 %v582, %v578
    %v927 = vpack.c.b16 %v583, %v579
    %v928 = vpack.c.b16 %v588, %v584
    %v929 = vpack.c.b16 %v589, %v585
    %v930 = vpack.c.b16 %v590, %v586
    %v931 = vpack.c.b16 %v591, %v587
    %v932 = vpack.c.b16 %v596, %v592
    %v933 = vpack.c.b16 %v597, %v593
    %v934 = vpack.c.b16 %v598, %v594
    %v935 = vpack.c.b16 %v599, %v595
    %v936 = vpack.c.b16 %v604, %v600
    %v937 = vpack.c.b16 %v605, %v601
    %v938 = vpack.c.b16 %v606, %v602
    %v939 = vpack.c.b16 %v607, %v603
    %v940 = vpack.c.b16 %v612, %v608
    %v941 = vpack.c.b16 %v613, %v609
    %v942 = vpack.c.b16 %v614, %v610
    %v943 = vpack.c.b16 %v615, %v611
    %v944 = vpack.c.b16 %v620, %v616
    %v945 = vpack.c.b16 %v621, %v617
    %v946 = vpack.c.b16 %v622, %v618
    %v947 = vpack.c.b16 %v623, %v619
    %v948 = vpack.c.b16 %v628, %v624
    %v949 = vpack.c.b16 %v629, %v625
    %v950 = vpack.c.b16 %v630, %v626
    %v951 = vpack.c.b16 %v631, %v627
    %v952 = vpack.c.b16 %v636, %v632
    %v953 = vpack.c.b16 %v637, %v633
    %v954 = vpack.c.b16 %v638, %v634
    %v955 = vpack.c.b16 %v639, %v635
    %v956 = vpack.c.b16 %v644, %v640
    %v957 = vpack.c.b16 %v645, %v641
    %v958 = vpack.c.b16 %v646, %v642
    %v959 = vpack.c.b16 %v647, %v643
    %v960 = vpack.c.b16 %v652, %v648
    %v961 = vpack.c.b16 %v653, %v649
    %v962 = vpack.c.b16 %v654, %v650
    %v963 = vpack.c.b16 %v655, %v651
    %v964 = vpack.c.b16 %v660, %v656
    %v965 = vpack.c.b16 %v661, %v657
    %v966 = vpack.c.b16 %v662, %v658
    %v967 = vpack.c.b16 %v663, %v659
    %v968 = vpack.c.b16 %v668, %v664
    %v969 = vpack.c.b16 %v669, %v665
    %v970 = vpack.c.b16 %v670, %v666
    %v971 = vpack.c.b16 %v671, %v667
    %v972 = vpack.c.b16 %v676, %v672
    %v973 = vpack.c.b16 %v677, %v673
    %v974 = vpack.c.b16 %v678, %v674
    %v975 = vpack.c.b16 %v679, %v675
    %v976 = vpack.c.b16 %v684, %v680
    %v977 = vpack.c.b16 %v685, %v681
    %v978 = vpack.c.b16 %v686, %v682
    %v979 = vpack.c.b16 %v687, %v683
    %v980 = vpack.c.b16 %v692, %v688
    %v981 = vpack.c.b16 %v693, %v689
    %v982 = vpack.c.b16 %v694, %v690
    %v983 = vpack.c.b16 %v695, %v691
    %v984 = vpack.c.b16 %v700, %v696
    %v985 = vpack.c.b16 %v701, %v697
    %v986 = vpack.c.b16 %v702, %v698
    %v987 = vpack.c.b16 %v703, %v699
    %v988 = vpack.c.b16 %v708, %v704
    %v989 = vpack.c.b16 %v709, %v705
    %v990 = vpack.c.b16 %v710, %v706
    %v991 = vpack.c.b16 %v711, %v707
    %v992 = vpack.c.b16 %v716, %v712
    %v993 = vpack.c.b16 %v717, %v713
    %v994 = vpack.c.b16 %v718, %v714
    %v995 = vpack.c.b16 %v719, %v715
    %v996 = vpack.c.b16 %v724, %v720
    %v997 = vpack.c.b16 %v725, %v721
    %v998 = vpack.c.b16 %v726, %v722
    %v999 = vpack.c.b16 %v727, %v723
    %v1000 = vpack.c.b16 %v732, %v728
    %v1001 = vpack.c.b16 %v733, %v729
    %v1002 = vpack.c.b16 %v734, %v730
    %v1003 = vpack.c.b16 %v735, %v731
    %v1004 = vpack.c.b16 %v740, %v736
    %v1005 = vpack.c.b16 %v741, %v737
    %v1006 = vpack.c.b16 %v742, %v738
    %v1007 = vpack.c.b16 %v743, %v739
    %v1008 = vpack.c.b16 %v748, %v744
    %v1009 = vpack.c.b16 %v749, %v745
    %v1010 = vpack.c.b16 %v750, %v746
    %v1011 = vpack.c.b16 %v751, %v747
    %v1012 = vpack.c.b16 %v756, %v752
    %v1013 = vpack.c.b16 %v757, %v753
    %v1014 = vpack.c.b16 %v758, %v754
    %v1015 = vpack.c.b16 %v759, %v755
    %v1016 = vpack.c.b16 %v764, %v760
    %v1017 = vpack.c.b16 %v765, %v761
    %v1018 = vpack.c.b16 %v766, %v762
    %v1019 = vpack.c.b16 %v767, %v763
    %v1020 = vpack.c.b16 %v772, %v768
    %v1021 = vpack.c.b16 %v773, %v769
    %v1022 = vpack.c.b16 %v774, %v770
    %v1023 = vpack.c.b16 %v775, %v771
    %v1024 = vpack.c.b16 %v780, %v776
    %v1025 = vpack.c.b16 %v781, %v777
    %v1026 = vpack.c.b16 %v782, %v778
    %v1027 = vpack.c.b16 %v783, %v779
    %v1028 = vpack.c.b16 %v788, %v784
    %v1029 = vpack.c.b16 %v789, %v785
    %v1030 = vpack.c.b16 %v790, %v786
    %v1031 = vpack.c.b16 %v791, %v787
    %v1032 = vpack.c.b16 %v796, %v792
    %v1033 = vpack.c.b16 %v797, %v793
    %v1034 = vpack.c.b16 %v798, %v794
    %v1035 = vpack.c.b16 %v799, %v795
    %v1036 = vpack.c.b16 %v804, %v800
    %v1037 = vpack.c.b16 %v805, %v801
    %v1038 = vpack.c.b16 %v806, %v802
    %v1039 = vpack.c.b16 %v807, %v803
    %v1040 = vpack.c.b16 %v812, %v808
    %v1041 = vpack.c.b16 %v813, %v809
    %v1042 = vpack.c.b16 %v814, %v810
    %v1043 = vpack.c.b16 %v815, %v811
    %v1044 = vpack.c.b16 %v820, %v816
    %v1045 = vpack.c.b16 %v821, %v817
    %v1046 = vpack.c.b16 %v822, %v818
    %v1047 = vpack.c.b16 %v823, %v819
    %v1048 = vpack.c.b16 %v828, %v824
    %v1049 = vpack.c.b16 %v829, %v825
    %v1050 = vpack.c.b16 %v830, %v826
    %v1051 = vpack.c.b16 %v831, %v827
    %v1052 = vpack.c.b16 %v836, %v832
    %v1053 = vpack.c.b16 %v837, %v833
    %v1054 = vpack.c.b16 %v838, %v834
    %v1055 = vpack.c.b16 %v839, %v835
    %v1056 = vpack.c.b16 %v844, %v840
    %v1057 = vpack.c.b16 %v845, %v841
    %v1058 = vpack.c.b16 %v846, %v842
    %v1059 = vpack.c.b16 %v847, %v843
    %v1060 = vpack.c.b16 %v852, %v848
    %v1061 = vpack.c.b16 %v853, %v849
    %v1062 = vpack.c.b16 %v854, %v850
    %v1063 = vpack.c.b16 %v855, %v851
    %v1064 = vpack.c.b16 %v860, %v856
    %v1065 = vpack.c.b16 %v861, %v857
    %v1066 = vpack.c.b16 %v862, %v858
    %v1067 = vpack.c.b16 %v863, %v859
    %v1068 = vpack.c.b16 %v868, %v864
    %v1069 = vpack.c.b16 %v869, %v865
    %v1070 = vpack.c.b16 %v870, %v866
    %v1071 = vpack.c.b16 %v871, %v867
    %vm1272 = vcmask 261120
    %v1274 = vsel %vm1272, %v265, 0
    %1276 = vmatprep.subr.bf16.mxu0 %v901
    %1277 = vmatpush1.bf16.msra.mxu0 %v900
    %1278 = vmatprep.subr.bf16.mxu0 %v897
    %1279 = vmatpush1.bf16.msra.mxu0 %v896
    %1280 = vmatprep.subr.bf16.mxu0 %v893
    %1281 = vmatpush1.bf16.msra.mxu0 %v892
    %1282 = vmatprep.subr.bf16.mxu0 %v889
    %1283 = vmatpush1.bf16.msra.mxu0 %v888
    %1284 = vmatprep.subr.bf16.mxu0 %v885
    %1285 = vmatpush1.bf16.msra.mxu0 %v884
    %1286 = vmatprep.subr.bf16.mxu0 %v881
    %1287 = vmatpush1.bf16.msra.mxu0 %v880
    %1288 = vmatprep.subr.bf16.mxu0 %v877
    %1289 = vmatpush1.bf16.msra.mxu0 %v876
    %1290 = vmatprep.subr.bf16.mxu0 %v873
    %1291 = vmatpush1.bf16.msra.mxu0 %v872
    %1292 = vmatprep.subr.bf16.mxu0 %v933
    %1293 = vmatpush2.bf16.msra.mxu0 %v932
    %1294 = vmatprep.subr.bf16.mxu0 %v929
    %1295 = vmatpush2.bf16.msra.mxu0 %v928
    %1296 = vmatprep.subr.bf16.mxu0 %v925
    %1297 = vmatpush2.bf16.msra.mxu0 %v924
    %1298 = vmatprep.subr.bf16.mxu0 %v921
    %1299 = vmatpush2.bf16.msra.mxu0 %v920
    %1300 = vmatprep.subr.bf16.mxu0 %v917
    %1301 = vmatpush2.bf16.msra.mxu0 %v916
    %1302 = vmatprep.subr.bf16.mxu0 %v913
    %1303 = vmatpush2.bf16.msra.mxu0 %v912
    %1304 = vmatprep.subr.bf16.mxu0 %v909
    %1305 = vmatpush2.bf16.msra.mxu0 %v908
    %1306 = vmatprep.subr.bf16.mxu0 %v905
    %1307 = vmatpush2.bf16.msra.mxu0 %v904
    %1308 = vmatprep.mubr.bf16.mxu0 %v260
    %1309 = vmatmul.mubr.bf16.gmra.mxu0 %v259
    %v1310 = vpop.f32.mrf.mxu0
    %v1311 = vadd.f32 %v231, %v1310
    %v1312 = vpop.f32.mrf.mxu0
    %v1313 = vadd.f32 %v235, %v1312
    %v1314 = vpop.f32.mrf.mxu0
    %v1315 = vpop.f32.mrf.mxu0
    %1316 = vdwg.mxu0
    %1317 = vmatprep.subr.bf16.mxu0 %v965
    %1318 = vmatpush1.bf16.msra.mxu0 %v964
    %1319 = vmatprep.subr.bf16.mxu0 %v961
    %1320 = vmatpush1.bf16.msra.mxu0 %v960
    %1321 = vmatprep.subr.bf16.mxu0 %v957
    %1322 = vmatpush1.bf16.msra.mxu0 %v956
    %1323 = vmatprep.subr.bf16.mxu0 %v953
    %1324 = vmatpush1.bf16.msra.mxu0 %v952
    %1325 = vmatprep.subr.bf16.mxu0 %v949
    %1326 = vmatpush1.bf16.msra.mxu0 %v948
    %1327 = vmatprep.subr.bf16.mxu0 %v945
    %1328 = vmatpush1.bf16.msra.mxu0 %v944
    %1329 = vmatprep.subr.bf16.mxu0 %v941
    %1330 = vmatpush1.bf16.msra.mxu0 %v940
    %1331 = vmatprep.subr.bf16.mxu0 %v937
    %1332 = vmatpush1.bf16.msra.mxu0 %v936
    %1333 = vmatprep.subr.bf16.mxu0 %v997
    %1334 = vmatpush2.bf16.msra.mxu0 %v996
    %1335 = vmatprep.subr.bf16.mxu0 %v993
    %1336 = vmatpush2.bf16.msra.mxu0 %v992
    %1337 = vmatprep.subr.bf16.mxu0 %v989
    %1338 = vmatpush2.bf16.msra.mxu0 %v988
    %1339 = vmatprep.subr.bf16.mxu0 %v985
    %1340 = vmatpush2.bf16.msra.mxu0 %v984
    %1341 = vmatprep.subr.bf16.mxu0 %v981
    %1342 = vmatpush2.bf16.msra.mxu0 %v980
    %1343 = vmatprep.subr.bf16.mxu0 %v977
    %1344 = vmatpush2.bf16.msra.mxu0 %v976
    %1345 = vmatprep.subr.bf16.mxu0 %v973
    %1346 = vmatpush2.bf16.msra.mxu0 %v972
    %1347 = vmatprep.subr.bf16.mxu0 %v969
    %1348 = vmatpush2.bf16.msra.mxu0 %v968
    %1349 = vmatprep.mubr.bf16.mxu0 %v262
    %1350 = vmatmul.mubr.bf16.gmra.mxu0 %v261
    %v1351 = vpop.f32.mrf.mxu0
    %v1352 = vadd.f32 %v1311, %v1351
    %v1353 = vpop.f32.mrf.mxu0
    %v1354 = vadd.f32 %v1313, %v1353
    %v1355 = vpop.f32.mrf.mxu0
    %v1356 = vpop.f32.mrf.mxu0
    %1357 = vdwg.mxu0
    %1358 = vmatprep.subr.bf16.mxu0 %v1029
    %1359 = vmatpush1.bf16.msra.mxu0 %v1028
    %1360 = vmatprep.subr.bf16.mxu0 %v1025
    %1361 = vmatpush1.bf16.msra.mxu0 %v1024
    %1362 = vmatprep.subr.bf16.mxu0 %v1021
    %1363 = vmatpush1.bf16.msra.mxu0 %v1020
    %1364 = vmatprep.subr.bf16.mxu0 %v1017
    %1365 = vmatpush1.bf16.msra.mxu0 %v1016
    %1366 = vmatprep.subr.bf16.mxu0 %v1013
    %1367 = vmatpush1.bf16.msra.mxu0 %v1012
    %1368 = vmatprep.subr.bf16.mxu0 %v1009
    %1369 = vmatpush1.bf16.msra.mxu0 %v1008
    %1370 = vmatprep.subr.bf16.mxu0 %v1005
    %1371 = vmatpush1.bf16.msra.mxu0 %v1004
    %1372 = vmatprep.subr.bf16.mxu0 %v1001
    %1373 = vmatpush1.bf16.msra.mxu0 %v1000
    %1374 = vmatprep.subr.bf16.mxu0 %v1061
    %1375 = vmatpush2.bf16.msra.mxu0 %v1060
    %1376 = vmatprep.subr.bf16.mxu0 %v1057
    %1377 = vmatpush2.bf16.msra.mxu0 %v1056
    %1378 = vmatprep.subr.bf16.mxu0 %v1053
    %1379 = vmatpush2.bf16.msra.mxu0 %v1052
    %1380 = vmatprep.subr.bf16.mxu0 %v1049
    %1381 = vmatpush2.bf16.msra.mxu0 %v1048
    %1382 = vmatprep.subr.bf16.mxu0 %v1045
    %1383 = vmatpush2.bf16.msra.mxu0 %v1044
    %1384 = vmatprep.subr.bf16.mxu0 %v1041
    %1385 = vmatpush2.bf16.msra.mxu0 %v1040
    %1386 = vmatprep.subr.bf16.mxu0 %v1037
    %1387 = vmatpush2.bf16.msra.mxu0 %v1036
    %1388 = vmatprep.subr.bf16.mxu0 %v1033
    %1389 = vmatpush2.bf16.msra.mxu0 %v1032
    %1390 = vmatprep.mubr.bf16.mxu0 %v264
    %1391 = vmatmul.mubr.bf16.gmra.mxu0 %v263
    %v1392 = vpop.f32.mrf.mxu0
    %v1393 = vadd.f32 %v1352, %v1392
    %v1394 = vpop.f32.mrf.mxu0
    %v1395 = vadd.f32 %v1354, %v1394
    %v1396 = vpop.f32.mrf.mxu0
    %v1397 = vpop.f32.mrf.mxu0
    %1398 = vdwg.mxu0
    %1399 = vmatprep.subr.bf16.mxu0 0
    %1400 = vmatpush1.bf16.msra.mxu0 0
    %1401 = vmatprep.subr.bf16.mxu0 0
    %1402 = vmatpush1.bf16.msra.mxu0 0
    %1403 = vmatprep.subr.bf16.mxu0 0
    %1404 = vmatpush1.bf16.msra.mxu0 0
    %1405 = vmatprep.subr.bf16.mxu0 0
    %1406 = vmatpush1.bf16.msra.mxu0 0
    %1407 = vmatprep.subr.bf16.mxu0 0
    %1408 = vmatpush1.bf16.msra.mxu0 0
    %1409 = vmatprep.subr.bf16.mxu0 0
    %1410 = vmatpush1.bf16.msra.mxu0 0
    %1411 = vmatprep.subr.bf16.mxu0 %v1069
    %1412 = vmatpush1.bf16.msra.mxu0 %v1068
    %1413 = vmatprep.subr.bf16.mxu0 %v1065
    %1414 = vmatpush1.bf16.msra.mxu0 %v1064
    %1415 = vmatprep.subr.bf16.mxu0 0
    %1416 = vmatpush2.bf16.msra.mxu0 0
    %1417 = vmatprep.subr.bf16.mxu0 0
    %1418 = vmatpush2.bf16.msra.mxu0 0
    %1419 = vmatprep.subr.bf16.mxu0 0
    %1420 = vmatpush2.bf16.msra.mxu0 0
    %1421 = vmatprep.subr.bf16.mxu0 0
    %1422 = vmatpush2.bf16.msra.mxu0 0
    %1423 = vmatprep.subr.bf16.mxu0 0
    %1424 = vmatpush2.bf16.msra.mxu0 0
    %1425 = vmatprep.subr.bf16.mxu0 0
    %1426 = vmatpush2.bf16.msra.mxu0 0
    %1427 = vmatprep.subr.bf16.mxu0 0
    %1428 = vmatpush2.bf16.msra.mxu0 0
    %1429 = vmatprep.subr.bf16.mxu0 0
    %1430 = vmatpush2.bf16.msra.mxu0 0
    %1431 = vmatprep.mubr.bf16.mxu0 0
    %1432 = vmatmul.mubr.bf16.gmra.mxu0 %v1274
    %v1433 = vpop.f32.mrf.mxu0
    %v1434 = vadd.f32 %v1393, %v1433
    %v1435 = vpop.f32.mrf.mxu0
    %v1436 = vadd.f32 %v1395, %v1435
    %v1437 = vpop.f32.mrf.mxu0
    %v1438 = vpop.f32.mrf.mxu0
    %1439 = vdwg.mxu0
    %1440 = vmatprep.subr.bf16.mxu0 %v903
    %1441 = vmatpush1.bf16.msra.mxu0 %v902
    %1442 = vmatprep.subr.bf16.mxu0 %v899
    %1443 = vmatpush1.bf16.msra.mxu0 %v898
    %1444 = vmatprep.subr.bf16.mxu0 %v895
    %1445 = vmatpush1.bf16.msra.mxu0 %v894
    %1446 = vmatprep.subr.bf16.mxu0 %v891
    %1447 = vmatpush1.bf16.msra.mxu0 %v890
    %1448 = vmatprep.subr.bf16.mxu0 %v887
    %1449 = vmatpush1.bf16.msra.mxu0 %v886
    %1450 = vmatprep.subr.bf16.mxu0 %v883
    %1451 = vmatpush1.bf16.msra.mxu0 %v882
    %1452 = vmatprep.subr.bf16.mxu0 %v879
    %1453 = vmatpush1.bf16.msra.mxu0 %v878
    %1454 = vmatprep.subr.bf16.mxu0 %v875
    %1455 = vmatpush1.bf16.msra.mxu0 %v874
    %1456 = vmatprep.subr.bf16.mxu0 %v935
    %1457 = vmatpush2.bf16.msra.mxu0 %v934
    %1458 = vmatprep.subr.bf16.mxu0 %v931
    %1459 = vmatpush2.bf16.msra.mxu0 %v930
    %1460 = vmatprep.subr.bf16.mxu0 %v927
    %1461 = vmatpush2.bf16.msra.mxu0 %v926
    %1462 = vmatprep.subr.bf16.mxu0 %v923
    %1463 = vmatpush2.bf16.msra.mxu0 %v922
    %1464 = vmatprep.subr.bf16.mxu0 %v919
    %1465 = vmatpush2.bf16.msra.mxu0 %v918
    %1466 = vmatprep.subr.bf16.mxu0 %v915
    %1467 = vmatpush2.bf16.msra.mxu0 %v914
    %1468 = vmatprep.subr.bf16.mxu0 %v911
    %1469 = vmatpush2.bf16.msra.mxu0 %v910
    %1470 = vmatprep.subr.bf16.mxu0 %v907
    %1471 = vmatpush2.bf16.msra.mxu0 %v906
    %1472 = vmatprep.mubr.bf16.mxu0 %v260
    %1473 = vmatmul.mubr.bf16.gmra.mxu0 %v259
    %v1474 = vpop.f32.mrf.mxu0
    %v1475 = vadd.f32 %v239, %v1474
    %v1476 = vpop.f32.mrf.mxu0
    %v1477 = vadd.f32 %v243, %v1476
    %v1478 = vpop.f32.mrf.mxu0
    %v1479 = vpop.f32.mrf.mxu0
    %1480 = vdwg.mxu0
    %1481 = vmatprep.subr.bf16.mxu0 %v967
    %1482 = vmatpush1.bf16.msra.mxu0 %v966
    %1483 = vmatprep.subr.bf16.mxu0 %v963
    %1484 = vmatpush1.bf16.msra.mxu0 %v962
    %1485 = vmatprep.subr.bf16.mxu0 %v959
    %1486 = vmatpush1.bf16.msra.mxu0 %v958
    %1487 = vmatprep.subr.bf16.mxu0 %v955
    %1488 = vmatpush1.bf16.msra.mxu0 %v954
    %1489 = vmatprep.subr.bf16.mxu0 %v951
    %1490 = vmatpush1.bf16.msra.mxu0 %v950
    %1491 = vmatprep.subr.bf16.mxu0 %v947
    %1492 = vmatpush1.bf16.msra.mxu0 %v946
    %1493 = vmatprep.subr.bf16.mxu0 %v943
    %1494 = vmatpush1.bf16.msra.mxu0 %v942
    %1495 = vmatprep.subr.bf16.mxu0 %v939
    %1496 = vmatpush1.bf16.msra.mxu0 %v938
    %1497 = vmatprep.subr.bf16.mxu0 %v999
    %1498 = vmatpush2.bf16.msra.mxu0 %v998
    %1499 = vmatprep.subr.bf16.mxu0 %v995
    %1500 = vmatpush2.bf16.msra.mxu0 %v994
    %1501 = vmatprep.subr.bf16.mxu0 %v991
    %1502 = vmatpush2.bf16.msra.mxu0 %v990
    %1503 = vmatprep.subr.bf16.mxu0 %v987
    %1504 = vmatpush2.bf16.msra.mxu0 %v986
    %1505 = vmatprep.subr.bf16.mxu0 %v983
    %1506 = vmatpush2.bf16.msra.mxu0 %v982
    %1507 = vmatprep.subr.bf16.mxu0 %v979
    %1508 = vmatpush2.bf16.msra.mxu0 %v978
    %1509 = vmatprep.subr.bf16.mxu0 %v975
    %1510 = vmatpush2.bf16.msra.mxu0 %v974
    %1511 = vmatprep.subr.bf16.mxu0 %v971
    %1512 = vmatpush2.bf16.msra.mxu0 %v970
    %1513 = vmatprep.mubr.bf16.mxu0 %v262
    %1514 = vmatmul.mubr.bf16.gmra.mxu0 %v261
    %v1515 = vpop.f32.mrf.mxu0
    %v1516 = vadd.f32 %v1475, %v1515
    %v1517 = vpop.f32.mrf.mxu0
    %v1518 = vadd.f32 %v1477, %v1517
    %v1519 = vpop.f32.mrf.mxu0
    %v1520 = vpop.f32.mrf.mxu0
    %1521 = vdwg.mxu0
    %1522 = vmatprep.subr.bf16.mxu0 %v1031
    %1523 = vmatpush1.bf16.msra.mxu0 %v1030
    %1524 = vmatprep.subr.bf16.mxu0 %v1027
    %1525 = vmatpush1.bf16.msra.mxu0 %v1026
    %1526 = vmatprep.subr.bf16.mxu0 %v1023
    %1527 = vmatpush1.bf16.msra.mxu0 %v1022
    %1528 = vmatprep.subr.bf16.mxu0 %v1019
    %1529 = vmatpush1.bf16.msra.mxu0 %v1018
    %1530 = vmatprep.subr.bf16.mxu0 %v1015
    %1531 = vmatpush1.bf16.msra.mxu0 %v1014
    %1532 = vmatprep.subr.bf16.mxu0 %v1011
    %1533 = vmatpush1.bf16.msra.mxu0 %v1010
    %1534 = vmatprep.subr.bf16.mxu0 %v1007
    %1535 = vmatpush1.bf16.msra.mxu0 %v1006
    %1536 = vmatprep.subr.bf16.mxu0 %v1003
    %1537 = vmatpush1.bf16.msra.mxu0 %v1002
    %1538 = vmatprep.subr.bf16.mxu0 %v1063
    %1539 = vmatpush2.bf16.msra.mxu0 %v1062
    %1540 = vmatprep.subr.bf16.mxu0 %v1059
    %1541 = vmatpush2.bf16.msra.mxu0 %v1058
    %1542 = vmatprep.subr.bf16.mxu0 %v1055
    %1543 = vmatpush2.bf16.msra.mxu0 %v1054
    %1544 = vmatprep.subr.bf16.mxu0 %v1051
    %1545 = vmatpush2.bf16.msra.mxu0 %v1050
    %1546 = vmatprep.subr.bf16.mxu0 %v1047
    %1547 = vmatpush2.bf16.msra.mxu0 %v1046
    %1548 = vmatprep.subr.bf16.mxu0 %v1043
    %1549 = vmatpush2.bf16.msra.mxu0 %v1042
    %1550 = vmatprep.subr.bf16.mxu0 %v1039
    %1551 = vmatpush2.bf16.msra.mxu0 %v1038
    %1552 = vmatprep.subr.bf16.mxu0 %v1035
    %1553 = vmatpush2.bf16.msra.mxu0 %v1034
    %1554 = vmatprep.mubr.bf16.mxu0 %v264
    %1555 = vmatmul.mubr.bf16.gmra.mxu0 %v263
    %v1556 = vpop.f32.mrf.mxu0
    %v1557 = vadd.f32 %v1516, %v1556
    %v1558 = vpop.f32.mrf.mxu0
    %v1559 = vadd.f32 %v1518, %v1558
    %v1560 = vpop.f32.mrf.mxu0
    %v1561 = vpop.f32.mrf.mxu0
    %1562 = vdwg.mxu0
    %1563 = vmatprep.subr.bf16.mxu0 0
    %1564 = vmatpush1.bf16.msra.mxu0 0
    %1565 = vmatprep.subr.bf16.mxu0 0
    %1566 = vmatpush1.bf16.msra.mxu0 0
    %1567 = vmatprep.subr.bf16.mxu0 0
    %1568 = vmatpush1.bf16.msra.mxu0 0
    %1569 = vmatprep.subr.bf16.mxu0 0
    %1570 = vmatpush1.bf16.msra.mxu0 0
    %1571 = vmatprep.subr.bf16.mxu0 0
    %1572 = vmatpush1.bf16.msra.mxu0 0
    %1573 = vmatprep.subr.bf16.mxu0 0
    %1574 = vmatpush1.bf16.msra.mxu0 0
    %1575 = vmatprep.subr.bf16.mxu0 %v1071
    %1576 = vmatpush1.bf16.msra.mxu0 %v1070
    %1577 = vmatprep.subr.bf16.mxu0 %v1067
    %1578 = vmatpush1.bf16.msra.mxu0 %v1066
    %1579 = vmatprep.subr.bf16.mxu0 0
    %1580 = vmatpush2.bf16.msra.mxu0 0
    %1581 = vmatprep.subr.bf16.mxu0 0
    %1582 = vmatpush2.bf16.msra.mxu0 0
    %1583 = vmatprep.subr.bf16.mxu0 0
    %1584 = vmatpush2.bf16.msra.mxu0 0
    %1585 = vmatprep.subr.bf16.mxu0 0
    %1586 = vmatpush2.bf16.msra.mxu0 0
    %1587 = vmatprep.subr.bf16.mxu0 0
    %1588 = vmatpush2.bf16.msra.mxu0 0
    %1589 = vmatprep.subr.bf16.mxu0 0
    %1590 = vmatpush2.bf16.msra.mxu0 0
    %1591 = vmatprep.subr.bf16.mxu0 0
    %1592 = vmatpush2.bf16.msra.mxu0 0
    %1593 = vmatprep.subr.bf16.mxu0 0
    %1594 = vmatpush2.bf16.msra.mxu0 0
    %1595 = vmatprep.mubr.bf16.mxu0 0
    %1596 = vmatmul.mubr.bf16.gmra.mxu0 %v1274
    %v1597 = vpop.f32.mrf.mxu0
    %v1598 = vadd.f32 %v1557, %v1597
    %v1599 = vpop.f32.mrf.mxu0
    %v1600 = vadd.f32 %v1559, %v1599
    %v1601 = vpop.f32.mrf.mxu0
    %v1602 = vpop.f32.mrf.mxu0
    %1603 = vdwg.mxu0
    %v1604 = vmax.f32 %v1434, 0.0
    %v1605 = vmax.f32 %v1436, 0.0
    %v1606 = vmax.f32 %v1598, 0.0
    %v1607 = vmax.f32 %v1600, 0.0
    %v1608 = vpack.c.bf16 %v1604, %v1604
    %v1609 = vpack.c.bf16 %v1605, %v1605
    %v1610 = vpack.c.bf16 %v1606, %v1606
    %v1611 = vpack.c.bf16 %v1607, %v1607
    %v1612 = vld [vmem:[%s3] sm:$0xf]
    %v1613 = vld [vmem:[%s3 + $0x4] sm:$0xf]
    %v1614 = vld [vmem:[%s3 + $0x8] sm:$0xf]
    %v1615 = vld [vmem:[%s3 + $0xc] sm:$0xf]
    %v1616 = vld [vmem:[%s3 + $0x10] sm:$0xf]
    %v1617 = vld [vmem:[%s3 + $0x14] sm:$0xf]
    %v1618 = vld [vmem:[%s3 + $0x18] sm:$0xf]
    %v1619 = vld [vmem:[%s3 + $0x1c] sm:$0xf]
    %v1620 = vld [vmem:[%s3 + $0x20] sm:$0xf]
    %v1621 = vld [vmem:[%s3 + $0x24] sm:$0xf]
    %v1622 = vld [vmem:[%s3 + $0x28] sm:$0xf]
    %v1623 = vld [vmem:[%s3 + $0x2c] sm:$0xf]
    %v1624 = vld [vmem:[%s3 + $0x30] sm:$0xf]
    %v1625 = vld [vmem:[%s3 + $0x34] sm:$0xf]
    %v1626 = vld [vmem:[%s3 + $0x38] sm:$0xf]
    %v1627 = vld [vmem:[%s3 + $0x3c] sm:$0xf]
    %v1628 = vld [vmem:[%s3 + $0x40] sm:$0xf]
    %v1629 = vld [vmem:[%s3 + $0x44] sm:$0xf]
    %v1630 = vld [vmem:[%s3 + $0x48] sm:$0xf]
    %v1631 = vld [vmem:[%s3 + $0x4c] sm:$0xf]
    %v1632 = vld [vmem:[%s3 + $0x50] sm:$0xf]
    %v1633 = vld [vmem:[%s3 + $0x54] sm:$0xf]
    %v1634 = vld [vmem:[%s3 + $0x58] sm:$0xf]
    %v1635 = vld [vmem:[%s3 + $0x5c] sm:$0xf]
    %v1636 = vld [vmem:[%s3 + $0x60] sm:$0xf]
    %v1637 = vld [vmem:[%s3 + $0x64] sm:$0xf]
    %v1638 = vld [vmem:[%s3 + $0x68] sm:$0xf]
    %v1639 = vld [vmem:[%s3 + $0x6c] sm:$0xf]
    %v1640 = vld [vmem:[%s3 + $0x70] sm:$0xf]
    %v1641 = vld [vmem:[%s3 + $0x74] sm:$0xf]
    %v1642 = vld [vmem:[%s3 + $0x78] sm:$0xf]
    %v1643 = vld [vmem:[%s3 + $0x7c] sm:$0xf]
    %v1644 = vld [vmem:[%s3 + $0x80] sm:$0xf]
    %v1645 = vld [vmem:[%s3 + $0x84] sm:$0xf]
    %v1646 = vld [vmem:[%s3 + $0x88] sm:$0xf]
    %v1647 = vld [vmem:[%s3 + $0x8c] sm:$0xf]
    %v1648 = vld [vmem:[%s3 + $0x90] sm:$0xf]
    %v1649 = vld [vmem:[%s3 + $0x94] sm:$0xf]
    %v1650 = vld [vmem:[%s3 + $0x98] sm:$0xf]
    %v1651 = vld [vmem:[%s3 + $0x9c] sm:$0xf]
    %v1652 = vld [vmem:[%s3 + $0xa0] sm:$0xf]
    %v1653 = vld [vmem:[%s3 + $0xa4] sm:$0xf]
    %v1654 = vld [vmem:[%s3 + $0xa8] sm:$0xf]
    %v1655 = vld [vmem:[%s3 + $0xac] sm:$0xf]
    %v1656 = vld [vmem:[%s3 + $0xb0] sm:$0xf]
    %v1657 = vld [vmem:[%s3 + $0xb4] sm:$0xf]
    %v1658 = vld [vmem:[%s3 + $0xb8] sm:$0xf]
    %v1659 = vld [vmem:[%s3 + $0xbc] sm:$0xf]
    %v1660 = vld [vmem:[%s3 + $0xc0] sm:$0xf]
    %v1661 = vld [vmem:[%s3 + $0xc4] sm:$0xf]
    %v1662 = vld [vmem:[%s3 + $0xc8] sm:$0xf]
    %v1663 = vld [vmem:[%s3 + $0xcc] sm:$0xf]
    %v1664 = vld [vmem:[%s3 + $0xd0] sm:$0xf]
    %v1665 = vld [vmem:[%s3 + $0xd4] sm:$0xf]
    %v1666 = vld [vmem:[%s3 + $0xd8] sm:$0xf]
    %v1667 = vld [vmem:[%s3 + $0xdc] sm:$0xf]
    %v1668 = vld [vmem:[%s3 + $0xe0] sm:$0xf]
    %v1669 = vld [vmem:[%s3 + $0xe4] sm:$0xf]
    %v1670 = vld [vmem:[%s3 + $0xe8] sm:$0xf]
    %v1671 = vld [vmem:[%s3 + $0xec] sm:$0xf]
    %v1672 = vld [vmem:[%s3 + $0xf0] sm:$0xf]
    %v1673 = vld [vmem:[%s3 + $0xf4] sm:$0xf]
    %v1674 = vld [vmem:[%s3 + $0xf8] sm:$0xf]
    %v1675 = vld [vmem:[%s3 + $0xfc] sm:$0xf]
    %v1676 = vld [vmem:[%s4] sm:$0x1]
    %v1678 = vlaneseq
    %v1679 = vshrl.u32 %v1678, 7
    %v1680 = vsub.s32 0, %v1679
    %v1681 = vrot.slane %v1676, %v1680
    %v1747 = vunpack.c.l.b16 %v1612
    %v1748 = vunpack.c.l.b16 %v1613
    %v1749 = vunpack.c.l.b16 %v1614
    %v1750 = vunpack.c.l.b16 %v1615
    %v1751 = vunpack.c.l.b16 %v1616
    %v1752 = vunpack.c.l.b16 %v1617
    %v1753 = vunpack.c.l.b16 %v1618
    %v1754 = vunpack.c.l.b16 %v1619
    %v1755 = vunpack.c.l.b16 %v1620
    %v1756 = vunpack.c.l.b16 %v1621
    %v1757 = vunpack.c.l.b16 %v1622
    %v1758 = vunpack.c.l.b16 %v1623
    %v1759 = vunpack.c.l.b16 %v1624
    %v1760 = vunpack.c.l.b16 %v1625
    %v1761 = vunpack.c.l.b16 %v1626
    %v1762 = vunpack.c.l.b16 %v1627
    %v1763 = vunpack.c.l.b16 %v1628
    %v1764 = vunpack.c.l.b16 %v1629
    %v1765 = vunpack.c.l.b16 %v1630
    %v1766 = vunpack.c.l.b16 %v1631
    %v1767 = vunpack.c.l.b16 %v1632
    %v1768 = vunpack.c.l.b16 %v1633
    %v1769 = vunpack.c.l.b16 %v1634
    %v1770 = vunpack.c.l.b16 %v1635
    %v1771 = vunpack.c.l.b16 %v1636
    %v1772 = vunpack.c.l.b16 %v1637
    %v1773 = vunpack.c.l.b16 %v1638
    %v1774 = vunpack.c.l.b16 %v1639
    %v1775 = vunpack.c.l.b16 %v1640
    %v1776 = vunpack.c.l.b16 %v1641
    %v1777 = vunpack.c.l.b16 %v1642
    %v1778 = vunpack.c.l.b16 %v1643
    %v1779 = vunpack.c.l.b16 %v1644
    %v1780 = vunpack.c.l.b16 %v1645
    %v1781 = vunpack.c.l.b16 %v1646
    %v1782 = vunpack.c.l.b16 %v1647
    %v1783 = vunpack.c.l.b16 %v1648
    %v1784 = vunpack.c.l.b16 %v1649
    %v1785 = vunpack.c.l.b16 %v1650
    %v1786 = vunpack.c.l.b16 %v1651
    %v1787 = vunpack.c.l.b16 %v1652
    %v1788 = vunpack.c.l.b16 %v1653
    %v1789 = vunpack.c.l.b16 %v1654
    %v1790 = vunpack.c.l.b16 %v1655
    %v1791 = vunpack.c.l.b16 %v1656
    %v1792 = vunpack.c.l.b16 %v1657
    %v1793 = vunpack.c.l.b16 %v1658
    %v1794 = vunpack.c.l.b16 %v1659
    %v1795 = vunpack.c.l.b16 %v1660
    %v1796 = vunpack.c.l.b16 %v1661
    %v1797 = vunpack.c.l.b16 %v1662
    %v1798 = vunpack.c.l.b16 %v1663
    %v1799 = vunpack.c.l.b16 %v1664
    %v1800 = vunpack.c.l.b16 %v1665
    %v1801 = vunpack.c.l.b16 %v1666
    %v1802 = vunpack.c.l.b16 %v1667
    %v1803 = vunpack.c.l.b16 %v1668
    %v1804 = vunpack.c.l.b16 %v1669
    %v1805 = vunpack.c.l.b16 %v1670
    %v1806 = vunpack.c.l.b16 %v1671
    %v1807 = vunpack.c.l.b16 %v1672
    %v1808 = vunpack.c.l.b16 %v1673
    %v1809 = vunpack.c.l.b16 %v1674
    %v1810 = vunpack.c.l.b16 %v1675
    %v1811 = vpack.c.b16 %v1748, %v1747
    %v1812 = vpack.c.b16 %v1750, %v1749
    %v1813 = vpack.c.b16 %v1752, %v1751
    %v1814 = vpack.c.b16 %v1754, %v1753
    %v1815 = vpack.c.b16 %v1756, %v1755
    %v1816 = vpack.c.b16 %v1758, %v1757
    %v1817 = vpack.c.b16 %v1760, %v1759
    %v1818 = vpack.c.b16 %v1762, %v1761
    %v1819 = vpack.c.b16 %v1764, %v1763
    %v1820 = vpack.c.b16 %v1766, %v1765
    %v1821 = vpack.c.b16 %v1768, %v1767
    %v1822 = vpack.c.b16 %v1770, %v1769
    %v1823 = vpack.c.b16 %v1772, %v1771
    %v1824 = vpack.c.b16 %v1774, %v1773
    %v1825 = vpack.c.b16 %v1776, %v1775
    %v1826 = vpack.c.b16 %v1778, %v1777
    %v1827 = vpack.c.b16 %v1780, %v1779
    %v1828 = vpack.c.b16 %v1782, %v1781
    %v1829 = vpack.c.b16 %v1784, %v1783
    %v1830 = vpack.c.b16 %v1786, %v1785
    %v1831 = vpack.c.b16 %v1788, %v1787
    %v1832 = vpack.c.b16 %v1790, %v1789
    %v1833 = vpack.c.b16 %v1792, %v1791
    %v1834 = vpack.c.b16 %v1794, %v1793
    %v1835 = vpack.c.b16 %v1796, %v1795
    %v1836 = vpack.c.b16 %v1798, %v1797
    %v1837 = vpack.c.b16 %v1800, %v1799
    %v1838 = vpack.c.b16 %v1802, %v1801
    %v1839 = vpack.c.b16 %v1804, %v1803
    %v1840 = vpack.c.b16 %v1806, %v1805
    %v1841 = vpack.c.b16 %v1808, %v1807
    %v1842 = vpack.c.b16 %v1810, %v1809
    %1875 = vmatprep.subr.bf16.mxu0 0
    %1876 = vmatpush1.bf16.msra.mxu0 %v1818
    %1877 = vmatprep.subr.bf16.mxu0 0
    %1878 = vmatpush1.bf16.msra.mxu0 %v1817
    %1879 = vmatprep.subr.bf16.mxu0 0
    %1880 = vmatpush1.bf16.msra.mxu0 %v1816
    %1881 = vmatprep.subr.bf16.mxu0 0
    %1882 = vmatpush1.bf16.msra.mxu0 %v1815
    %1883 = vmatprep.subr.bf16.mxu0 0
    %1884 = vmatpush1.bf16.msra.mxu0 %v1814
    %1885 = vmatprep.subr.bf16.mxu0 0
    %1886 = vmatpush1.bf16.msra.mxu0 %v1813
    %1887 = vmatprep.subr.bf16.mxu0 0
    %1888 = vmatpush1.bf16.msra.mxu0 %v1812
    %1889 = vmatprep.subr.bf16.mxu0 0
    %1890 = vmatpush1.bf16.msra.mxu0 %v1811
    %1891 = vmatprep.subr.bf16.mxu0 0
    %1892 = vmatpush2.bf16.msra.mxu0 %v1826
    %1893 = vmatprep.subr.bf16.mxu0 0
    %1894 = vmatpush2.bf16.msra.mxu0 %v1825
    %1895 = vmatprep.subr.bf16.mxu0 0
    %1896 = vmatpush2.bf16.msra.mxu0 %v1824
    %1897 = vmatprep.subr.bf16.mxu0 0
    %1898 = vmatpush2.bf16.msra.mxu0 %v1823
    %1899 = vmatprep.subr.bf16.mxu0 0
    %1900 = vmatpush2.bf16.msra.mxu0 %v1822
    %1901 = vmatprep.subr.bf16.mxu0 0
    %1902 = vmatpush2.bf16.msra.mxu0 %v1821
    %1903 = vmatprep.subr.bf16.mxu0 0
    %1904 = vmatpush2.bf16.msra.mxu0 %v1820
    %1905 = vmatprep.subr.bf16.mxu0 0
    %1906 = vmatpush2.bf16.msra.mxu0 %v1819
    %1907 = vmatprep.mubr.bf16.mxu0 %v1609
    %1908 = vmatmul.mubr.bf16.gmra.mxu0 %v1608
    %v1909 = vpop.f32.mrf.mxu0
    %v1910 = vadd.f32 %v1681, %v1909
    %v1911 = vpop.f32.mrf.mxu0
    %v1912 = vpop.f32.mrf.mxu0
    %v1913 = vpop.f32.mrf.mxu0
    %1914 = vdwg.mxu0
    %1915 = vmatprep.subr.bf16.mxu0 0
    %1916 = vmatpush1.bf16.msra.mxu0 %v1834
    %1917 = vmatprep.subr.bf16.mxu0 0
    %1918 = vmatpush1.bf16.msra.mxu0 %v1833
    %1919 = vmatprep.subr.bf16.mxu0 0
    %1920 = vmatpush1.bf16.msra.mxu0 %v1832
    %1921 = vmatprep.subr.bf16.mxu0 0
    %1922 = vmatpush1.bf16.msra.mxu0 %v1831
    %1923 = vmatprep.subr.bf16.mxu0 0
    %1924 = vmatpush1.bf16.msra.mxu0 %v1830
    %1925 = vmatprep.subr.bf16.mxu0 0
    %1926 = vmatpush1.bf16.msra.mxu0 %v1829
    %1927 = vmatprep.subr.bf16.mxu0 0
    %1928 = vmatpush1.bf16.msra.mxu0 %v1828
    %1929 = vmatprep.subr.bf16.mxu0 0
    %1930 = vmatpush1.bf16.msra.mxu0 %v1827
    %1931 = vmatprep.subr.bf16.mxu0 0
    %1932 = vmatpush2.bf16.msra.mxu0 %v1842
    %1933 = vmatprep.subr.bf16.mxu0 0
    %1934 = vmatpush2.bf16.msra.mxu0 %v1841
    %1935 = vmatprep.subr.bf16.mxu0 0
    %1936 = vmatpush2.bf16.msra.mxu0 %v1840
    %1937 = vmatprep.subr.bf16.mxu0 0
    %1938 = vmatpush2.bf16.msra.mxu0 %v1839
    %1939 = vmatprep.subr.bf16.mxu0 0
    %1940 = vmatpush2.bf16.msra.mxu0 %v1838
    %1941 = vmatprep.subr.bf16.mxu0 0
    %1942 = vmatpush2.bf16.msra.mxu0 %v1837
    %1943 = vmatprep.subr.bf16.mxu0 0
    %1944 = vmatpush2.bf16.msra.mxu0 %v1836
    %1945 = vmatprep.subr.bf16.mxu0 0
    %1946 = vmatpush2.bf16.msra.mxu0 %v1835
    %1947 = vmatprep.mubr.bf16.mxu0 %v1611
    %1948 = vmatmul.mubr.bf16.gmra.mxu0 %v1610
    %v1949 = vpop.f32.mrf.mxu0
    %v1950 = vadd.f32 %v1910, %v1949
    %v1951 = vpop.f32.mrf.mxu0
    %v1952 = vpop.f32.mrf.mxu0
    %v1953 = vpop.f32.mrf.mxu0
    %1954 = vdwg.mxu0
    %1955 = vst.msk [vmem:[#allocation2] sm:$0xff] %vm1272, %v1950
    // Predicated region
    $region22: #{digit_conv_forward.5} parent=1 // pred_check
      _
    $region23: #{digit_conv_forward.5} parent=1 // pred_check_branch
      %1957 = sbr.rel (0) target = $region25
    $region24: #{digit_conv_forward.5} parent=1 // pred_region
      %s1959 = ssub.s32 128, 128
      %1960 = vsyncadd [#allocation3], %s1959
      %s1962 = sshll.u32 [#allocation2], 4
      %s1963 = int_to_ptr.vmem [resolvable:$true] %s1962
      %1965 = dma.vmem_to_hbm [thread:$0]  %s1963, 128, %s5, [#allocation3]
    $region25: #{digit_conv_forward.5} parent=1 // pred_fallthru
      _
    // Predicated region
    $region26: #{digit_conv_forward.5} parent=1 // pred_check
      _
    $region27: #{digit_conv_forward.5} parent=1 // pred_check_branch
      %1967 = sbr.rel (0) target = $region29
    $region28: #{digit_conv_forward.5} parent=1 // pred_region
      %1968 = dma.done [#allocation3], 128
    $region29: #{digit_conv_forward.5} parent=1 // pred_fallthru
      _
    %1969 = vsyncpa [#allocation3], 1

</llo_original>
